<compile_context>
chip_gen: v7x
topology: tpu7x:2x2x1
jax: 0.10.0
libtpu: 0.0.40
codegen_flags: <defaults>
</compile_context>

<pallas_src>
import math

import jax
import jax.numpy as jnp
from jax.experimental import pallas as pl
from jax.experimental.pallas import tpu as pltpu


def _pick_vmem_limit():
    """Generation-aware scoped-VMEM limit: ~3/4 of physical, capped at 100 MiB."""
    try:
        cap = int(getattr(pltpu.get_tpu_info(), "vmem_capacity_bytes"))
        return int(min(cap - cap // 4, 100 * 1024 * 1024))
    except Exception:  # unknown chip / interpret mode -> safe everywhere
        return 48 * 1024 * 1024


VMEM_LIMIT_BYTES = _pick_vmem_limit()


# ----------------------------------------------------------------------------
# Pallas kernels
# ----------------------------------------------------------------------------
def _bn_lrelu_conv3x3(v_ref, scale_ref, shift_ref, w_ref, apad_ref):
    """f32 (H2*W2, Cout) = conv3x3(leaky_relu(v * scale + shift)), zero padding.

    The activated tile is cast to bf16 once and stored into a zero-halo VMEM
    scratch; the 9 shifted windows are re-read from VMEM (never HBM) and fed
    to the MXU with f32 accumulation.  Only the 1-px halo is zeroed each step
    (the interior is fully overwritten), so there is no full-buffer clear and
    no reliance on cross-step scratch state (megacore-safe).
    """
    _, H2, W2, C = v_ref.shape
    cout = w_ref.shape[-1]

    scale = scale_ref[...].reshape(1, 1, C)
    shift = shift_ref[...].reshape(1, 1, C)
    a = v_ref[0].astype(jnp.float32) * scale + shift
    a = jnp.where(a >= 0.0, a, 0.01 * a)            # leaky_relu, slope 0.01

    # Border-only zeroing of the halo (cheap), then one bf16 interior store.
    zrow = jnp.zeros((1, W2 + 2, C), apad_ref.dtype)
    zcol = jnp.zeros((H2 + 2, 1, C), apad_ref.dtype)
    apad_ref[0:1, :, :] = zrow
    apad_ref[H2 + 1:H2 + 2, :, :] = zrow
    apad_ref[:, 0:1, :] = zcol
    apad_ref[:, W2 + 1:W2 + 2, :] = zcol
    apad_ref[1:H2 + 1, 1:W2 + 1, :] = a.astype(apad_ref.dtype)   # single cast

    # Pure `acc += dot` chain (no interleaved VPU ops) -> MRB-friendly on v7x.
    # TODO(synk): at larger W2/C, replace the 9 strided window slices with
    #   contiguous row-slab matmuls + pltpu.roll of the accumulator.
    acc = jnp.zeros((H2 * W2, cout), jnp.float32)
    for dr in range(3):
        for dc in range(3):
            win = apad_ref[dr:dr + H2, dc:dc + W2, :].reshape(H2 * W2, C)
            acc = acc + jnp.dot(win, w_ref[dr, dc],
                                preferred_element_type=jnp.float32)
    return acc


def _conv1_kernel(xc_ref, scale_ref, shift_ref, w_ref,
                  h1_ref, s2_ref, q2_ref, apad_ref):
    """h1 = conv1(leaky_relu(bn1(xcat))); per-batch BN2 partial stats in epilogue."""
    _, H2, W2, _ = xc_ref.shape
    acc = _bn_lrelu_conv3x3(xc_ref, scale_ref, shift_ref, w_ref, apad_ref)
    cout = acc.shape[-1]
    h1_ref[0] = acc.reshape(H2, W2, cout).astype(h1_ref.dtype)
    # BN2 batch stats from the f32 accumulator (free epilogue; no extra HBM pass).
    s2_ref[0] = jnp.sum(acc, axis=0, keepdims=True)
    q2_ref[0] = jnp.sum(acc * acc, axis=0, keepdims=True)


def pallas_bn_lrelu_conv1(xcat_b, scale1, shift1, w1):
    B, H2, W2, C2 = xcat_b.shape
    Cout = w1.shape[-1]
    return pl.pallas_call(
        _conv1_kernel,
        out_shape=(jax.ShapeDtypeStruct((B, H2, W2, Cout), jnp.bfloat16),
                   jax.ShapeDtypeStruct((B, 1, Cout), jnp.float32),
                   jax.ShapeDtypeStruct((B, 1, Cout), jnp.float32)),
        grid=(B,),
        in_specs=[
            pl.BlockSpec((1, H2, W2, C2), lambda b: (b, 0, 0, 0)),
            pl.BlockSpec((1, C2), lambda b: (0, 0)),
            pl.BlockSpec((1, C2), lambda b: (0, 0)),
            pl.BlockSpec((3, 3, C2, Cout), lambda b: (0, 0, 0, 0)),
        ],
        out_specs=(
            pl.BlockSpec((1, H2, W2, Cout), lambda b: (b, 0, 0, 0)),
            pl.BlockSpec((1, 1, Cout), lambda b: (b, 0, 0)),
            pl.BlockSpec((1, 1, Cout), lambda b: (b, 0, 0)),
        ),
        scratch_shapes=[pltpu.VMEM((H2 + 2, W2 + 2, C2), jnp.bfloat16)],
        compiler_params=pltpu.CompilerParams(
            dimension_semantics=("parallel",),
            vmem_limit_bytes=VMEM_LIMIT_BYTES),
    )(xcat_b, scale1, shift1, w1)


def _conv2_kernel(h1_ref, xc_ref, scale_ref, shift_ref, w_ref, wsc_ref, bsc_ref,
                  o_ref, apad_ref):
    """out = conv2(leaky_relu(bn2(h1))) + xcat @ Wsc + bsc  (fused 1x1 shortcut)."""
    _, H2, W2, C2 = xc_ref.shape
    acc = _bn_lrelu_conv3x3(h1_ref, scale_ref, shift_ref, w_ref, apad_ref)
    cout = acc.shape[-1]
    xc = xc_ref[0].reshape(H2 * W2, C2)
    acc = acc + jnp.dot(xc, wsc_ref[...], preferred_element_type=jnp.float32)
    acc = acc + bsc_ref[...]
    o_ref[0] = acc.reshape(H2, W2, cout).astype(o_ref.dtype)


def _conv2_kernel_identity(h1_ref, xc_ref, scale_ref, shift_ref, w_ref,
                           o_ref, apad_ref):
    """2*Cin == Cout: plain residual add -- no eye-matmul, no shortcut weight DMA."""
    _, H2, W2, C2 = xc_ref.shape
    acc = _bn_lrelu_conv3x3(h1_ref, scale_ref, shift_ref, w_ref, apad_ref)
    acc = acc + xc_ref[0].reshape(H2 * W2, C2).astype(jnp.float32)
    o_ref[0] = acc.reshape(H2, W2, C2).astype(o_ref.dtype)


def pallas_bn_lrelu_conv2_residual(h1_b, xcat_b, scale2, shift2, w2,
                                   wsc=None, bsc=None):
    B, H2, W2, Cout = h1_b.shape
    C2 = xcat_b.shape[-1]
    in_specs = [
        pl.BlockSpec((1, H2, W2, Cout), lambda b: (b, 0, 0, 0)),
        pl.BlockSpec((1, H2, W2, C2), lambda b: (b, 0, 0, 0)),
        pl.BlockSpec((1, Cout), lambda b: (0, 0)),
        pl.BlockSpec((1, Cout), lambda b: (0, 0)),
        pl.BlockSpec((3, 3, Cout, Cout), lambda b: (0, 0, 0, 0)),
    ]
    if wsc is not None:
        kernel = _conv2_kernel
        in_specs += [pl.BlockSpec((C2, Cout), lambda b: (0, 0)),
                     pl.BlockSpec((1, Cout), lambda b: (0, 0))]
        args = (h1_b, xcat_b, scale2, shift2, w2, wsc, bsc)
    else:
        kernel = _conv2_kernel_identity
        args = (h1_b, xcat_b, scale2, shift2, w2)
    return pl.pallas_call(
        kernel,
        out_shape=jax.ShapeDtypeStruct((B, H2, W2, Cout), jnp.float32),
        grid=(B,),
        in_specs=in_specs,
        out_specs=pl.BlockSpec((1, H2, W2, Cout), lambda b: (b, 0, 0, 0)),
        scratch_shapes=[pltpu.VMEM((H2 + 2, W2 + 2, Cout), jnp.bfloat16)],
        compiler_params=pltpu.CompilerParams(
            dimension_semantics=("parallel",),
            vmem_limit_bytes=VMEM_LIMIT_BYTES),
    )(*args)


# ----------------------------------------------------------------------------
# Glue (plain JAX): upsample+concat+stats producer, weight reorder, BN finalize
# ----------------------------------------------------------------------------
def _bn_scale_shift(ssum, ssq, n, gamma, beta):
    """BatchNorm2d training-mode batch stats (biased var, eps=1e-5) -> scale/shift."""
    # TODO(synk): switch to a Welford/two-pass reduction if B*H*W grows enough
    #   for the E[x^2]-E[x]^2 cancellation to matter.
    mean = ssum / n
    var = jnp.maximum(ssq / n - mean * mean, 0.0)
    scale = gamma * jax.lax.rsqrt(var + 1e-5)
    shift = beta - mean * scale
    c = scale.shape[-1]
    return (scale.reshape(1, c).astype(jnp.float32),
            shift.reshape(1, c).astype(jnp.float32))


def decoder_block_forward(x, latent, p):
    """x: (B, H, W, Cin); latent: (B, 2H, 2W, Cin); returns (B, 2H, 2W, Cout) f32."""
    B, H, W, Cin = x.shape
    Cout = p["conv1_w"].shape[0]
    C2 = 2 * Cin
    H2, W2 = 2 * H, 2 * W
    n = B * H2 * W2

    # --- ConvTranspose2d(k=2, s=2) upsample + concat + bf16 cast + BN1 stats --
    # K = Cin is far too small to feed the MXU, so this stays as one fused XLA
    # producer pass.  BN1 sum/sumsq are folded into the same producer (f32,
    # pre-rounding) instead of a separate Pallas stats kernel re-reading xcat
    # from HBM.  xcat is stored ONCE, bf16, at its true channel width.
    up = jnp.einsum("bhwi,ioac->bhawco", x, p["ct_w"]).reshape(B, H2, W2, Cin)
    xcat_b = jnp.concatenate([up, latent], axis=-1).astype(jnp.bfloat16)
    s1 = jnp.concatenate([jnp.sum(up, axis=(0, 1, 2)),
                          jnp.sum(latent, axis=(0, 1, 2))])
    q1 = jnp.concatenate([jnp.sum(jnp.square(up), axis=(0, 1, 2)),
                          jnp.sum(jnp.square(latent), axis=(0, 1, 2))])
    scale1, shift1 = _bn_scale_shift(s1, q1, n, p["bn1_g"], p["bn1_b"])

    # --- conv1 = 3x3(leaky_relu(bn1(xcat))); BN2 partial stats in epilogue ----
    w1 = jnp.transpose(p["conv1_w"], (2, 3, 1, 0)).astype(jnp.bfloat16)  # (3,3,C2,Cout)
    h1_b, s2, q2 = pallas_bn_lrelu_conv1(xcat_b, scale1, shift1, w1)
    scale2, shift2 = _bn_scale_shift(jnp.sum(s2.reshape(B, Cout), axis=0),
                                     jnp.sum(q2.reshape(B, Cout), axis=0),
                                     n, p["bn2_g"], p["bn2_b"])

    # --- conv2 + residual (1x1 shortcut conv + bias, or identity add), fused --
    w2 = jnp.transpose(p["conv2_w"], (2, 3, 1, 0)).astype(jnp.bfloat16)  # (3,3,Cout,Cout)
    if "sc_w" in p:                       # is_shortcut == True (2*Cin != Cout)
        wsc = jnp.transpose(p["sc_w"].reshape(Cout, C2), (1, 0)).astype(jnp.bfloat16)
        bsc = p["sc_b"].reshape(1, Cout).astype(jnp.float32)
    else:                                 # identity residual (2*Cin == Cout)
        wsc = bsc = None
    return pallas_bn_lrelu_conv2_residual(h1_b, xcat_b, scale2, shift2, w2, wsc, bsc)


# ----------------------------------------------------------------------------
# Pure-JAX reference (sanity check of the Pallas path)
# ----------------------------------------------------------------------------
def reference_forward(x, latent, p):
    B, H, W, Cin = x.shape
    Cout = p["conv1_w"].shape[0]
    C2 = 2 * Cin

    up = jnp.einsum("bhwi,iokl->bhkwlo", x, p["ct_w"]).reshape(B, 2 * H, 2 * W, Cin)
    xcat = jnp.concatenate([up, latent], axis=-1)

    def bn_lrelu(v, g, b):
        m = v.mean(axis=(0, 1, 2), keepdims=True)
        var = jnp.square(v - m).mean(axis=(0, 1, 2), keepdims=True)
        y = (v - m) * jax.lax.rsqrt(var + 1e-5) * g + b
        return jnp.where(y >= 0, y, 0.01 * y)

    def conv3x3(v, w):
        return jax.lax.conv_general_dilated(
            v, jnp.transpose(w, (2, 3, 1, 0)), window_strides=(1, 1),
            padding=((1, 1), (1, 1)), dimension_numbers=("NHWC", "HWIO", "NHWC"))

    h = conv3x3(bn_lrelu(xcat, p["bn1_g"], p["bn1_b"]), p["conv1_w"])
    h = conv3x3(bn_lrelu(h, p["bn2_g"], p["bn2_b"]), p["conv2_w"])
    sc = jnp.einsum("bhwi,oi->bhwo", xcat, p["sc_w"].reshape(Cout, C2)) + p["sc_b"]
    return sc + h


# ----------------------------------------------------------------------------
def init_params(key, cin, cout):
    ks = jax.random.split(key, 9)
    c2 = 2 * cin
    return {
        "ct_w": jax.random.normal(ks[0], (cin, cin, 2, 2), jnp.float32)
        / math.sqrt(cin * 4),
        "bn1_g": 1.0 + 0.1 * jax.random.normal(ks[1], (c2,), jnp.float32),
        "bn1_b": 0.1 * jax.random.normal(ks[2], (c2,), jnp.float32),
        "conv1_w": jax.random.normal(ks[3], (cout, c2, 3, 3), jnp.float32)
        / math.sqrt(c2 * 9),
        "bn2_g": 1.0 + 0.1 * jax.random.normal(ks[4], (cout,), jnp.float32),
        "bn2_b": 0.1 * jax.random.normal(ks[5], (cout,), jnp.float32),
        "conv2_w": jax.random.normal(ks[6], (cout, cout, 3, 3), jnp.float32)
        / math.sqrt(cout * 9),
        "sc_w": jax.random.normal(ks[7], (cout, c2, 1, 1), jnp.float32)
        / math.sqrt(c2),
        "sc_b": 0.1 * jax.random.normal(ks[8], (cout,), jnp.float32),
    }


if __name__ == "__main__":
    key = jax.random.PRNGKey(0)
    B, Cin, Cout, H, W = 2, 4, 16, 8, 8  # DecoderBlock(in_channels=4, out_channels=16)

    kx, kl, kp = jax.random.split(key, 3)
    x = jax.random.normal(kx, (B, H, W, Cin), jnp.float32)              # NHWC
    latent = jax.random.normal(kl, (B, 2 * H, 2 * W, Cin), jnp.float32)
    params = init_params(kp, Cin, Cout)

    fwd = jax.jit(decoder_block_forward)
    out = jax.block_until_ready(fwd(x, latent, params))
    assert out.shape == (B, 2 * H, 2 * W, Cout)

    ref = jax.block_until_ready(jax.jit(reference_forward)(x, latent, params))
    err = float(jnp.max(jnp.abs(out - ref)))
    scale = 1.0 + float(jnp.max(jnp.abs(ref)))
    # Loose tolerance: Pallas path uses bf16 MXU operands with f32 accumulation.
    assert err <= 0.05 * scale, f"mismatch: max abs err {err}"

    print("KERNEL_OK")
</pallas_src>

<mosaic_0001>
module attributes {stable_mosaic.version = 11 : i64} {
  func.func @_conv1_kernel(%arg0: i32, %arg1: memref<1x16x16x8xbf16, #tpu.memory_space<vmem>>, %arg2: memref<1x8xf32, #tpu.memory_space<vmem>>, %arg3: memref<1x8xf32, #tpu.memory_space<vmem>>, %arg4: memref<3x3x8x16xbf16, #tpu.memory_space<vmem>>, %arg5: memref<1x16x16x16xbf16, #tpu.memory_space<vmem>>, %arg6: memref<1x1x16xf32, #tpu.memory_space<vmem>>, %arg7: memref<1x1x16xf32, #tpu.memory_space<vmem>>, %arg8: memref<18x18x8xbf16, #tpu.memory_space<vmem>>) attributes {dimension_semantics = [#tpu.dimension_semantics<parallel>], iteration_bounds = array<i64: 2>, scalar_prefetch = 0 : i64, scratch_operands = 1 : i64, tpu.core_type = #tpu.core_type<tc>, window_params = [{transform_indices = @transform_0, window_bounds = array<i64: 1, 16, 16, 8>}, {pipeline_mode = #tpu.pipeline_mode<synchronous>, transform_indices = @transform_1, window_bounds = array<i64: 1, 8>}, {pipeline_mode = #tpu.pipeline_mode<synchronous>, transform_indices = @transform_2, window_bounds = array<i64: 1, 8>}, {pipeline_mode = #tpu.pipeline_mode<synchronous>, transform_indices = @transform_3, window_bounds = array<i64: 3, 3, 8, 16>}, {transform_indices = @transform_4, window_bounds = array<i64: 1, 16, 16, 16>}, {transform_indices = @transform_5, window_bounds = array<i64: 1, 1, 16>}, {transform_indices = @transform_6, window_bounds = array<i64: 1, 1, 16>}]} {
    %c0 = arith.constant 0 : index
    %c0_0 = arith.constant 0 : index
    %0 = vector.load %arg2[%c0, %c0_0] : memref<1x8xf32, #tpu.memory_space<vmem>>, vector<1x8xf32>
    %1 = vector.shape_cast %0 : vector<1x8xf32> to vector<1x1x8xf32>
    %c0_1 = arith.constant 0 : index
    %c0_2 = arith.constant 0 : index
    %2 = vector.load %arg3[%c0_1, %c0_2] : memref<1x8xf32, #tpu.memory_space<vmem>>, vector<1x8xf32>
    %3 = vector.shape_cast %2 : vector<1x8xf32> to vector<1x1x8xf32>
    %c0_3 = arith.constant 0 : index
    %c0_4 = arith.constant 0 : index
    %c0_5 = arith.constant 0 : index
    %c0_6 = arith.constant 0 : index
    %4 = vector.load %arg1[%c0_3, %c0_4, %c0_5, %c0_6] : memref<1x16x16x8xbf16, #tpu.memory_space<vmem>>, vector<1x16x16x8xbf16>
    %5 = vector.shape_cast %4 : vector<1x16x16x8xbf16> to vector<16x16x8xbf16>
    %6 = arith.extf %5 : vector<16x16x8xbf16> to vector<16x16x8xf32>
    %7 = vector.broadcast %1 : vector<1x1x8xf32> to vector<16x16x8xf32>
    %8 = arith.mulf %6, %7 : vector<16x16x8xf32>
    %9 = vector.broadcast %3 : vector<1x1x8xf32> to vector<16x16x8xf32>
    %10 = arith.addf %8, %9 : vector<16x16x8xf32>
    %cst = arith.constant 0.000000e+00 : f32
    %11 = vector.broadcast %cst : f32 to vector<16x16x8xf32>
    %12 = arith.cmpf oge, %10, %11 : vector<16x16x8xf32>
    %cst_7 = arith.constant 0.00999999977 : f32
    %13 = vector.broadcast %cst_7 : f32 to vector<16x16x8xf32>
    %14 = arith.mulf %13, %10 : vector<16x16x8xf32>
    %15 = arith.select %12, %10, %14 : vector<16x16x8xi1>, vector<16x16x8xf32>
    %cst_8 = arith.constant 0.000000e+00 : bf16
    %16 = vector.broadcast %cst_8 : bf16 to vector<1x18x8xbf16>
    %cst_9 = arith.constant 0.000000e+00 : bf16
    %17 = vector.broadcast %cst_9 : bf16 to vector<18x1x8xbf16>
    %c0_10 = arith.constant 0 : index
    %c0_11 = arith.constant 0 : index
    %c0_12 = arith.constant 0 : index
    %18 = vector.load %arg8[%c0_10, %c0_11, %c0_12] : memref<18x18x8xbf16, #tpu.memory_space<vmem>>, vector<1x18x8xbf16>
    tpu.vector_store %arg8[%c0_10, %c0_11, %c0_12], %16 {strides = array<i32>} : memref<18x18x8xbf16, #tpu.memory_space<vmem>>, vector<1x18x8xbf16>,
    %c17 = arith.constant 17 : index
    %c0_13 = arith.constant 0 : index
    %c0_14 = arith.constant 0 : index
    %19 = vector.load %arg8[%c17, %c0_13, %c0_14] : memref<18x18x8xbf16, #tpu.memory_space<vmem>>, vector<1x18x8xbf16>
    tpu.vector_store %arg8[%c17, %c0_13, %c0_14], %16 {strides = array<i32>} : memref<18x18x8xbf16, #tpu.memory_space<vmem>>, vector<1x18x8xbf16>,
    %c0_15 = arith.constant 0 : index
    %c0_16 = arith.constant 0 : index
    %c0_17 = arith.constant 0 : index
    %20 = vector.load %arg8[%c0_15, %c0_16, %c0_17] : memref<18x18x8xbf16, #tpu.memory_space<vmem>>, vector<18x1x8xbf16>
    tpu.vector_store %arg8[%c0_15, %c0_16, %c0_17], %17 {strides = array<i32>} : memref<18x18x8xbf16, #tpu.memory_space<vmem>>, vector<18x1x8xbf16>,
    %c0_18 = arith.constant 0 : index
    %c17_19 = arith.constant 17 : index
    %c0_20 = arith.constant 0 : index
    %21 = vector.load %arg8[%c0_18, %c17_19, %c0_20] : memref<18x18x8xbf16, #tpu.memory_space<vmem>>, vector<18x1x8xbf16>
    tpu.vector_store %arg8[%c0_18, %c17_19, %c0_20], %17 {strides = array<i32>} : memref<18x18x8xbf16, #tpu.memory_space<vmem>>, vector<18x1x8xbf16>,
    %22 = arith.truncf %15 : vector<16x16x8xf32> to vector<16x16x8xbf16>
    %c1 = arith.constant 1 : index
    %c1_21 = arith.constant 1 : index
    %c0_22 = arith.constant 0 : index
    %23 = vector.load %arg8[%c1, %c1_21, %c0_22] : memref<18x18x8xbf16, #tpu.memory_space<vmem>>, vector<16x16x8xbf16>
    tpu.vector_store %arg8[%c1, %c1_21, %c0_22], %22 {strides = array<i32>} : memref<18x18x8xbf16, #tpu.memory_space<vmem>>, vector<16x16x8xbf16>,
    %cst_23 = arith.constant 0.000000e+00 : f32
    %24 = vector.broadcast %cst_23 : f32 to vector<256x16xf32>
    %c0_24 = arith.constant 0 : index
    %c0_25 = arith.constant 0 : index
    %c0_26 = arith.constant 0 : index
    %25 = vector.load %arg8[%c0_24, %c0_25, %c0_26] : memref<18x18x8xbf16, #tpu.memory_space<vmem>>, vector<16x16x8xbf16>
    %26 = vector.shape_cast %25 : vector<16x16x8xbf16> to vector<256x8xbf16>
    %c0_27 = arith.constant 0 : index
    %c0_28 = arith.constant 0 : index
    %c0_29 = arith.constant 0 : index
    %c0_30 = arith.constant 0 : index
    %27 = vector.load %arg4[%c0_27, %c0_28, %c0_29, %c0_30] : memref<3x3x8x16xbf16, #tpu.memory_space<vmem>>, vector<1x1x8x16xbf16>
    %28 = vector.shape_cast %27 : vector<1x1x8x16xbf16> to vector<8x16xbf16>
    %cst_31 = arith.constant dense<0.000000e+00> : vector<256x16xf32>
    %29 = tpu.matmul %26, %28, %cst_31 {dimension_numbers = #tpu.dot_dimension_numbers<[1], [0], [0], [1], [0, 0, 1, 1], [], []>} : vector<256x8xbf16>, vector<8x16xbf16>, vector<256x16xf32> -> vector<256x16xf32>
    %30 = arith.addf %24, %29 : vector<256x16xf32>
    %c0_32 = arith.constant 0 : index
    %c1_33 = arith.constant 1 : index
    %c0_34 = arith.constant 0 : index
    %31 = vector.load %arg8[%c0_32, %c1_33, %c0_34] : memref<18x18x8xbf16, #tpu.memory_space<vmem>>, vector<16x16x8xbf16>
    %32 = vector.shape_cast %31 : vector<16x16x8xbf16> to vector<256x8xbf16>
    %c0_35 = arith.constant 0 : index
    %c1_36 = arith.constant 1 : index
    %c0_37 = arith.constant 0 : index
    %c0_38 = arith.constant 0 : index
    %33 = vector.load %arg4[%c0_35, %c1_36, %c0_37, %c0_38] : memref<3x3x8x16xbf16, #tpu.memory_space<vmem>>, vector<1x1x8x16xbf16>
    %34 = vector.shape_cast %33 : vector<1x1x8x16xbf16> to vector<8x16xbf16>
    %cst_39 = arith.constant dense<0.000000e+00> : vector<256x16xf32>
    %35 = tpu.matmul %32, %34, %cst_39 {dimension_numbers = #tpu.dot_dimension_numbers<[1], [0], [0], [1], [0, 0, 1, 1], [], []>} : vector<256x8xbf16>, vector<8x16xbf16>, vector<256x16xf32> -> vector<256x16xf32>
    %36 = arith.addf %30, %35 : vector<256x16xf32>
    %c0_40 = arith.constant 0 : index
    %c2 = arith.constant 2 : index
    %c0_41 = arith.constant 0 : index
    %37 = vector.load %arg8[%c0_40, %c2, %c0_41] : memref<18x18x8xbf16, #tpu.memory_space<vmem>>, vector<16x16x8xbf16>
    %38 = vector.shape_cast %37 : vector<16x16x8xbf16> to vector<256x8xbf16>
    %c0_42 = arith.constant 0 : index
    %c2_43 = arith.constant 2 : index
    %c0_44 = arith.constant 0 : index
    %c0_45 = arith.constant 0 : index
    %39 = vector.load %arg4[%c0_42, %c2_43, %c0_44, %c0_45] : memref<3x3x8x16xbf16, #tpu.memory_space<vmem>>, vector<1x1x8x16xbf16>
    %40 = vector.shape_cast %39 : vector<1x1x8x16xbf16> to vector<8x16xbf16>
    %cst_46 = arith.constant dense<0.000000e+00> : vector<256x16xf32>
    %41 = tpu.matmul %38, %40, %cst_46 {dimension_numbers = #tpu.dot_dimension_numbers<[1], [0], [0], [1], [0, 0, 1, 1], [], []>} : vector<256x8xbf16>, vector<8x16xbf16>, vector<256x16xf32> -> vector<256x16xf32>
    %42 = arith.addf %36, %41 : vector<256x16xf32>
    %c1_47 = arith.constant 1 : index
    %c0_48 = arith.constant 0 : index
    %c0_49 = arith.constant 0 : index
    %43 = vector.load %arg8[%c1_47, %c0_48, %c0_49] : memref<18x18x8xbf16, #tpu.memory_space<vmem>>, vector<16x16x8xbf16>
    %44 = vector.shape_cast %43 : vector<16x16x8xbf16> to vector<256x8xbf16>
    %c1_50 = arith.constant 1 : index
    %c0_51 = arith.constant 0 : index
    %c0_52 = arith.constant 0 : index
    %c0_53 = arith.constant 0 : index
    %45 = vector.load %arg4[%c1_50, %c0_51, %c0_52, %c0_53] : memref<3x3x8x16xbf16, #tpu.memory_space<vmem>>, vector<1x1x8x16xbf16>
    %46 = vector.shape_cast %45 : vector<1x1x8x16xbf16> to vector<8x16xbf16>
    %cst_54 = arith.constant dense<0.000000e+00> : vector<256x16xf32>
    %47 = tpu.matmul %44, %46, %cst_54 {dimension_numbers = #tpu.dot_dimension_numbers<[1], [0], [0], [1], [0, 0, 1, 1], [], []>} : vector<256x8xbf16>, vector<8x16xbf16>, vector<256x16xf32> -> vector<256x16xf32>
    %48 = arith.addf %42, %47 : vector<256x16xf32>
    %c1_55 = arith.constant 1 : index
    %c1_56 = arith.constant 1 : index
    %c0_57 = arith.constant 0 : index
    %49 = vector.load %arg8[%c1_55, %c1_56, %c0_57] : memref<18x18x8xbf16, #tpu.memory_space<vmem>>, vector<16x16x8xbf16>
    %50 = vector.shape_cast %49 : vector<16x16x8xbf16> to vector<256x8xbf16>
    %c1_58 = arith.constant 1 : index
    %c1_59 = arith.constant 1 : index
    %c0_60 = arith.constant 0 : index
    %c0_61 = arith.constant 0 : index
    %51 = vector.load %arg4[%c1_58, %c1_59, %c0_60, %c0_61] : memref<3x3x8x16xbf16, #tpu.memory_space<vmem>>, vector<1x1x8x16xbf16>
    %52 = vector.shape_cast %51 : vector<1x1x8x16xbf16> to vector<8x16xbf16>
    %cst_62 = arith.constant dense<0.000000e+00> : vector<256x16xf32>
    %53 = tpu.matmul %50, %52, %cst_62 {dimension_numbers = #tpu.dot_dimension_numbers<[1], [0], [0], [1], [0, 0, 1, 1], [], []>} : vector<256x8xbf16>, vector<8x16xbf16>, vector<256x16xf32> -> vector<256x16xf32>
    %54 = arith.addf %48, %53 : vector<256x16xf32>
    %c1_63 = arith.constant 1 : index
    %c2_64 = arith.constant 2 : index
    %c0_65 = arith.constant 0 : index
    %55 = vector.load %arg8[%c1_63, %c2_64, %c0_65] : memref<18x18x8xbf16, #tpu.memory_space<vmem>>, vector<16x16x8xbf16>
    %56 = vector.shape_cast %55 : vector<16x16x8xbf16> to vector<256x8xbf16>
    %c1_66 = arith.constant 1 : index
    %c2_67 = arith.constant 2 : index
    %c0_68 = arith.constant 0 : index
    %c0_69 = arith.constant 0 : index
    %57 = vector.load %arg4[%c1_66, %c2_67, %c0_68, %c0_69] : memref<3x3x8x16xbf16, #tpu.memory_space<vmem>>, vector<1x1x8x16xbf16>
    %58 = vector.shape_cast %57 : vector<1x1x8x16xbf16> to vector<8x16xbf16>
    %cst_70 = arith.constant dense<0.000000e+00> : vector<256x16xf32>
    %59 = tpu.matmul %56, %58, %cst_70 {dimension_numbers = #tpu.dot_dimension_numbers<[1], [0], [0], [1], [0, 0, 1, 1], [], []>} : vector<256x8xbf16>, vector<8x16xbf16>, vector<256x16xf32> -> vector<256x16xf32>
    %60 = arith.addf %54, %59 : vector<256x16xf32>
    %c2_71 = arith.constant 2 : index
    %c0_72 = arith.constant 0 : index
    %c0_73 = arith.constant 0 : index
    %61 = vector.load %arg8[%c2_71, %c0_72, %c0_73] : memref<18x18x8xbf16, #tpu.memory_space<vmem>>, vector<16x16x8xbf16>
    %62 = vector.shape_cast %61 : vector<16x16x8xbf16> to vector<256x8xbf16>
    %c2_74 = arith.constant 2 : index
    %c0_75 = arith.constant 0 : index
    %c0_76 = arith.constant 0 : index
    %c0_77 = arith.constant 0 : index
    %63 = vector.load %arg4[%c2_74, %c0_75, %c0_76, %c0_77] : memref<3x3x8x16xbf16, #tpu.memory_space<vmem>>, vector<1x1x8x16xbf16>
    %64 = vector.shape_cast %63 : vector<1x1x8x16xbf16> to vector<8x16xbf16>
    %cst_78 = arith.constant dense<0.000000e+00> : vector<256x16xf32>
    %65 = tpu.matmul %62, %64, %cst_78 {dimension_numbers = #tpu.dot_dimension_numbers<[1], [0], [0], [1], [0, 0, 1, 1], [], []>} : vector<256x8xbf16>, vector<8x16xbf16>, vector<256x16xf32> -> vector<256x16xf32>
    %66 = arith.addf %60, %65 : vector<256x16xf32>
    %c2_79 = arith.constant 2 : index
    %c1_80 = arith.constant 1 : index
    %c0_81 = arith.constant 0 : index
    %67 = vector.load %arg8[%c2_79, %c1_80, %c0_81] : memref<18x18x8xbf16, #tpu.memory_space<vmem>>, vector<16x16x8xbf16>
    %68 = vector.shape_cast %67 : vector<16x16x8xbf16> to vector<256x8xbf16>
    %c2_82 = arith.constant 2 : index
    %c1_83 = arith.constant 1 : index
    %c0_84 = arith.constant 0 : index
    %c0_85 = arith.constant 0 : index
    %69 = vector.load %arg4[%c2_82, %c1_83, %c0_84, %c0_85] : memref<3x3x8x16xbf16, #tpu.memory_space<vmem>>, vector<1x1x8x16xbf16>
    %70 = vector.shape_cast %69 : vector<1x1x8x16xbf16> to vector<8x16xbf16>
    %cst_86 = arith.constant dense<0.000000e+00> : vector<256x16xf32>
    %71 = tpu.matmul %68, %70, %cst_86 {dimension_numbers = #tpu.dot_dimension_numbers<[1], [0], [0], [1], [0, 0, 1, 1], [], []>} : vector<256x8xbf16>, vector<8x16xbf16>, vector<256x16xf32> -> vector<256x16xf32>
    %72 = arith.addf %66, %71 : vector<256x16xf32>
    %c2_87 = arith.constant 2 : index
    %c2_88 = arith.constant 2 : index
    %c0_89 = arith.constant 0 : index
    %73 = vector.load %arg8[%c2_87, %c2_88, %c0_89] : memref<18x18x8xbf16, #tpu.memory_space<vmem>>, vector<16x16x8xbf16>
    %74 = vector.shape_cast %73 : vector<16x16x8xbf16> to vector<256x8xbf16>
    %c2_90 = arith.constant 2 : index
    %c2_91 = arith.constant 2 : index
    %c0_92 = arith.constant 0 : index
    %c0_93 = arith.constant 0 : index
    %75 = vector.load %arg4[%c2_90, %c2_91, %c0_92, %c0_93] : memref<3x3x8x16xbf16, #tpu.memory_space<vmem>>, vector<1x1x8x16xbf16>
    %76 = vector.shape_cast %75 : vector<1x1x8x16xbf16> to vector<8x16xbf16>
    %cst_94 = arith.constant dense<0.000000e+00> : vector<256x16xf32>
    %77 = tpu.matmul %74, %76, %cst_94 {dimension_numbers = #tpu.dot_dimension_numbers<[1], [0], [0], [1], [0, 0, 1, 1], [], []>} : vector<256x8xbf16>, vector<8x16xbf16>, vector<256x16xf32> -> vector<256x16xf32>
    %78 = arith.addf %72, %77 : vector<256x16xf32>
    %79 = vector.shape_cast %78 : vector<256x16xf32> to vector<16x16x16xf32>
    %80 = arith.truncf %79 : vector<16x16x16xf32> to vector<16x16x16xbf16>
    %c0_95 = arith.constant 0 : index
    %c0_96 = arith.constant 0 : index
    %c0_97 = arith.constant 0 : index
    %c0_98 = arith.constant 0 : index
    %81 = vector.load %arg5[%c0_95, %c0_96, %c0_97, %c0_98] : memref<1x16x16x16xbf16, #tpu.memory_space<vmem>>, vector<1x16x16x16xbf16>
    %82 = vector.shape_cast %81 : vector<1x16x16x16xbf16> to vector<16x16x16xbf16>
    %83 = vector.shape_cast %80 : vector<16x16x16xbf16> to vector<1x16x16x16xbf16>
    tpu.vector_store %arg5[%c0_95, %c0_96, %c0_97, %c0_98], %83 {strides = array<i32>} : memref<1x16x16x16xbf16, #tpu.memory_space<vmem>>, vector<1x16x16x16xbf16>,
    %cst_99 = arith.constant dense<0.000000e+00> : vector<16xf32>
    %84 = vector.multi_reduction <add>, %78, %cst_99 [0] : vector<256x16xf32> to vector<16xf32>
    %85 = vector.shape_cast %84 : vector<16xf32> to vector<1x16xf32>
    %c0_100 = arith.constant 0 : index
    %c0_101 = arith.constant 0 : index
    %c0_102 = arith.constant 0 : index
    %86 = vector.load %arg6[%c0_100, %c0_101, %c0_102] : memref<1x1x16xf32, #tpu.memory_space<vmem>>, vector<1x1x16xf32>
    %87 = vector.shape_cast %86 : vector<1x1x16xf32> to vector<1x16xf32>
    %88 = vector.shape_cast %85 : vector<1x16xf32> to vector<1x1x16xf32>
    tpu.vector_store %arg6[%c0_100, %c0_101, %c0_102], %88 {strides = array<i32>} : memref<1x1x16xf32, #tpu.memory_space<vmem>>, vector<1x1x16xf32>,
    %89 = arith.mulf %78, %78 : vector<256x16xf32>
    %cst_103 = arith.constant dense<0.000000e+00> : vector<16xf32>
    %90 = vector.multi_reduction <add>, %89, %cst_103 [0] : vector<256x16xf32> to vector<16xf32>
    %91 = vector.shape_cast %90 : vector<16xf32> to vector<1x16xf32>
    %c0_104 = arith.constant 0 : index
    %c0_105 = arith.constant 0 : index
    %c0_106 = arith.constant 0 : index
    %92 = vector.load %arg7[%c0_104, %c0_105, %c0_106] : memref<1x1x16xf32, #tpu.memory_space<vmem>>, vector<1x1x16xf32>
    %93 = vector.shape_cast %92 : vector<1x1x16xf32> to vector<1x16xf32>
    %94 = vector.shape_cast %91 : vector<1x16xf32> to vector<1x1x16xf32>
    tpu.vector_store %arg7[%c0_104, %c0_105, %c0_106], %94 {strides = array<i32>} : memref<1x1x16xf32, #tpu.memory_space<vmem>>, vector<1x1x16xf32>,
    return
  }
  func.func @transform_0(%arg0: i32) -> (i32, i32, i32, i32) {
    %c0_i32 = arith.constant 0 : i32
    %c0_i32_0 = arith.constant 0 : i32
    %c0_i32_1 = arith.constant 0 : i32
    %c0_i32_2 = arith.constant 0 : i32
    return %arg0, %c0_i32, %c0_i32_0, %c0_i32_1 : i32, i32, i32, i32
  }
  func.func @transform_1(%arg0: i32) -> (i32, i32) {
    %c0_i32 = arith.constant 0 : i32
    %c0_i32_0 = arith.constant 0 : i32
    %c0_i32_1 = arith.constant 0 : i32
    return %c0_i32, %c0_i32_0 : i32, i32
  }
  func.func @transform_2(%arg0: i32) -> (i32, i32) {
    %c0_i32 = arith.constant 0 : i32
    %c0_i32_0 = arith.constant 0 : i32
    %c0_i32_1 = arith.constant 0 : i32
    return %c0_i32, %c0_i32_0 : i32, i32
  }
  func.func @transform_3(%arg0: i32) -> (i32, i32, i32, i32) {
    %c0_i32 = arith.constant 0 : i32
    %c0_i32_0 = arith.constant 0 : i32
    %c0_i32_1 = arith.constant 0 : i32
    %c0_i32_2 = arith.constant 0 : i32
    %c0_i32_3 = arith.constant 0 : i32
    return %c0_i32, %c0_i32_0, %c0_i32_1, %c0_i32_2 : i32, i32, i32, i32
  }
  func.func @transform_4(%arg0: i32) -> (i32, i32, i32, i32) {
    %c0_i32 = arith.constant 0 : i32
    %c0_i32_0 = arith.constant 0 : i32
    %c0_i32_1 = arith.constant 0 : i32
    %c0_i32_2 = arith.constant 0 : i32
    return %arg0, %c0_i32, %c0_i32_0, %c0_i32_1 : i32, i32, i32, i32
  }
  func.func @transform_5(%arg0: i32) -> (i32, i32, i32) {
    %c0_i32 = arith.constant 0 : i32
    %c0_i32_0 = arith.constant 0 : i32
    %c0_i32_1 = arith.constant 0 : i32
    return %arg0, %c0_i32, %c0_i32_0 : i32, i32, i32
  }
  func.func @transform_6(%arg0: i32) -> (i32, i32, i32) {
    %c0_i32 = arith.constant 0 : i32
    %c0_i32_0 = arith.constant 0 : i32
    %c0_i32_1 = arith.constant 0 : i32
    return %arg0, %c0_i32, %c0_i32_0 : i32, i32, i32
  }
}

module attributes {stable_mosaic.version = 11 : i64} {
  func.func @_conv2_kernel(%arg0: i32, %arg1: memref<1x16x16x16xbf16, #tpu.memory_space<vmem>>, %arg2: memref<1x16x16x8xbf16, #tpu.memory_space<vmem>>, %arg3: memref<1x16xf32, #tpu.memory_space<vmem>>, %arg4: memref<1x16xf32, #tpu.memory_space<vmem>>, %arg5: memref<3x3x16x16xbf16, #tpu.memory_space<vmem>>, %arg6: memref<8x16xbf16, #tpu.memory_space<vmem>>, %arg7: memref<1x16xf32, #tpu.memory_space<vmem>>, %arg8: memref<1x16x16x16xf32, #tpu.memory_space<vmem>>, %arg9: memref<18x18x16xbf16, #tpu.memory_space<vmem>>) attributes {dimension_semantics = [#tpu.dimension_semantics<parallel>], iteration_bounds = array<i64: 2>, scalar_prefetch = 0 : i64, scratch_operands = 1 : i64, tpu.core_type = #tpu.core_type<tc>, window_params = [{transform_indices = @transform_0, window_bounds = array<i64: 1, 16, 16, 16>}, {transform_indices = @transform_1, window_bounds = array<i64: 1, 16, 16, 8>}, {pipeline_mode = #tpu.pipeline_mode<synchronous>, transform_indices = @transform_2, window_bounds = array<i64: 1, 16>}, {pipeline_mode = #tpu.pipeline_mode<synchronous>, transform_indices = @transform_3, window_bounds = array<i64: 1, 16>}, {pipeline_mode = #tpu.pipeline_mode<synchronous>, transform_indices = @transform_4, window_bounds = array<i64: 3, 3, 16, 16>}, {pipeline_mode = #tpu.pipeline_mode<synchronous>, transform_indices = @transform_5, window_bounds = array<i64: 8, 16>}, {pipeline_mode = #tpu.pipeline_mode<synchronous>, transform_indices = @transform_6, window_bounds = array<i64: 1, 16>}, {transform_indices = @transform_7, window_bounds = array<i64: 1, 16, 16, 16>}]} {
    %c0 = arith.constant 0 : index
    %c0_0 = arith.constant 0 : index
    %0 = vector.load %arg3[%c0, %c0_0] : memref<1x16xf32, #tpu.memory_space<vmem>>, vector<1x16xf32>
    %1 = vector.shape_cast %0 : vector<1x16xf32> to vector<1x1x16xf32>
    %c0_1 = arith.constant 0 : index
    %c0_2 = arith.constant 0 : index
    %2 = vector.load %arg4[%c0_1, %c0_2] : memref<1x16xf32, #tpu.memory_space<vmem>>, vector<1x16xf32>
    %3 = vector.shape_cast %2 : vector<1x16xf32> to vector<1x1x16xf32>
    %c0_3 = arith.constant 0 : index
    %c0_4 = arith.constant 0 : index
    %c0_5 = arith.constant 0 : index
    %c0_6 = arith.constant 0 : index
    %4 = vector.load %arg1[%c0_3, %c0_4, %c0_5, %c0_6] : memref<1x16x16x16xbf16, #tpu.memory_space<vmem>>, vector<1x16x16x16xbf16>
    %5 = vector.shape_cast %4 : vector<1x16x16x16xbf16> to vector<16x16x16xbf16>
    %6 = arith.extf %5 : vector<16x16x16xbf16> to vector<16x16x16xf32>
    %7 = vector.broadcast %1 : vector<1x1x16xf32> to vector<16x16x16xf32>
    %8 = arith.mulf %6, %7 : vector<16x16x16xf32>
    %9 = vector.broadcast %3 : vector<1x1x16xf32> to vector<16x16x16xf32>
    %10 = arith.addf %8, %9 : vector<16x16x16xf32>
    %cst = arith.constant 0.000000e+00 : f32
    %11 = vector.broadcast %cst : f32 to vector<16x16x16xf32>
    %12 = arith.cmpf oge, %10, %11 : vector<16x16x16xf32>
    %cst_7 = arith.constant 0.00999999977 : f32
    %13 = vector.broadcast %cst_7 : f32 to vector<16x16x16xf32>
    %14 = arith.mulf %13, %10 : vector<16x16x16xf32>
    %15 = arith.select %12, %10, %14 : vector<16x16x16xi1>, vector<16x16x16xf32>
    %cst_8 = arith.constant 0.000000e+00 : bf16
    %16 = vector.broadcast %cst_8 : bf16 to vector<1x18x16xbf16>
    %cst_9 = arith.constant 0.000000e+00 : bf16
    %17 = vector.broadcast %cst_9 : bf16 to vector<18x1x16xbf16>
    %c0_10 = arith.constant 0 : index
    %c0_11 = arith.constant 0 : index
    %c0_12 = arith.constant 0 : index
    %18 = vector.load %arg9[%c0_10, %c0_11, %c0_12] : memref<18x18x16xbf16, #tpu.memory_space<vmem>>, vector<1x18x16xbf16>
    tpu.vector_store %arg9[%c0_10, %c0_11, %c0_12], %16 {strides = array<i32>} : memref<18x18x16xbf16, #tpu.memory_space<vmem>>, vector<1x18x16xbf16>,
    %c17 = arith.constant 17 : index
    %c0_13 = arith.constant 0 : index
    %c0_14 = arith.constant 0 : index
    %19 = vector.load %arg9[%c17, %c0_13, %c0_14] : memref<18x18x16xbf16, #tpu.memory_space<vmem>>, vector<1x18x16xbf16>
    tpu.vector_store %arg9[%c17, %c0_13, %c0_14], %16 {strides = array<i32>} : memref<18x18x16xbf16, #tpu.memory_space<vmem>>, vector<1x18x16xbf16>,
    %c0_15 = arith.constant 0 : index
    %c0_16 = arith.constant 0 : index
    %c0_17 = arith.constant 0 : index
    %20 = vector.load %arg9[%c0_15, %c0_16, %c0_17] : memref<18x18x16xbf16, #tpu.memory_space<vmem>>, vector<18x1x16xbf16>
    tpu.vector_store %arg9[%c0_15, %c0_16, %c0_17], %17 {strides = array<i32>} : memref<18x18x16xbf16, #tpu.memory_space<vmem>>, vector<18x1x16xbf16>,
    %c0_18 = arith.constant 0 : index
    %c17_19 = arith.constant 17 : index
    %c0_20 = arith.constant 0 : index
    %21 = vector.load %arg9[%c0_18, %c17_19, %c0_20] : memref<18x18x16xbf16, #tpu.memory_space<vmem>>, vector<18x1x16xbf16>
    tpu.vector_store %arg9[%c0_18, %c17_19, %c0_20], %17 {strides = array<i32>} : memref<18x18x16xbf16, #tpu.memory_space<vmem>>, vector<18x1x16xbf16>,
    %22 = arith.truncf %15 : vector<16x16x16xf32> to vector<16x16x16xbf16>
    %c1 = arith.constant 1 : index
    %c1_21 = arith.constant 1 : index
    %c0_22 = arith.constant 0 : index
    %23 = vector.load %arg9[%c1, %c1_21, %c0_22] : memref<18x18x16xbf16, #tpu.memory_space<vmem>>, vector<16x16x16xbf16>
    tpu.vector_store %arg9[%c1, %c1_21, %c0_22], %22 {strides = array<i32>} : memref<18x18x16xbf16, #tpu.memory_space<vmem>>, vector<16x16x16xbf16>,
    %cst_23 = arith.constant 0.000000e+00 : f32
    %24 = vector.broadcast %cst_23 : f32 to vector<256x16xf32>
    %c0_24 = arith.constant 0 : index
    %c0_25 = arith.constant 0 : index
    %c0_26 = arith.constant 0 : index
    %25 = vector.load %arg9[%c0_24, %c0_25, %c0_26] : memref<18x18x16xbf16, #tpu.memory_space<vmem>>, vector<16x16x16xbf16>
    %26 = vector.shape_cast %25 : vector<16x16x16xbf16> to vector<256x16xbf16>
    %c0_27 = arith.constant 0 : index
    %c0_28 = arith.constant 0 : index
    %c0_29 = arith.constant 0 : index
    %c0_30 = arith.constant 0 : index
    %27 = vector.load %arg5[%c0_27, %c0_28, %c0_29, %c0_30] : memref<3x3x16x16xbf16, #tpu.memory_space<vmem>>, vector<1x1x16x16xbf16>
    %28 = vector.shape_cast %27 : vector<1x1x16x16xbf16> to vector<16x16xbf16>
    %cst_31 = arith.constant dense<0.000000e+00> : vector<256x16xf32>
    %29 = tpu.matmul %26, %28, %cst_31 {dimension_numbers = #tpu.dot_dimension_numbers<[1], [0], [0], [1], [0, 0, 1, 1], [], []>} : vector<256x16xbf16>, vector<16x16xbf16>, vector<256x16xf32> -> vector<256x16xf32>
    %30 = arith.addf %24, %29 : vector<256x16xf32>
    %c0_32 = arith.constant 0 : index
    %c1_33 = arith.constant 1 : index
    %c0_34 = arith.constant 0 : index
    %31 = vector.load %arg9[%c0_32, %c1_33, %c0_34] : memref<18x18x16xbf16, #tpu.memory_space<vmem>>, vector<16x16x16xbf16>
    %32 = vector.shape_cast %31 : vector<16x16x16xbf16> to vector<256x16xbf16>
    %c0_35 = arith.constant 0 : index
    %c1_36 = arith.constant 1 : index
    %c0_37 = arith.constant 0 : index
    %c0_38 = arith.constant 0 : index
    %33 = vector.load %arg5[%c0_35, %c1_36, %c0_37, %c0_38] : memref<3x3x16x16xbf16, #tpu.memory_space<vmem>>, vector<1x1x16x16xbf16>
    %34 = vector.shape_cast %33 : vector<1x1x16x16xbf16> to vector<16x16xbf16>
    %cst_39 = arith.constant dense<0.000000e+00> : vector<256x16xf32>
    %35 = tpu.matmul %32, %34, %cst_39 {dimension_numbers = #tpu.dot_dimension_numbers<[1], [0], [0], [1], [0, 0, 1, 1], [], []>} : vector<256x16xbf16>, vector<16x16xbf16>, vector<256x16xf32> -> vector<256x16xf32>
    %36 = arith.addf %30, %35 : vector<256x16xf32>
    %c0_40 = arith.constant 0 : index
    %c2 = arith.constant 2 : index
    %c0_41 = arith.constant 0 : index
    %37 = vector.load %arg9[%c0_40, %c2, %c0_41] : memref<18x18x16xbf16, #tpu.memory_space<vmem>>, vector<16x16x16xbf16>
    %38 = vector.shape_cast %37 : vector<16x16x16xbf16> to vector<256x16xbf16>
    %c0_42 = arith.constant 0 : index
    %c2_43 = arith.constant 2 : index
    %c0_44 = arith.constant 0 : index
    %c0_45 = arith.constant 0 : index
    %39 = vector.load %arg5[%c0_42, %c2_43, %c0_44, %c0_45] : memref<3x3x16x16xbf16, #tpu.memory_space<vmem>>, vector<1x1x16x16xbf16>
    %40 = vector.shape_cast %39 : vector<1x1x16x16xbf16> to vector<16x16xbf16>
    %cst_46 = arith.constant dense<0.000000e+00> : vector<256x16xf32>
    %41 = tpu.matmul %38, %40, %cst_46 {dimension_numbers = #tpu.dot_dimension_numbers<[1], [0], [0], [1], [0, 0, 1, 1], [], []>} : vector<256x16xbf16>, vector<16x16xbf16>, vector<256x16xf32> -> vector<256x16xf32>
    %42 = arith.addf %36, %41 : vector<256x16xf32>
    %c1_47 = arith.constant 1 : index
    %c0_48 = arith.constant 0 : index
    %c0_49 = arith.constant 0 : index
    %43 = vector.load %arg9[%c1_47, %c0_48, %c0_49] : memref<18x18x16xbf16, #tpu.memory_space<vmem>>, vector<16x16x16xbf16>
    %44 = vector.shape_cast %43 : vector<16x16x16xbf16> to vector<256x16xbf16>
    %c1_50 = arith.constant 1 : index
    %c0_51 = arith.constant 0 : index
    %c0_52 = arith.constant 0 : index
    %c0_53 = arith.constant 0 : index
    %45 = vector.load %arg5[%c1_50, %c0_51, %c0_52, %c0_53] : memref<3x3x16x16xbf16, #tpu.memory_space<vmem>>, vector<1x1x16x16xbf16>
    %46 = vector.shape_cast %45 : vector<1x1x16x16xbf16> to vector<16x16xbf16>
    %cst_54 = arith.constant dense<0.000000e+00> : vector<256x16xf32>
    %47 = tpu.matmul %44, %46, %cst_54 {dimension_numbers = #tpu.dot_dimension_numbers<[1], [0], [0], [1], [0, 0, 1, 1], [], []>} : vector<256x16xbf16>, vector<16x16xbf16>, vector<256x16xf32> -> vector<256x16xf32>
    %48 = arith.addf %42, %47 : vector<256x16xf32>
    %c1_55 = arith.constant 1 : index
    %c1_56 = arith.constant 1 : index
    %c0_57 = arith.constant 0 : index
    %49 = vector.load %arg9[%c1_55, %c1_56, %c0_57] : memref<18x18x16xbf16, #tpu.memory_space<vmem>>, vector<16x16x16xbf16>
    %50 = vector.shape_cast %49 : vector<16x16x16xbf16> to vector<256x16xbf16>
    %c1_58 = arith.constant 1 : index
    %c1_59 = arith.constant 1 : index
    %c0_60 = arith.constant 0 : index
    %c0_61 = arith.constant 0 : index
    %51 = vector.load %arg5[%c1_58, %c1_59, %c0_60, %c0_61] : memref<3x3x16x16xbf16, #tpu.memory_space<vmem>>, vector<1x1x16x16xbf16>
    %52 = vector.shape_cast %51 : vector<1x1x16x16xbf16> to vector<16x16xbf16>
    %cst_62 = arith.constant dense<0.000000e+00> : vector<256x16xf32>
    %53 = tpu.matmul %50, %52, %cst_62 {dimension_numbers = #tpu.dot_dimension_numbers<[1], [0], [0], [1], [0, 0, 1, 1], [], []>} : vector<256x16xbf16>, vector<16x16xbf16>, vector<256x16xf32> -> vector<256x16xf32>
    %54 = arith.addf %48, %53 : vector<256x16xf32>
    %c1_63 = arith.constant 1 : index
    %c2_64 = arith.constant 2 : index
    %c0_65 = arith.constant 0 : index
    %55 = vector.load %arg9[%c1_63, %c2_64, %c0_65] : memref<18x18x16xbf16, #tpu.memory_space<vmem>>, vector<16x16x16xbf16>
    %56 = vector.shape_cast %55 : vector<16x16x16xbf16> to vector<256x16xbf16>
    %c1_66 = arith.constant 1 : index
    %c2_67 = arith.constant 2 : index
    %c0_68 = arith.constant 0 : index
    %c0_69 = arith.constant 0 : index
    %57 = vector.load %arg5[%c1_66, %c2_67, %c0_68, %c0_69] : memref<3x3x16x16xbf16, #tpu.memory_space<vmem>>, vector<1x1x16x16xbf16>
    %58 = vector.shape_cast %57 : vector<1x1x16x16xbf16> to vector<16x16xbf16>
    %cst_70 = arith.constant dense<0.000000e+00> : vector<256x16xf32>
    %59 = tpu.matmul %56, %58, %cst_70 {dimension_numbers = #tpu.dot_dimension_numbers<[1], [0], [0], [1], [0, 0, 1, 1], [], []>} : vector<256x16xbf16>, vector<16x16xbf16>, vector<256x16xf32> -> vector<256x16xf32>
    %60 = arith.addf %54, %59 : vector<256x16xf32>
    %c2_71 = arith.constant 2 : index
    %c0_72 = arith.constant 0 : index
    %c0_73 = arith.constant 0 : index
    %61 = vector.load %arg9[%c2_71, %c0_72, %c0_73] : memref<18x18x16xbf16, #tpu.memory_space<vmem>>, vector<16x16x16xbf16>
    %62 = vector.shape_cast %61 : vector<16x16x16xbf16> to vector<256x16xbf16>
    %c2_74 = arith.constant 2 : index
    %c0_75 = arith.constant 0 : index
    %c0_76 = arith.constant 0 : index
    %c0_77 = arith.constant 0 : index
    %63 = vector.load %arg5[%c2_74, %c0_75, %c0_76, %c0_77] : memref<3x3x16x16xbf16, #tpu.memory_space<vmem>>, vector<1x1x16x16xbf16>
    %64 = vector.shape_cast %63 : vector<1x1x16x16xbf16> to vector<16x16xbf16>
    %cst_78 = arith.constant dense<0.000000e+00> : vector<256x16xf32>
    %65 = tpu.matmul %62, %64, %cst_78 {dimension_numbers = #tpu.dot_dimension_numbers<[1], [0], [0], [1], [0, 0, 1, 1], [], []>} : vector<256x16xbf16>, vector<16x16xbf16>, vector<256x16xf32> -> vector<256x16xf32>
    %66 = arith.addf %60, %65 : vector<256x16xf32>
    %c2_79 = arith.constant 2 : index
    %c1_80 = arith.constant 1 : index
    %c0_81 = arith.constant 0 : index
    %67 = vector.load %arg9[%c2_79, %c1_80, %c0_81] : memref<18x18x16xbf16, #tpu.memory_space<vmem>>, vector<16x16x16xbf16>
    %68 = vector.shape_cast %67 : vector<16x16x16xbf16> to vector<256x16xbf16>
    %c2_82 = arith.constant 2 : index
    %c1_83 = arith.constant 1 : index
    %c0_84 = arith.constant 0 : index
    %c0_85 = arith.constant 0 : index
    %69 = vector.load %arg5[%c2_82, %c1_83, %c0_84, %c0_85] : memref<3x3x16x16xbf16, #tpu.memory_space<vmem>>, vector<1x1x16x16xbf16>
    %70 = vector.shape_cast %69 : vector<1x1x16x16xbf16> to vector<16x16xbf16>
    %cst_86 = arith.constant dense<0.000000e+00> : vector<256x16xf32>
    %71 = tpu.matmul %68, %70, %cst_86 {dimension_numbers = #tpu.dot_dimension_numbers<[1], [0], [0], [1], [0, 0, 1, 1], [], []>} : vector<256x16xbf16>, vector<16x16xbf16>, vector<256x16xf32> -> vector<256x16xf32>
    %72 = arith.addf %66, %71 : vector<256x16xf32>
    %c2_87 = arith.constant 2 : index
    %c2_88 = arith.constant 2 : index
    %c0_89 = arith.constant 0 : index
    %73 = vector.load %arg9[%c2_87, %c2_88, %c0_89] : memref<18x18x16xbf16, #tpu.memory_space<vmem>>, vector<16x16x16xbf16>
    %74 = vector.shape_cast %73 : vector<16x16x16xbf16> to vector<256x16xbf16>
    %c2_90 = arith.constant 2 : index
    %c2_91 = arith.constant 2 : index
    %c0_92 = arith.constant 0 : index
    %c0_93 = arith.constant 0 : index
    %75 = vector.load %arg5[%c2_90, %c2_91, %c0_92, %c0_93] : memref<3x3x16x16xbf16, #tpu.memory_space<vmem>>, vector<1x1x16x16xbf16>
    %76 = vector.shape_cast %75 : vector<1x1x16x16xbf16> to vector<16x16xbf16>
    %cst_94 = arith.constant dense<0.000000e+00> : vector<256x16xf32>
    %77 = tpu.matmul %74, %76, %cst_94 {dimension_numbers = #tpu.dot_dimension_numbers<[1], [0], [0], [1], [0, 0, 1, 1], [], []>} : vector<256x16xbf16>, vector<16x16xbf16>, vector<256x16xf32> -> vector<256x16xf32>
    %78 = arith.addf %72, %77 : vector<256x16xf32>
    %c0_95 = arith.constant 0 : index
    %c0_96 = arith.constant 0 : index
    %c0_97 = arith.constant 0 : index
    %c0_98 = arith.constant 0 : index
    %79 = vector.load %arg2[%c0_95, %c0_96, %c0_97, %c0_98] : memref<1x16x16x8xbf16, #tpu.memory_space<vmem>>, vector<1x16x16x8xbf16>
    %80 = vector.shape_cast %79 : vector<1x16x16x8xbf16> to vector<16x16x8xbf16>
    %81 = vector.shape_cast %80 : vector<16x16x8xbf16> to vector<256x8xbf16>
    %c0_99 = arith.constant 0 : index
    %c0_100 = arith.constant 0 : index
    %82 = vector.load %arg6[%c0_99, %c0_100] : memref<8x16xbf16, #tpu.memory_space<vmem>>, vector<8x16xbf16>
    %cst_101 = arith.constant dense<0.000000e+00> : vector<256x16xf32>
    %83 = tpu.matmul %81, %82, %cst_101 {dimension_numbers = #tpu.dot_dimension_numbers<[1], [0], [0], [1], [0, 0, 1, 1], [], []>} : vector<256x8xbf16>, vector<8x16xbf16>, vector<256x16xf32> -> vector<256x16xf32>
    %84 = arith.addf %78, %83 : vector<256x16xf32>
    %c0_102 = arith.constant 0 : index
    %c0_103 = arith.constant 0 : index
    %85 = vector.load %arg7[%c0_102, %c0_103] : memref<1x16xf32, #tpu.memory_space<vmem>>, vector<1x16xf32>
    %86 = vector.broadcast %85 : vector<1x16xf32> to vector<256x16xf32>
    %87 = arith.addf %84, %86 : vector<256x16xf32>
    %88 = vector.shape_cast %87 : vector<256x16xf32> to vector<16x16x16xf32>
    %c0_104 = arith.constant 0 : index
    %c0_105 = arith.constant 0 : index
    %c0_106 = arith.constant 0 : index
    %c0_107 = arith.constant 0 : index
    %89 = vector.load %arg8[%c0_104, %c0_105, %c0_106, %c0_107] : memref<1x16x16x16xf32, #tpu.memory_space<vmem>>, vector<1x16x16x16xf32>
    %90 = vector.shape_cast %89 : vector<1x16x16x16xf32> to vector<16x16x16xf32>
    %91 = vector.shape_cast %88 : vector<16x16x16xf32> to vector<1x16x16x16xf32>
    tpu.vector_store %arg8[%c0_104, %c0_105, %c0_106, %c0_107], %91 {strides = array<i32>} : memref<1x16x16x16xf32, #tpu.memory_space<vmem>>, vector<1x16x16x16xf32>,
    return
  }
  func.func @transform_0(%arg0: i32) -> (i32, i32, i32, i32) {
    %c0_i32 = arith.constant 0 : i32
    %c0_i32_0 = arith.constant 0 : i32
    %c0_i32_1 = arith.constant 0 : i32
    %c0_i32_2 = arith.constant 0 : i32
    return %arg0, %c0_i32, %c0_i32_0, %c0_i32_1 : i32, i32, i32, i32
  }
  func.func @transform_1(%arg0: i32) -> (i32, i32, i32, i32) {
    %c0_i32 = arith.constant 0 : i32
    %c0_i32_0 = arith.constant 0 : i32
    %c0_i32_1 = arith.constant 0 : i32
    %c0_i32_2 = arith.constant 0 : i32
    return %arg0, %c0_i32, %c0_i32_0, %c0_i32_1 : i32, i32, i32, i32
  }
  func.func @transform_2(%arg0: i32) -> (i32, i32) {
    %c0_i32 = arith.constant 0 : i32
    %c0_i32_0 = arith.constant 0 : i32
    %c0_i32_1 = arith.constant 0 : i32
    return %c0_i32, %c0_i32_0 : i32, i32
  }
  func.func @transform_3(%arg0: i32) -> (i32, i32) {
    %c0_i32 = arith.constant 0 : i32
    %c0_i32_0 = arith.constant 0 : i32
    %c0_i32_1 = arith.constant 0 : i32
    return %c0_i32, %c0_i32_0 : i32, i32
  }
  func.func @transform_4(%arg0: i32) -> (i32, i32, i32, i32) {
    %c0_i32 = arith.constant 0 : i32
    %c0_i32_0 = arith.constant 0 : i32
    %c0_i32_1 = arith.constant 0 : i32
    %c0_i32_2 = arith.constant 0 : i32
    %c0_i32_3 = arith.constant 0 : i32
    return %c0_i32, %c0_i32_0, %c0_i32_1, %c0_i32_2 : i32, i32, i32, i32
  }
  func.func @transform_5(%arg0: i32) -> (i32, i32) {
    %c0_i32 = arith.constant 0 : i32
    %c0_i32_0 = arith.constant 0 : i32
    %c0_i32_1 = arith.constant 0 : i32
    return %c0_i32, %c0_i32_0 : i32, i32
  }
  func.func @transform_6(%arg0: i32) -> (i32, i32) {
    %c0_i32 = arith.constant 0 : i32
    %c0_i32_0 = arith.constant 0 : i32
    %c0_i32_1 = arith.constant 0 : i32
    return %c0_i32, %c0_i32_0 : i32, i32
  }
  func.func @transform_7(%arg0: i32) -> (i32, i32, i32, i32) {
    %c0_i32 = arith.constant 0 : i32
    %c0_i32_0 = arith.constant 0 : i32
    %c0_i32_1 = arith.constant 0 : i32
    %c0_i32_2 = arith.constant 0 : i32
    return %arg0, %c0_i32, %c0_i32_0, %c0_i32_1 : i32, i32, i32, i32
  }
}

</mosaic_0001>

<llo_original>
// kernel: decoder_block_forward.2
$region0: #{decoder_block_forward.2}
  #allocation0 [shape = 'u32[]', space=smem, size = 0x4, offset = 0x4, fixed_abs, tag = 'smem constant byte address 0x4 - core index']
  #allocation1 [shape = 'u32[144,128]{1,0:T(1,128)}', space=vmem, size = 0x12000, scoped, tag = 'internal scratch']
  #allocation2 [shape = 'bf16[18,18,8]{2,1,0:T(8,128)(2,1)}', space=vmem, size = 0x1b000, scoped, tag = 'scratch operand']
  %s0 = inlined_call_operand.vmem [shape: bf16[2,16,16,8], index: 0, kind: input, shape index: {}]
  %s1 = inlined_call_operand.vmem [shape: f32[1,8], index: 1, kind: input, shape index: {}]
  %s2 = inlined_call_operand.vmem [shape: f32[1,8], index: 2, kind: input, shape index: {}]
  %s3 = inlined_call_operand.vmem [shape: bf16[3,3,8,16], index: 3, kind: input, shape index: {}]
  %s4 = inlined_call_operand.vmem [shape: bf16[2,16,16,16], index: 4, kind: output, shape index: {0}]
  %s5 = inlined_call_operand.vmem [shape: f32[2,1,16], index: 5, kind: output, shape index: {1}]
  %s6 = inlined_call_operand.vmem [shape: f32[2,1,16], index: 6, kind: output, shape index: {2}]
  %7 = xla_tuple %s4, %s5, %s6
  %s8 = sld [smem:[#allocation0]]
  $region65: #{decoder_block_forward.2} parent=0
    _
  %s10 = ssub.s32 1, %s8
  %s11 = scalar_select 0, %s10, %s8
  loop: start=0, step=1, limit=4
  $region2: #{decoder_block_forward.2} parent=0 // loop_pre_header
    _
  $region3: #{decoder_block_forward.2} parent=0 // loop_header
    %s13 = sphi 0, %s17
    %p14 = scmp.ge.s32.totalorder %s13, 4
    %s23 = sphi 0, %s25
    %s26 = sphi 0, %s23
    %s27 = sphi 0, %s26
    %s43 = sphi 0, %s27
    %s47 = sphi 0, %s47
    %s49 = sphi 0, %s47
    %s50 = sphi 0, %s49
    %s64 = sphi 0, %s50
    %s68 = sphi 0, %s68
    %s70 = sphi 0, %s68
    %s71 = sphi 0, %s70
    %s85 = sphi 0, %s71
    %s89 = sphi 0, %s89
    %s91 = sphi 0, %s89
    %s92 = sphi 0, %s91
    %s106 = sphi 0, %s92
    %s112 = sphi 0, %s114
    %s115 = sphi 0, %s112
    %s116 = sphi 0, %s115
    %s132 = sphi 0, %s116
    %s138 = sphi 0, %s140
    %s141 = sphi 0, %s138
    %s142 = sphi 0, %s141
    %s158 = sphi 0, %s142
    %s164 = sphi 0, %s166
    %s167 = sphi 0, %s164
    %s168 = sphi 0, %s167
    %s184 = sphi 0, %s168
  $region4: #{decoder_block_forward.2} parent=0 // loop_header_branch
    %16 = sbr.rel (%p14) target = $region8
  $region5: #{decoder_block_forward.2} parent=0 // loop_body
    %s18 = ssub.s32 %s13, 1
    %s19 = ssub.s32 %s13, 2
    %s20 = sadd.s32 %s13, 1
    %s21 = ssub.s32 %s13, %s20
    %p22 = scmp.eq.s32.totalorder %s21, 0
    %s24 = sadd.s32 %s23, 1
    %s25 = scalar_select %p22, %s23, %s24
    %p28 = pneg %p22
    %p29 = scmp.eq.s32.totalorder %s13, 1
    %p30 = por %p28, %p29
    %p31 = scmp.ne.s32.totalorder %s23, %s26
    %p32 = scmp.eq.s32.totalorder %s13, 0
    %p33 = por %p31, %p32
    %p34 = scmp.ne.s32.totalorder %s23, %s26
    %p35 = scmp.eq.s32.totalorder %s18, 1
    %p36 = por %p34, %p35
    %p37 = scmp.ne.s32.totalorder %s26, %s27
    %p38 = scmp.eq.s32.totalorder %s18, 0
    %p39 = por %p37, %p38
    %p40 = scmp.ne.s32.totalorder %s26, %s27
    %p41 = scmp.eq.s32.totalorder %s19, 1
    %p42 = por %p40, %p41
    %p44 = scmp.ne.s32.totalorder %s27, %s43
    %p45 = scmp.eq.s32.totalorder %s19, 0
    %p46 = por %p44, %p45
    %s48 = sadd.s32 %s47, 1
    %p51 = scmp.eq.s32.totalorder %s13, 1
    %p52 = scmp.ne.s32.totalorder %s47, %s49
    %p53 = scmp.eq.s32.totalorder %s13, 0
    %p54 = por %p52, %p53
    %p55 = scmp.ne.s32.totalorder %s47, %s49
    %p56 = scmp.eq.s32.totalorder %s18, 1
    %p57 = por %p55, %p56
    %p58 = scmp.ne.s32.totalorder %s49, %s50
    %p59 = scmp.eq.s32.totalorder %s18, 0
    %p60 = por %p58, %p59
    %p61 = scmp.ne.s32.totalorder %s49, %s50
    %p62 = scmp.eq.s32.totalorder %s19, 1
    %p63 = por %p61, %p62
    %p65 = scmp.ne.s32.totalorder %s50, %s64
    %p66 = scmp.eq.s32.totalorder %s19, 0
    %p67 = por %p65, %p66
    %s69 = sadd.s32 %s68, 1
    %p72 = scmp.eq.s32.totalorder %s13, 1
    %p73 = scmp.ne.s32.totalorder %s68, %s70
    %p74 = scmp.eq.s32.totalorder %s13, 0
    %p75 = por %p73, %p74
    %p76 = scmp.ne.s32.totalorder %s68, %s70
    %p77 = scmp.eq.s32.totalorder %s18, 1
    %p78 = por %p76, %p77
    %p79 = scmp.ne.s32.totalorder %s70, %s71
    %p80 = scmp.eq.s32.totalorder %s18, 0
    %p81 = por %p79, %p80
    %p82 = scmp.ne.s32.totalorder %s70, %s71
    %p83 = scmp.eq.s32.totalorder %s19, 1
    %p84 = por %p82, %p83
    %p86 = scmp.ne.s32.totalorder %s71, %s85
    %p87 = scmp.eq.s32.totalorder %s19, 0
    %p88 = por %p86, %p87
    %s90 = sadd.s32 %s89, 1
    %p93 = scmp.eq.s32.totalorder %s13, 1
    %p94 = scmp.ne.s32.totalorder %s89, %s91
    %p95 = scmp.eq.s32.totalorder %s13, 0
    %p96 = por %p94, %p95
    %p97 = scmp.ne.s32.totalorder %s89, %s91
    %p98 = scmp.eq.s32.totalorder %s18, 1
    %p99 = por %p97, %p98
    %p100 = scmp.ne.s32.totalorder %s91, %s92
    %p101 = scmp.eq.s32.totalorder %s18, 0
    %p102 = por %p100, %p101
    %p103 = scmp.ne.s32.totalorder %s91, %s92
    %p104 = scmp.eq.s32.totalorder %s19, 1
    %p105 = por %p103, %p104
    %p107 = scmp.ne.s32.totalorder %s92, %s106
    %p108 = scmp.eq.s32.totalorder %s19, 0
    %p109 = por %p107, %p108
    %s110 = ssub.s32 %s13, %s20
    %p111 = scmp.eq.s32.totalorder %s110, 0
    %s113 = sadd.s32 %s112, 1
    %s114 = scalar_select %p111, %s112, %s113
    %p117 = pneg %p111
    %p118 = scmp.eq.s32.totalorder %s13, 1
    %p119 = por %p117, %p118
    %p120 = scmp.ne.s32.totalorder %s112, %s115
    %p121 = scmp.eq.s32.totalorder %s13, 0
    %p122 = por %p120, %p121
    %p123 = scmp.ne.s32.totalorder %s112, %s115
    %p124 = scmp.eq.s32.totalorder %s18, 1
    %p125 = por %p123, %p124
    %p126 = scmp.ne.s32.totalorder %s115, %s116
    %p127 = scmp.eq.s32.totalorder %s18, 0
    %p128 = por %p126, %p127
    %p129 = scmp.ne.s32.totalorder %s115, %s116
    %p130 = scmp.eq.s32.totalorder %s19, 1
    %p131 = por %p129, %p130
    %p133 = scmp.ne.s32.totalorder %s116, %s132
    %p134 = scmp.eq.s32.totalorder %s19, 0
    %p135 = por %p133, %p134
    %s136 = ssub.s32 %s13, %s20
    %p137 = scmp.eq.s32.totalorder %s136, 0
    %s139 = sadd.s32 %s138, 1
    %s140 = scalar_select %p137, %s138, %s139
    %p143 = pneg %p137
    %p144 = scmp.eq.s32.totalorder %s13, 1
    %p145 = por %p143, %p144
    %p146 = scmp.ne.s32.totalorder %s138, %s141
    %p147 = scmp.eq.s32.totalorder %s13, 0
    %p148 = por %p146, %p147
    %p149 = scmp.ne.s32.totalorder %s138, %s141
    %p150 = scmp.eq.s32.totalorder %s18, 1
    %p151 = por %p149, %p150
    %p152 = scmp.ne.s32.totalorder %s141, %s142
    %p153 = scmp.eq.s32.totalorder %s18, 0
    %p154 = por %p152, %p153
    %p155 = scmp.ne.s32.totalorder %s141, %s142
    %p156 = scmp.eq.s32.totalorder %s19, 1
    %p157 = por %p155, %p156
    %p159 = scmp.ne.s32.totalorder %s142, %s158
    %p160 = scmp.eq.s32.totalorder %s19, 0
    %p161 = por %p159, %p160
    %s162 = ssub.s32 %s13, %s20
    %p163 = scmp.eq.s32.totalorder %s162, 0
    %s165 = sadd.s32 %s164, 1
    %s166 = scalar_select %p163, %s164, %s165
    %p169 = pneg %p163
    %p170 = scmp.eq.s32.totalorder %s13, 1
    %p171 = por %p169, %p170
    %p172 = scmp.ne.s32.totalorder %s164, %s167
    %p173 = scmp.eq.s32.totalorder %s13, 0
    %p174 = por %p172, %p173
    %p175 = scmp.ne.s32.totalorder %s164, %s167
    %p176 = scmp.eq.s32.totalorder %s18, 1
    %p177 = por %p175, %p176
    %p178 = scmp.ne.s32.totalorder %s167, %s168
    %p179 = scmp.eq.s32.totalorder %s18, 0
    %p180 = por %p178, %p179
    %p181 = scmp.ne.s32.totalorder %s167, %s168
    %p182 = scmp.eq.s32.totalorder %s19, 1
    %p183 = por %p181, %p182
    %p185 = scmp.ne.s32.totalorder %s168, %s184
    %p186 = scmp.eq.s32.totalorder %s19, 0
    %p187 = por %p185, %p186
    %p188 = scmp.le.s32.totalorder 1, %s13
    %p189 = scmp.lt.s32.totalorder %s13, 3
    %p190 = pnand %p188, %p189
    %p191 = pneg %p190
    // Predicated region
    $region9: #{decoder_block_forward.2} parent=5 // pred_check
      _
    $region10: #{decoder_block_forward.2} parent=5 // pred_check_branch
      %193 = sbr.rel (%p190) target = $region12
    $region11: #{decoder_block_forward.2} parent=5 // pred_region
      %s194 = ssub.s32 %s13, 1
      // Predicated region
      $region13: #{decoder_block_forward.2} parent=11 // pred_check
        %p195 = pneg %p60
      $region14: #{decoder_block_forward.2} parent=11 // pred_check_branch
        %197 = sbr.rel (%p195) target = $region16
      $region15: #{decoder_block_forward.2} parent=11 // pred_region
        _
      $region16: #{decoder_block_forward.2} parent=11 // pred_fallthru
        _
      // Predicated region
      $region17: #{decoder_block_forward.2} parent=11 // pred_check
        %p198 = pneg %p81
      $region18: #{decoder_block_forward.2} parent=11 // pred_check_branch
        %200 = sbr.rel (%p198) target = $region20
      $region19: #{decoder_block_forward.2} parent=11 // pred_region
        _
      $region20: #{decoder_block_forward.2} parent=11 // pred_fallthru
        _
      // Predicated region
      $region21: #{decoder_block_forward.2} parent=11 // pred_check
        %p201 = pneg %p102
      $region22: #{decoder_block_forward.2} parent=11 // pred_check_branch
        %203 = sbr.rel (%p201) target = $region24
      $region23: #{decoder_block_forward.2} parent=11 // pred_region
        _
      $region24: #{decoder_block_forward.2} parent=11 // pred_fallthru
        _
    $region12: #{decoder_block_forward.2} parent=5 // pred_fallthru
      _
    %p204 = scmp.lt.s32.totalorder %s13, 2
    // Predicated region
    $region25: #{decoder_block_forward.2} parent=5 // pred_check
      %p205 = pneg %p204
    $region26: #{decoder_block_forward.2} parent=5 // pred_check_branch
      %207 = sbr.rel (%p205) target = $region28
    $region27: #{decoder_block_forward.2} parent=5 // pred_region
      // Predicated region
      $region29: #{decoder_block_forward.2} parent=27 // pred_check
        %p208 = pneg %p33
      $region30: #{decoder_block_forward.2} parent=27 // pred_check_branch
        %210 = sbr.rel (%p208) target = $region32
      $region31: #{decoder_block_forward.2} parent=27 // pred_region
        %p211 = scmp.lt.s32.totalorder %s13, 1
        %s212 = scalar_select %p211, %s13, 1
        %s213 = smul.addr %s212, 32
        %s214 = smul.addr %s213, 4
        %s215 = scalar_lea.vmem %s0, %s214
      $region32: #{decoder_block_forward.2} parent=27 // pred_fallthru
        _
    $region28: #{decoder_block_forward.2} parent=5 // pred_fallthru
      _
    %p216 = scmp.le.s32.totalorder 1, %s13
    %p217 = scmp.lt.s32.totalorder %s13, 3
    %p218 = pnand %p216, %p217
    %p219 = pneg %p218
    // Predicated region
    $region33: #{decoder_block_forward.2} parent=5 // pred_check
      _
    $region34: #{decoder_block_forward.2} parent=5 // pred_check_branch
      %221 = sbr.rel (%p218) target = $region36
    $region35: #{decoder_block_forward.2} parent=5 // pred_region
      %s222 = ssub.s32 %s13, 1
      %p223 = scmp.lt.s32.totalorder %s18, 1
      %s224 = scalar_select %p223, %s18, 1
      %s225 = smul.addr %s224, 32
      %s226 = smul.addr %s225, 4
      %s227 = scalar_lea.vmem %s0, %s226
      %p228 = pneg %p39
      %p229 = pneg %p36
      %p230 = pneg %p60
      %p231 = pneg %p57
      %p232 = pneg %p81
      %p233 = pneg %p78
      %p234 = pneg %p102
      %p235 = pneg %p99
      %p236 = pneg %p128
      %p237 = pneg %p125
      %p238 = scmp.lt.s32.totalorder %s18, 1
      %s239 = scalar_select %p238, %s18, 1
      %s240 = smul.addr %s239, 32
      %s241 = smul.addr %s240, 4
      %s242 = scalar_lea.vmem %s4, %s241
      %p243 = pneg %p154
      %p244 = pneg %p151
      %p245 = scmp.lt.s32.totalorder %s18, 1
      %s246 = scalar_select %p245, %s18, 1
      %s247 = scalar_lea.vmem %s5, %s246
      %p248 = pneg %p180
      %p249 = pneg %p177
      %p250 = scmp.lt.s32.totalorder %s18, 1
      %s251 = scalar_select %p250, %s18, 1
      %s252 = scalar_lea.vmem %s6, %s251
      %p253 = scmp.lt.s32.totalorder %s18, 1
      %s254 = scalar_select %p253, %s18, 1
      %s255 = smul.addr %s254, 32
      %s256 = smul.addr %s255, 4
      %s257 = scalar_lea.vmem %s0, %s256
      %p258 = scmp.lt.s32.totalorder %s18, 1
      %s259 = scalar_select %p258, %s18, 1
      %s260 = smul.addr %s259, 32
      %s261 = smul.addr %s260, 4
      %s262 = scalar_lea.vmem %s4, %s261
      %p263 = scmp.lt.s32.totalorder %s18, 1
      %s264 = scalar_select %p263, %s18, 1
      %s265 = scalar_lea.vmem %s5, %s264
      %p266 = scmp.lt.s32.totalorder %s18, 1
      %s267 = scalar_select %p266, %s18, 1
      %s268 = scalar_lea.vmem %s6, %s267
      %v270 = vld [vmem:[%s1] sm:$0x1]
      %v271 = vld [vmem:[%s2] sm:$0x1]
      %v272 = vld [vmem:[%s257] sm:$0xf]
      %v273 = vld [vmem:[%s257 + $0x4] sm:$0xf]
      %v274 = vld [vmem:[%s257 + $0x8] sm:$0xf]
      %v275 = vld [vmem:[%s257 + $0xc] sm:$0xf]
      %v276 = vld [vmem:[%s257 + $0x10] sm:$0xf]
      %v277 = vld [vmem:[%s257 + $0x14] sm:$0xf]
      %v278 = vld [vmem:[%s257 + $0x18] sm:$0xf]
      %v279 = vld [vmem:[%s257 + $0x1c] sm:$0xf]
      %v280 = vld [vmem:[%s257 + $0x20] sm:$0xf]
      %v281 = vld [vmem:[%s257 + $0x24] sm:$0xf]
      %v282 = vld [vmem:[%s257 + $0x28] sm:$0xf]
      %v283 = vld [vmem:[%s257 + $0x2c] sm:$0xf]
      %v284 = vld [vmem:[%s257 + $0x30] sm:$0xf]
      %v285 = vld [vmem:[%s257 + $0x34] sm:$0xf]
      %v286 = vld [vmem:[%s257 + $0x38] sm:$0xf]
      %v287 = vld [vmem:[%s257 + $0x3c] sm:$0xf]
      %v288 = vld [vmem:[%s257 + $0x40] sm:$0xf]
      %v289 = vld [vmem:[%s257 + $0x44] sm:$0xf]
      %v290 = vld [vmem:[%s257 + $0x48] sm:$0xf]
      %v291 = vld [vmem:[%s257 + $0x4c] sm:$0xf]
      %v292 = vld [vmem:[%s257 + $0x50] sm:$0xf]
      %v293 = vld [vmem:[%s257 + $0x54] sm:$0xf]
      %v294 = vld [vmem:[%s257 + $0x58] sm:$0xf]
      %v295 = vld [vmem:[%s257 + $0x5c] sm:$0xf]
      %v296 = vld [vmem:[%s257 + $0x60] sm:$0xf]
      %v297 = vld [vmem:[%s257 + $0x64] sm:$0xf]
      %v298 = vld [vmem:[%s257 + $0x68] sm:$0xf]
      %v299 = vld [vmem:[%s257 + $0x6c] sm:$0xf]
      %v300 = vld [vmem:[%s257 + $0x70] sm:$0xf]
      %v301 = vld [vmem:[%s257 + $0x74] sm:$0xf]
      %v302 = vld [vmem:[%s257 + $0x78] sm:$0xf]
      %v303 = vld [vmem:[%s257 + $0x7c] sm:$0xf]
      %v304 = vunpack.c.l.bf16 %v272
      %v305 = vunpack.c.l.bf16 %v273
      %v306 = vunpack.c.l.bf16 %v274
      %v307 = vunpack.c.l.bf16 %v275
      %v308 = vunpack.c.l.bf16 %v276
      %v309 = vunpack.c.l.bf16 %v277
      %v310 = vunpack.c.l.bf16 %v278
      %v311 = vunpack.c.l.bf16 %v279
      %v312 = vunpack.c.l.bf16 %v280
      %v313 = vunpack.c.l.bf16 %v281
      %v314 = vunpack.c.l.bf16 %v282
      %v315 = vunpack.c.l.bf16 %v283
      %v316 = vunpack.c.l.bf16 %v284
      %v317 = vunpack.c.l.bf16 %v285
      %v318 = vunpack.c.l.bf16 %v286
      %v319 = vunpack.c.l.bf16 %v287
      %v320 = vunpack.c.l.bf16 %v288
      %v321 = vunpack.c.l.bf16 %v289
      %v322 = vunpack.c.l.bf16 %v290
      %v323 = vunpack.c.l.bf16 %v291
      %v324 = vunpack.c.l.bf16 %v292
      %v325 = vunpack.c.l.bf16 %v293
      %v326 = vunpack.c.l.bf16 %v294
      %v327 = vunpack.c.l.bf16 %v295
      %v328 = vunpack.c.l.bf16 %v296
      %v329 = vunpack.c.l.bf16 %v297
      %v330 = vunpack.c.l.bf16 %v298
      %v331 = vunpack.c.l.bf16 %v299
      %v332 = vunpack.c.l.bf16 %v300
      %v333 = vunpack.c.l.bf16 %v301
      %v334 = vunpack.c.l.bf16 %v302
      %v335 = vunpack.c.l.bf16 %v303
      %v337 = vlaneseq
      %v338 = vshrl.u32 %v337, 7
      %v339 = vsub.s32 0, %v338
      %v340 = vrot.slane %v270, %v339
      %v342 = vmul.f32 %v304, %v340
      %v343 = vmul.f32 %v305, %v340
      %v344 = vmul.f32 %v306, %v340
      %v345 = vmul.f32 %v307, %v340
      %v346 = vmul.f32 %v308, %v340
      %v347 = vmul.f32 %v309, %v340
      %v348 = vmul.f32 %v310, %v340
      %v349 = vmul.f32 %v311, %v340
      %v350 = vmul.f32 %v312, %v340
      %v351 = vmul.f32 %v313, %v340
      %v352 = vmul.f32 %v314, %v340
      %v353 = vmul.f32 %v315, %v340
      %v354 = vmul.f32 %v316, %v340
      %v355 = vmul.f32 %v317, %v340
      %v356 = vmul.f32 %v318, %v340
      %v357 = vmul.f32 %v319, %v340
      %v358 = vmul.f32 %v320, %v340
      %v359 = vmul.f32 %v321, %v340
      %v360 = vmul.f32 %v322, %v340
      %v361 = vmul.f32 %v323, %v340
      %v362 = vmul.f32 %v324, %v340
      %v363 = vmul.f32 %v325, %v340
      %v364 = vmul.f32 %v326, %v340
      %v365 = vmul.f32 %v327, %v340
      %v366 = vmul.f32 %v328, %v340
      %v367 = vmul.f32 %v329, %v340
      %v368 = vmul.f32 %v330, %v340
      %v369 = vmul.f32 %v331, %v340
      %v370 = vmul.f32 %v332, %v340
      %v371 = vmul.f32 %v333, %v340
      %v372 = vmul.f32 %v334, %v340
      %v373 = vmul.f32 %v335, %v340
      %v375 = vlaneseq
      %v376 = vshrl.u32 %v375, 7
      %v377 = vsub.s32 0, %v376
      %v378 = vrot.slane %v271, %v377
      %v380 = vadd.f32 %v342, %v378
      %v381 = vadd.f32 %v343, %v378
      %v382 = vadd.f32 %v344, %v378
      %v383 = vadd.f32 %v345, %v378
      %v384 = vadd.f32 %v346, %v378
      %v385 = vadd.f32 %v347, %v378
      %v386 = vadd.f32 %v348, %v378
      %v387 = vadd.f32 %v349, %v378
      %v388 = vadd.f32 %v350, %v378
      %v389 = vadd.f32 %v351, %v378
      %v390 = vadd.f32 %v352, %v378
      %v391 = vadd.f32 %v353, %v378
      %v392 = vadd.f32 %v354, %v378
      %v393 = vadd.f32 %v355, %v378
      %v394 = vadd.f32 %v356, %v378
      %v395 = vadd.f32 %v357, %v378
      %v396 = vadd.f32 %v358, %v378
      %v397 = vadd.f32 %v359, %v378
      %v398 = vadd.f32 %v360, %v378
      %v399 = vadd.f32 %v361, %v378
      %v400 = vadd.f32 %v362, %v378
      %v401 = vadd.f32 %v363, %v378
      %v402 = vadd.f32 %v364, %v378
      %v403 = vadd.f32 %v365, %v378
      %v404 = vadd.f32 %v366, %v378
      %v405 = vadd.f32 %v367, %v378
      %v406 = vadd.f32 %v368, %v378
      %v407 = vadd.f32 %v369, %v378
      %v408 = vadd.f32 %v370, %v378
      %v409 = vadd.f32 %v371, %v378
      %v410 = vadd.f32 %v372, %v378
      %v411 = vadd.f32 %v373, %v378
      %vm412 = vcmp.ge.f32.partialorder %v380, 0.0
      %vm413 = vcmp.ge.f32.partialorder %v381, 0.0
      %vm414 = vcmp.ge.f32.partialorder %v382, 0.0
      %vm415 = vcmp.ge.f32.partialorder %v383, 0.0
      %vm416 = vcmp.ge.f32.partialorder %v384, 0.0
      %vm417 = vcmp.ge.f32.partialorder %v385, 0.0
      %vm418 = vcmp.ge.f32.partialorder %v386, 0.0
      %vm419 = vcmp.ge.f32.partialorder %v387, 0.0
      %vm420 = vcmp.ge.f32.partialorder %v388, 0.0
      %vm421 = vcmp.ge.f32.partialorder %v389, 0.0
      %vm422 = vcmp.ge.f32.partialorder %v390, 0.0
      %vm423 = vcmp.ge.f32.partialorder %v391, 0.0
      %vm424 = vcmp.ge.f32.partialorder %v392, 0.0
      %vm425 = vcmp.ge.f32.partialorder %v393, 0.0
      %vm426 = vcmp.ge.f32.partialorder %v394, 0.0
      %vm427 = vcmp.ge.f32.partialorder %v395, 0.0
      %vm428 = vcmp.ge.f32.partialorder %v396, 0.0
      %vm429 = vcmp.ge.f32.partialorder %v397, 0.0
      %vm430 = vcmp.ge.f32.partialorder %v398, 0.0
      %vm431 = vcmp.ge.f32.partialorder %v399, 0.0
      %vm432 = vcmp.ge.f32.partialorder %v400, 0.0
      %vm433 = vcmp.ge.f32.partialorder %v401, 0.0
      %vm434 = vcmp.ge.f32.partialorder %v402, 0.0
      %vm435 = vcmp.ge.f32.partialorder %v403, 0.0
      %vm436 = vcmp.ge.f32.partialorder %v404, 0.0
      %vm437 = vcmp.ge.f32.partialorder %v405, 0.0
      %vm438 = vcmp.ge.f32.partialorder %v406, 0.0
      %vm439 = vcmp.ge.f32.partialorder %v407, 0.0
      %vm440 = vcmp.ge.f32.partialorder %v408, 0.0
      %vm441 = vcmp.ge.f32.partialorder %v409, 0.0
      %vm442 = vcmp.ge.f32.partialorder %v410, 0.0
      %vm443 = vcmp.ge.f32.partialorder %v411, 0.0
      %v444 = vmul.f32 %v380, 0.01
      %v445 = vmul.f32 %v381, 0.01
      %v446 = vmul.f32 %v382, 0.01
      %v447 = vmul.f32 %v383, 0.01
      %v448 = vmul.f32 %v384, 0.01
      %v449 = vmul.f32 %v385, 0.01
      %v450 = vmul.f32 %v386, 0.01
      %v451 = vmul.f32 %v387, 0.01
      %v452 = vmul.f32 %v388, 0.01
      %v453 = vmul.f32 %v389, 0.01
      %v454 = vmul.f32 %v390, 0.01
      %v455 = vmul.f32 %v391, 0.01
      %v456 = vmul.f32 %v392, 0.01
      %v457 = vmul.f32 %v393, 0.01
      %v458 = vmul.f32 %v394, 0.01
      %v459 = vmul.f32 %v395, 0.01
      %v460 = vmul.f32 %v396, 0.01
      %v461 = vmul.f32 %v397, 0.01
      %v462 = vmul.f32 %v398, 0.01
      %v463 = vmul.f32 %v399, 0.01
      %v464 = vmul.f32 %v400, 0.01
      %v465 = vmul.f32 %v401, 0.01
      %v466 = vmul.f32 %v402, 0.01
      %v467 = vmul.f32 %v403, 0.01
      %v468 = vmul.f32 %v404, 0.01
      %v469 = vmul.f32 %v405, 0.01
      %v470 = vmul.f32 %v406, 0.01
      %v471 = vmul.f32 %v407, 0.01
      %v472 = vmul.f32 %v408, 0.01
      %v473 = vmul.f32 %v409, 0.01
      %v474 = vmul.f32 %v410, 0.01
      %v475 = vmul.f32 %v411, 0.01
      %v476 = vsel %vm412, %v380, %v444
      %v477 = vsel %vm413, %v381, %v445
      %v478 = vsel %vm414, %v382, %v446
      %v479 = vsel %vm415, %v383, %v447
      %v480 = vsel %vm416, %v384, %v448
      %v481 = vsel %vm417, %v385, %v449
      %v482 = vsel %vm418, %v386, %v450
      %v483 = vsel %vm419, %v387, %v451
      %v484 = vsel %vm420, %v388, %v452
      %v485 = vsel %vm421, %v389, %v453
      %v486 = vsel %vm422, %v390, %v454
      %v487 = vsel %vm423, %v391, %v455
      %v488 = vsel %vm424, %v392, %v456
      %v489 = vsel %vm425, %v393, %v457
      %v490 = vsel %vm426, %v394, %v458
      %v491 = vsel %vm427, %v395, %v459
      %v492 = vsel %vm428, %v396, %v460
      %v493 = vsel %vm429, %v397, %v461
      %v494 = vsel %vm430, %v398, %v462
      %v495 = vsel %vm431, %v399, %v463
      %v496 = vsel %vm432, %v400, %v464
      %v497 = vsel %vm433, %v401, %v465
      %v498 = vsel %vm434, %v402, %v466
      %v499 = vsel %vm435, %v403, %v467
      %v500 = vsel %vm436, %v404, %v468
      %v501 = vsel %vm437, %v405, %v469
      %v502 = vsel %vm438, %v406, %v470
      %v503 = vsel %vm439, %v407, %v471
      %v504 = vsel %vm440, %v408, %v472
      %v505 = vsel %vm441, %v409, %v473
      %v506 = vsel %vm442, %v410, %v474
      %v507 = vsel %vm443, %v411, %v475
      %vm508 = vcmask 60416
      %509 = vst.msk [vmem:[#allocation2] sm:$0xf] %vm508, 0
      %510 = vst.msk [vmem:[#allocation2 + $0x4] sm:$0xf] %vm508, 0
      %vm511 = vcmask 57344
      %512 = vst.msk [vmem:[#allocation2 + $0x8] sm:$0x1] %vm511, 0
      %s513 = scalar_lea.vmem [#allocation2], 204
      %514 = vst.msk [vmem:[%s513] sm:$0xf] %vm508, 0
      %515 = vst.msk [vmem:[%s513 + $0x4] sm:$0xf] %vm508, 0
      %516 = vst.msk [vmem:[%s513 + $0x8] sm:$0x1] %vm511, 0
      %vm517 = vcmask 57344
      %vm518 = vsmask.f32 256
      %vm519 = vmand %vm517, %vm518
      %v520 = vld [vmem:[#allocation2] sm:$0x1]
      %v521 = vsel %vm519, 0, %v520
      %522 = vst [vmem:[#allocation2] sm:$0x1] %v521
      %v523 = vld [vmem:[#allocation2 + $0xc] sm:$0x1]
      %v524 = vsel %vm519, 0, %v523
      %525 = vst [vmem:[#allocation2 + $0xc] sm:$0x1] %v524
      %v526 = vld [vmem:[#allocation2 + $0x18] sm:$0x1]
      %v527 = vsel %vm519, 0, %v526
      %528 = vst [vmem:[#allocation2 + $0x18] sm:$0x1] %v527
      %v529 = vld [vmem:[#allocation2 + $0x24] sm:$0x1]
      %v530 = vsel %vm519, 0, %v529
      %531 = vst [vmem:[#allocation2 + $0x24] sm:$0x1] %v530
      %v532 = vld [vmem:[#allocation2 + $0x30] sm:$0x1]
      %v533 = vsel %vm519, 0, %v532
      %534 = vst [vmem:[#allocation2 + $0x30] sm:$0x1] %v533
      %v535 = vld [vmem:[#allocation2 + $0x3c] sm:$0x1]
      %v536 = vsel %vm519, 0, %v535
      %537 = vst [vmem:[#allocation2 + $0x3c] sm:$0x1] %v536
      %v538 = vld [vmem:[#allocation2 + $0x48] sm:$0x1]
      %v539 = vsel %vm519, 0, %v538
      %540 = vst [vmem:[#allocation2 + $0x48] sm:$0x1] %v539
      %v541 = vld [vmem:[#allocation2 + $0x54] sm:$0x1]
      %v542 = vsel %vm519, 0, %v541
      %543 = vst [vmem:[#allocation2 + $0x54] sm:$0x1] %v542
      %v544 = vld [vmem:[#allocation2 + $0x60] sm:$0x1]
      %v545 = vsel %vm519, 0, %v544
      %546 = vst [vmem:[#allocation2 + $0x60] sm:$0x1] %v545
      %v547 = vld [vmem:[#allocation2 + $0x6c] sm:$0x1]
      %v548 = vsel %vm519, 0, %v547
      %549 = vst [vmem:[#allocation2 + $0x6c] sm:$0x1] %v548
      %v550 = vld [vmem:[#allocation2 + $0x78] sm:$0x1]
      %v551 = vsel %vm519, 0, %v550
      %552 = vst [vmem:[#allocation2 + $0x78] sm:$0x1] %v551
      %v553 = vld [vmem:[#allocation2 + $0x84] sm:$0x1]
      %v554 = vsel %vm519, 0, %v553
      %555 = vst [vmem:[#allocation2 + $0x84] sm:$0x1] %v554
      %v556 = vld [vmem:[#allocation2 + $0x90] sm:$0x1]
      %v557 = vsel %vm519, 0, %v556
      %558 = vst [vmem:[#allocation2 + $0x90] sm:$0x1] %v557
      %v559 = vld [vmem:[#allocation2 + $0x9c] sm:$0x1]
      %v560 = vsel %vm519, 0, %v559
      %561 = vst [vmem:[#allocation2 + $0x9c] sm:$0x1] %v560
      %v562 = vld [vmem:[#allocation2 + $0xa8] sm:$0x1]
      %v563 = vsel %vm519, 0, %v562
      %564 = vst [vmem:[#allocation2 + $0xa8] sm:$0x1] %v563
      %v565 = vld [vmem:[#allocation2 + $0xb4] sm:$0x1]
      %v566 = vsel %vm519, 0, %v565
      %567 = vst [vmem:[#allocation2 + $0xb4] sm:$0x1] %v566
      %v568 = vld [vmem:[#allocation2 + $0xc0] sm:$0x1]
      %v569 = vsel %vm519, 0, %v568
      %570 = vst [vmem:[#allocation2 + $0xc0] sm:$0x1] %v569
      %v571 = vld [vmem:[#allocation2 + $0xcc] sm:$0x1]
      %v572 = vsel %vm519, 0, %v571
      %573 = vst [vmem:[#allocation2 + $0xcc] sm:$0x1] %v572
      %vm574 = vsmask.f32 7938
      %vm575 = vmand %vm517, %vm574
      %v576 = vld [vmem:[#allocation2 + $0x8] sm:$0x1]
      %v577 = vsel %vm575, 0, %v576
      %578 = vst [vmem:[#allocation2 + $0x8] sm:$0x1] %v577
      %v579 = vld [vmem:[#allocation2 + $0x14] sm:$0x1]
      %v580 = vsel %vm575, 0, %v579
      %581 = vst [vmem:[#allocation2 + $0x14] sm:$0x1] %v580
      %v582 = vld [vmem:[#allocation2 + $0x20] sm:$0x1]
      %v583 = vsel %vm575, 0, %v582
      %584 = vst [vmem:[#allocation2 + $0x20] sm:$0x1] %v583
      %v585 = vld [vmem:[#allocation2 + $0x2c] sm:$0x1]
      %v586 = vsel %vm575, 0, %v585
      %587 = vst [vmem:[#allocation2 + $0x2c] sm:$0x1] %v586
      %v588 = vld [vmem:[#allocation2 + $0x38] sm:$0x1]
      %v589 = vsel %vm575, 0, %v588
      %590 = vst [vmem:[#allocation2 + $0x38] sm:$0x1] %v589
      %v591 = vld [vmem:[#allocation2 + $0x44] sm:$0x1]
      %v592 = vsel %vm575, 0, %v591
      %593 = vst [vmem:[#allocation2 + $0x44] sm:$0x1] %v592
      %v594 = vld [vmem:[#allocation2 + $0x50] sm:$0x1]
      %v595 = vsel %vm575, 0, %v594
      %596 = vst [vmem:[#allocation2 + $0x50] sm:$0x1] %v595
      %v597 = vld [vmem:[#allocation2 + $0x5c] sm:$0x1]
      %v598 = vsel %vm575, 0, %v597
      %599 = vst [vmem:[#allocation2 + $0x5c] sm:$0x1] %v598
      %v600 = vld [vmem:[#allocation2 + $0x68] sm:$0x1]
      %v601 = vsel %vm575, 0, %v600
      %602 = vst [vmem:[#allocation2 + $0x68] sm:$0x1] %v601
      %v603 = vld [vmem:[#allocation2 + $0x74] sm:$0x1]
      %v604 = vsel %vm575, 0, %v603
      %605 = vst [vmem:[#allocation2 + $0x74] sm:$0x1] %v604
      %v606 = vld [vmem:[#allocation2 + $0x80] sm:$0x1]
      %v607 = vsel %vm575, 0, %v606
      %608 = vst [vmem:[#allocation2 + $0x80] sm:$0x1] %v607
      %v609 = vld [vmem:[#allocation2 + $0x8c] sm:$0x1]
      %v610 = vsel %vm575, 0, %v609
      %611 = vst [vmem:[#allocation2 + $0x8c] sm:$0x1] %v610
      %v612 = vld [vmem:[#allocation2 + $0x98] sm:$0x1]
      %v613 = vsel %vm575, 0, %v612
      %614 = vst [vmem:[#allocation2 + $0x98] sm:$0x1] %v613
      %v615 = vld [vmem:[#allocation2 + $0xa4] sm:$0x1]
      %v616 = vsel %vm575, 0, %v615
      %617 = vst [vmem:[#allocation2 + $0xa4] sm:$0x1] %v616
      %v618 = vld [vmem:[#allocation2 + $0xb0] sm:$0x1]
      %v619 = vsel %vm575, 0, %v618
      %620 = vst [vmem:[#allocation2 + $0xb0] sm:$0x1] %v619
      %v621 = vld [vmem:[#allocation2 + $0xbc] sm:$0x1]
      %v622 = vsel %vm575, 0, %v621
      %623 = vst [vmem:[#allocation2 + $0xbc] sm:$0x1] %v622
      %v624 = vld [vmem:[#allocation2 + $0xc8] sm:$0x1]
      %v625 = vsel %vm575, 0, %v624
      %626 = vst [vmem:[#allocation2 + $0xc8] sm:$0x1] %v625
      %v627 = vld [vmem:[#allocation2 + $0xd4] sm:$0x1]
      %v628 = vsel %vm575, 0, %v627
      %629 = vst [vmem:[#allocation2 + $0xd4] sm:$0x1] %v628
      %v630 = vpack.c.bf16 %v477, %v476
      %v631 = vpack.c.bf16 %v479, %v478
      %v632 = vpack.c.bf16 %v481, %v480
      %v633 = vpack.c.bf16 %v483, %v482
      %v634 = vpack.c.bf16 %v485, %v484
      %v635 = vpack.c.bf16 %v487, %v486
      %v636 = vpack.c.bf16 %v489, %v488
      %v637 = vpack.c.bf16 %v491, %v490
      %v638 = vpack.c.bf16 %v493, %v492
      %v639 = vpack.c.bf16 %v495, %v494
      %v640 = vpack.c.bf16 %v497, %v496
      %v641 = vpack.c.bf16 %v499, %v498
      %v642 = vpack.c.bf16 %v501, %v500
      %v643 = vpack.c.bf16 %v503, %v502
      %v644 = vpack.c.bf16 %v505, %v504
      %v645 = vpack.c.bf16 %v507, %v506
      %v662 = vunpack.c.l.b16 %v630
      %v663 = vunpack.c.h.b16 %v630
      %v664 = vunpack.c.l.b16 %v631
      %v665 = vunpack.c.h.b16 %v631
      %v666 = vunpack.c.l.b16 %v632
      %v667 = vunpack.c.h.b16 %v632
      %v668 = vunpack.c.l.b16 %v633
      %v669 = vunpack.c.h.b16 %v633
      %v670 = vunpack.c.l.b16 %v634
      %v671 = vunpack.c.h.b16 %v634
      %v672 = vunpack.c.l.b16 %v635
      %v673 = vunpack.c.h.b16 %v635
      %v674 = vunpack.c.l.b16 %v636
      %v675 = vunpack.c.h.b16 %v636
      %v676 = vunpack.c.l.b16 %v637
      %v677 = vunpack.c.h.b16 %v637
      %v678 = vunpack.c.l.b16 %v638
      %v679 = vunpack.c.h.b16 %v638
      %v680 = vunpack.c.l.b16 %v639
      %v681 = vunpack.c.h.b16 %v639
      %v682 = vunpack.c.l.b16 %v640
      %v683 = vunpack.c.h.b16 %v640
      %v684 = vunpack.c.l.b16 %v641
      %v685 = vunpack.c.h.b16 %v641
      %v686 = vunpack.c.l.b16 %v642
      %v687 = vunpack.c.h.b16 %v642
      %v688 = vunpack.c.l.b16 %v643
      %v689 = vunpack.c.h.b16 %v643
      %v690 = vunpack.c.l.b16 %v644
      %v691 = vunpack.c.h.b16 %v644
      %v692 = vunpack.c.l.b16 %v645
      %v693 = vunpack.c.h.b16 %v645
      %v694 = vpack.c.b16 %v662, %v662
      %v695 = vpack.c.b16 %v663, %v663
      %v696 = vpack.c.b16 %v664, %v664
      %v697 = vpack.c.b16 %v665, %v665
      %v698 = vpack.c.b16 %v666, %v666
      %v699 = vpack.c.b16 %v667, %v667
      %v700 = vpack.c.b16 %v668, %v668
      %v701 = vpack.c.b16 %v669, %v669
      %v702 = vpack.c.b16 %v670, %v670
      %v703 = vpack.c.b16 %v671, %v671
      %v704 = vpack.c.b16 %v672, %v672
      %v705 = vpack.c.b16 %v673, %v673
      %v706 = vpack.c.b16 %v674, %v674
      %v707 = vpack.c.b16 %v675, %v675
      %v708 = vpack.c.b16 %v676, %v676
      %v709 = vpack.c.b16 %v677, %v677
      %v710 = vpack.c.b16 %v678, %v678
      %v711 = vpack.c.b16 %v679, %v679
      %v712 = vpack.c.b16 %v680, %v680
      %v713 = vpack.c.b16 %v681, %v681
      %v714 = vpack.c.b16 %v682, %v682
      %v715 = vpack.c.b16 %v683, %v683
      %v716 = vpack.c.b16 %v684, %v684
      %v717 = vpack.c.b16 %v685, %v685
      %v718 = vpack.c.b16 %v686, %v686
      %v719 = vpack.c.b16 %v687, %v687
      %v720 = vpack.c.b16 %v688, %v688
      %v721 = vpack.c.b16 %v689, %v689
      %v722 = vpack.c.b16 %v690, %v690
      %v723 = vpack.c.b16 %v691, %v691
      %v724 = vpack.c.b16 %v692, %v692
      %v725 = vpack.c.b16 %v693, %v693
      %vm726 = vsmask.f32 4368
      %vm727 = vmor %vm518, %vm726
      %v729 = vshrl.u32 %v694, 16
      %v731 = vrot.slane %v729, 7
      %v732 = vshll.u32 %v694, 16
      %v734 = vor.u32 %v731, %v732
      %v735 = vrot.slane %v731, 4
      %v737 = vshrl.u32 %v695, 16
      %v739 = vrot.slane %v737, 7
      %v740 = vshll.u32 %v695, 16
      %v742 = vor.u32 %v739, %v740
      %v743 = vsel %vm727, %v735, %v742
      %v744 = vrot.slane %v739, 4
      %v746 = vshrl.u32 %v696, 16
      %v748 = vrot.slane %v746, 7
      %v749 = vshll.u32 %v696, 16
      %v751 = vor.u32 %v748, %v749
      %v752 = vrot.slane %v748, 4
      %v754 = vshrl.u32 %v697, 16
      %v756 = vrot.slane %v754, 7
      %v757 = vshll.u32 %v697, 16
      %v759 = vor.u32 %v756, %v757
      %v760 = vsel %vm727, %v752, %v759
      %v761 = vrot.slane %v756, 4
      %v763 = vshrl.u32 %v698, 16
      %v765 = vrot.slane %v763, 7
      %v766 = vshll.u32 %v698, 16
      %v768 = vor.u32 %v765, %v766
      %v769 = vrot.slane %v765, 4
      %v771 = vshrl.u32 %v699, 16
      %v773 = vrot.slane %v771, 7
      %v774 = vshll.u32 %v699, 16
      %v776 = vor.u32 %v773, %v774
      %v777 = vsel %vm727, %v769, %v776
      %v778 = vrot.slane %v773, 4
      %v780 = vshrl.u32 %v700, 16
      %v782 = vrot.slane %v780, 7
      %v783 = vshll.u32 %v700, 16
      %v785 = vor.u32 %v782, %v783
      %v786 = vrot.slane %v782, 4
      %v788 = vshrl.u32 %v701, 16
      %v790 = vrot.slane %v788, 7
      %v791 = vshll.u32 %v701, 16
      %v793 = vor.u32 %v790, %v791
      %v794 = vsel %vm727, %v786, %v793
      %v795 = vrot.slane %v790, 4
      %v797 = vshrl.u32 %v702, 16
      %v799 = vrot.slane %v797, 7
      %v800 = vshll.u32 %v702, 16
      %v802 = vor.u32 %v799, %v800
      %v803 = vrot.slane %v799, 4
      %v805 = vshrl.u32 %v703, 16
      %v807 = vrot.slane %v805, 7
      %v808 = vshll.u32 %v703, 16
      %v810 = vor.u32 %v807, %v808
      %v811 = vsel %vm727, %v803, %v810
      %v812 = vrot.slane %v807, 4
      %v814 = vshrl.u32 %v704, 16
      %v816 = vrot.slane %v814, 7
      %v817 = vshll.u32 %v704, 16
      %v819 = vor.u32 %v816, %v817
      %v820 = vrot.slane %v816, 4
      %v822 = vshrl.u32 %v705, 16
      %v824 = vrot.slane %v822, 7
      %v825 = vshll.u32 %v705, 16
      %v827 = vor.u32 %v824, %v825
      %v828 = vsel %vm727, %v820, %v827
      %v829 = vrot.slane %v824, 4
      %v831 = vshrl.u32 %v706, 16
      %v833 = vrot.slane %v831, 7
      %v834 = vshll.u32 %v706, 16
      %v836 = vor.u32 %v833, %v834
      %v837 = vrot.slane %v833, 4
      %v839 = vshrl.u32 %v707, 16
      %v841 = vrot.slane %v839, 7
      %v842 = vshll.u32 %v707, 16
      %v844 = vor.u32 %v841, %v842
      %v845 = vsel %vm727, %v837, %v844
      %v846 = vrot.slane %v841, 4
      %v848 = vshrl.u32 %v708, 16
      %v850 = vrot.slane %v848, 7
      %v851 = vshll.u32 %v708, 16
      %v853 = vor.u32 %v850, %v851
      %v854 = vrot.slane %v850, 4
      %v856 = vshrl.u32 %v709, 16
      %v858 = vrot.slane %v856, 7
      %v859 = vshll.u32 %v709, 16
      %v861 = vor.u32 %v858, %v859
      %v862 = vsel %vm727, %v854, %v861
      %v863 = vrot.slane %v858, 4
      %v865 = vshrl.u32 %v710, 16
      %v867 = vrot.slane %v865, 7
      %v868 = vshll.u32 %v710, 16
      %v870 = vor.u32 %v867, %v868
      %v871 = vrot.slane %v867, 4
      %v873 = vshrl.u32 %v711, 16
      %v875 = vrot.slane %v873, 7
      %v876 = vshll.u32 %v711, 16
      %v878 = vor.u32 %v875, %v876
      %v879 = vsel %vm727, %v871, %v878
      %v880 = vrot.slane %v875, 4
      %v882 = vshrl.u32 %v712, 16
      %v884 = vrot.slane %v882, 7
      %v885 = vshll.u32 %v712, 16
      %v887 = vor.u32 %v884, %v885
      %v888 = vrot.slane %v884, 4
      %v890 = vshrl.u32 %v713, 16
      %v892 = vrot.slane %v890, 7
      %v893 = vshll.u32 %v713, 16
      %v895 = vor.u32 %v892, %v893
      %v896 = vsel %vm727, %v888, %v895
      %v897 = vrot.slane %v892, 4
      %v899 = vshrl.u32 %v714, 16
      %v901 = vrot.slane %v899, 7
      %v902 = vshll.u32 %v714, 16
      %v904 = vor.u32 %v901, %v902
      %v905 = vrot.slane %v901, 4
      %v907 = vshrl.u32 %v715, 16
      %v909 = vrot.slane %v907, 7
      %v910 = vshll.u32 %v715, 16
      %v912 = vor.u32 %v909, %v910
      %v913 = vsel %vm727, %v905, %v912
      %v914 = vrot.slane %v909, 4
      %v916 = vshrl.u32 %v716, 16
      %v918 = vrot.slane %v916, 7
      %v919 = vshll.u32 %v716, 16
      %v921 = vor.u32 %v918, %v919
      %v922 = vrot.slane %v918, 4
      %v924 = vshrl.u32 %v717, 16
      %v926 = vrot.slane %v924, 7
      %v927 = vshll.u32 %v717, 16
      %v929 = vor.u32 %v926, %v927
      %v930 = vsel %vm727, %v922, %v929
      %v931 = vrot.slane %v926, 4
      %v933 = vshrl.u32 %v718, 16
      %v935 = vrot.slane %v933, 7
      %v936 = vshll.u32 %v718, 16
      %v938 = vor.u32 %v935, %v936
      %v939 = vrot.slane %v935, 4
      %v941 = vshrl.u32 %v719, 16
      %v943 = vrot.slane %v941, 7
      %v944 = vshll.u32 %v719, 16
      %v946 = vor.u32 %v943, %v944
      %v947 = vsel %vm727, %v939, %v946
      %v948 = vrot.slane %v943, 4
      %v950 = vshrl.u32 %v720, 16
      %v952 = vrot.slane %v950, 7
      %v953 = vshll.u32 %v720, 16
      %v955 = vor.u32 %v952, %v953
      %v956 = vrot.slane %v952, 4
      %v958 = vshrl.u32 %v721, 16
      %v960 = vrot.slane %v958, 7
      %v961 = vshll.u32 %v721, 16
      %v963 = vor.u32 %v960, %v961
      %v964 = vsel %vm727, %v956, %v963
      %v965 = vrot.slane %v960, 4
      %v967 = vshrl.u32 %v722, 16
      %v969 = vrot.slane %v967, 7
      %v970 = vshll.u32 %v722, 16
      %v972 = vor.u32 %v969, %v970
      %v973 = vrot.slane %v969, 4
      %v975 = vshrl.u32 %v723, 16
      %v977 = vrot.slane %v975, 7
      %v978 = vshll.u32 %v723, 16
      %v980 = vor.u32 %v977, %v978
      %v981 = vsel %vm727, %v973, %v980
      %v982 = vrot.slane %v977, 4
      %v984 = vshrl.u32 %v724, 16
      %v986 = vrot.slane %v984, 7
      %v987 = vshll.u32 %v724, 16
      %v989 = vor.u32 %v986, %v987
      %v990 = vrot.slane %v986, 4
      %v992 = vshrl.u32 %v725, 16
      %v994 = vrot.slane %v992, 7
      %v995 = vshll.u32 %v725, 16
      %v997 = vor.u32 %v994, %v995
      %v998 = vsel %vm727, %v990, %v997
      %v999 = vrot.slane %v994, 4
      %s1048 = scalar_lea.vmem [#allocation2], 12
      %vm1049 = vcmask 60416
      %vm1050 = vmand %vm1049, %vm574
      %v1051 = vld [vmem:[%s1048] sm:$0xf]
      %v1052 = vsel %vm1050, %v734, %v1051
      %1053 = vst [vmem:[%s1048] sm:$0xf] %v1052
      %1054 = vst.msk [vmem:[%s1048 + $0x4] sm:$0xf] %vm508, %v743
      %v1055 = vld [vmem:[%s1048 + $0x8] sm:$0x1]
      %v1056 = vsel %vm519, %v744, %v1055
      %1057 = vst [vmem:[%s1048 + $0x8] sm:$0x1] %v1056
      %v1058 = vld [vmem:[%s1048 + $0xc] sm:$0xf]
      %v1059 = vsel %vm1050, %v751, %v1058
      %1060 = vst [vmem:[%s1048 + $0xc] sm:$0xf] %v1059
      %1061 = vst.msk [vmem:[%s1048 + $0x10] sm:$0xf] %vm508, %v760
      %v1062 = vld [vmem:[%s1048 + $0x14] sm:$0x1]
      %v1063 = vsel %vm519, %v761, %v1062
      %1064 = vst [vmem:[%s1048 + $0x14] sm:$0x1] %v1063
      %v1065 = vld [vmem:[%s1048 + $0x18] sm:$0xf]
      %v1066 = vsel %vm1050, %v768, %v1065
      %1067 = vst [vmem:[%s1048 + $0x18] sm:$0xf] %v1066
      %1068 = vst.msk [vmem:[%s1048 + $0x1c] sm:$0xf] %vm508, %v777
      %v1069 = vld [vmem:[%s1048 + $0x20] sm:$0x1]
      %v1070 = vsel %vm519, %v778, %v1069
      %1071 = vst [vmem:[%s1048 + $0x20] sm:$0x1] %v1070
      %v1072 = vld [vmem:[%s1048 + $0x24] sm:$0xf]
      %v1073 = vsel %vm1050, %v785, %v1072
      %1074 = vst [vmem:[%s1048 + $0x24] sm:$0xf] %v1073
      %1075 = vst.msk [vmem:[%s1048 + $0x28] sm:$0xf] %vm508, %v794
      %v1076 = vld [vmem:[%s1048 + $0x2c] sm:$0x1]
      %v1077 = vsel %vm519, %v795, %v1076
      %1078 = vst [vmem:[%s1048 + $0x2c] sm:$0x1] %v1077
      %v1079 = vld [vmem:[%s1048 + $0x30] sm:$0xf]
      %v1080 = vsel %vm1050, %v802, %v1079
      %1081 = vst [vmem:[%s1048 + $0x30] sm:$0xf] %v1080
      %1082 = vst.msk [vmem:[%s1048 + $0x34] sm:$0xf] %vm508, %v811
      %v1083 = vld [vmem:[%s1048 + $0x38] sm:$0x1]
      %v1084 = vsel %vm519, %v812, %v1083
      %1085 = vst [vmem:[%s1048 + $0x38] sm:$0x1] %v1084
      %v1086 = vld [vmem:[%s1048 + $0x3c] sm:$0xf]
      %v1087 = vsel %vm1050, %v819, %v1086
      %1088 = vst [vmem:[%s1048 + $0x3c] sm:$0xf] %v1087
      %1089 = vst.msk [vmem:[%s1048 + $0x40] sm:$0xf] %vm508, %v828
      %v1090 = vld [vmem:[%s1048 + $0x44] sm:$0x1]
      %v1091 = vsel %vm519, %v829, %v1090
      %1092 = vst [vmem:[%s1048 + $0x44] sm:$0x1] %v1091
      %v1093 = vld [vmem:[%s1048 + $0x48] sm:$0xf]
      %v1094 = vsel %vm1050, %v836, %v1093
      %1095 = vst [vmem:[%s1048 + $0x48] sm:$0xf] %v1094
      %1096 = vst.msk [vmem:[%s1048 + $0x4c] sm:$0xf] %vm508, %v845
      %v1097 = vld [vmem:[%s1048 + $0x50] sm:$0x1]
      %v1098 = vsel %vm519, %v846, %v1097
      %1099 = vst [vmem:[%s1048 + $0x50] sm:$0x1] %v1098
      %v1100 = vld [vmem:[%s1048 + $0x54] sm:$0xf]
      %v1101 = vsel %vm1050, %v853, %v1100
      %1102 = vst [vmem:[%s1048 + $0x54] sm:$0xf] %v1101
      %1103 = vst.msk [vmem:[%s1048 + $0x58] sm:$0xf] %vm508, %v862
      %v1104 = vld [vmem:[%s1048 + $0x5c] sm:$0x1]
      %v1105 = vsel %vm519, %v863, %v1104
      %1106 = vst [vmem:[%s1048 + $0x5c] sm:$0x1] %v1105
      %v1107 = vld [vmem:[%s1048 + $0x60] sm:$0xf]
      %v1108 = vsel %vm1050, %v870, %v1107
      %1109 = vst [vmem:[%s1048 + $0x60] sm:$0xf] %v1108
      %1110 = vst.msk [vmem:[%s1048 + $0x64] sm:$0xf] %vm508, %v879
      %v1111 = vld [vmem:[%s1048 + $0x68] sm:$0x1]
      %v1112 = vsel %vm519, %v880, %v1111
      %1113 = vst [vmem:[%s1048 + $0x68] sm:$0x1] %v1112
      %v1114 = vld [vmem:[%s1048 + $0x6c] sm:$0xf]
      %v1115 = vsel %vm1050, %v887, %v1114
      %1116 = vst [vmem:[%s1048 + $0x6c] sm:$0xf] %v1115
      %1117 = vst.msk [vmem:[%s1048 + $0x70] sm:$0xf] %vm508, %v896
      %v1118 = vld [vmem:[%s1048 + $0x74] sm:$0x1]
      %v1119 = vsel %vm519, %v897, %v1118
      %1120 = vst [vmem:[%s1048 + $0x74] sm:$0x1] %v1119
      %v1121 = vld [vmem:[%s1048 + $0x78] sm:$0xf]
      %v1122 = vsel %vm1050, %v904, %v1121
      %1123 = vst [vmem:[%s1048 + $0x78] sm:$0xf] %v1122
      %1124 = vst.msk [vmem:[%s1048 + $0x7c] sm:$0xf] %vm508, %v913
      %v1125 = vld [vmem:[%s1048 + $0x80] sm:$0x1]
      %v1126 = vsel %vm519, %v914, %v1125
      %1127 = vst [vmem:[%s1048 + $0x80] sm:$0x1] %v1126
      %v1128 = vld [vmem:[%s1048 + $0x84] sm:$0xf]
      %v1129 = vsel %vm1050, %v921, %v1128
      %1130 = vst [vmem:[%s1048 + $0x84] sm:$0xf] %v1129
      %1131 = vst.msk [vmem:[%s1048 + $0x88] sm:$0xf] %vm508, %v930
      %v1132 = vld [vmem:[%s1048 + $0x8c] sm:$0x1]
      %v1133 = vsel %vm519, %v931, %v1132
      %1134 = vst [vmem:[%s1048 + $0x8c] sm:$0x1] %v1133
      %v1135 = vld [vmem:[%s1048 + $0x90] sm:$0xf]
      %v1136 = vsel %vm1050, %v938, %v1135
      %1137 = vst [vmem:[%s1048 + $0x90] sm:$0xf] %v1136
      %1138 = vst.msk [vmem:[%s1048 + $0x94] sm:$0xf] %vm508, %v947
      %v1139 = vld [vmem:[%s1048 + $0x98] sm:$0x1]
      %v1140 = vsel %vm519, %v948, %v1139
      %1141 = vst [vmem:[%s1048 + $0x98] sm:$0x1] %v1140
      %v1142 = vld [vmem:[%s1048 + $0x9c] sm:$0xf]
      %v1143 = vsel %vm1050, %v955, %v1142
      %1144 = vst [vmem:[%s1048 + $0x9c] sm:$0xf] %v1143
      %1145 = vst.msk [vmem:[%s1048 + $0xa0] sm:$0xf] %vm508, %v964
      %v1146 = vld [vmem:[%s1048 + $0xa4] sm:$0x1]
      %v1147 = vsel %vm519, %v965, %v1146
      %1148 = vst [vmem:[%s1048 + $0xa4] sm:$0x1] %v1147
      %v1149 = vld [vmem:[%s1048 + $0xa8] sm:$0xf]
      %v1150 = vsel %vm1050, %v972, %v1149
      %1151 = vst [vmem:[%s1048 + $0xa8] sm:$0xf] %v1150
      %1152 = vst.msk [vmem:[%s1048 + $0xac] sm:$0xf] %vm508, %v981
      %v1153 = vld [vmem:[%s1048 + $0xb0] sm:$0x1]
      %v1154 = vsel %vm519, %v982, %v1153
      %1155 = vst [vmem:[%s1048 + $0xb0] sm:$0x1] %v1154
      %v1156 = vld [vmem:[%s1048 + $0xb4] sm:$0xf]
      %v1157 = vsel %vm1050, %v989, %v1156
      %1158 = vst [vmem:[%s1048 + $0xb4] sm:$0xf] %v1157
      %1159 = vst.msk [vmem:[%s1048 + $0xb8] sm:$0xf] %vm508, %v998
      %v1160 = vld [vmem:[%s1048 + $0xbc] sm:$0x1]
      %v1161 = vsel %vm519, %v999, %v1160
      %1162 = vst [vmem:[%s1048 + $0xbc] sm:$0x1] %v1161
      %v1163 = vld [vmem:[#allocation2] sm:$0xf]
      %v1164 = vld [vmem:[#allocation2 + $0x4] sm:$0xf]
      %v1165 = vld [vmem:[#allocation2 + $0xc] sm:$0xf]
      %v1166 = vld [vmem:[#allocation2 + $0x10] sm:$0xf]
      %v1167 = vld [vmem:[#allocation2 + $0x18] sm:$0xf]
      %v1168 = vld [vmem:[#allocation2 + $0x1c] sm:$0xf]
      %v1169 = vld [vmem:[#allocation2 + $0x24] sm:$0xf]
      %v1170 = vld [vmem:[#allocation2 + $0x28] sm:$0xf]
      %v1171 = vld [vmem:[#allocation2 + $0x30] sm:$0xf]
      %v1172 = vld [vmem:[#allocation2 + $0x34] sm:$0xf]
      %v1173 = vld [vmem:[#allocation2 + $0x3c] sm:$0xf]
      %v1174 = vld [vmem:[#allocation2 + $0x40] sm:$0xf]
      %v1175 = vld [vmem:[#allocation2 + $0x48] sm:$0xf]
      %v1176 = vld [vmem:[#allocation2 + $0x4c] sm:$0xf]
      %v1177 = vld [vmem:[#allocation2 + $0x54] sm:$0xf]
      %v1178 = vld [vmem:[#allocation2 + $0x58] sm:$0xf]
      %v1179 = vld [vmem:[#allocation2 + $0x60] sm:$0xf]
      %v1180 = vld [vmem:[#allocation2 + $0x64] sm:$0xf]
      %v1181 = vld [vmem:[#allocation2 + $0x6c] sm:$0xf]
      %v1182 = vld [vmem:[#allocation2 + $0x70] sm:$0xf]
      %v1183 = vld [vmem:[#allocation2 + $0x78] sm:$0xf]
      %v1184 = vld [vmem:[#allocation2 + $0x7c] sm:$0xf]
      %v1185 = vld [vmem:[#allocation2 + $0x84] sm:$0xf]
      %v1186 = vld [vmem:[#allocation2 + $0x88] sm:$0xf]
      %v1187 = vld [vmem:[#allocation2 + $0x90] sm:$0xf]
      %v1188 = vld [vmem:[#allocation2 + $0x94] sm:$0xf]
      %v1189 = vld [vmem:[#allocation2 + $0x9c] sm:$0xf]
      %v1190 = vld [vmem:[#allocation2 + $0xa0] sm:$0xf]
      %v1191 = vld [vmem:[#allocation2 + $0xa8] sm:$0xf]
      %v1192 = vld [vmem:[#allocation2 + $0xac] sm:$0xf]
      %v1193 = vld [vmem:[#allocation2 + $0xb4] sm:$0xf]
      %v1194 = vld [vmem:[#allocation2 + $0xb8] sm:$0xf]
      %v1195 = vld [vmem:[%s3] sm:$0xf]
      %v1196 = vld [vmem:[#allocation2 + $0x8] sm:$0x1]
      %v1197 = vld [vmem:[#allocation2 + $0x14] sm:$0x1]
      %v1198 = vld [vmem:[#allocation2 + $0x20] sm:$0x1]
      %v1199 = vld [vmem:[#allocation2 + $0x2c] sm:$0x1]
      %v1200 = vld [vmem:[#allocation2 + $0x38] sm:$0x1]
      %v1201 = vld [vmem:[#allocation2 + $0x44] sm:$0x1]
      %v1202 = vld [vmem:[#allocation2 + $0x50] sm:$0x1]
      %v1203 = vld [vmem:[#allocation2 + $0x5c] sm:$0x1]
      %v1204 = vld [vmem:[#allocation2 + $0x68] sm:$0x1]
      %v1205 = vld [vmem:[#allocation2 + $0x74] sm:$0x1]
      %v1206 = vld [vmem:[#allocation2 + $0x80] sm:$0x1]
      %v1207 = vld [vmem:[#allocation2 + $0x8c] sm:$0x1]
      %v1208 = vld [vmem:[#allocation2 + $0x98] sm:$0x1]
      %v1209 = vld [vmem:[#allocation2 + $0xa4] sm:$0x1]
      %v1210 = vld [vmem:[#allocation2 + $0xb0] sm:$0x1]
      %v1211 = vld [vmem:[#allocation2 + $0xbc] sm:$0x1]
      %vm1212 = vsmask.f32 3328
      %vm1213 = vsmask.f32 7440
      %vm1214 = vmor %vm1212, %vm1213
      %v1216 = vshrl.u32 %v1163, 16
      %v1218 = vrot.slane %v1216, 4
      %v1219 = vshll.u32 %v1163, 16
      %v1221 = vrot.slane %v1219, 5
      %v1222 = vor.u32 %v1218, %v1221
      %v1223 = vrot.slane %v1222, 4
      %v1225 = vshll.u32 %v1164, 16
      %v1227 = vrot.slane %v1225, 5
      %v1228 = vsel %vm1214, %v1223, %v1227
      %v1229 = vshrl.u32 %v1164, 16
      %v1231 = vrot.slane %v1229, 4
      %v1232 = vor.u32 %v1231, %v1227
      %v1233 = vrot.slane %v1232, 4
      %v1235 = vshll.u32 %v1196, 16
      %v1237 = vrot.slane %v1235, 5
      %v1238 = vsel %vm1214, %v1233, %v1237
      %v1240 = vshrl.u32 %v1165, 16
      %v1242 = vrot.slane %v1240, 4
      %v1243 = vshll.u32 %v1165, 16
      %v1245 = vrot.slane %v1243, 5
      %v1246 = vor.u32 %v1242, %v1245
      %v1247 = vrot.slane %v1246, 4
      %v1249 = vshll.u32 %v1166, 16
      %v1251 = vrot.slane %v1249, 5
      %v1252 = vsel %vm1214, %v1247, %v1251
      %v1253 = vshrl.u32 %v1166, 16
      %v1255 = vrot.slane %v1253, 4
      %v1256 = vor.u32 %v1255, %v1251
      %v1257 = vrot.slane %v1256, 4
      %v1259 = vshll.u32 %v1197, 16
      %v1261 = vrot.slane %v1259, 5
      %v1262 = vsel %vm1214, %v1257, %v1261
      %v1264 = vshrl.u32 %v1167, 16
      %v1266 = vrot.slane %v1264, 4
      %v1267 = vshll.u32 %v1167, 16
      %v1269 = vrot.slane %v1267, 5
      %v1270 = vor.u32 %v1266, %v1269
      %v1271 = vrot.slane %v1270, 4
      %v1273 = vshll.u32 %v1168, 16
      %v1275 = vrot.slane %v1273, 5
      %v1276 = vsel %vm1214, %v1271, %v1275
      %v1277 = vshrl.u32 %v1168, 16
      %v1279 = vrot.slane %v1277, 4
      %v1280 = vor.u32 %v1279, %v1275
      %v1281 = vrot.slane %v1280, 4
      %v1283 = vshll.u32 %v1198, 16
      %v1285 = vrot.slane %v1283, 5
      %v1286 = vsel %vm1214, %v1281, %v1285
      %v1288 = vshrl.u32 %v1169, 16
      %v1290 = vrot.slane %v1288, 4
      %v1291 = vshll.u32 %v1169, 16
      %v1293 = vrot.slane %v1291, 5
      %v1294 = vor.u32 %v1290, %v1293
      %v1295 = vrot.slane %v1294, 4
      %v1297 = vshll.u32 %v1170, 16
      %v1299 = vrot.slane %v1297, 5
      %v1300 = vsel %vm1214, %v1295, %v1299
      %v1301 = vshrl.u32 %v1170, 16
      %v1303 = vrot.slane %v1301, 4
      %v1304 = vor.u32 %v1303, %v1299
      %v1305 = vrot.slane %v1304, 4
      %v1307 = vshll.u32 %v1199, 16
      %v1309 = vrot.slane %v1307, 5
      %v1310 = vsel %vm1214, %v1305, %v1309
      %v1312 = vshrl.u32 %v1171, 16
      %v1314 = vrot.slane %v1312, 4
      %v1315 = vshll.u32 %v1171, 16
      %v1317 = vrot.slane %v1315, 5
      %v1318 = vor.u32 %v1314, %v1317
      %v1319 = vrot.slane %v1318, 4
      %v1321 = vshll.u32 %v1172, 16
      %v1323 = vrot.slane %v1321, 5
      %v1324 = vsel %vm1214, %v1319, %v1323
      %v1325 = vshrl.u32 %v1172, 16
      %v1327 = vrot.slane %v1325, 4
      %v1328 = vor.u32 %v1327, %v1323
      %v1329 = vrot.slane %v1328, 4
      %v1331 = vshll.u32 %v1200, 16
      %v1333 = vrot.slane %v1331, 5
      %v1334 = vsel %vm1214, %v1329, %v1333
      %v1336 = vshrl.u32 %v1173, 16
      %v1338 = vrot.slane %v1336, 4
      %v1339 = vshll.u32 %v1173, 16
      %v1341 = vrot.slane %v1339, 5
      %v1342 = vor.u32 %v1338, %v1341
      %v1343 = vrot.slane %v1342, 4
      %v1345 = vshll.u32 %v1174, 16
      %v1347 = vrot.slane %v1345, 5
      %v1348 = vsel %vm1214, %v1343, %v1347
      %v1349 = vshrl.u32 %v1174, 16
      %v1351 = vrot.slane %v1349, 4
      %v1352 = vor.u32 %v1351, %v1347
      %v1353 = vrot.slane %v1352, 4
      %v1355 = vshll.u32 %v1201, 16
      %v1357 = vrot.slane %v1355, 5
      %v1358 = vsel %vm1214, %v1353, %v1357
      %v1360 = vshrl.u32 %v1175, 16
      %v1362 = vrot.slane %v1360, 4
      %v1363 = vshll.u32 %v1175, 16
      %v1365 = vrot.slane %v1363, 5
      %v1366 = vor.u32 %v1362, %v1365
      %v1367 = vrot.slane %v1366, 4
      %v1369 = vshll.u32 %v1176, 16
      %v1371 = vrot.slane %v1369, 5
      %v1372 = vsel %vm1214, %v1367, %v1371
      %v1373 = vshrl.u32 %v1176, 16
      %v1375 = vrot.slane %v1373, 4
      %v1376 = vor.u32 %v1375, %v1371
      %v1377 = vrot.slane %v1376, 4
      %v1379 = vshll.u32 %v1202, 16
      %v1381 = vrot.slane %v1379, 5
      %v1382 = vsel %vm1214, %v1377, %v1381
      %v1384 = vshrl.u32 %v1177, 16
      %v1386 = vrot.slane %v1384, 4
      %v1387 = vshll.u32 %v1177, 16
      %v1389 = vrot.slane %v1387, 5
      %v1390 = vor.u32 %v1386, %v1389
      %v1391 = vrot.slane %v1390, 4
      %v1393 = vshll.u32 %v1178, 16
      %v1395 = vrot.slane %v1393, 5
      %v1396 = vsel %vm1214, %v1391, %v1395
      %v1397 = vshrl.u32 %v1178, 16
      %v1399 = vrot.slane %v1397, 4
      %v1400 = vor.u32 %v1399, %v1395
      %v1401 = vrot.slane %v1400, 4
      %v1403 = vshll.u32 %v1203, 16
      %v1405 = vrot.slane %v1403, 5
      %v1406 = vsel %vm1214, %v1401, %v1405
      %v1408 = vshrl.u32 %v1179, 16
      %v1410 = vrot.slane %v1408, 4
      %v1411 = vshll.u32 %v1179, 16
      %v1413 = vrot.slane %v1411, 5
      %v1414 = vor.u32 %v1410, %v1413
      %v1415 = vrot.slane %v1414, 4
      %v1417 = vshll.u32 %v1180, 16
      %v1419 = vrot.slane %v1417, 5
      %v1420 = vsel %vm1214, %v1415, %v1419
      %v1421 = vshrl.u32 %v1180, 16
      %v1423 = vrot.slane %v1421, 4
      %v1424 = vor.u32 %v1423, %v1419
      %v1425 = vrot.slane %v1424, 4
      %v1427 = vshll.u32 %v1204, 16
      %v1429 = vrot.slane %v1427, 5
      %v1430 = vsel %vm1214, %v1425, %v1429
      %v1432 = vshrl.u32 %v1181, 16
      %v1434 = vrot.slane %v1432, 4
      %v1435 = vshll.u32 %v1181, 16
      %v1437 = vrot.slane %v1435, 5
      %v1438 = vor.u32 %v1434, %v1437
      %v1439 = vrot.slane %v1438, 4
      %v1441 = vshll.u32 %v1182, 16
      %v1443 = vrot.slane %v1441, 5
      %v1444 = vsel %vm1214, %v1439, %v1443
      %v1445 = vshrl.u32 %v1182, 16
      %v1447 = vrot.slane %v1445, 4
      %v1448 = vor.u32 %v1447, %v1443
      %v1449 = vrot.slane %v1448, 4
      %v1451 = vshll.u32 %v1205, 16
      %v1453 = vrot.slane %v1451, 5
      %v1454 = vsel %vm1214, %v1449, %v1453
      %v1456 = vshrl.u32 %v1183, 16
      %v1458 = vrot.slane %v1456, 4
      %v1459 = vshll.u32 %v1183, 16
      %v1461 = vrot.slane %v1459, 5
      %v1462 = vor.u32 %v1458, %v1461
      %v1463 = vrot.slane %v1462, 4
      %v1465 = vshll.u32 %v1184, 16
      %v1467 = vrot.slane %v1465, 5
      %v1468 = vsel %vm1214, %v1463, %v1467
      %v1469 = vshrl.u32 %v1184, 16
      %v1471 = vrot.slane %v1469, 4
      %v1472 = vor.u32 %v1471, %v1467
      %v1473 = vrot.slane %v1472, 4
      %v1475 = vshll.u32 %v1206, 16
      %v1477 = vrot.slane %v1475, 5
      %v1478 = vsel %vm1214, %v1473, %v1477
      %v1480 = vshrl.u32 %v1185, 16
      %v1482 = vrot.slane %v1480, 4
      %v1483 = vshll.u32 %v1185, 16
      %v1485 = vrot.slane %v1483, 5
      %v1486 = vor.u32 %v1482, %v1485
      %v1487 = vrot.slane %v1486, 4
      %v1489 = vshll.u32 %v1186, 16
      %v1491 = vrot.slane %v1489, 5
      %v1492 = vsel %vm1214, %v1487, %v1491
      %v1493 = vshrl.u32 %v1186, 16
      %v1495 = vrot.slane %v1493, 4
      %v1496 = vor.u32 %v1495, %v1491
      %v1497 = vrot.slane %v1496, 4
      %v1499 = vshll.u32 %v1207, 16
      %v1501 = vrot.slane %v1499, 5
      %v1502 = vsel %vm1214, %v1497, %v1501
      %v1504 = vshrl.u32 %v1187, 16
      %v1506 = vrot.slane %v1504, 4
      %v1507 = vshll.u32 %v1187, 16
      %v1509 = vrot.slane %v1507, 5
      %v1510 = vor.u32 %v1506, %v1509
      %v1511 = vrot.slane %v1510, 4
      %v1513 = vshll.u32 %v1188, 16
      %v1515 = vrot.slane %v1513, 5
      %v1516 = vsel %vm1214, %v1511, %v1515
      %v1517 = vshrl.u32 %v1188, 16
      %v1519 = vrot.slane %v1517, 4
      %v1520 = vor.u32 %v1519, %v1515
      %v1521 = vrot.slane %v1520, 4
      %v1523 = vshll.u32 %v1208, 16
      %v1525 = vrot.slane %v1523, 5
      %v1526 = vsel %vm1214, %v1521, %v1525
      %v1528 = vshrl.u32 %v1189, 16
      %v1530 = vrot.slane %v1528, 4
      %v1531 = vshll.u32 %v1189, 16
      %v1533 = vrot.slane %v1531, 5
      %v1534 = vor.u32 %v1530, %v1533
      %v1535 = vrot.slane %v1534, 4
      %v1537 = vshll.u32 %v1190, 16
      %v1539 = vrot.slane %v1537, 5
      %v1540 = vsel %vm1214, %v1535, %v1539
      %v1541 = vshrl.u32 %v1190, 16
      %v1543 = vrot.slane %v1541, 4
      %v1544 = vor.u32 %v1543, %v1539
      %v1545 = vrot.slane %v1544, 4
      %v1547 = vshll.u32 %v1209, 16
      %v1549 = vrot.slane %v1547, 5
      %v1550 = vsel %vm1214, %v1545, %v1549
      %v1552 = vshrl.u32 %v1191, 16
      %v1554 = vrot.slane %v1552, 4
      %v1555 = vshll.u32 %v1191, 16
      %v1557 = vrot.slane %v1555, 5
      %v1558 = vor.u32 %v1554, %v1557
      %v1559 = vrot.slane %v1558, 4
      %v1561 = vshll.u32 %v1192, 16
      %v1563 = vrot.slane %v1561, 5
      %v1564 = vsel %vm1214, %v1559, %v1563
      %v1565 = vshrl.u32 %v1192, 16
      %v1567 = vrot.slane %v1565, 4
      %v1568 = vor.u32 %v1567, %v1563
      %v1569 = vrot.slane %v1568, 4
      %v1571 = vshll.u32 %v1210, 16
      %v1573 = vrot.slane %v1571, 5
      %v1574 = vsel %vm1214, %v1569, %v1573
      %v1576 = vshrl.u32 %v1193, 16
      %v1578 = vrot.slane %v1576, 4
      %v1579 = vshll.u32 %v1193, 16
      %v1581 = vrot.slane %v1579, 5
      %v1582 = vor.u32 %v1578, %v1581
      %v1583 = vrot.slane %v1582, 4
      %v1585 = vshll.u32 %v1194, 16
      %v1587 = vrot.slane %v1585, 5
      %v1588 = vsel %vm1214, %v1583, %v1587
      %v1589 = vshrl.u32 %v1194, 16
      %v1591 = vrot.slane %v1589, 4
      %v1592 = vor.u32 %v1591, %v1587
      %v1593 = vrot.slane %v1592, 4
      %v1595 = vshll.u32 %v1211, 16
      %v1597 = vrot.slane %v1595, 5
      %v1598 = vsel %vm1214, %v1593, %v1597
      %s1599 = scalar_lea.vmem %s3, 4
      %v1600 = vld [vmem:[%s1599] sm:$0xf]
      %v1601 = vunpack.c.l.b16 %v1228
      %v1602 = vunpack.c.l.b16 %v1238
      %v1603 = vunpack.c.l.b16 %v1252
      %v1604 = vunpack.c.l.b16 %v1262
      %v1605 = vunpack.c.l.b16 %v1276
      %v1606 = vunpack.c.l.b16 %v1286
      %v1607 = vunpack.c.l.b16 %v1300
      %v1608 = vunpack.c.l.b16 %v1310
      %v1609 = vunpack.c.l.b16 %v1324
      %v1610 = vunpack.c.l.b16 %v1334
      %v1611 = vunpack.c.l.b16 %v1348
      %v1612 = vunpack.c.l.b16 %v1358
      %v1613 = vunpack.c.l.b16 %v1372
      %v1614 = vunpack.c.l.b16 %v1382
      %v1615 = vunpack.c.l.b16 %v1396
      %v1616 = vunpack.c.l.b16 %v1406
      %v1617 = vunpack.c.l.b16 %v1420
      %v1618 = vunpack.c.l.b16 %v1430
      %v1619 = vunpack.c.l.b16 %v1444
      %v1620 = vunpack.c.l.b16 %v1454
      %v1621 = vunpack.c.l.b16 %v1468
      %v1622 = vunpack.c.l.b16 %v1478
      %v1623 = vunpack.c.l.b16 %v1492
      %v1624 = vunpack.c.l.b16 %v1502
      %v1625 = vunpack.c.l.b16 %v1516
      %v1626 = vunpack.c.l.b16 %v1526
      %v1627 = vunpack.c.l.b16 %v1540
      %v1628 = vunpack.c.l.b16 %v1550
      %v1629 = vunpack.c.l.b16 %v1564
      %v1630 = vunpack.c.l.b16 %v1574
      %v1631 = vunpack.c.l.b16 %v1588
      %v1632 = vunpack.c.l.b16 %v1598
      %v1633 = vpack.c.b16 %v1602, %v1601
      %v1634 = vpack.c.b16 %v1604, %v1603
      %v1635 = vpack.c.b16 %v1606, %v1605
      %v1636 = vpack.c.b16 %v1608, %v1607
      %v1637 = vpack.c.b16 %v1610, %v1609
      %v1638 = vpack.c.b16 %v1612, %v1611
      %v1639 = vpack.c.b16 %v1614, %v1613
      %v1640 = vpack.c.b16 %v1616, %v1615
      %v1641 = vpack.c.b16 %v1618, %v1617
      %v1642 = vpack.c.b16 %v1620, %v1619
      %v1643 = vpack.c.b16 %v1622, %v1621
      %v1644 = vpack.c.b16 %v1624, %v1623
      %v1645 = vpack.c.b16 %v1626, %v1625
      %v1646 = vpack.c.b16 %v1628, %v1627
      %v1647 = vpack.c.b16 %v1630, %v1629
      %v1648 = vpack.c.b16 %v1632, %v1631
      %vm1649 = vcmask 64512
      %v1651 = vsel %vm1649, %v1633, 0
      %v1654 = vsel %vm1649, %v1634, 0
      %v1657 = vsel %vm1649, %v1635, 0
      %v1660 = vsel %vm1649, %v1636, 0
      %v1663 = vsel %vm1649, %v1637, 0
      %v1666 = vsel %vm1649, %v1638, 0
      %v1669 = vsel %vm1649, %v1639, 0
      %v1672 = vsel %vm1649, %v1640, 0
      %v1675 = vsel %vm1649, %v1641, 0
      %v1678 = vsel %vm1649, %v1642, 0
      %v1681 = vsel %vm1649, %v1643, 0
      %v1684 = vsel %vm1649, %v1644, 0
      %v1687 = vsel %vm1649, %v1645, 0
      %v1690 = vsel %vm1649, %v1646, 0
      %v1693 = vsel %vm1649, %v1647, 0
      %v1696 = vsel %vm1649, %v1648, 0
      %vm1698 = vcmask 1043456
      %v1700 = vsel %vm1698, %v1600, 0
      %1702 = vmatprep.subr.bf16.mxu0 0
      %1703 = vmatpush1.bf16.msra.mxu0 %v1700
      %1704 = vmatprep.subr.bf16.mxu0 0
      %1705 = vmatpush1.bf16.msra.mxu0 0
      %1706 = vmatprep.subr.bf16.mxu0 0
      %1707 = vmatpush1.bf16.msra.mxu0 0
      %1708 = vmatprep.subr.bf16.mxu0 0
      %1709 = vmatpush1.bf16.msra.mxu0 0
      %1710 = vmatprep.subr.bf16.mxu0 0
      %1711 = vmatpush1.bf16.msra.mxu0 0
      %1712 = vmatprep.subr.bf16.mxu0 0
      %1713 = vmatpush1.bf16.msra.mxu0 0
      %1714 = vmatprep.subr.bf16.mxu0 0
      %1715 = vmatpush1.bf16.msra.mxu0 0
      %1716 = vmatprep.subr.bf16.mxu0 0
      %1717 = vmatpush1.bf16.msra.mxu0 0
      %1718 = vmatprep.subr.bf16.mxu0 0
      %1719 = vmatpush1.bf16.msra.mxu0 0
      %1720 = vmatprep.subr.bf16.mxu0 0
      %1721 = vmatpush1.bf16.msra.mxu0 0
      %1722 = vmatprep.subr.bf16.mxu0 0
      %1723 = vmatpush1.bf16.msra.mxu0 0
      %1724 = vmatprep.subr.bf16.mxu0 0
      %1725 = vmatpush1.bf16.msra.mxu0 0
      %1726 = vmatprep.subr.bf16.mxu0 0
      %1727 = vmatpush1.bf16.msra.mxu0 0
      %1728 = vmatprep.subr.bf16.mxu0 0
      %1729 = vmatpush1.bf16.msra.mxu0 0
      %1730 = vmatprep.subr.bf16.mxu0 0
      %1731 = vmatpush1.bf16.msra.mxu0 0
      %1732 = vmatprep.subr.bf16.mxu0 0
      %1733 = vmatpush1.bf16.msra.mxu0 0
      %1734 = vmatprep.mubr.bf16.mxu0 0
      %1735 = vmatmul.mubr.bf16.gmra.mrb[0].mxu0 %v1651
      %v1736 = vpop.f32.mrb[0].mxu0
      %v1737 = vadd.f32 0.0, %v1736
      %v1738 = vpop.f32.mrb[0].mxu0
      %v1739 = vpop.f32.mrb[0].mxu0
      %v1740 = vadd.f32 0.0, %v1739
      %v1741 = vpop.f32.mrb[0].mxu0
      %1742 = vmatprep.mubr.bf16.mxu0 0
      %1743 = vmatmul.mubr.bf16.gmra.mrb[0].mxu0 %v1654
      %v1744 = vpop.f32.mrb[0].mxu0
      %v1745 = vadd.f32 0.0, %v1744
      %v1746 = vpop.f32.mrb[0].mxu0
      %v1747 = vpop.f32.mrb[0].mxu0
      %v1748 = vadd.f32 0.0, %v1747
      %v1749 = vpop.f32.mrb[0].mxu0
      %1750 = vmatprep.mubr.bf16.mxu0 0
      %1751 = vmatmul.mubr.bf16.gmra.mrb[0].mxu0 %v1657
      %v1752 = vpop.f32.mrb[0].mxu0
      %v1753 = vadd.f32 0.0, %v1752
      %v1754 = vpop.f32.mrb[0].mxu0
      %v1755 = vpop.f32.mrb[0].mxu0
      %v1756 = vadd.f32 0.0, %v1755
      %v1757 = vpop.f32.mrb[0].mxu0
      %1758 = vmatprep.mubr.bf16.mxu0 0
      %1759 = vmatmul.mubr.bf16.gmra.mrb[0].mxu0 %v1660
      %v1760 = vpop.f32.mrb[0].mxu0
      %v1761 = vadd.f32 0.0, %v1760
      %v1762 = vpop.f32.mrb[0].mxu0
      %v1763 = vpop.f32.mrb[0].mxu0
      %v1764 = vadd.f32 0.0, %v1763
      %v1765 = vpop.f32.mrb[0].mxu0
      %1766 = vmatprep.mubr.bf16.mxu0 0
      %1767 = vmatmul.mubr.bf16.gmra.mrb[0].mxu0 %v1663
      %v1768 = vpop.f32.mrb[0].mxu0
      %v1769 = vadd.f32 0.0, %v1768
      %v1770 = vpop.f32.mrb[0].mxu0
      %v1771 = vpop.f32.mrb[0].mxu0
      %v1772 = vadd.f32 0.0, %v1771
      %v1773 = vpop.f32.mrb[0].mxu0
      %1774 = vmatprep.mubr.bf16.mxu0 0
      %1775 = vmatmul.mubr.bf16.gmra.mrb[0].mxu0 %v1666
      %v1776 = vpop.f32.mrb[0].mxu0
      %v1777 = vadd.f32 0.0, %v1776
      %v1778 = vpop.f32.mrb[0].mxu0
      %v1779 = vpop.f32.mrb[0].mxu0
      %v1780 = vadd.f32 0.0, %v1779
      %v1781 = vpop.f32.mrb[0].mxu0
      %1782 = vmatprep.mubr.bf16.mxu0 0
      %1783 = vmatmul.mubr.bf16.gmra.mrb[0].mxu0 %v1669
      %v1784 = vpop.f32.mrb[0].mxu0
      %v1785 = vadd.f32 0.0, %v1784
      %v1786 = vpop.f32.mrb[0].mxu0
      %v1787 = vpop.f32.mrb[0].mxu0
      %v1788 = vadd.f32 0.0, %v1787
      %v1789 = vpop.f32.mrb[0].mxu0
      %1790 = vmatprep.mubr.bf16.mxu0 0
      %1791 = vmatmul.mubr.bf16.gmra.mrb[0].mxu0 %v1672
      %v1792 = vpop.f32.mrb[0].mxu0
      %v1793 = vadd.f32 0.0, %v1792
      %v1794 = vpop.f32.mrb[0].mxu0
      %v1795 = vpop.f32.mrb[0].mxu0
      %v1796 = vadd.f32 0.0, %v1795
      %v1797 = vpop.f32.mrb[0].mxu0
      %1798 = vmatprep.mubr.bf16.mxu0 0
      %1799 = vmatmul.mubr.bf16.gmra.mrb[0].mxu0 %v1675
      %v1800 = vpop.f32.mrb[0].mxu0
      %v1801 = vadd.f32 0.0, %v1800
      %v1802 = vpop.f32.mrb[0].mxu0
      %v1803 = vpop.f32.mrb[0].mxu0
      %v1804 = vadd.f32 0.0, %v1803
      %v1805 = vpop.f32.mrb[0].mxu0
      %1806 = vmatprep.mubr.bf16.mxu0 0
      %1807 = vmatmul.mubr.bf16.gmra.mrb[0].mxu0 %v1678
      %v1808 = vpop.f32.mrb[0].mxu0
      %v1809 = vadd.f32 0.0, %v1808
      %v1810 = vpop.f32.mrb[0].mxu0
      %v1811 = vpop.f32.mrb[0].mxu0
      %v1812 = vadd.f32 0.0, %v1811
      %v1813 = vpop.f32.mrb[0].mxu0
      %1814 = vmatprep.mubr.bf16.mxu0 0
      %1815 = vmatmul.mubr.bf16.gmra.mrb[0].mxu0 %v1681
      %v1816 = vpop.f32.mrb[0].mxu0
      %v1817 = vadd.f32 0.0, %v1816
      %v1818 = vpop.f32.mrb[0].mxu0
      %v1819 = vpop.f32.mrb[0].mxu0
      %v1820 = vadd.f32 0.0, %v1819
      %v1821 = vpop.f32.mrb[0].mxu0
      %1822 = vmatprep.mubr.bf16.mxu0 0
      %1823 = vmatmul.mubr.bf16.gmra.mrb[0].mxu0 %v1684
      %v1824 = vpop.f32.mrb[0].mxu0
      %v1825 = vadd.f32 0.0, %v1824
      %v1826 = vpop.f32.mrb[0].mxu0
      %v1827 = vpop.f32.mrb[0].mxu0
      %v1828 = vadd.f32 0.0, %v1827
      %v1829 = vpop.f32.mrb[0].mxu0
      %1830 = vmatprep.mubr.bf16.mxu0 0
      %1831 = vmatmul.mubr.bf16.gmra.mrb[0].mxu0 %v1687
      %v1832 = vpop.f32.mrb[0].mxu0
      %v1833 = vadd.f32 0.0, %v1832
      %v1834 = vpop.f32.mrb[0].mxu0
      %v1835 = vpop.f32.mrb[0].mxu0
      %v1836 = vadd.f32 0.0, %v1835
      %v1837 = vpop.f32.mrb[0].mxu0
      %1838 = vmatprep.mubr.bf16.mxu0 0
      %1839 = vmatmul.mubr.bf16.gmra.mrb[0].mxu0 %v1690
      %v1840 = vpop.f32.mrb[0].mxu0
      %v1841 = vadd.f32 0.0, %v1840
      %v1842 = vpop.f32.mrb[0].mxu0
      %v1843 = vpop.f32.mrb[0].mxu0
      %v1844 = vadd.f32 0.0, %v1843
      %v1845 = vpop.f32.mrb[0].mxu0
      %1846 = vmatprep.mubr.bf16.mxu0 0
      %1847 = vmatmul.mubr.bf16.gmra.mrb[0].mxu0 %v1693
      %v1848 = vpop.f32.mrb[0].mxu0
      %v1849 = vadd.f32 0.0, %v1848
      %v1850 = vpop.f32.mrb[0].mxu0
      %v1851 = vpop.f32.mrb[0].mxu0
      %v1852 = vadd.f32 0.0, %v1851
      %v1853 = vpop.f32.mrb[0].mxu0
      %1854 = vmatprep.mubr.bf16.mxu0 0
      %1855 = vmatmul.mubr.bf16.gmra.mrb[0].mxu0 %v1696
      %v1856 = vpop.f32.mrb[0].mxu0
      %v1857 = vadd.f32 0.0, %v1856
      %v1858 = vpop.f32.mrb[0].mxu0
      %v1859 = vpop.f32.mrb[0].mxu0
      %v1860 = vadd.f32 0.0, %v1859
      %v1861 = vpop.f32.mrb[0].mxu0
      %1862 = vdwg.mxu0
      %v1895 = vunpack.c.l.b16 %v1163
      %v1896 = vunpack.c.l.b16 %v1164
      %v1897 = vunpack.c.l.b16 %v1165
      %v1898 = vunpack.c.l.b16 %v1166
      %v1899 = vunpack.c.l.b16 %v1167
      %v1900 = vunpack.c.l.b16 %v1168
      %v1901 = vunpack.c.l.b16 %v1169
      %v1902 = vunpack.c.l.b16 %v1170
      %v1903 = vunpack.c.l.b16 %v1171
      %v1904 = vunpack.c.l.b16 %v1172
      %v1905 = vunpack.c.l.b16 %v1173
      %v1906 = vunpack.c.l.b16 %v1174
      %v1907 = vunpack.c.l.b16 %v1175
      %v1908 = vunpack.c.l.b16 %v1176
      %v1909 = vunpack.c.l.b16 %v1177
      %v1910 = vunpack.c.l.b16 %v1178
      %v1911 = vunpack.c.l.b16 %v1179
      %v1912 = vunpack.c.l.b16 %v1180
      %v1913 = vunpack.c.l.b16 %v1181
      %v1914 = vunpack.c.l.b16 %v1182
      %v1915 = vunpack.c.l.b16 %v1183
      %v1916 = vunpack.c.l.b16 %v1184
      %v1917 = vunpack.c.l.b16 %v1185
      %v1918 = vunpack.c.l.b16 %v1186
      %v1919 = vunpack.c.l.b16 %v1187
      %v1920 = vunpack.c.l.b16 %v1188
      %v1921 = vunpack.c.l.b16 %v1189
      %v1922 = vunpack.c.l.b16 %v1190
      %v1923 = vunpack.c.l.b16 %v1191
      %v1924 = vunpack.c.l.b16 %v1192
      %v1925 = vunpack.c.l.b16 %v1193
      %v1926 = vunpack.c.l.b16 %v1194
      %v1927 = vpack.c.b16 %v1896, %v1895
      %v1928 = vpack.c.b16 %v1898, %v1897
      %v1929 = vpack.c.b16 %v1900, %v1899
      %v1930 = vpack.c.b16 %v1902, %v1901
      %v1931 = vpack.c.b16 %v1904, %v1903
      %v1932 = vpack.c.b16 %v1906, %v1905
      %v1933 = vpack.c.b16 %v1908, %v1907
      %v1934 = vpack.c.b16 %v1910, %v1909
      %v1935 = vpack.c.b16 %v1912, %v1911
      %v1936 = vpack.c.b16 %v1914, %v1913
      %v1937 = vpack.c.b16 %v1916, %v1915
      %v1938 = vpack.c.b16 %v1918, %v1917
      %v1939 = vpack.c.b16 %v1920, %v1919
      %v1940 = vpack.c.b16 %v1922, %v1921
      %v1941 = vpack.c.b16 %v1924, %v1923
      %v1942 = vpack.c.b16 %v1926, %v1925
      %v1944 = vsel %vm1649, %v1927, 0
      %v1947 = vsel %vm1649, %v1928, 0
      %v1950 = vsel %vm1649, %v1929, 0
      %v1953 = vsel %vm1649, %v1930, 0
      %v1956 = vsel %vm1649, %v1931, 0
      %v1959 = vsel %vm1649, %v1932, 0
      %v1962 = vsel %vm1649, %v1933, 0
      %v1965 = vsel %vm1649, %v1934, 0
      %v1968 = vsel %vm1649, %v1935, 0
      %v1971 = vsel %vm1649, %v1936, 0
      %v1974 = vsel %vm1649, %v1937, 0
      %v1977 = vsel %vm1649, %v1938, 0
      %v1980 = vsel %vm1649, %v1939, 0
      %v1983 = vsel %vm1649, %v1940, 0
      %v1986 = vsel %vm1649, %v1941, 0
      %v1989 = vsel %vm1649, %v1942, 0
      %v1992 = vsel %vm1698, %v1195, 0
      %1994 = vmatprep.subr.bf16.mxu0 0
      %1995 = vmatpush1.bf16.msra.mxu0 %v1992
      %1996 = vmatprep.subr.bf16.mxu0 0
      %1997 = vmatpush1.bf16.msra.mxu0 0
      %1998 = vmatprep.subr.bf16.mxu0 0
      %1999 = vmatpush1.bf16.msra.mxu0 0
      %2000 = vmatprep.subr.bf16.mxu0 0
      %2001 = vmatpush1.bf16.msra.mxu0 0
      %2002 = vmatprep.subr.bf16.mxu0 0
      %2003 = vmatpush1.bf16.msra.mxu0 0
      %2004 = vmatprep.subr.bf16.mxu0 0
      %2005 = vmatpush1.bf16.msra.mxu0 0
      %2006 = vmatprep.subr.bf16.mxu0 0
      %2007 = vmatpush1.bf16.msra.mxu0 0
      %2008 = vmatprep.subr.bf16.mxu0 0
      %2009 = vmatpush1.bf16.msra.mxu0 0
      %2010 = vmatprep.subr.bf16.mxu0 0
      %2011 = vmatpush1.bf16.msra.mxu0 0
      %2012 = vmatprep.subr.bf16.mxu0 0
      %2013 = vmatpush1.bf16.msra.mxu0 0
      %2014 = vmatprep.subr.bf16.mxu0 0
      %2015 = vmatpush1.bf16.msra.mxu0 0
      %2016 = vmatprep.subr.bf16.mxu0 0
      %2017 = vmatpush1.bf16.msra.mxu0 0
      %2018 = vmatprep.subr.bf16.mxu0 0
      %2019 = vmatpush1.bf16.msra.mxu0 0
      %2020 = vmatprep.subr.bf16.mxu0 0
      %2021 = vmatpush1.bf16.msra.mxu0 0
      %2022 = vmatprep.subr.bf16.mxu0 0
      %2023 = vmatpush1.bf16.msra.mxu0 0
      %2024 = vmatprep.subr.bf16.mxu0 0
      %2025 = vmatpush1.bf16.msra.mxu0 0
      %2026 = vmatprep.mubr.bf16.mxu0 0
      %2027 = vmatmul.mubr.bf16.gmra.mrb[0].mxu0 %v1944
      %v2028 = vpop.f32.mrb[0].mxu0
      %v2029 = vadd.f32 %v1737, %v2028
      %v2030 = vpop.f32.mrb[0].mxu0
      %v2031 = vpop.f32.mrb[0].mxu0
      %v2032 = vadd.f32 %v1740, %v2031
      %v2033 = vpop.f32.mrb[0].mxu0
      %2034 = vmatprep.mubr.bf16.mxu0 0
      %2035 = vmatmul.mubr.bf16.gmra.mrb[0].mxu0 %v1947
      %v2036 = vpop.f32.mrb[0].mxu0
      %v2037 = vadd.f32 %v1745, %v2036
      %v2038 = vpop.f32.mrb[0].mxu0
      %v2039 = vpop.f32.mrb[0].mxu0
      %v2040 = vadd.f32 %v1748, %v2039
      %v2041 = vpop.f32.mrb[0].mxu0
      %2042 = vmatprep.mubr.bf16.mxu0 0
      %2043 = vmatmul.mubr.bf16.gmra.mrb[0].mxu0 %v1950
      %v2044 = vpop.f32.mrb[0].mxu0
      %v2045 = vadd.f32 %v1753, %v2044
      %v2046 = vpop.f32.mrb[0].mxu0
      %v2047 = vpop.f32.mrb[0].mxu0
      %v2048 = vadd.f32 %v1756, %v2047
      %v2049 = vpop.f32.mrb[0].mxu0
      %2050 = vmatprep.mubr.bf16.mxu0 0
      %2051 = vmatmul.mubr.bf16.gmra.mrb[0].mxu0 %v1953
      %v2052 = vpop.f32.mrb[0].mxu0
      %v2053 = vadd.f32 %v1761, %v2052
      %v2054 = vpop.f32.mrb[0].mxu0
      %v2055 = vpop.f32.mrb[0].mxu0
      %v2056 = vadd.f32 %v1764, %v2055
      %v2057 = vpop.f32.mrb[0].mxu0
      %2058 = vmatprep.mubr.bf16.mxu0 0
      %2059 = vmatmul.mubr.bf16.gmra.mrb[0].mxu0 %v1956
      %v2060 = vpop.f32.mrb[0].mxu0
      %v2061 = vadd.f32 %v1769, %v2060
      %v2062 = vpop.f32.mrb[0].mxu0
      %v2063 = vpop.f32.mrb[0].mxu0
      %v2064 = vadd.f32 %v1772, %v2063
      %v2065 = vpop.f32.mrb[0].mxu0
      %2066 = vmatprep.mubr.bf16.mxu0 0
      %2067 = vmatmul.mubr.bf16.gmra.mrb[0].mxu0 %v1959
      %v2068 = vpop.f32.mrb[0].mxu0
      %v2069 = vadd.f32 %v1777, %v2068
      %v2070 = vpop.f32.mrb[0].mxu0
      %v2071 = vpop.f32.mrb[0].mxu0
      %v2072 = vadd.f32 %v1780, %v2071
      %v2073 = vpop.f32.mrb[0].mxu0
      %2074 = vmatprep.mubr.bf16.mxu0 0
      %2075 = vmatmul.mubr.bf16.gmra.mrb[0].mxu0 %v1962
      %v2076 = vpop.f32.mrb[0].mxu0
      %v2077 = vadd.f32 %v1785, %v2076
      %v2078 = vpop.f32.mrb[0].mxu0
      %v2079 = vpop.f32.mrb[0].mxu0
      %v2080 = vadd.f32 %v1788, %v2079
      %v2081 = vpop.f32.mrb[0].mxu0
      %2082 = vmatprep.mubr.bf16.mxu0 0
      %2083 = vmatmul.mubr.bf16.gmra.mrb[0].mxu0 %v1965
      %v2084 = vpop.f32.mrb[0].mxu0
      %v2085 = vadd.f32 %v1793, %v2084
      %v2086 = vpop.f32.mrb[0].mxu0
      %v2087 = vpop.f32.mrb[0].mxu0
      %v2088 = vadd.f32 %v1796, %v2087
      %v2089 = vpop.f32.mrb[0].mxu0
      %2090 = vmatprep.mubr.bf16.mxu0 0
      %2091 = vmatmul.mubr.bf16.gmra.mrb[0].mxu0 %v1968
      %v2092 = vpop.f32.mrb[0].mxu0
      %v2093 = vadd.f32 %v1801, %v2092
      %v2094 = vpop.f32.mrb[0].mxu0
      %v2095 = vpop.f32.mrb[0].mxu0
      %v2096 = vadd.f32 %v1804, %v2095
      %v2097 = vpop.f32.mrb[0].mxu0
      %2098 = vmatprep.mubr.bf16.mxu0 0
      %2099 = vmatmul.mubr.bf16.gmra.mrb[0].mxu0 %v1971
      %v2100 = vpop.f32.mrb[0].mxu0
      %v2101 = vadd.f32 %v1809, %v2100
      %v2102 = vpop.f32.mrb[0].mxu0
      %v2103 = vpop.f32.mrb[0].mxu0
      %v2104 = vadd.f32 %v1812, %v2103
      %v2105 = vpop.f32.mrb[0].mxu0
      %2106 = vmatprep.mubr.bf16.mxu0 0
      %2107 = vmatmul.mubr.bf16.gmra.mrb[0].mxu0 %v1974
      %v2108 = vpop.f32.mrb[0].mxu0
      %v2109 = vadd.f32 %v1817, %v2108
      %v2110 = vpop.f32.mrb[0].mxu0
      %v2111 = vpop.f32.mrb[0].mxu0
      %v2112 = vadd.f32 %v1820, %v2111
      %v2113 = vpop.f32.mrb[0].mxu0
      %2114 = vmatprep.mubr.bf16.mxu0 0
      %2115 = vmatmul.mubr.bf16.gmra.mrb[0].mxu0 %v1977
      %v2116 = vpop.f32.mrb[0].mxu0
      %v2117 = vadd.f32 %v1825, %v2116
      %v2118 = vpop.f32.mrb[0].mxu0
      %v2119 = vpop.f32.mrb[0].mxu0
      %v2120 = vadd.f32 %v1828, %v2119
      %v2121 = vpop.f32.mrb[0].mxu0
      %2122 = vmatprep.mubr.bf16.mxu0 0
      %2123 = vmatmul.mubr.bf16.gmra.mrb[0].mxu0 %v1980
      %v2124 = vpop.f32.mrb[0].mxu0
      %v2125 = vadd.f32 %v1833, %v2124
      %v2126 = vpop.f32.mrb[0].mxu0
      %v2127 = vpop.f32.mrb[0].mxu0
      %v2128 = vadd.f32 %v1836, %v2127
      %v2129 = vpop.f32.mrb[0].mxu0
      %2130 = vmatprep.mubr.bf16.mxu0 0
      %2131 = vmatmul.mubr.bf16.gmra.mrb[0].mxu0 %v1983
      %v2132 = vpop.f32.mrb[0].mxu0
      %v2133 = vadd.f32 %v1841, %v2132
      %v2134 = vpop.f32.mrb[0].mxu0
      %v2135 = vpop.f32.mrb[0].mxu0
      %v2136 = vadd.f32 %v1844, %v2135
      %v2137 = vpop.f32.mrb[0].mxu0
      %2138 = vmatprep.mubr.bf16.mxu0 0
      %2139 = vmatmul.mubr.bf16.gmra.mrb[0].mxu0 %v1986
      %v2140 = vpop.f32.mrb[0].mxu0
      %v2141 = vadd.f32 %v1849, %v2140
      %v2142 = vpop.f32.mrb[0].mxu0
      %v2143 = vpop.f32.mrb[0].mxu0
      %v2144 = vadd.f32 %v1852, %v2143
      %v2145 = vpop.f32.mrb[0].mxu0
      %2146 = vmatprep.mubr.bf16.mxu0 0
      %2147 = vmatmul.mubr.bf16.gmra.mrb[0].mxu0 %v1989
      %v2148 = vpop.f32.mrb[0].mxu0
      %v2149 = vadd.f32 %v1857, %v2148
      %v2150 = vpop.f32.mrb[0].mxu0
      %v2151 = vpop.f32.mrb[0].mxu0
      %v2152 = vadd.f32 %v1860, %v2151
      %v2153 = vpop.f32.mrb[0].mxu0
      %2154 = vdwg.mxu0
      %v2155 = vld [vmem:[#allocation2] sm:$0xe]
      %v2156 = vld [vmem:[#allocation2 + $0xc] sm:$0xe]
      %v2157 = vld [vmem:[#allocation2 + $0x18] sm:$0xe]
      %v2158 = vld [vmem:[#allocation2 + $0x24] sm:$0xe]
      %v2159 = vld [vmem:[#allocation2 + $0x30] sm:$0xe]
      %v2160 = vld [vmem:[#allocation2 + $0x3c] sm:$0xe]
      %v2161 = vld [vmem:[#allocation2 + $0x48] sm:$0xe]
      %v2162 = vld [vmem:[#allocation2 + $0x54] sm:$0xe]
      %v2163 = vld [vmem:[#allocation2 + $0x60] sm:$0xe]
      %v2164 = vld [vmem:[#allocation2 + $0x6c] sm:$0xe]
      %v2165 = vld [vmem:[#allocation2 + $0x78] sm:$0xe]
      %v2166 = vld [vmem:[#allocation2 + $0x84] sm:$0xe]
      %v2167 = vld [vmem:[#allocation2 + $0x90] sm:$0xe]
      %v2168 = vld [vmem:[#allocation2 + $0x9c] sm:$0xe]
      %v2169 = vld [vmem:[#allocation2 + $0xa8] sm:$0xe]
      %v2170 = vld [vmem:[#allocation2 + $0xb4] sm:$0xe]
      %vm2203 = vcmask 1042432
      %vm2204 = vcmask 1046532
      %vm2205 = vmor %vm2203, %vm2204
      %v2206 = vrot.slane %v2155, 5
      %v2207 = vrot.slane %v2206, 4
      %v2208 = vrot.slane %v1164, 5
      %v2209 = vsel %vm2205, %v2207, %v2208
      %v2210 = vrot.slane %v2208, 4
      %v2211 = vrot.slane %v1196, 5
      %v2212 = vsel %vm2205, %v2210, %v2211
      %v2213 = vrot.slane %v2156, 5
      %v2214 = vrot.slane %v2213, 4
      %v2215 = vrot.slane %v1166, 5
      %v2216 = vsel %vm2205, %v2214, %v2215
      %v2217 = vrot.slane %v2215, 4
      %v2218 = vrot.slane %v1197, 5
      %v2219 = vsel %vm2205, %v2217, %v2218
      %v2220 = vrot.slane %v2157, 5
      %v2221 = vrot.slane %v2220, 4
      %v2222 = vrot.slane %v1168, 5
      %v2223 = vsel %vm2205, %v2221, %v2222
      %v2224 = vrot.slane %v2222, 4
      %v2225 = vrot.slane %v1198, 5
      %v2226 = vsel %vm2205, %v2224, %v2225
      %v2227 = vrot.slane %v2158, 5
      %v2228 = vrot.slane %v2227, 4
      %v2229 = vrot.slane %v1170, 5
      %v2230 = vsel %vm2205, %v2228, %v2229
      %v2231 = vrot.slane %v2229, 4
      %v2232 = vrot.slane %v1199, 5
      %v2233 = vsel %vm2205, %v2231, %v2232
      %v2234 = vrot.slane %v2159, 5
      %v2235 = vrot.slane %v2234, 4
      %v2236 = vrot.slane %v1172, 5
      %v2237 = vsel %vm2205, %v2235, %v2236
      %v2238 = vrot.slane %v2236, 4
      %v2239 = vrot.slane %v1200, 5
      %v2240 = vsel %vm2205, %v2238, %v2239
      %v2241 = vrot.slane %v2160, 5
      %v2242 = vrot.slane %v2241, 4
      %v2243 = vrot.slane %v1174, 5
      %v2244 = vsel %vm2205, %v2242, %v2243
      %v2245 = vrot.slane %v2243, 4
      %v2246 = vrot.slane %v1201, 5
      %v2247 = vsel %vm2205, %v2245, %v2246
      %v2248 = vrot.slane %v2161, 5
      %v2249 = vrot.slane %v2248, 4
      %v2250 = vrot.slane %v1176, 5
      %v2251 = vsel %vm2205, %v2249, %v2250
      %v2252 = vrot.slane %v2250, 4
      %v2253 = vrot.slane %v1202, 5
      %v2254 = vsel %vm2205, %v2252, %v2253
      %v2255 = vrot.slane %v2162, 5
      %v2256 = vrot.slane %v2255, 4
      %v2257 = vrot.slane %v1178, 5
      %v2258 = vsel %vm2205, %v2256, %v2257
      %v2259 = vrot.slane %v2257, 4
      %v2260 = vrot.slane %v1203, 5
      %v2261 = vsel %vm2205, %v2259, %v2260
      %v2262 = vrot.slane %v2163, 5
      %v2263 = vrot.slane %v2262, 4
      %v2264 = vrot.slane %v1180, 5
      %v2265 = vsel %vm2205, %v2263, %v2264
      %v2266 = vrot.slane %v2264, 4
      %v2267 = vrot.slane %v1204, 5
      %v2268 = vsel %vm2205, %v2266, %v2267
      %v2269 = vrot.slane %v2164, 5
      %v2270 = vrot.slane %v2269, 4
      %v2271 = vrot.slane %v1182, 5
      %v2272 = vsel %vm2205, %v2270, %v2271
      %v2273 = vrot.slane %v2271, 4
      %v2274 = vrot.slane %v1205, 5
      %v2275 = vsel %vm2205, %v2273, %v2274
      %v2276 = vrot.slane %v2165, 5
      %v2277 = vrot.slane %v2276, 4
      %v2278 = vrot.slane %v1184, 5
      %v2279 = vsel %vm2205, %v2277, %v2278
      %v2280 = vrot.slane %v2278, 4
      %v2281 = vrot.slane %v1206, 5
      %v2282 = vsel %vm2205, %v2280, %v2281
      %v2283 = vrot.slane %v2166, 5
      %v2284 = vrot.slane %v2283, 4
      %v2285 = vrot.slane %v1186, 5
      %v2286 = vsel %vm2205, %v2284, %v2285
      %v2287 = vrot.slane %v2285, 4
      %v2288 = vrot.slane %v1207, 5
      %v2289 = vsel %vm2205, %v2287, %v2288
      %v2290 = vrot.slane %v2167, 5
      %v2291 = vrot.slane %v2290, 4
      %v2292 = vrot.slane %v1188, 5
      %v2293 = vsel %vm2205, %v2291, %v2292
      %v2294 = vrot.slane %v2292, 4
      %v2295 = vrot.slane %v1208, 5
      %v2296 = vsel %vm2205, %v2294, %v2295
      %v2297 = vrot.slane %v2168, 5
      %v2298 = vrot.slane %v2297, 4
      %v2299 = vrot.slane %v1190, 5
      %v2300 = vsel %vm2205, %v2298, %v2299
      %v2301 = vrot.slane %v2299, 4
      %v2302 = vrot.slane %v1209, 5
      %v2303 = vsel %vm2205, %v2301, %v2302
      %v2304 = vrot.slane %v2169, 5
      %v2305 = vrot.slane %v2304, 4
      %v2306 = vrot.slane %v1192, 5
      %v2307 = vsel %vm2205, %v2305, %v2306
      %v2308 = vrot.slane %v2306, 4
      %v2309 = vrot.slane %v1210, 5
      %v2310 = vsel %vm2205, %v2308, %v2309
      %v2311 = vrot.slane %v2170, 5
      %v2312 = vrot.slane %v2311, 4
      %v2313 = vrot.slane %v1194, 5
      %v2314 = vsel %vm2205, %v2312, %v2313
      %v2315 = vrot.slane %v2313, 4
      %v2316 = vrot.slane %v1211, 5
      %v2317 = vsel %vm2205, %v2315, %v2316
      %s2318 = scalar_lea.vmem %s3, 8
      %v2319 = vld [vmem:[%s2318] sm:$0xf]
      %v2320 = vunpack.c.l.b16 %v2209
      %v2321 = vunpack.c.l.b16 %v2212
      %v2322 = vunpack.c.l.b16 %v2216
      %v2323 = vunpack.c.l.b16 %v2219
      %v2324 = vunpack.c.l.b16 %v2223
      %v2325 = vunpack.c.l.b16 %v2226
      %v2326 = vunpack.c.l.b16 %v2230
      %v2327 = vunpack.c.l.b16 %v2233
      %v2328 = vunpack.c.l.b16 %v2237
      %v2329 = vunpack.c.l.b16 %v2240
      %v2330 = vunpack.c.l.b16 %v2244
      %v2331 = vunpack.c.l.b16 %v2247
      %v2332 = vunpack.c.l.b16 %v2251
      %v2333 = vunpack.c.l.b16 %v2254
      %v2334 = vunpack.c.l.b16 %v2258
      %v2335 = vunpack.c.l.b16 %v2261
      %v2336 = vunpack.c.l.b16 %v2265
      %v2337 = vunpack.c.l.b16 %v2268
      %v2338 = vunpack.c.l.b16 %v2272
      %v2339 = vunpack.c.l.b16 %v2275
      %v2340 = vunpack.c.l.b16 %v2279
      %v2341 = vunpack.c.l.b16 %v2282
      %v2342 = vunpack.c.l.b16 %v2286
      %v2343 = vunpack.c.l.b16 %v2289
      %v2344 = vunpack.c.l.b16 %v2293
      %v2345 = vunpack.c.l.b16 %v2296
      %v2346 = vunpack.c.l.b16 %v2300
      %v2347 = vunpack.c.l.b16 %v2303
      %v2348 = vunpack.c.l.b16 %v2307
      %v2349 = vunpack.c.l.b16 %v2310
      %v2350 = vunpack.c.l.b16 %v2314
      %v2351 = vunpack.c.l.b16 %v2317
      %v2352 = vpack.c.b16 %v2321, %v2320
      %v2353 = vpack.c.b16 %v2323, %v2322
      %v2354 = vpack.c.b16 %v2325, %v2324
      %v2355 = vpack.c.b16 %v2327, %v2326
      %v2356 = vpack.c.b16 %v2329, %v2328
      %v2357 = vpack.c.b16 %v2331, %v2330
      %v2358 = vpack.c.b16 %v2333, %v2332
      %v2359 = vpack.c.b16 %v2335, %v2334
      %v2360 = vpack.c.b16 %v2337, %v2336
      %v2361 = vpack.c.b16 %v2339, %v2338
      %v2362 = vpack.c.b16 %v2341, %v2340
      %v2363 = vpack.c.b16 %v2343, %v2342
      %v2364 = vpack.c.b16 %v2345, %v2344
      %v2365 = vpack.c.b16 %v2347, %v2346
      %v2366 = vpack.c.b16 %v2349, %v2348
      %v2367 = vpack.c.b16 %v2351, %v2350
      %v2369 = vsel %vm1649, %v2352, 0
      %v2372 = vsel %vm1649, %v2353, 0
      %v2375 = vsel %vm1649, %v2354, 0
      %v2378 = vsel %vm1649, %v2355, 0
      %v2381 = vsel %vm1649, %v2356, 0
      %v2384 = vsel %vm1649, %v2357, 0
      %v2387 = vsel %vm1649, %v2358, 0
      %v2390 = vsel %vm1649, %v2359, 0
      %v2393 = vsel %vm1649, %v2360, 0
      %v2396 = vsel %vm1649, %v2361, 0
      %v2399 = vsel %vm1649, %v2362, 0
      %v2402 = vsel %vm1649, %v2363, 0
      %v2405 = vsel %vm1649, %v2364, 0
      %v2408 = vsel %vm1649, %v2365, 0
      %v2411 = vsel %vm1649, %v2366, 0
      %v2414 = vsel %vm1649, %v2367, 0
      %v2417 = vsel %vm1698, %v2319, 0
      %2419 = vmatprep.subr.bf16.mxu0 0
      %2420 = vmatpush1.bf16.msra.mxu0 %v2417
      %2421 = vmatprep.subr.bf16.mxu0 0
      %2422 = vmatpush1.bf16.msra.mxu0 0
      %2423 = vmatprep.subr.bf16.mxu0 0
      %2424 = vmatpush1.bf16.msra.mxu0 0
      %2425 = vmatprep.subr.bf16.mxu0 0
      %2426 = vmatpush1.bf16.msra.mxu0 0
      %2427 = vmatprep.subr.bf16.mxu0 0
      %2428 = vmatpush1.bf16.msra.mxu0 0
      %2429 = vmatprep.subr.bf16.mxu0 0
      %2430 = vmatpush1.bf16.msra.mxu0 0
      %2431 = vmatprep.subr.bf16.mxu0 0
      %2432 = vmatpush1.bf16.msra.mxu0 0
      %2433 = vmatprep.subr.bf16.mxu0 0
      %2434 = vmatpush1.bf16.msra.mxu0 0
      %2435 = vmatprep.subr.bf16.mxu0 0
      %2436 = vmatpush1.bf16.msra.mxu0 0
      %2437 = vmatprep.subr.bf16.mxu0 0
      %2438 = vmatpush1.bf16.msra.mxu0 0
      %2439 = vmatprep.subr.bf16.mxu0 0
      %2440 = vmatpush1.bf16.msra.mxu0 0
      %2441 = vmatprep.subr.bf16.mxu0 0
      %2442 = vmatpush1.bf16.msra.mxu0 0
      %2443 = vmatprep.subr.bf16.mxu0 0
      %2444 = vmatpush1.bf16.msra.mxu0 0
      %2445 = vmatprep.subr.bf16.mxu0 0
      %2446 = vmatpush1.bf16.msra.mxu0 0
      %2447 = vmatprep.subr.bf16.mxu0 0
      %2448 = vmatpush1.bf16.msra.mxu0 0
      %2449 = vmatprep.subr.bf16.mxu0 0
      %2450 = vmatpush1.bf16.msra.mxu0 0
      %2451 = vmatprep.mubr.bf16.mxu0 0
      %2452 = vmatmul.mubr.bf16.gmra.mrb[0].mxu0 %v2369
      %v2453 = vpop.f32.mrb[0].mxu0
      %v2454 = vadd.f32 0.0, %v2453
      %v2455 = vpop.f32.mrb[0].mxu0
      %v2456 = vpop.f32.mrb[0].mxu0
      %v2457 = vadd.f32 0.0, %v2456
      %v2458 = vpop.f32.mrb[0].mxu0
      %2459 = vmatprep.mubr.bf16.mxu0 0
      %2460 = vmatmul.mubr.bf16.gmra.mrb[0].mxu0 %v2372
      %v2461 = vpop.f32.mrb[0].mxu0
      %v2462 = vadd.f32 0.0, %v2461
      %v2463 = vpop.f32.mrb[0].mxu0
      %v2464 = vpop.f32.mrb[0].mxu0
      %v2465 = vadd.f32 0.0, %v2464
      %v2466 = vpop.f32.mrb[0].mxu0
      %2467 = vmatprep.mubr.bf16.mxu0 0
      %2468 = vmatmul.mubr.bf16.gmra.mrb[0].mxu0 %v2375
      %v2469 = vpop.f32.mrb[0].mxu0
      %v2470 = vadd.f32 0.0, %v2469
      %v2471 = vpop.f32.mrb[0].mxu0
      %v2472 = vpop.f32.mrb[0].mxu0
      %v2473 = vadd.f32 0.0, %v2472
      %v2474 = vpop.f32.mrb[0].mxu0
      %2475 = vmatprep.mubr.bf16.mxu0 0
      %2476 = vmatmul.mubr.bf16.gmra.mrb[0].mxu0 %v2378
      %v2477 = vpop.f32.mrb[0].mxu0
      %v2478 = vadd.f32 0.0, %v2477
      %v2479 = vpop.f32.mrb[0].mxu0
      %v2480 = vpop.f32.mrb[0].mxu0
      %v2481 = vadd.f32 0.0, %v2480
      %v2482 = vpop.f32.mrb[0].mxu0
      %2483 = vmatprep.mubr.bf16.mxu0 0
      %2484 = vmatmul.mubr.bf16.gmra.mrb[0].mxu0 %v2381
      %v2485 = vpop.f32.mrb[0].mxu0
      %v2486 = vadd.f32 0.0, %v2485
      %v2487 = vpop.f32.mrb[0].mxu0
      %v2488 = vpop.f32.mrb[0].mxu0
      %v2489 = vadd.f32 0.0, %v2488
      %v2490 = vpop.f32.mrb[0].mxu0
      %2491 = vmatprep.mubr.bf16.mxu0 0
      %2492 = vmatmul.mubr.bf16.gmra.mrb[0].mxu0 %v2384
      %v2493 = vpop.f32.mrb[0].mxu0
      %v2494 = vadd.f32 0.0, %v2493
      %v2495 = vpop.f32.mrb[0].mxu0
      %v2496 = vpop.f32.mrb[0].mxu0
      %v2497 = vadd.f32 0.0, %v2496
      %v2498 = vpop.f32.mrb[0].mxu0
      %2499 = vmatprep.mubr.bf16.mxu0 0
      %2500 = vmatmul.mubr.bf16.gmra.mrb[0].mxu0 %v2387
      %v2501 = vpop.f32.mrb[0].mxu0
      %v2502 = vadd.f32 0.0, %v2501
      %v2503 = vpop.f32.mrb[0].mxu0
      %v2504 = vpop.f32.mrb[0].mxu0
      %v2505 = vadd.f32 0.0, %v2504
      %v2506 = vpop.f32.mrb[0].mxu0
      %2507 = vmatprep.mubr.bf16.mxu0 0
      %2508 = vmatmul.mubr.bf16.gmra.mrb[0].mxu0 %v2390
      %v2509 = vpop.f32.mrb[0].mxu0
      %v2510 = vadd.f32 0.0, %v2509
      %v2511 = vpop.f32.mrb[0].mxu0
      %v2512 = vpop.f32.mrb[0].mxu0
      %v2513 = vadd.f32 0.0, %v2512
      %v2514 = vpop.f32.mrb[0].mxu0
      %2515 = vmatprep.mubr.bf16.mxu0 0
      %2516 = vmatmul.mubr.bf16.gmra.mrb[0].mxu0 %v2393
      %v2517 = vpop.f32.mrb[0].mxu0
      %v2518 = vadd.f32 0.0, %v2517
      %v2519 = vpop.f32.mrb[0].mxu0
      %v2520 = vpop.f32.mrb[0].mxu0
      %v2521 = vadd.f32 0.0, %v2520
      %v2522 = vpop.f32.mrb[0].mxu0
      %2523 = vmatprep.mubr.bf16.mxu0 0
      %2524 = vmatmul.mubr.bf16.gmra.mrb[0].mxu0 %v2396
      %v2525 = vpop.f32.mrb[0].mxu0
      %v2526 = vadd.f32 0.0, %v2525
      %v2527 = vpop.f32.mrb[0].mxu0
      %v2528 = vpop.f32.mrb[0].mxu0
      %v2529 = vadd.f32 0.0, %v2528
      %v2530 = vpop.f32.mrb[0].mxu0
      %2531 = vmatprep.mubr.bf16.mxu0 0
      %2532 = vmatmul.mubr.bf16.gmra.mrb[0].mxu0 %v2399
      %v2533 = vpop.f32.mrb[0].mxu0
      %v2534 = vadd.f32 0.0, %v2533
      %v2535 = vpop.f32.mrb[0].mxu0
      %v2536 = vpop.f32.mrb[0].mxu0
      %v2537 = vadd.f32 0.0, %v2536
      %v2538 = vpop.f32.mrb[0].mxu0
      %2539 = vmatprep.mubr.bf16.mxu0 0
      %2540 = vmatmul.mubr.bf16.gmra.mrb[0].mxu0 %v2402
      %v2541 = vpop.f32.mrb[0].mxu0
      %v2542 = vadd.f32 0.0, %v2541
      %v2543 = vpop.f32.mrb[0].mxu0
      %v2544 = vpop.f32.mrb[0].mxu0
      %v2545 = vadd.f32 0.0, %v2544
      %v2546 = vpop.f32.mrb[0].mxu0
      %2547 = vmatprep.mubr.bf16.mxu0 0
      %2548 = vmatmul.mubr.bf16.gmra.mrb[0].mxu0 %v2405
      %v2549 = vpop.f32.mrb[0].mxu0
      %v2550 = vadd.f32 0.0, %v2549
      %v2551 = vpop.f32.mrb[0].mxu0
      %v2552 = vpop.f32.mrb[0].mxu0
      %v2553 = vadd.f32 0.0, %v2552
      %v2554 = vpop.f32.mrb[0].mxu0
      %2555 = vmatprep.mubr.bf16.mxu0 0
      %2556 = vmatmul.mubr.bf16.gmra.mrb[0].mxu0 %v2408
      %v2557 = vpop.f32.mrb[0].mxu0
      %v2558 = vadd.f32 0.0, %v2557
      %v2559 = vpop.f32.mrb[0].mxu0
      %v2560 = vpop.f32.mrb[0].mxu0
      %v2561 = vadd.f32 0.0, %v2560
      %v2562 = vpop.f32.mrb[0].mxu0
      %2563 = vmatprep.mubr.bf16.mxu0 0
      %2564 = vmatmul.mubr.bf16.gmra.mrb[0].mxu0 %v2411
      %v2565 = vpop.f32.mrb[0].mxu0
      %v2566 = vadd.f32 0.0, %v2565
      %v2567 = vpop.f32.mrb[0].mxu0
      %v2568 = vpop.f32.mrb[0].mxu0
      %v2569 = vadd.f32 0.0, %v2568
      %v2570 = vpop.f32.mrb[0].mxu0
      %2571 = vmatprep.mubr.bf16.mxu0 0
      %2572 = vmatmul.mubr.bf16.gmra.mrb[0].mxu0 %v2414
      %v2573 = vpop.f32.mrb[0].mxu0
      %v2574 = vadd.f32 0.0, %v2573
      %v2575 = vpop.f32.mrb[0].mxu0
      %v2576 = vpop.f32.mrb[0].mxu0
      %v2577 = vadd.f32 0.0, %v2576
      %v2578 = vpop.f32.mrb[0].mxu0
      %2579 = vdwg.mxu0
      %v2580 = vadd.f32 %v2029, %v2454
      %v2581 = vadd.f32 %v2032, %v2457
      %v2582 = vadd.f32 %v2037, %v2462
      %v2583 = vadd.f32 %v2040, %v2465
      %v2584 = vadd.f32 %v2045, %v2470
      %v2585 = vadd.f32 %v2048, %v2473
      %v2586 = vadd.f32 %v2053, %v2478
      %v2587 = vadd.f32 %v2056, %v2481
      %v2588 = vadd.f32 %v2061, %v2486
      %v2589 = vadd.f32 %v2064, %v2489
      %v2590 = vadd.f32 %v2069, %v2494
      %v2591 = vadd.f32 %v2072, %v2497
      %v2592 = vadd.f32 %v2077, %v2502
      %v2593 = vadd.f32 %v2080, %v2505
      %v2594 = vadd.f32 %v2085, %v2510
      %v2595 = vadd.f32 %v2088, %v2513
      %v2596 = vadd.f32 %v2093, %v2518
      %v2597 = vadd.f32 %v2096, %v2521
      %v2598 = vadd.f32 %v2101, %v2526
      %v2599 = vadd.f32 %v2104, %v2529
      %v2600 = vadd.f32 %v2109, %v2534
      %v2601 = vadd.f32 %v2112, %v2537
      %v2602 = vadd.f32 %v2117, %v2542
      %v2603 = vadd.f32 %v2120, %v2545
      %v2604 = vadd.f32 %v2125, %v2550
      %v2605 = vadd.f32 %v2128, %v2553
      %v2606 = vadd.f32 %v2133, %v2558
      %v2607 = vadd.f32 %v2136, %v2561
      %v2608 = vadd.f32 %v2141, %v2566
      %v2609 = vadd.f32 %v2144, %v2569
      %v2610 = vadd.f32 %v2149, %v2574
      %v2611 = vadd.f32 %v2152, %v2577
      %v2612 = vld [vmem:[%s1048] sm:$0xf]
      %v2613 = vld [vmem:[%s1048 + $0x4] sm:$0xf]
      %v2614 = vld [vmem:[%s1048 + $0xc] sm:$0xf]
      %v2615 = vld [vmem:[%s1048 + $0x10] sm:$0xf]
      %v2616 = vld [vmem:[%s1048 + $0x18] sm:$0xf]
      %v2617 = vld [vmem:[%s1048 + $0x1c] sm:$0xf]
      %v2618 = vld [vmem:[%s1048 + $0x24] sm:$0xf]
      %v2619 = vld [vmem:[%s1048 + $0x28] sm:$0xf]
      %v2620 = vld [vmem:[%s1048 + $0x30] sm:$0xf]
      %v2621 = vld [vmem:[%s1048 + $0x34] sm:$0xf]
      %v2622 = vld [vmem:[%s1048 + $0x3c] sm:$0xf]
      %v2623 = vld [vmem:[%s1048 + $0x40] sm:$0xf]
      %v2624 = vld [vmem:[%s1048 + $0x48] sm:$0xf]
      %v2625 = vld [vmem:[%s1048 + $0x4c] sm:$0xf]
      %v2626 = vld [vmem:[%s1048 + $0x54] sm:$0xf]
      %v2627 = vld [vmem:[%s1048 + $0x58] sm:$0xf]
      %v2628 = vld [vmem:[%s1048 + $0x60] sm:$0xf]
      %v2629 = vld [vmem:[%s1048 + $0x64] sm:$0xf]
      %v2630 = vld [vmem:[%s1048 + $0x6c] sm:$0xf]
      %v2631 = vld [vmem:[%s1048 + $0x70] sm:$0xf]
      %v2632 = vld [vmem:[%s1048 + $0x78] sm:$0xf]
      %v2633 = vld [vmem:[%s1048 + $0x7c] sm:$0xf]
      %v2634 = vld [vmem:[%s1048 + $0x84] sm:$0xf]
      %v2635 = vld [vmem:[%s1048 + $0x88] sm:$0xf]
      %v2636 = vld [vmem:[%s1048 + $0x90] sm:$0xf]
      %v2637 = vld [vmem:[%s1048 + $0x94] sm:$0xf]
      %v2638 = vld [vmem:[%s1048 + $0x9c] sm:$0xf]
      %v2639 = vld [vmem:[%s1048 + $0xa0] sm:$0xf]
      %v2640 = vld [vmem:[%s1048 + $0xa8] sm:$0xf]
      %v2641 = vld [vmem:[%s1048 + $0xac] sm:$0xf]
      %v2642 = vld [vmem:[%s1048 + $0xb4] sm:$0xf]
      %v2643 = vld [vmem:[%s1048 + $0xb8] sm:$0xf]
      %s2644 = scalar_lea.vmem %s3, 12
      %v2645 = vld [vmem:[%s2644] sm:$0xf]
      %v2678 = vunpack.c.l.b16 %v2612
      %v2679 = vunpack.c.l.b16 %v2613
      %v2680 = vunpack.c.l.b16 %v2614
      %v2681 = vunpack.c.l.b16 %v2615
      %v2682 = vunpack.c.l.b16 %v2616
      %v2683 = vunpack.c.l.b16 %v2617
      %v2684 = vunpack.c.l.b16 %v2618
      %v2685 = vunpack.c.l.b16 %v2619
      %v2686 = vunpack.c.l.b16 %v2620
      %v2687 = vunpack.c.l.b16 %v2621
      %v2688 = vunpack.c.l.b16 %v2622
      %v2689 = vunpack.c.l.b16 %v2623
      %v2690 = vunpack.c.l.b16 %v2624
      %v2691 = vunpack.c.l.b16 %v2625
      %v2692 = vunpack.c.l.b16 %v2626
      %v2693 = vunpack.c.l.b16 %v2627
      %v2694 = vunpack.c.l.b16 %v2628
      %v2695 = vunpack.c.l.b16 %v2629
      %v2696 = vunpack.c.l.b16 %v2630
      %v2697 = vunpack.c.l.b16 %v2631
      %v2698 = vunpack.c.l.b16 %v2632
      %v2699 = vunpack.c.l.b16 %v2633
      %v2700 = vunpack.c.l.b16 %v2634
      %v2701 = vunpack.c.l.b16 %v2635
      %v2702 = vunpack.c.l.b16 %v2636
      %v2703 = vunpack.c.l.b16 %v2637
      %v2704 = vunpack.c.l.b16 %v2638
      %v2705 = vunpack.c.l.b16 %v2639
      %v2706 = vunpack.c.l.b16 %v2640
      %v2707 = vunpack.c.l.b16 %v2641
      %v2708 = vunpack.c.l.b16 %v2642
      %v2709 = vunpack.c.l.b16 %v2643
      %v2710 = vpack.c.b16 %v2679, %v2678
      %v2711 = vpack.c.b16 %v2681, %v2680
      %v2712 = vpack.c.b16 %v2683, %v2682
      %v2713 = vpack.c.b16 %v2685, %v2684
      %v2714 = vpack.c.b16 %v2687, %v2686
      %v2715 = vpack.c.b16 %v2689, %v2688
      %v2716 = vpack.c.b16 %v2691, %v2690
      %v2717 = vpack.c.b16 %v2693, %v2692
      %v2718 = vpack.c.b16 %v2695, %v2694
      %v2719 = vpack.c.b16 %v2697, %v2696
      %v2720 = vpack.c.b16 %v2699, %v2698
      %v2721 = vpack.c.b16 %v2701, %v2700
      %v2722 = vpack.c.b16 %v2703, %v2702
      %v2723 = vpack.c.b16 %v2705, %v2704
      %v2724 = vpack.c.b16 %v2707, %v2706
      %v2725 = vpack.c.b16 %v2709, %v2708
      %v2727 = vsel %vm1649, %v2710, 0
      %v2730 = vsel %vm1649, %v2711, 0
      %v2733 = vsel %vm1649, %v2712, 0
      %v2736 = vsel %vm1649, %v2713, 0
      %v2739 = vsel %vm1649, %v2714, 0
      %v2742 = vsel %vm1649, %v2715, 0
      %v2745 = vsel %vm1649, %v2716, 0
      %v2748 = vsel %vm1649, %v2717, 0
      %v2751 = vsel %vm1649, %v2718, 0
      %v2754 = vsel %vm1649, %v2719, 0
      %v2757 = vsel %vm1649, %v2720, 0
      %v2760 = vsel %vm1649, %v2721, 0
      %v2763 = vsel %vm1649, %v2722, 0
      %v2766 = vsel %vm1649, %v2723, 0
      %v2769 = vsel %vm1649, %v2724, 0
      %v2772 = vsel %vm1649, %v2725, 0
      %v2775 = vsel %vm1698, %v2645, 0
      %2777 = vmatprep.subr.bf16.mxu0 0
      %2778 = vmatpush1.bf16.msra.mxu0 %v2775
      %2779 = vmatprep.subr.bf16.mxu0 0
      %2780 = vmatpush1.bf16.msra.mxu0 0
      %2781 = vmatprep.subr.bf16.mxu0 0
      %2782 = vmatpush1.bf16.msra.mxu0 0
      %2783 = vmatprep.subr.bf16.mxu0 0
      %2784 = vmatpush1.bf16.msra.mxu0 0
      %2785 = vmatprep.subr.bf16.mxu0 0
      %2786 = vmatpush1.bf16.msra.mxu0 0
      %2787 = vmatprep.subr.bf16.mxu0 0
      %2788 = vmatpush1.bf16.msra.mxu0 0
      %2789 = vmatprep.subr.bf16.mxu0 0
      %2790 = vmatpush1.bf16.msra.mxu0 0
      %2791 = vmatprep.subr.bf16.mxu0 0
      %2792 = vmatpush1.bf16.msra.mxu0 0
      %2793 = vmatprep.subr.bf16.mxu0 0
      %2794 = vmatpush1.bf16.msra.mxu0 0
      %2795 = vmatprep.subr.bf16.mxu0 0
      %2796 = vmatpush1.bf16.msra.mxu0 0
      %2797 = vmatprep.subr.bf16.mxu0 0
      %2798 = vmatpush1.bf16.msra.mxu0 0
      %2799 = vmatprep.subr.bf16.mxu0 0
      %2800 = vmatpush1.bf16.msra.mxu0 0
      %2801 = vmatprep.subr.bf16.mxu0 0
      %2802 = vmatpush1.bf16.msra.mxu0 0
      %2803 = vmatprep.subr.bf16.mxu0 0
      %2804 = vmatpush1.bf16.msra.mxu0 0
      %2805 = vmatprep.subr.bf16.mxu0 0
      %2806 = vmatpush1.bf16.msra.mxu0 0
      %2807 = vmatprep.subr.bf16.mxu0 0
      %2808 = vmatpush1.bf16.msra.mxu0 0
      %2809 = vmatprep.mubr.bf16.mxu0 0
      %2810 = vmatmul.mubr.bf16.gmra.mrb[0].mxu0 %v2727
      %v2811 = vpop.f32.mrb[0].mxu0
      %v2812 = vadd.f32 0.0, %v2811
      %v2813 = vpop.f32.mrb[0].mxu0
      %v2814 = vpop.f32.mrb[0].mxu0
      %v2815 = vadd.f32 0.0, %v2814
      %v2816 = vpop.f32.mrb[0].mxu0
      %2817 = vmatprep.mubr.bf16.mxu0 0
      %2818 = vmatmul.mubr.bf16.gmra.mrb[0].mxu0 %v2730
      %v2819 = vpop.f32.mrb[0].mxu0
      %v2820 = vadd.f32 0.0, %v2819
      %v2821 = vpop.f32.mrb[0].mxu0
      %v2822 = vpop.f32.mrb[0].mxu0
      %v2823 = vadd.f32 0.0, %v2822
      %v2824 = vpop.f32.mrb[0].mxu0
      %2825 = vmatprep.mubr.bf16.mxu0 0
      %2826 = vmatmul.mubr.bf16.gmra.mrb[0].mxu0 %v2733
      %v2827 = vpop.f32.mrb[0].mxu0
      %v2828 = vadd.f32 0.0, %v2827
      %v2829 = vpop.f32.mrb[0].mxu0
      %v2830 = vpop.f32.mrb[0].mxu0
      %v2831 = vadd.f32 0.0, %v2830
      %v2832 = vpop.f32.mrb[0].mxu0
      %2833 = vmatprep.mubr.bf16.mxu0 0
      %2834 = vmatmul.mubr.bf16.gmra.mrb[0].mxu0 %v2736
      %v2835 = vpop.f32.mrb[0].mxu0
      %v2836 = vadd.f32 0.0, %v2835
      %v2837 = vpop.f32.mrb[0].mxu0
      %v2838 = vpop.f32.mrb[0].mxu0
      %v2839 = vadd.f32 0.0, %v2838
      %v2840 = vpop.f32.mrb[0].mxu0
      %2841 = vmatprep.mubr.bf16.mxu0 0
      %2842 = vmatmul.mubr.bf16.gmra.mrb[0].mxu0 %v2739
      %v2843 = vpop.f32.mrb[0].mxu0
      %v2844 = vadd.f32 0.0, %v2843
      %v2845 = vpop.f32.mrb[0].mxu0
      %v2846 = vpop.f32.mrb[0].mxu0
      %v2847 = vadd.f32 0.0, %v2846
      %v2848 = vpop.f32.mrb[0].mxu0
      %2849 = vmatprep.mubr.bf16.mxu0 0
      %2850 = vmatmul.mubr.bf16.gmra.mrb[0].mxu0 %v2742
      %v2851 = vpop.f32.mrb[0].mxu0
      %v2852 = vadd.f32 0.0, %v2851
      %v2853 = vpop.f32.mrb[0].mxu0
      %v2854 = vpop.f32.mrb[0].mxu0
      %v2855 = vadd.f32 0.0, %v2854
      %v2856 = vpop.f32.mrb[0].mxu0
      %2857 = vmatprep.mubr.bf16.mxu0 0
      %2858 = vmatmul.mubr.bf16.gmra.mrb[0].mxu0 %v2745
      %v2859 = vpop.f32.mrb[0].mxu0
      %v2860 = vadd.f32 0.0, %v2859
      %v2861 = vpop.f32.mrb[0].mxu0
      %v2862 = vpop.f32.mrb[0].mxu0
      %v2863 = vadd.f32 0.0, %v2862
      %v2864 = vpop.f32.mrb[0].mxu0
      %2865 = vmatprep.mubr.bf16.mxu0 0
      %2866 = vmatmul.mubr.bf16.gmra.mrb[0].mxu0 %v2748
      %v2867 = vpop.f32.mrb[0].mxu0
      %v2868 = vadd.f32 0.0, %v2867
      %v2869 = vpop.f32.mrb[0].mxu0
      %v2870 = vpop.f32.mrb[0].mxu0
      %v2871 = vadd.f32 0.0, %v2870
      %v2872 = vpop.f32.mrb[0].mxu0
      %2873 = vmatprep.mubr.bf16.mxu0 0
      %2874 = vmatmul.mubr.bf16.gmra.mrb[0].mxu0 %v2751
      %v2875 = vpop.f32.mrb[0].mxu0
      %v2876 = vadd.f32 0.0, %v2875
      %v2877 = vpop.f32.mrb[0].mxu0
      %v2878 = vpop.f32.mrb[0].mxu0
      %v2879 = vadd.f32 0.0, %v2878
      %v2880 = vpop.f32.mrb[0].mxu0
      %2881 = vmatprep.mubr.bf16.mxu0 0
      %2882 = vmatmul.mubr.bf16.gmra.mrb[0].mxu0 %v2754
      %v2883 = vpop.f32.mrb[0].mxu0
      %v2884 = vadd.f32 0.0, %v2883
      %v2885 = vpop.f32.mrb[0].mxu0
      %v2886 = vpop.f32.mrb[0].mxu0
      %v2887 = vadd.f32 0.0, %v2886
      %v2888 = vpop.f32.mrb[0].mxu0
      %2889 = vmatprep.mubr.bf16.mxu0 0
      %2890 = vmatmul.mubr.bf16.gmra.mrb[0].mxu0 %v2757
      %v2891 = vpop.f32.mrb[0].mxu0
      %v2892 = vadd.f32 0.0, %v2891
      %v2893 = vpop.f32.mrb[0].mxu0
      %v2894 = vpop.f32.mrb[0].mxu0
      %v2895 = vadd.f32 0.0, %v2894
      %v2896 = vpop.f32.mrb[0].mxu0
      %2897 = vmatprep.mubr.bf16.mxu0 0
      %2898 = vmatmul.mubr.bf16.gmra.mrb[0].mxu0 %v2760
      %v2899 = vpop.f32.mrb[0].mxu0
      %v2900 = vadd.f32 0.0, %v2899
      %v2901 = vpop.f32.mrb[0].mxu0
      %v2902 = vpop.f32.mrb[0].mxu0
      %v2903 = vadd.f32 0.0, %v2902
      %v2904 = vpop.f32.mrb[0].mxu0
      %2905 = vmatprep.mubr.bf16.mxu0 0
      %2906 = vmatmul.mubr.bf16.gmra.mrb[0].mxu0 %v2763
      %v2907 = vpop.f32.mrb[0].mxu0
      %v2908 = vadd.f32 0.0, %v2907
      %v2909 = vpop.f32.mrb[0].mxu0
      %v2910 = vpop.f32.mrb[0].mxu0
      %v2911 = vadd.f32 0.0, %v2910
      %v2912 = vpop.f32.mrb[0].mxu0
      %2913 = vmatprep.mubr.bf16.mxu0 0
      %2914 = vmatmul.mubr.bf16.gmra.mrb[0].mxu0 %v2766
      %v2915 = vpop.f32.mrb[0].mxu0
      %v2916 = vadd.f32 0.0, %v2915
      %v2917 = vpop.f32.mrb[0].mxu0
      %v2918 = vpop.f32.mrb[0].mxu0
      %v2919 = vadd.f32 0.0, %v2918
      %v2920 = vpop.f32.mrb[0].mxu0
      %2921 = vmatprep.mubr.bf16.mxu0 0
      %2922 = vmatmul.mubr.bf16.gmra.mrb[0].mxu0 %v2769
      %v2923 = vpop.f32.mrb[0].mxu0
      %v2924 = vadd.f32 0.0, %v2923
      %v2925 = vpop.f32.mrb[0].mxu0
      %v2926 = vpop.f32.mrb[0].mxu0
      %v2927 = vadd.f32 0.0, %v2926
      %v2928 = vpop.f32.mrb[0].mxu0
      %2929 = vmatprep.mubr.bf16.mxu0 0
      %2930 = vmatmul.mubr.bf16.gmra.mrb[0].mxu0 %v2772
      %v2931 = vpop.f32.mrb[0].mxu0
      %v2932 = vadd.f32 0.0, %v2931
      %v2933 = vpop.f32.mrb[0].mxu0
      %v2934 = vpop.f32.mrb[0].mxu0
      %v2935 = vadd.f32 0.0, %v2934
      %v2936 = vpop.f32.mrb[0].mxu0
      %2937 = vdwg.mxu0
      %v2938 = vadd.f32 %v2580, %v2812
      %v2939 = vadd.f32 %v2581, %v2815
      %v2940 = vadd.f32 %v2582, %v2820
      %v2941 = vadd.f32 %v2583, %v2823
      %v2942 = vadd.f32 %v2584, %v2828
      %v2943 = vadd.f32 %v2585, %v2831
      %v2944 = vadd.f32 %v2586, %v2836
      %v2945 = vadd.f32 %v2587, %v2839
      %v2946 = vadd.f32 %v2588, %v2844
      %v2947 = vadd.f32 %v2589, %v2847
      %v2948 = vadd.f32 %v2590, %v2852
      %v2949 = vadd.f32 %v2591, %v2855
      %v2950 = vadd.f32 %v2592, %v2860
      %v2951 = vadd.f32 %v2593, %v2863
      %v2952 = vadd.f32 %v2594, %v2868
      %v2953 = vadd.f32 %v2595, %v2871
      %v2954 = vadd.f32 %v2596, %v2876
      %v2955 = vadd.f32 %v2597, %v2879
      %v2956 = vadd.f32 %v2598, %v2884
      %v2957 = vadd.f32 %v2599, %v2887
      %v2958 = vadd.f32 %v2600, %v2892
      %v2959 = vadd.f32 %v2601, %v2895
      %v2960 = vadd.f32 %v2602, %v2900
      %v2961 = vadd.f32 %v2603, %v2903
      %v2962 = vadd.f32 %v2604, %v2908
      %v2963 = vadd.f32 %v2605, %v2911
      %v2964 = vadd.f32 %v2606, %v2916
      %v2965 = vadd.f32 %v2607, %v2919
      %v2966 = vadd.f32 %v2608, %v2924
      %v2967 = vadd.f32 %v2609, %v2927
      %v2968 = vadd.f32 %v2610, %v2932
      %v2969 = vadd.f32 %v2611, %v2935
      %v2970 = vld [vmem:[%s1048] sm:$0xf]
      %v2971 = vld [vmem:[%s1048 + $0x4] sm:$0xf]
      %v2972 = vld [vmem:[%s1048 + $0x8] sm:$0x1]
      %v2973 = vld [vmem:[%s1048 + $0xc] sm:$0xf]
      %v2974 = vld [vmem:[%s1048 + $0x10] sm:$0xf]
      %v2975 = vld [vmem:[%s1048 + $0x14] sm:$0x1]
      %v2976 = vld [vmem:[%s1048 + $0x18] sm:$0xf]
      %v2977 = vld [vmem:[%s1048 + $0x1c] sm:$0xf]
      %v2978 = vld [vmem:[%s1048 + $0x20] sm:$0x1]
      %v2979 = vld [vmem:[%s1048 + $0x24] sm:$0xf]
      %v2980 = vld [vmem:[%s1048 + $0x28] sm:$0xf]
      %v2981 = vld [vmem:[%s1048 + $0x2c] sm:$0x1]
      %v2982 = vld [vmem:[%s1048 + $0x30] sm:$0xf]
      %v2983 = vld [vmem:[%s1048 + $0x34] sm:$0xf]
      %v2984 = vld [vmem:[%s1048 + $0x38] sm:$0x1]
      %v2985 = vld [vmem:[%s1048 + $0x3c] sm:$0xf]
      %v2986 = vld [vmem:[%s1048 + $0x40] sm:$0xf]
      %v2987 = vld [vmem:[%s1048 + $0x44] sm:$0x1]
      %v2988 = vld [vmem:[%s1048 + $0x48] sm:$0xf]
      %v2989 = vld [vmem:[%s1048 + $0x4c] sm:$0xf]
      %v2990 = vld [vmem:[%s1048 + $0x50] sm:$0x1]
      %v2991 = vld [vmem:[%s1048 + $0x54] sm:$0xf]
      %v2992 = vld [vmem:[%s1048 + $0x58] sm:$0xf]
      %v2993 = vld [vmem:[%s1048 + $0x5c] sm:$0x1]
      %v2994 = vld [vmem:[%s1048 + $0x60] sm:$0xf]
      %v2995 = vld [vmem:[%s1048 + $0x64] sm:$0xf]
      %v2996 = vld [vmem:[%s1048 + $0x68] sm:$0x1]
      %v2997 = vld [vmem:[%s1048 + $0x6c] sm:$0xf]
      %v2998 = vld [vmem:[%s1048 + $0x70] sm:$0xf]
      %v2999 = vld [vmem:[%s1048 + $0x74] sm:$0x1]
      %v3000 = vld [vmem:[%s1048 + $0x78] sm:$0xf]
      %v3001 = vld [vmem:[%s1048 + $0x7c] sm:$0xf]
      %v3002 = vld [vmem:[%s1048 + $0x80] sm:$0x1]
      %v3003 = vld [vmem:[%s1048 + $0x84] sm:$0xf]
      %v3004 = vld [vmem:[%s1048 + $0x88] sm:$0xf]
      %v3005 = vld [vmem:[%s1048 + $0x8c] sm:$0x1]
      %v3006 = vld [vmem:[%s1048 + $0x90] sm:$0xf]
      %v3007 = vld [vmem:[%s1048 + $0x94] sm:$0xf]
      %v3008 = vld [vmem:[%s1048 + $0x98] sm:$0x1]
      %v3009 = vld [vmem:[%s1048 + $0x9c] sm:$0xf]
      %v3010 = vld [vmem:[%s1048 + $0xa0] sm:$0xf]
      %v3011 = vld [vmem:[%s1048 + $0xa4] sm:$0x1]
      %v3012 = vld [vmem:[%s1048 + $0xa8] sm:$0xf]
      %v3013 = vld [vmem:[%s1048 + $0xac] sm:$0xf]
      %v3014 = vld [vmem:[%s1048 + $0xb0] sm:$0x1]
      %v3015 = vld [vmem:[%s1048 + $0xb4] sm:$0xf]
      %v3016 = vld [vmem:[%s1048 + $0xb8] sm:$0xf]
      %v3017 = vld [vmem:[%s1048 + $0xbc] sm:$0x1]
      %v3019 = vshrl.u32 %v2970, 16
      %v3021 = vrot.slane %v3019, 4
      %v3022 = vshll.u32 %v2970, 16
      %v3024 = vrot.slane %v3022, 5
      %v3025 = vor.u32 %v3021, %v3024
      %v3026 = vrot.slane %v3025, 4
      %v3028 = vshll.u32 %v2971, 16
      %v3030 = vrot.slane %v3028, 5
      %v3031 = vsel %vm1214, %v3026, %v3030
      %v3032 = vshrl.u32 %v2971, 16
      %v3034 = vrot.slane %v3032, 4
      %v3035 = vor.u32 %v3034, %v3030
      %v3036 = vrot.slane %v3035, 4
      %v3038 = vshll.u32 %v2972, 16
      %v3040 = vrot.slane %v3038, 5
      %v3041 = vsel %vm1214, %v3036, %v3040
      %v3043 = vshrl.u32 %v2973, 16
      %v3045 = vrot.slane %v3043, 4
      %v3046 = vshll.u32 %v2973, 16
      %v3048 = vrot.slane %v3046, 5
      %v3049 = vor.u32 %v3045, %v3048
      %v3050 = vrot.slane %v3049, 4
      %v3052 = vshll.u32 %v2974, 16
      %v3054 = vrot.slane %v3052, 5
      %v3055 = vsel %vm1214, %v3050, %v3054
      %v3056 = vshrl.u32 %v2974, 16
      %v3058 = vrot.slane %v3056, 4
      %v3059 = vor.u32 %v3058, %v3054
      %v3060 = vrot.slane %v3059, 4
      %v3062 = vshll.u32 %v2975, 16
      %v3064 = vrot.slane %v3062, 5
      %v3065 = vsel %vm1214, %v3060, %v3064
      %v3067 = vshrl.u32 %v2976, 16
      %v3069 = vrot.slane %v3067, 4
      %v3070 = vshll.u32 %v2976, 16
      %v3072 = vrot.slane %v3070, 5
      %v3073 = vor.u32 %v3069, %v3072
      %v3074 = vrot.slane %v3073, 4
      %v3076 = vshll.u32 %v2977, 16
      %v3078 = vrot.slane %v3076, 5
      %v3079 = vsel %vm1214, %v3074, %v3078
      %v3080 = vshrl.u32 %v2977, 16
      %v3082 = vrot.slane %v3080, 4
      %v3083 = vor.u32 %v3082, %v3078
      %v3084 = vrot.slane %v3083, 4
      %v3086 = vshll.u32 %v2978, 16
      %v3088 = vrot.slane %v3086, 5
      %v3089 = vsel %vm1214, %v3084, %v3088
      %v3091 = vshrl.u32 %v2979, 16
      %v3093 = vrot.slane %v3091, 4
      %v3094 = vshll.u32 %v2979, 16
      %v3096 = vrot.slane %v3094, 5
      %v3097 = vor.u32 %v3093, %v3096
      %v3098 = vrot.slane %v3097, 4
      %v3100 = vshll.u32 %v2980, 16
      %v3102 = vrot.slane %v3100, 5
      %v3103 = vsel %vm1214, %v3098, %v3102
      %v3104 = vshrl.u32 %v2980, 16
      %v3106 = vrot.slane %v3104, 4
      %v3107 = vor.u32 %v3106, %v3102
      %v3108 = vrot.slane %v3107, 4
      %v3110 = vshll.u32 %v2981, 16
      %v3112 = vrot.slane %v3110, 5
      %v3113 = vsel %vm1214, %v3108, %v3112
      %v3115 = vshrl.u32 %v2982, 16
      %v3117 = vrot.slane %v3115, 4
      %v3118 = vshll.u32 %v2982, 16
      %v3120 = vrot.slane %v3118, 5
      %v3121 = vor.u32 %v3117, %v3120
      %v3122 = vrot.slane %v3121, 4
      %v3124 = vshll.u32 %v2983, 16
      %v3126 = vrot.slane %v3124, 5
      %v3127 = vsel %vm1214, %v3122, %v3126
      %v3128 = vshrl.u32 %v2983, 16
      %v3130 = vrot.slane %v3128, 4
      %v3131 = vor.u32 %v3130, %v3126
      %v3132 = vrot.slane %v3131, 4
      %v3134 = vshll.u32 %v2984, 16
      %v3136 = vrot.slane %v3134, 5
      %v3137 = vsel %vm1214, %v3132, %v3136
      %v3139 = vshrl.u32 %v2985, 16
      %v3141 = vrot.slane %v3139, 4
      %v3142 = vshll.u32 %v2985, 16
      %v3144 = vrot.slane %v3142, 5
      %v3145 = vor.u32 %v3141, %v3144
      %v3146 = vrot.slane %v3145, 4
      %v3148 = vshll.u32 %v2986, 16
      %v3150 = vrot.slane %v3148, 5
      %v3151 = vsel %vm1214, %v3146, %v3150
      %v3152 = vshrl.u32 %v2986, 16
      %v3154 = vrot.slane %v3152, 4
      %v3155 = vor.u32 %v3154, %v3150
      %v3156 = vrot.slane %v3155, 4
      %v3158 = vshll.u32 %v2987, 16
      %v3160 = vrot.slane %v3158, 5
      %v3161 = vsel %vm1214, %v3156, %v3160
      %v3163 = vshrl.u32 %v2988, 16
      %v3165 = vrot.slane %v3163, 4
      %v3166 = vshll.u32 %v2988, 16
      %v3168 = vrot.slane %v3166, 5
      %v3169 = vor.u32 %v3165, %v3168
      %v3170 = vrot.slane %v3169, 4
      %v3172 = vshll.u32 %v2989, 16
      %v3174 = vrot.slane %v3172, 5
      %v3175 = vsel %vm1214, %v3170, %v3174
      %v3176 = vshrl.u32 %v2989, 16
      %v3178 = vrot.slane %v3176, 4
      %v3179 = vor.u32 %v3178, %v3174
      %v3180 = vrot.slane %v3179, 4
      %v3182 = vshll.u32 %v2990, 16
      %v3184 = vrot.slane %v3182, 5
      %v3185 = vsel %vm1214, %v3180, %v3184
      %v3187 = vshrl.u32 %v2991, 16
      %v3189 = vrot.slane %v3187, 4
      %v3190 = vshll.u32 %v2991, 16
      %v3192 = vrot.slane %v3190, 5
      %v3193 = vor.u32 %v3189, %v3192
      %v3194 = vrot.slane %v3193, 4
      %v3196 = vshll.u32 %v2992, 16
      %v3198 = vrot.slane %v3196, 5
      %v3199 = vsel %vm1214, %v3194, %v3198
      %v3200 = vshrl.u32 %v2992, 16
      %v3202 = vrot.slane %v3200, 4
      %v3203 = vor.u32 %v3202, %v3198
      %v3204 = vrot.slane %v3203, 4
      %v3206 = vshll.u32 %v2993, 16
      %v3208 = vrot.slane %v3206, 5
      %v3209 = vsel %vm1214, %v3204, %v3208
      %v3211 = vshrl.u32 %v2994, 16
      %v3213 = vrot.slane %v3211, 4
      %v3214 = vshll.u32 %v2994, 16
      %v3216 = vrot.slane %v3214, 5
      %v3217 = vor.u32 %v3213, %v3216
      %v3218 = vrot.slane %v3217, 4
      %v3220 = vshll.u32 %v2995, 16
      %v3222 = vrot.slane %v3220, 5
      %v3223 = vsel %vm1214, %v3218, %v3222
      %v3224 = vshrl.u32 %v2995, 16
      %v3226 = vrot.slane %v3224, 4
      %v3227 = vor.u32 %v3226, %v3222
      %v3228 = vrot.slane %v3227, 4
      %v3230 = vshll.u32 %v2996, 16
      %v3232 = vrot.slane %v3230, 5
      %v3233 = vsel %vm1214, %v3228, %v3232
      %v3235 = vshrl.u32 %v2997, 16
      %v3237 = vrot.slane %v3235, 4
      %v3238 = vshll.u32 %v2997, 16
      %v3240 = vrot.slane %v3238, 5
      %v3241 = vor.u32 %v3237, %v3240
      %v3242 = vrot.slane %v3241, 4
      %v3244 = vshll.u32 %v2998, 16
      %v3246 = vrot.slane %v3244, 5
      %v3247 = vsel %vm1214, %v3242, %v3246
      %v3248 = vshrl.u32 %v2998, 16
      %v3250 = vrot.slane %v3248, 4
      %v3251 = vor.u32 %v3250, %v3246
      %v3252 = vrot.slane %v3251, 4
      %v3254 = vshll.u32 %v2999, 16
      %v3256 = vrot.slane %v3254, 5
      %v3257 = vsel %vm1214, %v3252, %v3256
      %v3259 = vshrl.u32 %v3000, 16
      %v3261 = vrot.slane %v3259, 4
      %v3262 = vshll.u32 %v3000, 16
      %v3264 = vrot.slane %v3262, 5
      %v3265 = vor.u32 %v3261, %v3264
      %v3266 = vrot.slane %v3265, 4
      %v3268 = vshll.u32 %v3001, 16
      %v3270 = vrot.slane %v3268, 5
      %v3271 = vsel %vm1214, %v3266, %v3270
      %v3272 = vshrl.u32 %v3001, 16
      %v3274 = vrot.slane %v3272, 4
      %v3275 = vor.u32 %v3274, %v3270
      %v3276 = vrot.slane %v3275, 4
      %v3278 = vshll.u32 %v3002, 16
      %v3280 = vrot.slane %v3278, 5
      %v3281 = vsel %vm1214, %v3276, %v3280
      %v3283 = vshrl.u32 %v3003, 16
      %v3285 = vrot.slane %v3283, 4
      %v3286 = vshll.u32 %v3003, 16
      %v3288 = vrot.slane %v3286, 5
      %v3289 = vor.u32 %v3285, %v3288
      %v3290 = vrot.slane %v3289, 4
      %v3292 = vshll.u32 %v3004, 16
      %v3294 = vrot.slane %v3292, 5
      %v3295 = vsel %vm1214, %v3290, %v3294
      %v3296 = vshrl.u32 %v3004, 16
      %v3298 = vrot.slane %v3296, 4
      %v3299 = vor.u32 %v3298, %v3294
      %v3300 = vrot.slane %v3299, 4
      %v3302 = vshll.u32 %v3005, 16
      %v3304 = vrot.slane %v3302, 5
      %v3305 = vsel %vm1214, %v3300, %v3304
      %v3307 = vshrl.u32 %v3006, 16
      %v3309 = vrot.slane %v3307, 4
      %v3310 = vshll.u32 %v3006, 16
      %v3312 = vrot.slane %v3310, 5
      %v3313 = vor.u32 %v3309, %v3312
      %v3314 = vrot.slane %v3313, 4
      %v3316 = vshll.u32 %v3007, 16
      %v3318 = vrot.slane %v3316, 5
      %v3319 = vsel %vm1214, %v3314, %v3318
      %v3320 = vshrl.u32 %v3007, 16
      %v3322 = vrot.slane %v3320, 4
      %v3323 = vor.u32 %v3322, %v3318
      %v3324 = vrot.slane %v3323, 4
      %v3326 = vshll.u32 %v3008, 16
      %v3328 = vrot.slane %v3326, 5
      %v3329 = vsel %vm1214, %v3324, %v3328
      %v3331 = vshrl.u32 %v3009, 16
      %v3333 = vrot.slane %v3331, 4
      %v3334 = vshll.u32 %v3009, 16
      %v3336 = vrot.slane %v3334, 5
      %v3337 = vor.u32 %v3333, %v3336
      %v3338 = vrot.slane %v3337, 4
      %v3340 = vshll.u32 %v3010, 16
      %v3342 = vrot.slane %v3340, 5
      %v3343 = vsel %vm1214, %v3338, %v3342
      %v3344 = vshrl.u32 %v3010, 16
      %v3346 = vrot.slane %v3344, 4
      %v3347 = vor.u32 %v3346, %v3342
      %v3348 = vrot.slane %v3347, 4
      %v3350 = vshll.u32 %v3011, 16
      %v3352 = vrot.slane %v3350, 5
      %v3353 = vsel %vm1214, %v3348, %v3352
      %v3355 = vshrl.u32 %v3012, 16
      %v3357 = vrot.slane %v3355, 4
      %v3358 = vshll.u32 %v3012, 16
      %v3360 = vrot.slane %v3358, 5
      %v3361 = vor.u32 %v3357, %v3360
      %v3362 = vrot.slane %v3361, 4
      %v3364 = vshll.u32 %v3013, 16
      %v3366 = vrot.slane %v3364, 5
      %v3367 = vsel %vm1214, %v3362, %v3366
      %v3368 = vshrl.u32 %v3013, 16
      %v3370 = vrot.slane %v3368, 4
      %v3371 = vor.u32 %v3370, %v3366
      %v3372 = vrot.slane %v3371, 4
      %v3374 = vshll.u32 %v3014, 16
      %v3376 = vrot.slane %v3374, 5
      %v3377 = vsel %vm1214, %v3372, %v3376
      %v3379 = vshrl.u32 %v3015, 16
      %v3381 = vrot.slane %v3379, 4
      %v3382 = vshll.u32 %v3015, 16
      %v3384 = vrot.slane %v3382, 5
      %v3385 = vor.u32 %v3381, %v3384
      %v3386 = vrot.slane %v3385, 4
      %v3388 = vshll.u32 %v3016, 16
      %v3390 = vrot.slane %v3388, 5
      %v3391 = vsel %vm1214, %v3386, %v3390
      %v3392 = vshrl.u32 %v3016, 16
      %v3394 = vrot.slane %v3392, 4
      %v3395 = vor.u32 %v3394, %v3390
      %v3396 = vrot.slane %v3395, 4
      %v3398 = vshll.u32 %v3017, 16
      %v3400 = vrot.slane %v3398, 5
      %v3401 = vsel %vm1214, %v3396, %v3400
      %s3402 = scalar_lea.vmem %s3, 16
      %v3403 = vld [vmem:[%s3402] sm:$0xf]
      %v3404 = vunpack.c.l.b16 %v3031
      %v3405 = vunpack.c.l.b16 %v3041
      %v3406 = vunpack.c.l.b16 %v3055
      %v3407 = vunpack.c.l.b16 %v3065
      %v3408 = vunpack.c.l.b16 %v3079
      %v3409 = vunpack.c.l.b16 %v3089
      %v3410 = vunpack.c.l.b16 %v3103
      %v3411 = vunpack.c.l.b16 %v3113
      %v3412 = vunpack.c.l.b16 %v3127
      %v3413 = vunpack.c.l.b16 %v3137
      %v3414 = vunpack.c.l.b16 %v3151
      %v3415 = vunpack.c.l.b16 %v3161
      %v3416 = vunpack.c.l.b16 %v3175
      %v3417 = vunpack.c.l.b16 %v3185
      %v3418 = vunpack.c.l.b16 %v3199
      %v3419 = vunpack.c.l.b16 %v3209
      %v3420 = vunpack.c.l.b16 %v3223
      %v3421 = vunpack.c.l.b16 %v3233
      %v3422 = vunpack.c.l.b16 %v3247
      %v3423 = vunpack.c.l.b16 %v3257
      %v3424 = vunpack.c.l.b16 %v3271
      %v3425 = vunpack.c.l.b16 %v3281
      %v3426 = vunpack.c.l.b16 %v3295
      %v3427 = vunpack.c.l.b16 %v3305
      %v3428 = vunpack.c.l.b16 %v3319
      %v3429 = vunpack.c.l.b16 %v3329
      %v3430 = vunpack.c.l.b16 %v3343
      %v3431 = vunpack.c.l.b16 %v3353
      %v3432 = vunpack.c.l.b16 %v3367
      %v3433 = vunpack.c.l.b16 %v3377
      %v3434 = vunpack.c.l.b16 %v3391
      %v3435 = vunpack.c.l.b16 %v3401
      %v3436 = vpack.c.b16 %v3405, %v3404
      %v3437 = vpack.c.b16 %v3407, %v3406
      %v3438 = vpack.c.b16 %v3409, %v3408
      %v3439 = vpack.c.b16 %v3411, %v3410
      %v3440 = vpack.c.b16 %v3413, %v3412
      %v3441 = vpack.c.b16 %v3415, %v3414
      %v3442 = vpack.c.b16 %v3417, %v3416
      %v3443 = vpack.c.b16 %v3419, %v3418
      %v3444 = vpack.c.b16 %v3421, %v3420
      %v3445 = vpack.c.b16 %v3423, %v3422
      %v3446 = vpack.c.b16 %v3425, %v3424
      %v3447 = vpack.c.b16 %v3427, %v3426
      %v3448 = vpack.c.b16 %v3429, %v3428
      %v3449 = vpack.c.b16 %v3431, %v3430
      %v3450 = vpack.c.b16 %v3433, %v3432
      %v3451 = vpack.c.b16 %v3435, %v3434
      %v3453 = vsel %vm1649, %v3436, 0
      %v3456 = vsel %vm1649, %v3437, 0
      %v3459 = vsel %vm1649, %v3438, 0
      %v3462 = vsel %vm1649, %v3439, 0
      %v3465 = vsel %vm1649, %v3440, 0
      %v3468 = vsel %vm1649, %v3441, 0
      %v3471 = vsel %vm1649, %v3442, 0
      %v3474 = vsel %vm1649, %v3443, 0
      %v3477 = vsel %vm1649, %v3444, 0
      %v3480 = vsel %vm1649, %v3445, 0
      %v3483 = vsel %vm1649, %v3446, 0
      %v3486 = vsel %vm1649, %v3447, 0
      %v3489 = vsel %vm1649, %v3448, 0
      %v3492 = vsel %vm1649, %v3449, 0
      %v3495 = vsel %vm1649, %v3450, 0
      %v3498 = vsel %vm1649, %v3451, 0
      %v3501 = vsel %vm1698, %v3403, 0
      %3503 = vmatprep.subr.bf16.mxu0 0
      %3504 = vmatpush1.bf16.msra.mxu0 %v3501
      %3505 = vmatprep.subr.bf16.mxu0 0
      %3506 = vmatpush1.bf16.msra.mxu0 0
      %3507 = vmatprep.subr.bf16.mxu0 0
      %3508 = vmatpush1.bf16.msra.mxu0 0
      %3509 = vmatprep.subr.bf16.mxu0 0
      %3510 = vmatpush1.bf16.msra.mxu0 0
      %3511 = vmatprep.subr.bf16.mxu0 0
      %3512 = vmatpush1.bf16.msra.mxu0 0
      %3513 = vmatprep.subr.bf16.mxu0 0
      %3514 = vmatpush1.bf16.msra.mxu0 0
      %3515 = vmatprep.subr.bf16.mxu0 0
      %3516 = vmatpush1.bf16.msra.mxu0 0
      %3517 = vmatprep.subr.bf16.mxu0 0
      %3518 = vmatpush1.bf16.msra.mxu0 0
      %3519 = vmatprep.subr.bf16.mxu0 0
      %3520 = vmatpush1.bf16.msra.mxu0 0
      %3521 = vmatprep.subr.bf16.mxu0 0
      %3522 = vmatpush1.bf16.msra.mxu0 0
      %3523 = vmatprep.subr.bf16.mxu0 0
      %3524 = vmatpush1.bf16.msra.mxu0 0
      %3525 = vmatprep.subr.bf16.mxu0 0
      %3526 = vmatpush1.bf16.msra.mxu0 0
      %3527 = vmatprep.subr.bf16.mxu0 0
      %3528 = vmatpush1.bf16.msra.mxu0 0
      %3529 = vmatprep.subr.bf16.mxu0 0
      %3530 = vmatpush1.bf16.msra.mxu0 0
      %3531 = vmatprep.subr.bf16.mxu0 0
      %3532 = vmatpush1.bf16.msra.mxu0 0
      %3533 = vmatprep.subr.bf16.mxu0 0
      %3534 = vmatpush1.bf16.msra.mxu0 0
      %3535 = vmatprep.mubr.bf16.mxu0 0
      %3536 = vmatmul.mubr.bf16.gmra.mrb[0].mxu0 %v3453
      %v3537 = vpop.f32.mrb[0].mxu0
      %v3538 = vadd.f32 0.0, %v3537
      %v3539 = vpop.f32.mrb[0].mxu0
      %v3540 = vpop.f32.mrb[0].mxu0
      %v3541 = vadd.f32 0.0, %v3540
      %v3542 = vpop.f32.mrb[0].mxu0
      %3543 = vmatprep.mubr.bf16.mxu0 0
      %3544 = vmatmul.mubr.bf16.gmra.mrb[0].mxu0 %v3456
      %v3545 = vpop.f32.mrb[0].mxu0
      %v3546 = vadd.f32 0.0, %v3545
      %v3547 = vpop.f32.mrb[0].mxu0
      %v3548 = vpop.f32.mrb[0].mxu0
      %v3549 = vadd.f32 0.0, %v3548
      %v3550 = vpop.f32.mrb[0].mxu0
      %3551 = vmatprep.mubr.bf16.mxu0 0
      %3552 = vmatmul.mubr.bf16.gmra.mrb[0].mxu0 %v3459
      %v3553 = vpop.f32.mrb[0].mxu0
      %v3554 = vadd.f32 0.0, %v3553
      %v3555 = vpop.f32.mrb[0].mxu0
      %v3556 = vpop.f32.mrb[0].mxu0
      %v3557 = vadd.f32 0.0, %v3556
      %v3558 = vpop.f32.mrb[0].mxu0
      %3559 = vmatprep.mubr.bf16.mxu0 0
      %3560 = vmatmul.mubr.bf16.gmra.mrb[0].mxu0 %v3462
      %v3561 = vpop.f32.mrb[0].mxu0
      %v3562 = vadd.f32 0.0, %v3561
      %v3563 = vpop.f32.mrb[0].mxu0
      %v3564 = vpop.f32.mrb[0].mxu0
      %v3565 = vadd.f32 0.0, %v3564
      %v3566 = vpop.f32.mrb[0].mxu0
      %3567 = vmatprep.mubr.bf16.mxu0 0
      %3568 = vmatmul.mubr.bf16.gmra.mrb[0].mxu0 %v3465
      %v3569 = vpop.f32.mrb[0].mxu0
      %v3570 = vadd.f32 0.0, %v3569
      %v3571 = vpop.f32.mrb[0].mxu0
      %v3572 = vpop.f32.mrb[0].mxu0
      %v3573 = vadd.f32 0.0, %v3572
      %v3574 = vpop.f32.mrb[0].mxu0
      %3575 = vmatprep.mubr.bf16.mxu0 0
      %3576 = vmatmul.mubr.bf16.gmra.mrb[0].mxu0 %v3468
      %v3577 = vpop.f32.mrb[0].mxu0
      %v3578 = vadd.f32 0.0, %v3577
      %v3579 = vpop.f32.mrb[0].mxu0
      %v3580 = vpop.f32.mrb[0].mxu0
      %v3581 = vadd.f32 0.0, %v3580
      %v3582 = vpop.f32.mrb[0].mxu0
      %3583 = vmatprep.mubr.bf16.mxu0 0
      %3584 = vmatmul.mubr.bf16.gmra.mrb[0].mxu0 %v3471
      %v3585 = vpop.f32.mrb[0].mxu0
      %v3586 = vadd.f32 0.0, %v3585
      %v3587 = vpop.f32.mrb[0].mxu0
      %v3588 = vpop.f32.mrb[0].mxu0
      %v3589 = vadd.f32 0.0, %v3588
      %v3590 = vpop.f32.mrb[0].mxu0
      %3591 = vmatprep.mubr.bf16.mxu0 0
      %3592 = vmatmul.mubr.bf16.gmra.mrb[0].mxu0 %v3474
      %v3593 = vpop.f32.mrb[0].mxu0
      %v3594 = vadd.f32 0.0, %v3593
      %v3595 = vpop.f32.mrb[0].mxu0
      %v3596 = vpop.f32.mrb[0].mxu0
      %v3597 = vadd.f32 0.0, %v3596
      %v3598 = vpop.f32.mrb[0].mxu0
      %3599 = vmatprep.mubr.bf16.mxu0 0
      %3600 = vmatmul.mubr.bf16.gmra.mrb[0].mxu0 %v3477
      %v3601 = vpop.f32.mrb[0].mxu0
      %v3602 = vadd.f32 0.0, %v3601
      %v3603 = vpop.f32.mrb[0].mxu0
      %v3604 = vpop.f32.mrb[0].mxu0
      %v3605 = vadd.f32 0.0, %v3604
      %v3606 = vpop.f32.mrb[0].mxu0
      %3607 = vmatprep.mubr.bf16.mxu0 0
      %3608 = vmatmul.mubr.bf16.gmra.mrb[0].mxu0 %v3480
      %v3609 = vpop.f32.mrb[0].mxu0
      %v3610 = vadd.f32 0.0, %v3609
      %v3611 = vpop.f32.mrb[0].mxu0
      %v3612 = vpop.f32.mrb[0].mxu0
      %v3613 = vadd.f32 0.0, %v3612
      %v3614 = vpop.f32.mrb[0].mxu0
      %3615 = vmatprep.mubr.bf16.mxu0 0
      %3616 = vmatmul.mubr.bf16.gmra.mrb[0].mxu0 %v3483
      %v3617 = vpop.f32.mrb[0].mxu0
      %v3618 = vadd.f32 0.0, %v3617
      %v3619 = vpop.f32.mrb[0].mxu0
      %v3620 = vpop.f32.mrb[0].mxu0
      %v3621 = vadd.f32 0.0, %v3620
      %v3622 = vpop.f32.mrb[0].mxu0
      %3623 = vmatprep.mubr.bf16.mxu0 0
      %3624 = vmatmul.mubr.bf16.gmra.mrb[0].mxu0 %v3486
      %v3625 = vpop.f32.mrb[0].mxu0
      %v3626 = vadd.f32 0.0, %v3625
      %v3627 = vpop.f32.mrb[0].mxu0
      %v3628 = vpop.f32.mrb[0].mxu0
      %v3629 = vadd.f32 0.0, %v3628
      %v3630 = vpop.f32.mrb[0].mxu0
      %3631 = vmatprep.mubr.bf16.mxu0 0
      %3632 = vmatmul.mubr.bf16.gmra.mrb[0].mxu0 %v3489
      %v3633 = vpop.f32.mrb[0].mxu0
      %v3634 = vadd.f32 0.0, %v3633
      %v3635 = vpop.f32.mrb[0].mxu0
      %v3636 = vpop.f32.mrb[0].mxu0
      %v3637 = vadd.f32 0.0, %v3636
      %v3638 = vpop.f32.mrb[0].mxu0
      %3639 = vmatprep.mubr.bf16.mxu0 0
      %3640 = vmatmul.mubr.bf16.gmra.mrb[0].mxu0 %v3492
      %v3641 = vpop.f32.mrb[0].mxu0
      %v3642 = vadd.f32 0.0, %v3641
      %v3643 = vpop.f32.mrb[0].mxu0
      %v3644 = vpop.f32.mrb[0].mxu0
      %v3645 = vadd.f32 0.0, %v3644
      %v3646 = vpop.f32.mrb[0].mxu0
      %3647 = vmatprep.mubr.bf16.mxu0 0
      %3648 = vmatmul.mubr.bf16.gmra.mrb[0].mxu0 %v3495
      %v3649 = vpop.f32.mrb[0].mxu0
      %v3650 = vadd.f32 0.0, %v3649
      %v3651 = vpop.f32.mrb[0].mxu0
      %v3652 = vpop.f32.mrb[0].mxu0
      %v3653 = vadd.f32 0.0, %v3652
      %v3654 = vpop.f32.mrb[0].mxu0
      %3655 = vmatprep.mubr.bf16.mxu0 0
      %3656 = vmatmul.mubr.bf16.gmra.mrb[0].mxu0 %v3498
      %v3657 = vpop.f32.mrb[0].mxu0
      %v3658 = vadd.f32 0.0, %v3657
      %v3659 = vpop.f32.mrb[0].mxu0
      %v3660 = vpop.f32.mrb[0].mxu0
      %v3661 = vadd.f32 0.0, %v3660
      %v3662 = vpop.f32.mrb[0].mxu0
      %3663 = vdwg.mxu0
      %v3664 = vadd.f32 %v2938, %v3538
      %v3665 = vadd.f32 %v2939, %v3541
      %v3666 = vadd.f32 %v2940, %v3546
      %v3667 = vadd.f32 %v2941, %v3549
      %v3668 = vadd.f32 %v2942, %v3554
      %v3669 = vadd.f32 %v2943, %v3557
      %v3670 = vadd.f32 %v2944, %v3562
      %v3671 = vadd.f32 %v2945, %v3565
      %v3672 = vadd.f32 %v2946, %v3570
      %v3673 = vadd.f32 %v2947, %v3573
      %v3674 = vadd.f32 %v2948, %v3578
      %v3675 = vadd.f32 %v2949, %v3581
      %v3676 = vadd.f32 %v2950, %v3586
      %v3677 = vadd.f32 %v2951, %v3589
      %v3678 = vadd.f32 %v2952, %v3594
      %v3679 = vadd.f32 %v2953, %v3597
      %v3680 = vadd.f32 %v2954, %v3602
      %v3681 = vadd.f32 %v2955, %v3605
      %v3682 = vadd.f32 %v2956, %v3610
      %v3683 = vadd.f32 %v2957, %v3613
      %v3684 = vadd.f32 %v2958, %v3618
      %v3685 = vadd.f32 %v2959, %v3621
      %v3686 = vadd.f32 %v2960, %v3626
      %v3687 = vadd.f32 %v2961, %v3629
      %v3688 = vadd.f32 %v2962, %v3634
      %v3689 = vadd.f32 %v2963, %v3637
      %v3690 = vadd.f32 %v2964, %v3642
      %v3691 = vadd.f32 %v2965, %v3645
      %v3692 = vadd.f32 %v2966, %v3650
      %v3693 = vadd.f32 %v2967, %v3653
      %v3694 = vadd.f32 %v2968, %v3658
      %v3695 = vadd.f32 %v2969, %v3661
      %v3696 = vld [vmem:[%s1048] sm:$0xe]
      %v3697 = vld [vmem:[%s1048 + $0xc] sm:$0xe]
      %v3698 = vld [vmem:[%s1048 + $0x18] sm:$0xe]
      %v3699 = vld [vmem:[%s1048 + $0x24] sm:$0xe]
      %v3700 = vld [vmem:[%s1048 + $0x30] sm:$0xe]
      %v3701 = vld [vmem:[%s1048 + $0x3c] sm:$0xe]
      %v3702 = vld [vmem:[%s1048 + $0x48] sm:$0xe]
      %v3703 = vld [vmem:[%s1048 + $0x54] sm:$0xe]
      %v3704 = vld [vmem:[%s1048 + $0x60] sm:$0xe]
      %v3705 = vld [vmem:[%s1048 + $0x6c] sm:$0xe]
      %v3706 = vld [vmem:[%s1048 + $0x78] sm:$0xe]
      %v3707 = vld [vmem:[%s1048 + $0x84] sm:$0xe]
      %v3708 = vld [vmem:[%s1048 + $0x90] sm:$0xe]
      %v3709 = vld [vmem:[%s1048 + $0x9c] sm:$0xe]
      %v3710 = vld [vmem:[%s1048 + $0xa8] sm:$0xe]
      %v3711 = vld [vmem:[%s1048 + $0xb4] sm:$0xe]
      %v3760 = vrot.slane %v3696, 5
      %v3761 = vrot.slane %v3760, 4
      %v3762 = vrot.slane %v2971, 5
      %v3763 = vsel %vm2205, %v3761, %v3762
      %v3764 = vrot.slane %v3762, 4
      %v3765 = vrot.slane %v2972, 5
      %v3766 = vsel %vm2205, %v3764, %v3765
      %v3767 = vrot.slane %v3697, 5
      %v3768 = vrot.slane %v3767, 4
      %v3769 = vrot.slane %v2974, 5
      %v3770 = vsel %vm2205, %v3768, %v3769
      %v3771 = vrot.slane %v3769, 4
      %v3772 = vrot.slane %v2975, 5
      %v3773 = vsel %vm2205, %v3771, %v3772
      %v3774 = vrot.slane %v3698, 5
      %v3775 = vrot.slane %v3774, 4
      %v3776 = vrot.slane %v2977, 5
      %v3777 = vsel %vm2205, %v3775, %v3776
      %v3778 = vrot.slane %v3776, 4
      %v3779 = vrot.slane %v2978, 5
      %v3780 = vsel %vm2205, %v3778, %v3779
      %v3781 = vrot.slane %v3699, 5
      %v3782 = vrot.slane %v3781, 4
      %v3783 = vrot.slane %v2980, 5
      %v3784 = vsel %vm2205, %v3782, %v3783
      %v3785 = vrot.slane %v3783, 4
      %v3786 = vrot.slane %v2981, 5
      %v3787 = vsel %vm2205, %v3785, %v3786
      %v3788 = vrot.slane %v3700, 5
      %v3789 = vrot.slane %v3788, 4
      %v3790 = vrot.slane %v2983, 5
      %v3791 = vsel %vm2205, %v3789, %v3790
      %v3792 = vrot.slane %v3790, 4
      %v3793 = vrot.slane %v2984, 5
      %v3794 = vsel %vm2205, %v3792, %v3793
      %v3795 = vrot.slane %v3701, 5
      %v3796 = vrot.slane %v3795, 4
      %v3797 = vrot.slane %v2986, 5
      %v3798 = vsel %vm2205, %v3796, %v3797
      %v3799 = vrot.slane %v3797, 4
      %v3800 = vrot.slane %v2987, 5
      %v3801 = vsel %vm2205, %v3799, %v3800
      %v3802 = vrot.slane %v3702, 5
      %v3803 = vrot.slane %v3802, 4
      %v3804 = vrot.slane %v2989, 5
      %v3805 = vsel %vm2205, %v3803, %v3804
      %v3806 = vrot.slane %v3804, 4
      %v3807 = vrot.slane %v2990, 5
      %v3808 = vsel %vm2205, %v3806, %v3807
      %v3809 = vrot.slane %v3703, 5
      %v3810 = vrot.slane %v3809, 4
      %v3811 = vrot.slane %v2992, 5
      %v3812 = vsel %vm2205, %v3810, %v3811
      %v3813 = vrot.slane %v3811, 4
      %v3814 = vrot.slane %v2993, 5
      %v3815 = vsel %vm2205, %v3813, %v3814
      %v3816 = vrot.slane %v3704, 5
      %v3817 = vrot.slane %v3816, 4
      %v3818 = vrot.slane %v2995, 5
      %v3819 = vsel %vm2205, %v3817, %v3818
      %v3820 = vrot.slane %v3818, 4
      %v3821 = vrot.slane %v2996, 5
      %v3822 = vsel %vm2205, %v3820, %v3821
      %v3823 = vrot.slane %v3705, 5
      %v3824 = vrot.slane %v3823, 4
      %v3825 = vrot.slane %v2998, 5
      %v3826 = vsel %vm2205, %v3824, %v3825
      %v3827 = vrot.slane %v3825, 4
      %v3828 = vrot.slane %v2999, 5
      %v3829 = vsel %vm2205, %v3827, %v3828
      %v3830 = vrot.slane %v3706, 5
      %v3831 = vrot.slane %v3830, 4
      %v3832 = vrot.slane %v3001, 5
      %v3833 = vsel %vm2205, %v3831, %v3832
      %v3834 = vrot.slane %v3832, 4
      %v3835 = vrot.slane %v3002, 5
      %v3836 = vsel %vm2205, %v3834, %v3835
      %v3837 = vrot.slane %v3707, 5
      %v3838 = vrot.slane %v3837, 4
      %v3839 = vrot.slane %v3004, 5
      %v3840 = vsel %vm2205, %v3838, %v3839
      %v3841 = vrot.slane %v3839, 4
      %v3842 = vrot.slane %v3005, 5
      %v3843 = vsel %vm2205, %v3841, %v3842
      %v3844 = vrot.slane %v3708, 5
      %v3845 = vrot.slane %v3844, 4
      %v3846 = vrot.slane %v3007, 5
      %v3847 = vsel %vm2205, %v3845, %v3846
      %v3848 = vrot.slane %v3846, 4
      %v3849 = vrot.slane %v3008, 5
      %v3850 = vsel %vm2205, %v3848, %v3849
      %v3851 = vrot.slane %v3709, 5
      %v3852 = vrot.slane %v3851, 4
      %v3853 = vrot.slane %v3010, 5
      %v3854 = vsel %vm2205, %v3852, %v3853
      %v3855 = vrot.slane %v3853, 4
      %v3856 = vrot.slane %v3011, 5
      %v3857 = vsel %vm2205, %v3855, %v3856
      %v3858 = vrot.slane %v3710, 5
      %v3859 = vrot.slane %v3858, 4
      %v3860 = vrot.slane %v3013, 5
      %v3861 = vsel %vm2205, %v3859, %v3860
      %v3862 = vrot.slane %v3860, 4
      %v3863 = vrot.slane %v3014, 5
      %v3864 = vsel %vm2205, %v3862, %v3863
      %v3865 = vrot.slane %v3711, 5
      %v3866 = vrot.slane %v3865, 4
      %v3867 = vrot.slane %v3016, 5
      %v3868 = vsel %vm2205, %v3866, %v3867
      %v3869 = vrot.slane %v3867, 4
      %v3870 = vrot.slane %v3017, 5
      %v3871 = vsel %vm2205, %v3869, %v3870
      %s3872 = scalar_lea.vmem %s3, 20
      %v3873 = vld [vmem:[%s3872] sm:$0xf]
      %v3874 = vunpack.c.l.b16 %v3763
      %v3875 = vunpack.c.l.b16 %v3766
      %v3876 = vunpack.c.l.b16 %v3770
      %v3877 = vunpack.c.l.b16 %v3773
      %v3878 = vunpack.c.l.b16 %v3777
      %v3879 = vunpack.c.l.b16 %v3780
      %v3880 = vunpack.c.l.b16 %v3784
      %v3881 = vunpack.c.l.b16 %v3787
      %v3882 = vunpack.c.l.b16 %v3791
      %v3883 = vunpack.c.l.b16 %v3794
      %v3884 = vunpack.c.l.b16 %v3798
      %v3885 = vunpack.c.l.b16 %v3801
      %v3886 = vunpack.c.l.b16 %v3805
      %v3887 = vunpack.c.l.b16 %v3808
      %v3888 = vunpack.c.l.b16 %v3812
      %v3889 = vunpack.c.l.b16 %v3815
      %v3890 = vunpack.c.l.b16 %v3819
      %v3891 = vunpack.c.l.b16 %v3822
      %v3892 = vunpack.c.l.b16 %v3826
      %v3893 = vunpack.c.l.b16 %v3829
      %v3894 = vunpack.c.l.b16 %v3833
      %v3895 = vunpack.c.l.b16 %v3836
      %v3896 = vunpack.c.l.b16 %v3840
      %v3897 = vunpack.c.l.b16 %v3843
      %v3898 = vunpack.c.l.b16 %v3847
      %v3899 = vunpack.c.l.b16 %v3850
      %v3900 = vunpack.c.l.b16 %v3854
      %v3901 = vunpack.c.l.b16 %v3857
      %v3902 = vunpack.c.l.b16 %v3861
      %v3903 = vunpack.c.l.b16 %v3864
      %v3904 = vunpack.c.l.b16 %v3868
      %v3905 = vunpack.c.l.b16 %v3871
      %v3906 = vpack.c.b16 %v3875, %v3874
      %v3907 = vpack.c.b16 %v3877, %v3876
      %v3908 = vpack.c.b16 %v3879, %v3878
      %v3909 = vpack.c.b16 %v3881, %v3880
      %v3910 = vpack.c.b16 %v3883, %v3882
      %v3911 = vpack.c.b16 %v3885, %v3884
      %v3912 = vpack.c.b16 %v3887, %v3886
      %v3913 = vpack.c.b16 %v3889, %v3888
      %v3914 = vpack.c.b16 %v3891, %v3890
      %v3915 = vpack.c.b16 %v3893, %v3892
      %v3916 = vpack.c.b16 %v3895, %v3894
      %v3917 = vpack.c.b16 %v3897, %v3896
      %v3918 = vpack.c.b16 %v3899, %v3898
      %v3919 = vpack.c.b16 %v3901, %v3900
      %v3920 = vpack.c.b16 %v3903, %v3902
      %v3921 = vpack.c.b16 %v3905, %v3904
      %v3923 = vsel %vm1649, %v3906, 0
      %v3926 = vsel %vm1649, %v3907, 0
      %v3929 = vsel %vm1649, %v3908, 0
      %v3932 = vsel %vm1649, %v3909, 0
      %v3935 = vsel %vm1649, %v3910, 0
      %v3938 = vsel %vm1649, %v3911, 0
      %v3941 = vsel %vm1649, %v3912, 0
      %v3944 = vsel %vm1649, %v3913, 0
      %v3947 = vsel %vm1649, %v3914, 0
      %v3950 = vsel %vm1649, %v3915, 0
      %v3953 = vsel %vm1649, %v3916, 0
      %v3956 = vsel %vm1649, %v3917, 0
      %v3959 = vsel %vm1649, %v3918, 0
      %v3962 = vsel %vm1649, %v3919, 0
      %v3965 = vsel %vm1649, %v3920, 0
      %v3968 = vsel %vm1649, %v3921, 0
      %v3971 = vsel %vm1698, %v3873, 0
      %3973 = vmatprep.subr.bf16.mxu0 0
      %3974 = vmatpush1.bf16.msra.mxu0 %v3971
      %3975 = vmatprep.subr.bf16.mxu0 0
      %3976 = vmatpush1.bf16.msra.mxu0 0
      %3977 = vmatprep.subr.bf16.mxu0 0
      %3978 = vmatpush1.bf16.msra.mxu0 0
      %3979 = vmatprep.subr.bf16.mxu0 0
      %3980 = vmatpush1.bf16.msra.mxu0 0
      %3981 = vmatprep.subr.bf16.mxu0 0
      %3982 = vmatpush1.bf16.msra.mxu0 0
      %3983 = vmatprep.subr.bf16.mxu0 0
      %3984 = vmatpush1.bf16.msra.mxu0 0
      %3985 = vmatprep.subr.bf16.mxu0 0
      %3986 = vmatpush1.bf16.msra.mxu0 0
      %3987 = vmatprep.subr.bf16.mxu0 0
      %3988 = vmatpush1.bf16.msra.mxu0 0
      %3989 = vmatprep.subr.bf16.mxu0 0
      %3990 = vmatpush1.bf16.msra.mxu0 0
      %3991 = vmatprep.subr.bf16.mxu0 0
      %3992 = vmatpush1.bf16.msra.mxu0 0
      %3993 = vmatprep.subr.bf16.mxu0 0
      %3994 = vmatpush1.bf16.msra.mxu0 0
      %3995 = vmatprep.subr.bf16.mxu0 0
      %3996 = vmatpush1.bf16.msra.mxu0 0
      %3997 = vmatprep.subr.bf16.mxu0 0
      %3998 = vmatpush1.bf16.msra.mxu0 0
      %3999 = vmatprep.subr.bf16.mxu0 0
      %4000 = vmatpush1.bf16.msra.mxu0 0
      %4001 = vmatprep.subr.bf16.mxu0 0
      %4002 = vmatpush1.bf16.msra.mxu0 0
      %4003 = vmatprep.subr.bf16.mxu0 0
      %4004 = vmatpush1.bf16.msra.mxu0 0
      %4005 = vmatprep.mubr.bf16.mxu0 0
      %4006 = vmatmul.mubr.bf16.gmra.mrb[0].mxu0 %v3923
      %v4007 = vpop.f32.mrb[0].mxu0
      %v4008 = vadd.f32 0.0, %v4007
      %v4009 = vpop.f32.mrb[0].mxu0
      %v4010 = vpop.f32.mrb[0].mxu0
      %v4011 = vadd.f32 0.0, %v4010
      %v4012 = vpop.f32.mrb[0].mxu0
      %4013 = vmatprep.mubr.bf16.mxu0 0
      %4014 = vmatmul.mubr.bf16.gmra.mrb[0].mxu0 %v3926
      %v4015 = vpop.f32.mrb[0].mxu0
      %v4016 = vadd.f32 0.0, %v4015
      %v4017 = vpop.f32.mrb[0].mxu0
      %v4018 = vpop.f32.mrb[0].mxu0
      %v4019 = vadd.f32 0.0, %v4018
      %v4020 = vpop.f32.mrb[0].mxu0
      %4021 = vmatprep.mubr.bf16.mxu0 0
      %4022 = vmatmul.mubr.bf16.gmra.mrb[0].mxu0 %v3929
      %v4023 = vpop.f32.mrb[0].mxu0
      %v4024 = vadd.f32 0.0, %v4023
      %v4025 = vpop.f32.mrb[0].mxu0
      %v4026 = vpop.f32.mrb[0].mxu0
      %v4027 = vadd.f32 0.0, %v4026
      %v4028 = vpop.f32.mrb[0].mxu0
      %4029 = vmatprep.mubr.bf16.mxu0 0
      %4030 = vmatmul.mubr.bf16.gmra.mrb[0].mxu0 %v3932
      %v4031 = vpop.f32.mrb[0].mxu0
      %v4032 = vadd.f32 0.0, %v4031
      %v4033 = vpop.f32.mrb[0].mxu0
      %v4034 = vpop.f32.mrb[0].mxu0
      %v4035 = vadd.f32 0.0, %v4034
      %v4036 = vpop.f32.mrb[0].mxu0
      %4037 = vmatprep.mubr.bf16.mxu0 0
      %4038 = vmatmul.mubr.bf16.gmra.mrb[0].mxu0 %v3935
      %v4039 = vpop.f32.mrb[0].mxu0
      %v4040 = vadd.f32 0.0, %v4039
      %v4041 = vpop.f32.mrb[0].mxu0
      %v4042 = vpop.f32.mrb[0].mxu0
      %v4043 = vadd.f32 0.0, %v4042
      %v4044 = vpop.f32.mrb[0].mxu0
      %4045 = vmatprep.mubr.bf16.mxu0 0
      %4046 = vmatmul.mubr.bf16.gmra.mrb[0].mxu0 %v3938
      %v4047 = vpop.f32.mrb[0].mxu0
      %v4048 = vadd.f32 0.0, %v4047
      %v4049 = vpop.f32.mrb[0].mxu0
      %v4050 = vpop.f32.mrb[0].mxu0
      %v4051 = vadd.f32 0.0, %v4050
      %v4052 = vpop.f32.mrb[0].mxu0
      %4053 = vmatprep.mubr.bf16.mxu0 0
      %4054 = vmatmul.mubr.bf16.gmra.mrb[0].mxu0 %v3941
      %v4055 = vpop.f32.mrb[0].mxu0
      %v4056 = vadd.f32 0.0, %v4055
      %v4057 = vpop.f32.mrb[0].mxu0
      %v4058 = vpop.f32.mrb[0].mxu0
      %v4059 = vadd.f32 0.0, %v4058
      %v4060 = vpop.f32.mrb[0].mxu0
      %4061 = vmatprep.mubr.bf16.mxu0 0
      %4062 = vmatmul.mubr.bf16.gmra.mrb[0].mxu0 %v3944
      %v4063 = vpop.f32.mrb[0].mxu0
      %v4064 = vadd.f32 0.0, %v4063
      %v4065 = vpop.f32.mrb[0].mxu0
      %v4066 = vpop.f32.mrb[0].mxu0
      %v4067 = vadd.f32 0.0, %v4066
      %v4068 = vpop.f32.mrb[0].mxu0
      %4069 = vmatprep.mubr.bf16.mxu0 0
      %4070 = vmatmul.mubr.bf16.gmra.mrb[0].mxu0 %v3947
      %v4071 = vpop.f32.mrb[0].mxu0
      %v4072 = vadd.f32 0.0, %v4071
      %v4073 = vpop.f32.mrb[0].mxu0
      %v4074 = vpop.f32.mrb[0].mxu0
      %v4075 = vadd.f32 0.0, %v4074
      %v4076 = vpop.f32.mrb[0].mxu0
      %4077 = vmatprep.mubr.bf16.mxu0 0
      %4078 = vmatmul.mubr.bf16.gmra.mrb[0].mxu0 %v3950
      %v4079 = vpop.f32.mrb[0].mxu0
      %v4080 = vadd.f32 0.0, %v4079
      %v4081 = vpop.f32.mrb[0].mxu0
      %v4082 = vpop.f32.mrb[0].mxu0
      %v4083 = vadd.f32 0.0, %v4082
      %v4084 = vpop.f32.mrb[0].mxu0
      %4085 = vmatprep.mubr.bf16.mxu0 0
      %4086 = vmatmul.mubr.bf16.gmra.mrb[0].mxu0 %v3953
      %v4087 = vpop.f32.mrb[0].mxu0
      %v4088 = vadd.f32 0.0, %v4087
      %v4089 = vpop.f32.mrb[0].mxu0
      %v4090 = vpop.f32.mrb[0].mxu0
      %v4091 = vadd.f32 0.0, %v4090
      %v4092 = vpop.f32.mrb[0].mxu0
      %4093 = vmatprep.mubr.bf16.mxu0 0
      %4094 = vmatmul.mubr.bf16.gmra.mrb[0].mxu0 %v3956
      %v4095 = vpop.f32.mrb[0].mxu0
      %v4096 = vadd.f32 0.0, %v4095
      %v4097 = vpop.f32.mrb[0].mxu0
      %v4098 = vpop.f32.mrb[0].mxu0
      %v4099 = vadd.f32 0.0, %v4098
      %v4100 = vpop.f32.mrb[0].mxu0
      %4101 = vmatprep.mubr.bf16.mxu0 0
      %4102 = vmatmul.mubr.bf16.gmra.mrb[0].mxu0 %v3959
      %v4103 = vpop.f32.mrb[0].mxu0
      %v4104 = vadd.f32 0.0, %v4103
      %v4105 = vpop.f32.mrb[0].mxu0
      %v4106 = vpop.f32.mrb[0].mxu0
      %v4107 = vadd.f32 0.0, %v4106
      %v4108 = vpop.f32.mrb[0].mxu0
      %4109 = vmatprep.mubr.bf16.mxu0 0
      %4110 = vmatmul.mubr.bf16.gmra.mrb[0].mxu0 %v3962
      %v4111 = vpop.f32.mrb[0].mxu0
      %v4112 = vadd.f32 0.0, %v4111
      %v4113 = vpop.f32.mrb[0].mxu0
      %v4114 = vpop.f32.mrb[0].mxu0
      %v4115 = vadd.f32 0.0, %v4114
      %v4116 = vpop.f32.mrb[0].mxu0
      %4117 = vmatprep.mubr.bf16.mxu0 0
      %4118 = vmatmul.mubr.bf16.gmra.mrb[0].mxu0 %v3965
      %v4119 = vpop.f32.mrb[0].mxu0
      %v4120 = vadd.f32 0.0, %v4119
      %v4121 = vpop.f32.mrb[0].mxu0
      %v4122 = vpop.f32.mrb[0].mxu0
      %v4123 = vadd.f32 0.0, %v4122
      %v4124 = vpop.f32.mrb[0].mxu0
      %4125 = vmatprep.mubr.bf16.mxu0 0
      %4126 = vmatmul.mubr.bf16.gmra.mrb[0].mxu0 %v3968
      %v4127 = vpop.f32.mrb[0].mxu0
      %v4128 = vadd.f32 0.0, %v4127
      %v4129 = vpop.f32.mrb[0].mxu0
      %v4130 = vpop.f32.mrb[0].mxu0
      %v4131 = vadd.f32 0.0, %v4130
      %v4132 = vpop.f32.mrb[0].mxu0
      %4133 = vdwg.mxu0
      %v4134 = vadd.f32 %v3664, %v4008
      %v4135 = vadd.f32 %v3665, %v4011
      %v4136 = vadd.f32 %v3666, %v4016
      %v4137 = vadd.f32 %v3667, %v4019
      %v4138 = vadd.f32 %v3668, %v4024
      %v4139 = vadd.f32 %v3669, %v4027
      %v4140 = vadd.f32 %v3670, %v4032
      %v4141 = vadd.f32 %v3671, %v4035
      %v4142 = vadd.f32 %v3672, %v4040
      %v4143 = vadd.f32 %v3673, %v4043
      %v4144 = vadd.f32 %v3674, %v4048
      %v4145 = vadd.f32 %v3675, %v4051
      %v4146 = vadd.f32 %v3676, %v4056
      %v4147 = vadd.f32 %v3677, %v4059
      %v4148 = vadd.f32 %v3678, %v4064
      %v4149 = vadd.f32 %v3679, %v4067
      %v4150 = vadd.f32 %v3680, %v4072
      %v4151 = vadd.f32 %v3681, %v4075
      %v4152 = vadd.f32 %v3682, %v4080
      %v4153 = vadd.f32 %v3683, %v4083
      %v4154 = vadd.f32 %v3684, %v4088
      %v4155 = vadd.f32 %v3685, %v4091
      %v4156 = vadd.f32 %v3686, %v4096
      %v4157 = vadd.f32 %v3687, %v4099
      %v4158 = vadd.f32 %v3688, %v4104
      %v4159 = vadd.f32 %v3689, %v4107
      %v4160 = vadd.f32 %v3690, %v4112
      %v4161 = vadd.f32 %v3691, %v4115
      %v4162 = vadd.f32 %v3692, %v4120
      %v4163 = vadd.f32 %v3693, %v4123
      %v4164 = vadd.f32 %v3694, %v4128
      %v4165 = vadd.f32 %v3695, %v4131
      %s4166 = scalar_lea.vmem [#allocation2], 24
      %v4167 = vld [vmem:[%s4166] sm:$0xf]
      %v4168 = vld [vmem:[%s4166 + $0x4] sm:$0xf]
      %v4169 = vld [vmem:[%s4166 + $0xc] sm:$0xf]
      %v4170 = vld [vmem:[%s4166 + $0x10] sm:$0xf]
      %v4171 = vld [vmem:[%s4166 + $0x18] sm:$0xf]
      %v4172 = vld [vmem:[%s4166 + $0x1c] sm:$0xf]
      %v4173 = vld [vmem:[%s4166 + $0x24] sm:$0xf]
      %v4174 = vld [vmem:[%s4166 + $0x28] sm:$0xf]
      %v4175 = vld [vmem:[%s4166 + $0x30] sm:$0xf]
      %v4176 = vld [vmem:[%s4166 + $0x34] sm:$0xf]
      %v4177 = vld [vmem:[%s4166 + $0x3c] sm:$0xf]
      %v4178 = vld [vmem:[%s4166 + $0x40] sm:$0xf]
      %v4179 = vld [vmem:[%s4166 + $0x48] sm:$0xf]
      %v4180 = vld [vmem:[%s4166 + $0x4c] sm:$0xf]
      %v4181 = vld [vmem:[%s4166 + $0x54] sm:$0xf]
      %v4182 = vld [vmem:[%s4166 + $0x58] sm:$0xf]
      %v4183 = vld [vmem:[%s4166 + $0x60] sm:$0xf]
      %v4184 = vld [vmem:[%s4166 + $0x64] sm:$0xf]
      %v4185 = vld [vmem:[%s4166 + $0x6c] sm:$0xf]
      %v4186 = vld [vmem:[%s4166 + $0x70] sm:$0xf]
      %v4187 = vld [vmem:[%s4166 + $0x78] sm:$0xf]
      %v4188 = vld [vmem:[%s4166 + $0x7c] sm:$0xf]
      %v4189 = vld [vmem:[%s4166 + $0x84] sm:$0xf]
      %v4190 = vld [vmem:[%s4166 + $0x88] sm:$0xf]
      %v4191 = vld [vmem:[%s4166 + $0x90] sm:$0xf]
      %v4192 = vld [vmem:[%s4166 + $0x94] sm:$0xf]
      %v4193 = vld [vmem:[%s4166 + $0x9c] sm:$0xf]
      %v4194 = vld [vmem:[%s4166 + $0xa0] sm:$0xf]
      %v4195 = vld [vmem:[%s4166 + $0xa8] sm:$0xf]
      %v4196 = vld [vmem:[%s4166 + $0xac] sm:$0xf]
      %v4197 = vld [vmem:[%s4166 + $0xb4] sm:$0xf]
      %v4198 = vld [vmem:[%s4166 + $0xb8] sm:$0xf]
      %s4199 = scalar_lea.vmem %s3, 24
      %v4200 = vld [vmem:[%s4199] sm:$0xf]
      %v4233 = vunpack.c.l.b16 %v4167
      %v4234 = vunpack.c.l.b16 %v4168
      %v4235 = vunpack.c.l.b16 %v4169
      %v4236 = vunpack.c.l.b16 %v4170
      %v4237 = vunpack.c.l.b16 %v4171
      %v4238 = vunpack.c.l.b16 %v4172
      %v4239 = vunpack.c.l.b16 %v4173
      %v4240 = vunpack.c.l.b16 %v4174
      %v4241 = vunpack.c.l.b16 %v4175
      %v4242 = vunpack.c.l.b16 %v4176
      %v4243 = vunpack.c.l.b16 %v4177
      %v4244 = vunpack.c.l.b16 %v4178
      %v4245 = vunpack.c.l.b16 %v4179
      %v4246 = vunpack.c.l.b16 %v4180
      %v4247 = vunpack.c.l.b16 %v4181
      %v4248 = vunpack.c.l.b16 %v4182
      %v4249 = vunpack.c.l.b16 %v4183
      %v4250 = vunpack.c.l.b16 %v4184
      %v4251 = vunpack.c.l.b16 %v4185
      %v4252 = vunpack.c.l.b16 %v4186
      %v4253 = vunpack.c.l.b16 %v4187
      %v4254 = vunpack.c.l.b16 %v4188
      %v4255 = vunpack.c.l.b16 %v4189
      %v4256 = vunpack.c.l.b16 %v4190
      %v4257 = vunpack.c.l.b16 %v4191
      %v4258 = vunpack.c.l.b16 %v4192
      %v4259 = vunpack.c.l.b16 %v4193
      %v4260 = vunpack.c.l.b16 %v4194
      %v4261 = vunpack.c.l.b16 %v4195
      %v4262 = vunpack.c.l.b16 %v4196
      %v4263 = vunpack.c.l.b16 %v4197
      %v4264 = vunpack.c.l.b16 %v4198
      %v4265 = vpack.c.b16 %v4234, %v4233
      %v4266 = vpack.c.b16 %v4236, %v4235
      %v4267 = vpack.c.b16 %v4238, %v4237
      %v4268 = vpack.c.b16 %v4240, %v4239
      %v4269 = vpack.c.b16 %v4242, %v4241
      %v4270 = vpack.c.b16 %v4244, %v4243
      %v4271 = vpack.c.b16 %v4246, %v4245
      %v4272 = vpack.c.b16 %v4248, %v4247
      %v4273 = vpack.c.b16 %v4250, %v4249
      %v4274 = vpack.c.b16 %v4252, %v4251
      %v4275 = vpack.c.b16 %v4254, %v4253
      %v4276 = vpack.c.b16 %v4256, %v4255
      %v4277 = vpack.c.b16 %v4258, %v4257
      %v4278 = vpack.c.b16 %v4260, %v4259
      %v4279 = vpack.c.b16 %v4262, %v4261
      %v4280 = vpack.c.b16 %v4264, %v4263
      %v4282 = vsel %vm1649, %v4265, 0
      %v4285 = vsel %vm1649, %v4266, 0
      %v4288 = vsel %vm1649, %v4267, 0
      %v4291 = vsel %vm1649, %v4268, 0
      %v4294 = vsel %vm1649, %v4269, 0
      %v4297 = vsel %vm1649, %v4270, 0
      %v4300 = vsel %vm1649, %v4271, 0
      %v4303 = vsel %vm1649, %v4272, 0
      %v4306 = vsel %vm1649, %v4273, 0
      %v4309 = vsel %vm1649, %v4274, 0
      %v4312 = vsel %vm1649, %v4275, 0
      %v4315 = vsel %vm1649, %v4276, 0
      %v4318 = vsel %vm1649, %v4277, 0
      %v4321 = vsel %vm1649, %v4278, 0
      %v4324 = vsel %vm1649, %v4279, 0
      %v4327 = vsel %vm1649, %v4280, 0
      %v4330 = vsel %vm1698, %v4200, 0
      %4332 = vmatprep.subr.bf16.mxu0 0
      %4333 = vmatpush1.bf16.msra.mxu0 %v4330
      %4334 = vmatprep.subr.bf16.mxu0 0
      %4335 = vmatpush1.bf16.msra.mxu0 0
      %4336 = vmatprep.subr.bf16.mxu0 0
      %4337 = vmatpush1.bf16.msra.mxu0 0
      %4338 = vmatprep.subr.bf16.mxu0 0
      %4339 = vmatpush1.bf16.msra.mxu0 0
      %4340 = vmatprep.subr.bf16.mxu0 0
      %4341 = vmatpush1.bf16.msra.mxu0 0
      %4342 = vmatprep.subr.bf16.mxu0 0
      %4343 = vmatpush1.bf16.msra.mxu0 0
      %4344 = vmatprep.subr.bf16.mxu0 0
      %4345 = vmatpush1.bf16.msra.mxu0 0
      %4346 = vmatprep.subr.bf16.mxu0 0
      %4347 = vmatpush1.bf16.msra.mxu0 0
      %4348 = vmatprep.subr.bf16.mxu0 0
      %4349 = vmatpush1.bf16.msra.mxu0 0
      %4350 = vmatprep.subr.bf16.mxu0 0
      %4351 = vmatpush1.bf16.msra.mxu0 0
      %4352 = vmatprep.subr.bf16.mxu0 0
      %4353 = vmatpush1.bf16.msra.mxu0 0
      %4354 = vmatprep.subr.bf16.mxu0 0
      %4355 = vmatpush1.bf16.msra.mxu0 0
      %4356 = vmatprep.subr.bf16.mxu0 0
      %4357 = vmatpush1.bf16.msra.mxu0 0
      %4358 = vmatprep.subr.bf16.mxu0 0
      %4359 = vmatpush1.bf16.msra.mxu0 0
      %4360 = vmatprep.subr.bf16.mxu0 0
      %4361 = vmatpush1.bf16.msra.mxu0 0
      %4362 = vmatprep.subr.bf16.mxu0 0
      %4363 = vmatpush1.bf16.msra.mxu0 0
      %4364 = vmatprep.mubr.bf16.mxu0 0
      %4365 = vmatmul.mubr.bf16.gmra.mrb[0].mxu0 %v4282
      %v4366 = vpop.f32.mrb[0].mxu0
      %v4367 = vadd.f32 0.0, %v4366
      %v4368 = vpop.f32.mrb[0].mxu0
      %v4369 = vpop.f32.mrb[0].mxu0
      %v4370 = vadd.f32 0.0, %v4369
      %v4371 = vpop.f32.mrb[0].mxu0
      %4372 = vmatprep.mubr.bf16.mxu0 0
      %4373 = vmatmul.mubr.bf16.gmra.mrb[0].mxu0 %v4285
      %v4374 = vpop.f32.mrb[0].mxu0
      %v4375 = vadd.f32 0.0, %v4374
      %v4376 = vpop.f32.mrb[0].mxu0
      %v4377 = vpop.f32.mrb[0].mxu0
      %v4378 = vadd.f32 0.0, %v4377
      %v4379 = vpop.f32.mrb[0].mxu0
      %4380 = vmatprep.mubr.bf16.mxu0 0
      %4381 = vmatmul.mubr.bf16.gmra.mrb[0].mxu0 %v4288
      %v4382 = vpop.f32.mrb[0].mxu0
      %v4383 = vadd.f32 0.0, %v4382
      %v4384 = vpop.f32.mrb[0].mxu0
      %v4385 = vpop.f32.mrb[0].mxu0
      %v4386 = vadd.f32 0.0, %v4385
      %v4387 = vpop.f32.mrb[0].mxu0
      %4388 = vmatprep.mubr.bf16.mxu0 0
      %4389 = vmatmul.mubr.bf16.gmra.mrb[0].mxu0 %v4291
      %v4390 = vpop.f32.mrb[0].mxu0
      %v4391 = vadd.f32 0.0, %v4390
      %v4392 = vpop.f32.mrb[0].mxu0
      %v4393 = vpop.f32.mrb[0].mxu0
      %v4394 = vadd.f32 0.0, %v4393
      %v4395 = vpop.f32.mrb[0].mxu0
      %4396 = vmatprep.mubr.bf16.mxu0 0
      %4397 = vmatmul.mubr.bf16.gmra.mrb[0].mxu0 %v4294
      %v4398 = vpop.f32.mrb[0].mxu0
      %v4399 = vadd.f32 0.0, %v4398
      %v4400 = vpop.f32.mrb[0].mxu0
      %v4401 = vpop.f32.mrb[0].mxu0
      %v4402 = vadd.f32 0.0, %v4401
      %v4403 = vpop.f32.mrb[0].mxu0
      %4404 = vmatprep.mubr.bf16.mxu0 0
      %4405 = vmatmul.mubr.bf16.gmra.mrb[0].mxu0 %v4297
      %v4406 = vpop.f32.mrb[0].mxu0
      %v4407 = vadd.f32 0.0, %v4406
      %v4408 = vpop.f32.mrb[0].mxu0
      %v4409 = vpop.f32.mrb[0].mxu0
      %v4410 = vadd.f32 0.0, %v4409
      %v4411 = vpop.f32.mrb[0].mxu0
      %4412 = vmatprep.mubr.bf16.mxu0 0
      %4413 = vmatmul.mubr.bf16.gmra.mrb[0].mxu0 %v4300
      %v4414 = vpop.f32.mrb[0].mxu0
      %v4415 = vadd.f32 0.0, %v4414
      %v4416 = vpop.f32.mrb[0].mxu0
      %v4417 = vpop.f32.mrb[0].mxu0
      %v4418 = vadd.f32 0.0, %v4417
      %v4419 = vpop.f32.mrb[0].mxu0
      %4420 = vmatprep.mubr.bf16.mxu0 0
      %4421 = vmatmul.mubr.bf16.gmra.mrb[0].mxu0 %v4303
      %v4422 = vpop.f32.mrb[0].mxu0
      %v4423 = vadd.f32 0.0, %v4422
      %v4424 = vpop.f32.mrb[0].mxu0
      %v4425 = vpop.f32.mrb[0].mxu0
      %v4426 = vadd.f32 0.0, %v4425
      %v4427 = vpop.f32.mrb[0].mxu0
      %4428 = vmatprep.mubr.bf16.mxu0 0
      %4429 = vmatmul.mubr.bf16.gmra.mrb[0].mxu0 %v4306
      %v4430 = vpop.f32.mrb[0].mxu0
      %v4431 = vadd.f32 0.0, %v4430
      %v4432 = vpop.f32.mrb[0].mxu0
      %v4433 = vpop.f32.mrb[0].mxu0
      %v4434 = vadd.f32 0.0, %v4433
      %v4435 = vpop.f32.mrb[0].mxu0
      %4436 = vmatprep.mubr.bf16.mxu0 0
      %4437 = vmatmul.mubr.bf16.gmra.mrb[0].mxu0 %v4309
      %v4438 = vpop.f32.mrb[0].mxu0
      %v4439 = vadd.f32 0.0, %v4438
      %v4440 = vpop.f32.mrb[0].mxu0
      %v4441 = vpop.f32.mrb[0].mxu0
      %v4442 = vadd.f32 0.0, %v4441
      %v4443 = vpop.f32.mrb[0].mxu0
      %4444 = vmatprep.mubr.bf16.mxu0 0
      %4445 = vmatmul.mubr.bf16.gmra.mrb[0].mxu0 %v4312
      %v4446 = vpop.f32.mrb[0].mxu0
      %v4447 = vadd.f32 0.0, %v4446
      %v4448 = vpop.f32.mrb[0].mxu0
      %v4449 = vpop.f32.mrb[0].mxu0
      %v4450 = vadd.f32 0.0, %v4449
      %v4451 = vpop.f32.mrb[0].mxu0
      %4452 = vmatprep.mubr.bf16.mxu0 0
      %4453 = vmatmul.mubr.bf16.gmra.mrb[0].mxu0 %v4315
      %v4454 = vpop.f32.mrb[0].mxu0
      %v4455 = vadd.f32 0.0, %v4454
      %v4456 = vpop.f32.mrb[0].mxu0
      %v4457 = vpop.f32.mrb[0].mxu0
      %v4458 = vadd.f32 0.0, %v4457
      %v4459 = vpop.f32.mrb[0].mxu0
      %4460 = vmatprep.mubr.bf16.mxu0 0
      %4461 = vmatmul.mubr.bf16.gmra.mrb[0].mxu0 %v4318
      %v4462 = vpop.f32.mrb[0].mxu0
      %v4463 = vadd.f32 0.0, %v4462
      %v4464 = vpop.f32.mrb[0].mxu0
      %v4465 = vpop.f32.mrb[0].mxu0
      %v4466 = vadd.f32 0.0, %v4465
      %v4467 = vpop.f32.mrb[0].mxu0
      %4468 = vmatprep.mubr.bf16.mxu0 0
      %4469 = vmatmul.mubr.bf16.gmra.mrb[0].mxu0 %v4321
      %v4470 = vpop.f32.mrb[0].mxu0
      %v4471 = vadd.f32 0.0, %v4470
      %v4472 = vpop.f32.mrb[0].mxu0
      %v4473 = vpop.f32.mrb[0].mxu0
      %v4474 = vadd.f32 0.0, %v4473
      %v4475 = vpop.f32.mrb[0].mxu0
      %4476 = vmatprep.mubr.bf16.mxu0 0
      %4477 = vmatmul.mubr.bf16.gmra.mrb[0].mxu0 %v4324
      %v4478 = vpop.f32.mrb[0].mxu0
      %v4479 = vadd.f32 0.0, %v4478
      %v4480 = vpop.f32.mrb[0].mxu0
      %v4481 = vpop.f32.mrb[0].mxu0
      %v4482 = vadd.f32 0.0, %v4481
      %v4483 = vpop.f32.mrb[0].mxu0
      %4484 = vmatprep.mubr.bf16.mxu0 0
      %4485 = vmatmul.mubr.bf16.gmra.mrb[0].mxu0 %v4327
      %v4486 = vpop.f32.mrb[0].mxu0
      %v4487 = vadd.f32 0.0, %v4486
      %v4488 = vpop.f32.mrb[0].mxu0
      %v4489 = vpop.f32.mrb[0].mxu0
      %v4490 = vadd.f32 0.0, %v4489
      %v4491 = vpop.f32.mrb[0].mxu0
      %4492 = vdwg.mxu0
      %v4493 = vadd.f32 %v4134, %v4367
      %v4494 = vadd.f32 %v4135, %v4370
      %v4495 = vadd.f32 %v4136, %v4375
      %v4496 = vadd.f32 %v4137, %v4378
      %v4497 = vadd.f32 %v4138, %v4383
      %v4498 = vadd.f32 %v4139, %v4386
      %v4499 = vadd.f32 %v4140, %v4391
      %v4500 = vadd.f32 %v4141, %v4394
      %v4501 = vadd.f32 %v4142, %v4399
      %v4502 = vadd.f32 %v4143, %v4402
      %v4503 = vadd.f32 %v4144, %v4407
      %v4504 = vadd.f32 %v4145, %v4410
      %v4505 = vadd.f32 %v4146, %v4415
      %v4506 = vadd.f32 %v4147, %v4418
      %v4507 = vadd.f32 %v4148, %v4423
      %v4508 = vadd.f32 %v4149, %v4426
      %v4509 = vadd.f32 %v4150, %v4431
      %v4510 = vadd.f32 %v4151, %v4434
      %v4511 = vadd.f32 %v4152, %v4439
      %v4512 = vadd.f32 %v4153, %v4442
      %v4513 = vadd.f32 %v4154, %v4447
      %v4514 = vadd.f32 %v4155, %v4450
      %v4515 = vadd.f32 %v4156, %v4455
      %v4516 = vadd.f32 %v4157, %v4458
      %v4517 = vadd.f32 %v4158, %v4463
      %v4518 = vadd.f32 %v4159, %v4466
      %v4519 = vadd.f32 %v4160, %v4471
      %v4520 = vadd.f32 %v4161, %v4474
      %v4521 = vadd.f32 %v4162, %v4479
      %v4522 = vadd.f32 %v4163, %v4482
      %v4523 = vadd.f32 %v4164, %v4487
      %v4524 = vadd.f32 %v4165, %v4490
      %v4525 = vld [vmem:[%s4166] sm:$0xf]
      %v4526 = vld [vmem:[%s4166 + $0x4] sm:$0xf]
      %v4527 = vld [vmem:[%s4166 + $0x8] sm:$0x1]
      %v4528 = vld [vmem:[%s4166 + $0xc] sm:$0xf]
      %v4529 = vld [vmem:[%s4166 + $0x10] sm:$0xf]
      %v4530 = vld [vmem:[%s4166 + $0x14] sm:$0x1]
      %v4531 = vld [vmem:[%s4166 + $0x18] sm:$0xf]
      %v4532 = vld [vmem:[%s4166 + $0x1c] sm:$0xf]
      %v4533 = vld [vmem:[%s4166 + $0x20] sm:$0x1]
      %v4534 = vld [vmem:[%s4166 + $0x24] sm:$0xf]
      %v4535 = vld [vmem:[%s4166 + $0x28] sm:$0xf]
      %v4536 = vld [vmem:[%s4166 + $0x2c] sm:$0x1]
      %v4537 = vld [vmem:[%s4166 + $0x30] sm:$0xf]
      %v4538 = vld [vmem:[%s4166 + $0x34] sm:$0xf]
      %v4539 = vld [vmem:[%s4166 + $0x38] sm:$0x1]
      %v4540 = vld [vmem:[%s4166 + $0x3c] sm:$0xf]
      %v4541 = vld [vmem:[%s4166 + $0x40] sm:$0xf]
      %v4542 = vld [vmem:[%s4166 + $0x44] sm:$0x1]
      %v4543 = vld [vmem:[%s4166 + $0x48] sm:$0xf]
      %v4544 = vld [vmem:[%s4166 + $0x4c] sm:$0xf]
      %v4545 = vld [vmem:[%s4166 + $0x50] sm:$0x1]
      %v4546 = vld [vmem:[%s4166 + $0x54] sm:$0xf]
      %v4547 = vld [vmem:[%s4166 + $0x58] sm:$0xf]
      %v4548 = vld [vmem:[%s4166 + $0x5c] sm:$0x1]
      %v4549 = vld [vmem:[%s4166 + $0x60] sm:$0xf]
      %v4550 = vld [vmem:[%s4166 + $0x64] sm:$0xf]
      %v4551 = vld [vmem:[%s4166 + $0x68] sm:$0x1]
      %v4552 = vld [vmem:[%s4166 + $0x6c] sm:$0xf]
      %v4553 = vld [vmem:[%s4166 + $0x70] sm:$0xf]
      %v4554 = vld [vmem:[%s4166 + $0x74] sm:$0x1]
      %v4555 = vld [vmem:[%s4166 + $0x78] sm:$0xf]
      %v4556 = vld [vmem:[%s4166 + $0x7c] sm:$0xf]
      %v4557 = vld [vmem:[%s4166 + $0x80] sm:$0x1]
      %v4558 = vld [vmem:[%s4166 + $0x84] sm:$0xf]
      %v4559 = vld [vmem:[%s4166 + $0x88] sm:$0xf]
      %v4560 = vld [vmem:[%s4166 + $0x8c] sm:$0x1]
      %v4561 = vld [vmem:[%s4166 + $0x90] sm:$0xf]
      %v4562 = vld [vmem:[%s4166 + $0x94] sm:$0xf]
      %v4563 = vld [vmem:[%s4166 + $0x98] sm:$0x1]
      %v4564 = vld [vmem:[%s4166 + $0x9c] sm:$0xf]
      %v4565 = vld [vmem:[%s4166 + $0xa0] sm:$0xf]
      %v4566 = vld [vmem:[%s4166 + $0xa4] sm:$0x1]
      %v4567 = vld [vmem:[%s4166 + $0xa8] sm:$0xf]
      %v4568 = vld [vmem:[%s4166 + $0xac] sm:$0xf]
      %v4569 = vld [vmem:[%s4166 + $0xb0] sm:$0x1]
      %v4570 = vld [vmem:[%s4166 + $0xb4] sm:$0xf]
      %v4571 = vld [vmem:[%s4166 + $0xb8] sm:$0xf]
      %v4572 = vld [vmem:[%s4166 + $0xbc] sm:$0x1]
      %v4574 = vshrl.u32 %v4525, 16
      %v4576 = vrot.slane %v4574, 4
      %v4577 = vshll.u32 %v4525, 16
      %v4579 = vrot.slane %v4577, 5
      %v4580 = vor.u32 %v4576, %v4579
      %v4581 = vrot.slane %v4580, 4
      %v4583 = vshll.u32 %v4526, 16
      %v4585 = vrot.slane %v4583, 5
      %v4586 = vsel %vm1214, %v4581, %v4585
      %v4587 = vshrl.u32 %v4526, 16
      %v4589 = vrot.slane %v4587, 4
      %v4590 = vor.u32 %v4589, %v4585
      %v4591 = vrot.slane %v4590, 4
      %v4593 = vshll.u32 %v4527, 16
      %v4595 = vrot.slane %v4593, 5
      %v4596 = vsel %vm1214, %v4591, %v4595
      %v4598 = vshrl.u32 %v4528, 16
      %v4600 = vrot.slane %v4598, 4
      %v4601 = vshll.u32 %v4528, 16
      %v4603 = vrot.slane %v4601, 5
      %v4604 = vor.u32 %v4600, %v4603
      %v4605 = vrot.slane %v4604, 4
      %v4607 = vshll.u32 %v4529, 16
      %v4609 = vrot.slane %v4607, 5
      %v4610 = vsel %vm1214, %v4605, %v4609
      %v4611 = vshrl.u32 %v4529, 16
      %v4613 = vrot.slane %v4611, 4
      %v4614 = vor.u32 %v4613, %v4609
      %v4615 = vrot.slane %v4614, 4
      %v4617 = vshll.u32 %v4530, 16
      %v4619 = vrot.slane %v4617, 5
      %v4620 = vsel %vm1214, %v4615, %v4619
      %v4622 = vshrl.u32 %v4531, 16
      %v4624 = vrot.slane %v4622, 4
      %v4625 = vshll.u32 %v4531, 16
      %v4627 = vrot.slane %v4625, 5
      %v4628 = vor.u32 %v4624, %v4627
      %v4629 = vrot.slane %v4628, 4
      %v4631 = vshll.u32 %v4532, 16
      %v4633 = vrot.slane %v4631, 5
      %v4634 = vsel %vm1214, %v4629, %v4633
      %v4635 = vshrl.u32 %v4532, 16
      %v4637 = vrot.slane %v4635, 4
      %v4638 = vor.u32 %v4637, %v4633
      %v4639 = vrot.slane %v4638, 4
      %v4641 = vshll.u32 %v4533, 16
      %v4643 = vrot.slane %v4641, 5
      %v4644 = vsel %vm1214, %v4639, %v4643
      %v4646 = vshrl.u32 %v4534, 16
      %v4648 = vrot.slane %v4646, 4
      %v4649 = vshll.u32 %v4534, 16
      %v4651 = vrot.slane %v4649, 5
      %v4652 = vor.u32 %v4648, %v4651
      %v4653 = vrot.slane %v4652, 4
      %v4655 = vshll.u32 %v4535, 16
      %v4657 = vrot.slane %v4655, 5
      %v4658 = vsel %vm1214, %v4653, %v4657
      %v4659 = vshrl.u32 %v4535, 16
      %v4661 = vrot.slane %v4659, 4
      %v4662 = vor.u32 %v4661, %v4657
      %v4663 = vrot.slane %v4662, 4
      %v4665 = vshll.u32 %v4536, 16
      %v4667 = vrot.slane %v4665, 5
      %v4668 = vsel %vm1214, %v4663, %v4667
      %v4670 = vshrl.u32 %v4537, 16
      %v4672 = vrot.slane %v4670, 4
      %v4673 = vshll.u32 %v4537, 16
      %v4675 = vrot.slane %v4673, 5
      %v4676 = vor.u32 %v4672, %v4675
      %v4677 = vrot.slane %v4676, 4
      %v4679 = vshll.u32 %v4538, 16
      %v4681 = vrot.slane %v4679, 5
      %v4682 = vsel %vm1214, %v4677, %v4681
      %v4683 = vshrl.u32 %v4538, 16
      %v4685 = vrot.slane %v4683, 4
      %v4686 = vor.u32 %v4685, %v4681
      %v4687 = vrot.slane %v4686, 4
      %v4689 = vshll.u32 %v4539, 16
      %v4691 = vrot.slane %v4689, 5
      %v4692 = vsel %vm1214, %v4687, %v4691
      %v4694 = vshrl.u32 %v4540, 16
      %v4696 = vrot.slane %v4694, 4
      %v4697 = vshll.u32 %v4540, 16
      %v4699 = vrot.slane %v4697, 5
      %v4700 = vor.u32 %v4696, %v4699
      %v4701 = vrot.slane %v4700, 4
      %v4703 = vshll.u32 %v4541, 16
      %v4705 = vrot.slane %v4703, 5
      %v4706 = vsel %vm1214, %v4701, %v4705
      %v4707 = vshrl.u32 %v4541, 16
      %v4709 = vrot.slane %v4707, 4
      %v4710 = vor.u32 %v4709, %v4705
      %v4711 = vrot.slane %v4710, 4
      %v4713 = vshll.u32 %v4542, 16
      %v4715 = vrot.slane %v4713, 5
      %v4716 = vsel %vm1214, %v4711, %v4715
      %v4718 = vshrl.u32 %v4543, 16
      %v4720 = vrot.slane %v4718, 4
      %v4721 = vshll.u32 %v4543, 16
      %v4723 = vrot.slane %v4721, 5
      %v4724 = vor.u32 %v4720, %v4723
      %v4725 = vrot.slane %v4724, 4
      %v4727 = vshll.u32 %v4544, 16
      %v4729 = vrot.slane %v4727, 5
      %v4730 = vsel %vm1214, %v4725, %v4729
      %v4731 = vshrl.u32 %v4544, 16
      %v4733 = vrot.slane %v4731, 4
      %v4734 = vor.u32 %v4733, %v4729
      %v4735 = vrot.slane %v4734, 4
      %v4737 = vshll.u32 %v4545, 16
      %v4739 = vrot.slane %v4737, 5
      %v4740 = vsel %vm1214, %v4735, %v4739
      %v4742 = vshrl.u32 %v4546, 16
      %v4744 = vrot.slane %v4742, 4
      %v4745 = vshll.u32 %v4546, 16
      %v4747 = vrot.slane %v4745, 5
      %v4748 = vor.u32 %v4744, %v4747
      %v4749 = vrot.slane %v4748, 4
      %v4751 = vshll.u32 %v4547, 16
      %v4753 = vrot.slane %v4751, 5
      %v4754 = vsel %vm1214, %v4749, %v4753
      %v4755 = vshrl.u32 %v4547, 16
      %v4757 = vrot.slane %v4755, 4
      %v4758 = vor.u32 %v4757, %v4753
      %v4759 = vrot.slane %v4758, 4
      %v4761 = vshll.u32 %v4548, 16
      %v4763 = vrot.slane %v4761, 5
      %v4764 = vsel %vm1214, %v4759, %v4763
      %v4766 = vshrl.u32 %v4549, 16
      %v4768 = vrot.slane %v4766, 4
      %v4769 = vshll.u32 %v4549, 16
      %v4771 = vrot.slane %v4769, 5
      %v4772 = vor.u32 %v4768, %v4771
      %v4773 = vrot.slane %v4772, 4
      %v4775 = vshll.u32 %v4550, 16
      %v4777 = vrot.slane %v4775, 5
      %v4778 = vsel %vm1214, %v4773, %v4777
      %v4779 = vshrl.u32 %v4550, 16
      %v4781 = vrot.slane %v4779, 4
      %v4782 = vor.u32 %v4781, %v4777
      %v4783 = vrot.slane %v4782, 4
      %v4785 = vshll.u32 %v4551, 16
      %v4787 = vrot.slane %v4785, 5
      %v4788 = vsel %vm1214, %v4783, %v4787
      %v4790 = vshrl.u32 %v4552, 16
      %v4792 = vrot.slane %v4790, 4
      %v4793 = vshll.u32 %v4552, 16
      %v4795 = vrot.slane %v4793, 5
      %v4796 = vor.u32 %v4792, %v4795
      %v4797 = vrot.slane %v4796, 4
      %v4799 = vshll.u32 %v4553, 16
      %v4801 = vrot.slane %v4799, 5
      %v4802 = vsel %vm1214, %v4797, %v4801
      %v4803 = vshrl.u32 %v4553, 16
      %v4805 = vrot.slane %v4803, 4
      %v4806 = vor.u32 %v4805, %v4801
      %v4807 = vrot.slane %v4806, 4
      %v4809 = vshll.u32 %v4554, 16
      %v4811 = vrot.slane %v4809, 5
      %v4812 = vsel %vm1214, %v4807, %v4811
      %v4814 = vshrl.u32 %v4555, 16
      %v4816 = vrot.slane %v4814, 4
      %v4817 = vshll.u32 %v4555, 16
      %v4819 = vrot.slane %v4817, 5
      %v4820 = vor.u32 %v4816, %v4819
      %v4821 = vrot.slane %v4820, 4
      %v4823 = vshll.u32 %v4556, 16
      %v4825 = vrot.slane %v4823, 5
      %v4826 = vsel %vm1214, %v4821, %v4825
      %v4827 = vshrl.u32 %v4556, 16
      %v4829 = vrot.slane %v4827, 4
      %v4830 = vor.u32 %v4829, %v4825
      %v4831 = vrot.slane %v4830, 4
      %v4833 = vshll.u32 %v4557, 16
      %v4835 = vrot.slane %v4833, 5
      %v4836 = vsel %vm1214, %v4831, %v4835
      %v4838 = vshrl.u32 %v4558, 16
      %v4840 = vrot.slane %v4838, 4
      %v4841 = vshll.u32 %v4558, 16
      %v4843 = vrot.slane %v4841, 5
      %v4844 = vor.u32 %v4840, %v4843
      %v4845 = vrot.slane %v4844, 4
      %v4847 = vshll.u32 %v4559, 16
      %v4849 = vrot.slane %v4847, 5
      %v4850 = vsel %vm1214, %v4845, %v4849
      %v4851 = vshrl.u32 %v4559, 16
      %v4853 = vrot.slane %v4851, 4
      %v4854 = vor.u32 %v4853, %v4849
      %v4855 = vrot.slane %v4854, 4
      %v4857 = vshll.u32 %v4560, 16
      %v4859 = vrot.slane %v4857, 5
      %v4860 = vsel %vm1214, %v4855, %v4859
      %v4862 = vshrl.u32 %v4561, 16
      %v4864 = vrot.slane %v4862, 4
      %v4865 = vshll.u32 %v4561, 16
      %v4867 = vrot.slane %v4865, 5
      %v4868 = vor.u32 %v4864, %v4867
      %v4869 = vrot.slane %v4868, 4
      %v4871 = vshll.u32 %v4562, 16
      %v4873 = vrot.slane %v4871, 5
      %v4874 = vsel %vm1214, %v4869, %v4873
      %v4875 = vshrl.u32 %v4562, 16
      %v4877 = vrot.slane %v4875, 4
      %v4878 = vor.u32 %v4877, %v4873
      %v4879 = vrot.slane %v4878, 4
      %v4881 = vshll.u32 %v4563, 16
      %v4883 = vrot.slane %v4881, 5
      %v4884 = vsel %vm1214, %v4879, %v4883
      %v4886 = vshrl.u32 %v4564, 16
      %v4888 = vrot.slane %v4886, 4
      %v4889 = vshll.u32 %v4564, 16
      %v4891 = vrot.slane %v4889, 5
      %v4892 = vor.u32 %v4888, %v4891
      %v4893 = vrot.slane %v4892, 4
      %v4895 = vshll.u32 %v4565, 16
      %v4897 = vrot.slane %v4895, 5
      %v4898 = vsel %vm1214, %v4893, %v4897
      %v4899 = vshrl.u32 %v4565, 16
      %v4901 = vrot.slane %v4899, 4
      %v4902 = vor.u32 %v4901, %v4897
      %v4903 = vrot.slane %v4902, 4
      %v4905 = vshll.u32 %v4566, 16
      %v4907 = vrot.slane %v4905, 5
      %v4908 = vsel %vm1214, %v4903, %v4907
      %v4910 = vshrl.u32 %v4567, 16
      %v4912 = vrot.slane %v4910, 4
      %v4913 = vshll.u32 %v4567, 16
      %v4915 = vrot.slane %v4913, 5
      %v4916 = vor.u32 %v4912, %v4915
      %v4917 = vrot.slane %v4916, 4
      %v4919 = vshll.u32 %v4568, 16
      %v4921 = vrot.slane %v4919, 5
      %v4922 = vsel %vm1214, %v4917, %v4921
      %v4923 = vshrl.u32 %v4568, 16
      %v4925 = vrot.slane %v4923, 4
      %v4926 = vor.u32 %v4925, %v4921
      %v4927 = vrot.slane %v4926, 4
      %v4929 = vshll.u32 %v4569, 16
      %v4931 = vrot.slane %v4929, 5
      %v4932 = vsel %vm1214, %v4927, %v4931
      %v4934 = vshrl.u32 %v4570, 16
      %v4936 = vrot.slane %v4934, 4
      %v4937 = vshll.u32 %v4570, 16
      %v4939 = vrot.slane %v4937, 5
      %v4940 = vor.u32 %v4936, %v4939
      %v4941 = vrot.slane %v4940, 4
      %v4943 = vshll.u32 %v4571, 16
      %v4945 = vrot.slane %v4943, 5
      %v4946 = vsel %vm1214, %v4941, %v4945
      %v4947 = vshrl.u32 %v4571, 16
      %v4949 = vrot.slane %v4947, 4
      %v4950 = vor.u32 %v4949, %v4945
      %v4951 = vrot.slane %v4950, 4
      %v4953 = vshll.u32 %v4572, 16
      %v4955 = vrot.slane %v4953, 5
      %v4956 = vsel %vm1214, %v4951, %v4955
      %s4957 = scalar_lea.vmem %s3, 28
      %v4958 = vld [vmem:[%s4957] sm:$0xf]
      %v4959 = vunpack.c.l.b16 %v4586
      %v4960 = vunpack.c.l.b16 %v4596
      %v4961 = vunpack.c.l.b16 %v4610
      %v4962 = vunpack.c.l.b16 %v4620
      %v4963 = vunpack.c.l.b16 %v4634
      %v4964 = vunpack.c.l.b16 %v4644
      %v4965 = vunpack.c.l.b16 %v4658
      %v4966 = vunpack.c.l.b16 %v4668
      %v4967 = vunpack.c.l.b16 %v4682
      %v4968 = vunpack.c.l.b16 %v4692
      %v4969 = vunpack.c.l.b16 %v4706
      %v4970 = vunpack.c.l.b16 %v4716
      %v4971 = vunpack.c.l.b16 %v4730
      %v4972 = vunpack.c.l.b16 %v4740
      %v4973 = vunpack.c.l.b16 %v4754
      %v4974 = vunpack.c.l.b16 %v4764
      %v4975 = vunpack.c.l.b16 %v4778
      %v4976 = vunpack.c.l.b16 %v4788
      %v4977 = vunpack.c.l.b16 %v4802
      %v4978 = vunpack.c.l.b16 %v4812
      %v4979 = vunpack.c.l.b16 %v4826
      %v4980 = vunpack.c.l.b16 %v4836
      %v4981 = vunpack.c.l.b16 %v4850
      %v4982 = vunpack.c.l.b16 %v4860
      %v4983 = vunpack.c.l.b16 %v4874
      %v4984 = vunpack.c.l.b16 %v4884
      %v4985 = vunpack.c.l.b16 %v4898
      %v4986 = vunpack.c.l.b16 %v4908
      %v4987 = vunpack.c.l.b16 %v4922
      %v4988 = vunpack.c.l.b16 %v4932
      %v4989 = vunpack.c.l.b16 %v4946
      %v4990 = vunpack.c.l.b16 %v4956
      %v4991 = vpack.c.b16 %v4960, %v4959
      %v4992 = vpack.c.b16 %v4962, %v4961
      %v4993 = vpack.c.b16 %v4964, %v4963
      %v4994 = vpack.c.b16 %v4966, %v4965
      %v4995 = vpack.c.b16 %v4968, %v4967
      %v4996 = vpack.c.b16 %v4970, %v4969
      %v4997 = vpack.c.b16 %v4972, %v4971
      %v4998 = vpack.c.b16 %v4974, %v4973
      %v4999 = vpack.c.b16 %v4976, %v4975
      %v5000 = vpack.c.b16 %v4978, %v4977
      %v5001 = vpack.c.b16 %v4980, %v4979
      %v5002 = vpack.c.b16 %v4982, %v4981
      %v5003 = vpack.c.b16 %v4984, %v4983
      %v5004 = vpack.c.b16 %v4986, %v4985
      %v5005 = vpack.c.b16 %v4988, %v4987
      %v5006 = vpack.c.b16 %v4990, %v4989
      %v5008 = vsel %vm1649, %v4991, 0
      %v5011 = vsel %vm1649, %v4992, 0
      %v5014 = vsel %vm1649, %v4993, 0
      %v5017 = vsel %vm1649, %v4994, 0
      %v5020 = vsel %vm1649, %v4995, 0
      %v5023 = vsel %vm1649, %v4996, 0
      %v5026 = vsel %vm1649, %v4997, 0
      %v5029 = vsel %vm1649, %v4998, 0
      %v5032 = vsel %vm1649, %v4999, 0
      %v5035 = vsel %vm1649, %v5000, 0
      %v5038 = vsel %vm1649, %v5001, 0
      %v5041 = vsel %vm1649, %v5002, 0
      %v5044 = vsel %vm1649, %v5003, 0
      %v5047 = vsel %vm1649, %v5004, 0
      %v5050 = vsel %vm1649, %v5005, 0
      %v5053 = vsel %vm1649, %v5006, 0
      %v5056 = vsel %vm1698, %v4958, 0
      %5058 = vmatprep.subr.bf16.mxu0 0
      %5059 = vmatpush1.bf16.msra.mxu0 %v5056
      %5060 = vmatprep.subr.bf16.mxu0 0
      %5061 = vmatpush1.bf16.msra.mxu0 0
      %5062 = vmatprep.subr.bf16.mxu0 0
      %5063 = vmatpush1.bf16.msra.mxu0 0
      %5064 = vmatprep.subr.bf16.mxu0 0
      %5065 = vmatpush1.bf16.msra.mxu0 0
      %5066 = vmatprep.subr.bf16.mxu0 0
      %5067 = vmatpush1.bf16.msra.mxu0 0
      %5068 = vmatprep.subr.bf16.mxu0 0
      %5069 = vmatpush1.bf16.msra.mxu0 0
      %5070 = vmatprep.subr.bf16.mxu0 0
      %5071 = vmatpush1.bf16.msra.mxu0 0
      %5072 = vmatprep.subr.bf16.mxu0 0
      %5073 = vmatpush1.bf16.msra.mxu0 0
      %5074 = vmatprep.subr.bf16.mxu0 0
      %5075 = vmatpush1.bf16.msra.mxu0 0
      %5076 = vmatprep.subr.bf16.mxu0 0
      %5077 = vmatpush1.bf16.msra.mxu0 0
      %5078 = vmatprep.subr.bf16.mxu0 0
      %5079 = vmatpush1.bf16.msra.mxu0 0
      %5080 = vmatprep.subr.bf16.mxu0 0
      %5081 = vmatpush1.bf16.msra.mxu0 0
      %5082 = vmatprep.subr.bf16.mxu0 0
      %5083 = vmatpush1.bf16.msra.mxu0 0
      %5084 = vmatprep.subr.bf16.mxu0 0
      %5085 = vmatpush1.bf16.msra.mxu0 0
      %5086 = vmatprep.subr.bf16.mxu0 0
      %5087 = vmatpush1.bf16.msra.mxu0 0
      %5088 = vmatprep.subr.bf16.mxu0 0
      %5089 = vmatpush1.bf16.msra.mxu0 0
      %5090 = vmatprep.mubr.bf16.mxu0 0
      %5091 = vmatmul.mubr.bf16.gmra.mrb[0].mxu0 %v5008
      %v5092 = vpop.f32.mrb[0].mxu0
      %v5093 = vadd.f32 0.0, %v5092
      %v5094 = vpop.f32.mrb[0].mxu0
      %v5095 = vpop.f32.mrb[0].mxu0
      %v5096 = vadd.f32 0.0, %v5095
      %v5097 = vpop.f32.mrb[0].mxu0
      %5098 = vmatprep.mubr.bf16.mxu0 0
      %5099 = vmatmul.mubr.bf16.gmra.mrb[0].mxu0 %v5011
      %v5100 = vpop.f32.mrb[0].mxu0
      %v5101 = vadd.f32 0.0, %v5100
      %v5102 = vpop.f32.mrb[0].mxu0
      %v5103 = vpop.f32.mrb[0].mxu0
      %v5104 = vadd.f32 0.0, %v5103
      %v5105 = vpop.f32.mrb[0].mxu0
      %5106 = vmatprep.mubr.bf16.mxu0 0
      %5107 = vmatmul.mubr.bf16.gmra.mrb[0].mxu0 %v5014
      %v5108 = vpop.f32.mrb[0].mxu0
      %v5109 = vadd.f32 0.0, %v5108
      %v5110 = vpop.f32.mrb[0].mxu0
      %v5111 = vpop.f32.mrb[0].mxu0
      %v5112 = vadd.f32 0.0, %v5111
      %v5113 = vpop.f32.mrb[0].mxu0
      %5114 = vmatprep.mubr.bf16.mxu0 0
      %5115 = vmatmul.mubr.bf16.gmra.mrb[0].mxu0 %v5017
      %v5116 = vpop.f32.mrb[0].mxu0
      %v5117 = vadd.f32 0.0, %v5116
      %v5118 = vpop.f32.mrb[0].mxu0
      %v5119 = vpop.f32.mrb[0].mxu0
      %v5120 = vadd.f32 0.0, %v5119
      %v5121 = vpop.f32.mrb[0].mxu0
      %5122 = vmatprep.mubr.bf16.mxu0 0
      %5123 = vmatmul.mubr.bf16.gmra.mrb[0].mxu0 %v5020
      %v5124 = vpop.f32.mrb[0].mxu0
      %v5125 = vadd.f32 0.0, %v5124
      %v5126 = vpop.f32.mrb[0].mxu0
      %v5127 = vpop.f32.mrb[0].mxu0
      %v5128 = vadd.f32 0.0, %v5127
      %v5129 = vpop.f32.mrb[0].mxu0
      %5130 = vmatprep.mubr.bf16.mxu0 0
      %5131 = vmatmul.mubr.bf16.gmra.mrb[0].mxu0 %v5023
      %v5132 = vpop.f32.mrb[0].mxu0
      %v5133 = vadd.f32 0.0, %v5132
      %v5134 = vpop.f32.mrb[0].mxu0
      %v5135 = vpop.f32.mrb[0].mxu0
      %v5136 = vadd.f32 0.0, %v5135
      %v5137 = vpop.f32.mrb[0].mxu0
      %5138 = vmatprep.mubr.bf16.mxu0 0
      %5139 = vmatmul.mubr.bf16.gmra.mrb[0].mxu0 %v5026
      %v5140 = vpop.f32.mrb[0].mxu0
      %v5141 = vadd.f32 0.0, %v5140
      %v5142 = vpop.f32.mrb[0].mxu0
      %v5143 = vpop.f32.mrb[0].mxu0
      %v5144 = vadd.f32 0.0, %v5143
      %v5145 = vpop.f32.mrb[0].mxu0
      %5146 = vmatprep.mubr.bf16.mxu0 0
      %5147 = vmatmul.mubr.bf16.gmra.mrb[0].mxu0 %v5029
      %v5148 = vpop.f32.mrb[0].mxu0
      %v5149 = vadd.f32 0.0, %v5148
      %v5150 = vpop.f32.mrb[0].mxu0
      %v5151 = vpop.f32.mrb[0].mxu0
      %v5152 = vadd.f32 0.0, %v5151
      %v5153 = vpop.f32.mrb[0].mxu0
      %5154 = vmatprep.mubr.bf16.mxu0 0
      %5155 = vmatmul.mubr.bf16.gmra.mrb[0].mxu0 %v5032
      %v5156 = vpop.f32.mrb[0].mxu0
      %v5157 = vadd.f32 0.0, %v5156
      %v5158 = vpop.f32.mrb[0].mxu0
      %v5159 = vpop.f32.mrb[0].mxu0
      %v5160 = vadd.f32 0.0, %v5159
      %v5161 = vpop.f32.mrb[0].mxu0
      %5162 = vmatprep.mubr.bf16.mxu0 0
      %5163 = vmatmul.mubr.bf16.gmra.mrb[0].mxu0 %v5035
      %v5164 = vpop.f32.mrb[0].mxu0
      %v5165 = vadd.f32 0.0, %v5164
      %v5166 = vpop.f32.mrb[0].mxu0
      %v5167 = vpop.f32.mrb[0].mxu0
      %v5168 = vadd.f32 0.0, %v5167
      %v5169 = vpop.f32.mrb[0].mxu0
      %5170 = vmatprep.mubr.bf16.mxu0 0
      %5171 = vmatmul.mubr.bf16.gmra.mrb[0].mxu0 %v5038
      %v5172 = vpop.f32.mrb[0].mxu0
      %v5173 = vadd.f32 0.0, %v5172
      %v5174 = vpop.f32.mrb[0].mxu0
      %v5175 = vpop.f32.mrb[0].mxu0
      %v5176 = vadd.f32 0.0, %v5175
      %v5177 = vpop.f32.mrb[0].mxu0
      %5178 = vmatprep.mubr.bf16.mxu0 0
      %5179 = vmatmul.mubr.bf16.gmra.mrb[0].mxu0 %v5041
      %v5180 = vpop.f32.mrb[0].mxu0
      %v5181 = vadd.f32 0.0, %v5180
      %v5182 = vpop.f32.mrb[0].mxu0
      %v5183 = vpop.f32.mrb[0].mxu0
      %v5184 = vadd.f32 0.0, %v5183
      %v5185 = vpop.f32.mrb[0].mxu0
      %5186 = vmatprep.mubr.bf16.mxu0 0
      %5187 = vmatmul.mubr.bf16.gmra.mrb[0].mxu0 %v5044
      %v5188 = vpop.f32.mrb[0].mxu0
      %v5189 = vadd.f32 0.0, %v5188
      %v5190 = vpop.f32.mrb[0].mxu0
      %v5191 = vpop.f32.mrb[0].mxu0
      %v5192 = vadd.f32 0.0, %v5191
      %v5193 = vpop.f32.mrb[0].mxu0
      %5194 = vmatprep.mubr.bf16.mxu0 0
      %5195 = vmatmul.mubr.bf16.gmra.mrb[0].mxu0 %v5047
      %v5196 = vpop.f32.mrb[0].mxu0
      %v5197 = vadd.f32 0.0, %v5196
      %v5198 = vpop.f32.mrb[0].mxu0
      %v5199 = vpop.f32.mrb[0].mxu0
      %v5200 = vadd.f32 0.0, %v5199
      %v5201 = vpop.f32.mrb[0].mxu0
      %5202 = vmatprep.mubr.bf16.mxu0 0
      %5203 = vmatmul.mubr.bf16.gmra.mrb[0].mxu0 %v5050
      %v5204 = vpop.f32.mrb[0].mxu0
      %v5205 = vadd.f32 0.0, %v5204
      %v5206 = vpop.f32.mrb[0].mxu0
      %v5207 = vpop.f32.mrb[0].mxu0
      %v5208 = vadd.f32 0.0, %v5207
      %v5209 = vpop.f32.mrb[0].mxu0
      %5210 = vmatprep.mubr.bf16.mxu0 0
      %5211 = vmatmul.mubr.bf16.gmra.mrb[0].mxu0 %v5053
      %v5212 = vpop.f32.mrb[0].mxu0
      %v5213 = vadd.f32 0.0, %v5212
      %v5214 = vpop.f32.mrb[0].mxu0
      %v5215 = vpop.f32.mrb[0].mxu0
      %v5216 = vadd.f32 0.0, %v5215
      %v5217 = vpop.f32.mrb[0].mxu0
      %5218 = vdwg.mxu0
      %v5219 = vadd.f32 %v4493, %v5093
      %v5220 = vadd.f32 %v4494, %v5096
      %v5221 = vadd.f32 %v4495, %v5101
      %v5222 = vadd.f32 %v4496, %v5104
      %v5223 = vadd.f32 %v4497, %v5109
      %v5224 = vadd.f32 %v4498, %v5112
      %v5225 = vadd.f32 %v4499, %v5117
      %v5226 = vadd.f32 %v4500, %v5120
      %v5227 = vadd.f32 %v4501, %v5125
      %v5228 = vadd.f32 %v4502, %v5128
      %v5229 = vadd.f32 %v4503, %v5133
      %v5230 = vadd.f32 %v4504, %v5136
      %v5231 = vadd.f32 %v4505, %v5141
      %v5232 = vadd.f32 %v4506, %v5144
      %v5233 = vadd.f32 %v4507, %v5149
      %v5234 = vadd.f32 %v4508, %v5152
      %v5235 = vadd.f32 %v4509, %v5157
      %v5236 = vadd.f32 %v4510, %v5160
      %v5237 = vadd.f32 %v4511, %v5165
      %v5238 = vadd.f32 %v4512, %v5168
      %v5239 = vadd.f32 %v4513, %v5173
      %v5240 = vadd.f32 %v4514, %v5176
      %v5241 = vadd.f32 %v4515, %v5181
      %v5242 = vadd.f32 %v4516, %v5184
      %v5243 = vadd.f32 %v4517, %v5189
      %v5244 = vadd.f32 %v4518, %v5192
      %v5245 = vadd.f32 %v4519, %v5197
      %v5246 = vadd.f32 %v4520, %v5200
      %v5247 = vadd.f32 %v4521, %v5205
      %v5248 = vadd.f32 %v4522, %v5208
      %v5249 = vadd.f32 %v4523, %v5213
      %v5250 = vadd.f32 %v4524, %v5216
      %v5251 = vld [vmem:[%s4166] sm:$0xe]
      %v5252 = vld [vmem:[%s4166 + $0xc] sm:$0xe]
      %v5253 = vld [vmem:[%s4166 + $0x18] sm:$0xe]
      %v5254 = vld [vmem:[%s4166 + $0x24] sm:$0xe]
      %v5255 = vld [vmem:[%s4166 + $0x30] sm:$0xe]
      %v5256 = vld [vmem:[%s4166 + $0x3c] sm:$0xe]
      %v5257 = vld [vmem:[%s4166 + $0x48] sm:$0xe]
      %v5258 = vld [vmem:[%s4166 + $0x54] sm:$0xe]
      %v5259 = vld [vmem:[%s4166 + $0x60] sm:$0xe]
      %v5260 = vld [vmem:[%s4166 + $0x6c] sm:$0xe]
      %v5261 = vld [vmem:[%s4166 + $0x78] sm:$0xe]
      %v5262 = vld [vmem:[%s4166 + $0x84] sm:$0xe]
      %v5263 = vld [vmem:[%s4166 + $0x90] sm:$0xe]
      %v5264 = vld [vmem:[%s4166 + $0x9c] sm:$0xe]
      %v5265 = vld [vmem:[%s4166 + $0xa8] sm:$0xe]
      %v5266 = vld [vmem:[%s4166 + $0xb4] sm:$0xe]
      %v5315 = vrot.slane %v5251, 5
      %v5316 = vrot.slane %v5315, 4
      %v5317 = vrot.slane %v4526, 5
      %v5318 = vsel %vm2205, %v5316, %v5317
      %v5319 = vrot.slane %v5317, 4
      %v5320 = vrot.slane %v4527, 5
      %v5321 = vsel %vm2205, %v5319, %v5320
      %v5322 = vrot.slane %v5252, 5
      %v5323 = vrot.slane %v5322, 4
      %v5324 = vrot.slane %v4529, 5
      %v5325 = vsel %vm2205, %v5323, %v5324
      %v5326 = vrot.slane %v5324, 4
      %v5327 = vrot.slane %v4530, 5
      %v5328 = vsel %vm2205, %v5326, %v5327
      %v5329 = vrot.slane %v5253, 5
      %v5330 = vrot.slane %v5329, 4
      %v5331 = vrot.slane %v4532, 5
      %v5332 = vsel %vm2205, %v5330, %v5331
      %v5333 = vrot.slane %v5331, 4
      %v5334 = vrot.slane %v4533, 5
      %v5335 = vsel %vm2205, %v5333, %v5334
      %v5336 = vrot.slane %v5254, 5
      %v5337 = vrot.slane %v5336, 4
      %v5338 = vrot.slane %v4535, 5
      %v5339 = vsel %vm2205, %v5337, %v5338
      %v5340 = vrot.slane %v5338, 4
      %v5341 = vrot.slane %v4536, 5
      %v5342 = vsel %vm2205, %v5340, %v5341
      %v5343 = vrot.slane %v5255, 5
      %v5344 = vrot.slane %v5343, 4
      %v5345 = vrot.slane %v4538, 5
      %v5346 = vsel %vm2205, %v5344, %v5345
      %v5347 = vrot.slane %v5345, 4
      %v5348 = vrot.slane %v4539, 5
      %v5349 = vsel %vm2205, %v5347, %v5348
      %v5350 = vrot.slane %v5256, 5
      %v5351 = vrot.slane %v5350, 4
      %v5352 = vrot.slane %v4541, 5
      %v5353 = vsel %vm2205, %v5351, %v5352
      %v5354 = vrot.slane %v5352, 4
      %v5355 = vrot.slane %v4542, 5
      %v5356 = vsel %vm2205, %v5354, %v5355
      %v5357 = vrot.slane %v5257, 5
      %v5358 = vrot.slane %v5357, 4
      %v5359 = vrot.slane %v4544, 5
      %v5360 = vsel %vm2205, %v5358, %v5359
      %v5361 = vrot.slane %v5359, 4
      %v5362 = vrot.slane %v4545, 5
      %v5363 = vsel %vm2205, %v5361, %v5362
      %v5364 = vrot.slane %v5258, 5
      %v5365 = vrot.slane %v5364, 4
      %v5366 = vrot.slane %v4547, 5
      %v5367 = vsel %vm2205, %v5365, %v5366
      %v5368 = vrot.slane %v5366, 4
      %v5369 = vrot.slane %v4548, 5
      %v5370 = vsel %vm2205, %v5368, %v5369
      %v5371 = vrot.slane %v5259, 5
      %v5372 = vrot.slane %v5371, 4
      %v5373 = vrot.slane %v4550, 5
      %v5374 = vsel %vm2205, %v5372, %v5373
      %v5375 = vrot.slane %v5373, 4
      %v5376 = vrot.slane %v4551, 5
      %v5377 = vsel %vm2205, %v5375, %v5376
      %v5378 = vrot.slane %v5260, 5
      %v5379 = vrot.slane %v5378, 4
      %v5380 = vrot.slane %v4553, 5
      %v5381 = vsel %vm2205, %v5379, %v5380
      %v5382 = vrot.slane %v5380, 4
      %v5383 = vrot.slane %v4554, 5
      %v5384 = vsel %vm2205, %v5382, %v5383
      %v5385 = vrot.slane %v5261, 5
      %v5386 = vrot.slane %v5385, 4
      %v5387 = vrot.slane %v4556, 5
      %v5388 = vsel %vm2205, %v5386, %v5387
      %v5389 = vrot.slane %v5387, 4
      %v5390 = vrot.slane %v4557, 5
      %v5391 = vsel %vm2205, %v5389, %v5390
      %v5392 = vrot.slane %v5262, 5
      %v5393 = vrot.slane %v5392, 4
      %v5394 = vrot.slane %v4559, 5
      %v5395 = vsel %vm2205, %v5393, %v5394
      %v5396 = vrot.slane %v5394, 4
      %v5397 = vrot.slane %v4560, 5
      %v5398 = vsel %vm2205, %v5396, %v5397
      %v5399 = vrot.slane %v5263, 5
      %v5400 = vrot.slane %v5399, 4
      %v5401 = vrot.slane %v4562, 5
      %v5402 = vsel %vm2205, %v5400, %v5401
      %v5403 = vrot.slane %v5401, 4
      %v5404 = vrot.slane %v4563, 5
      %v5405 = vsel %vm2205, %v5403, %v5404
      %v5406 = vrot.slane %v5264, 5
      %v5407 = vrot.slane %v5406, 4
      %v5408 = vrot.slane %v4565, 5
      %v5409 = vsel %vm2205, %v5407, %v5408
      %v5410 = vrot.slane %v5408, 4
      %v5411 = vrot.slane %v4566, 5
      %v5412 = vsel %vm2205, %v5410, %v5411
      %v5413 = vrot.slane %v5265, 5
      %v5414 = vrot.slane %v5413, 4
      %v5415 = vrot.slane %v4568, 5
      %v5416 = vsel %vm2205, %v5414, %v5415
      %v5417 = vrot.slane %v5415, 4
      %v5418 = vrot.slane %v4569, 5
      %v5419 = vsel %vm2205, %v5417, %v5418
      %v5420 = vrot.slane %v5266, 5
      %v5421 = vrot.slane %v5420, 4
      %v5422 = vrot.slane %v4571, 5
      %v5423 = vsel %vm2205, %v5421, %v5422
      %v5424 = vrot.slane %v5422, 4
      %v5425 = vrot.slane %v4572, 5
      %v5426 = vsel %vm2205, %v5424, %v5425
      %s5427 = scalar_lea.vmem %s3, 32
      %v5428 = vld [vmem:[%s5427] sm:$0xf]
      %v5429 = vunpack.c.l.b16 %v5318
      %v5430 = vunpack.c.l.b16 %v5321
      %v5431 = vunpack.c.l.b16 %v5325
      %v5432 = vunpack.c.l.b16 %v5328
      %v5433 = vunpack.c.l.b16 %v5332
      %v5434 = vunpack.c.l.b16 %v5335
      %v5435 = vunpack.c.l.b16 %v5339
      %v5436 = vunpack.c.l.b16 %v5342
      %v5437 = vunpack.c.l.b16 %v5346
      %v5438 = vunpack.c.l.b16 %v5349
      %v5439 = vunpack.c.l.b16 %v5353
      %v5440 = vunpack.c.l.b16 %v5356
      %v5441 = vunpack.c.l.b16 %v5360
      %v5442 = vunpack.c.l.b16 %v5363
      %v5443 = vunpack.c.l.b16 %v5367
      %v5444 = vunpack.c.l.b16 %v5370
      %v5445 = vunpack.c.l.b16 %v5374
      %v5446 = vunpack.c.l.b16 %v5377
      %v5447 = vunpack.c.l.b16 %v5381
      %v5448 = vunpack.c.l.b16 %v5384
      %v5449 = vunpack.c.l.b16 %v5388
      %v5450 = vunpack.c.l.b16 %v5391
      %v5451 = vunpack.c.l.b16 %v5395
      %v5452 = vunpack.c.l.b16 %v5398
      %v5453 = vunpack.c.l.b16 %v5402
      %v5454 = vunpack.c.l.b16 %v5405
      %v5455 = vunpack.c.l.b16 %v5409
      %v5456 = vunpack.c.l.b16 %v5412
      %v5457 = vunpack.c.l.b16 %v5416
      %v5458 = vunpack.c.l.b16 %v5419
      %v5459 = vunpack.c.l.b16 %v5423
      %v5460 = vunpack.c.l.b16 %v5426
      %v5461 = vpack.c.b16 %v5430, %v5429
      %v5462 = vpack.c.b16 %v5432, %v5431
      %v5463 = vpack.c.b16 %v5434, %v5433
      %v5464 = vpack.c.b16 %v5436, %v5435
      %v5465 = vpack.c.b16 %v5438, %v5437
      %v5466 = vpack.c.b16 %v5440, %v5439
      %v5467 = vpack.c.b16 %v5442, %v5441
      %v5468 = vpack.c.b16 %v5444, %v5443
      %v5469 = vpack.c.b16 %v5446, %v5445
      %v5470 = vpack.c.b16 %v5448, %v5447
      %v5471 = vpack.c.b16 %v5450, %v5449
      %v5472 = vpack.c.b16 %v5452, %v5451
      %v5473 = vpack.c.b16 %v5454, %v5453
      %v5474 = vpack.c.b16 %v5456, %v5455
      %v5475 = vpack.c.b16 %v5458, %v5457
      %v5476 = vpack.c.b16 %v5460, %v5459
      %v5478 = vsel %vm1649, %v5461, 0
      %v5481 = vsel %vm1649, %v5462, 0
      %v5484 = vsel %vm1649, %v5463, 0
      %v5487 = vsel %vm1649, %v5464, 0
      %v5490 = vsel %vm1649, %v5465, 0
      %v5493 = vsel %vm1649, %v5466, 0
      %v5496 = vsel %vm1649, %v5467, 0
      %v5499 = vsel %vm1649, %v5468, 0
      %v5502 = vsel %vm1649, %v5469, 0
      %v5505 = vsel %vm1649, %v5470, 0
      %v5508 = vsel %vm1649, %v5471, 0
      %v5511 = vsel %vm1649, %v5472, 0
      %v5514 = vsel %vm1649, %v5473, 0
      %v5517 = vsel %vm1649, %v5474, 0
      %v5520 = vsel %vm1649, %v5475, 0
      %v5523 = vsel %vm1649, %v5476, 0
      %v5526 = vsel %vm1698, %v5428, 0
      %5528 = vmatprep.subr.bf16.mxu0 0
      %5529 = vmatpush1.bf16.msra.mxu0 %v5526
      %5530 = vmatprep.subr.bf16.mxu0 0
      %5531 = vmatpush1.bf16.msra.mxu0 0
      %5532 = vmatprep.subr.bf16.mxu0 0
      %5533 = vmatpush1.bf16.msra.mxu0 0
      %5534 = vmatprep.subr.bf16.mxu0 0
      %5535 = vmatpush1.bf16.msra.mxu0 0
      %5536 = vmatprep.subr.bf16.mxu0 0
      %5537 = vmatpush1.bf16.msra.mxu0 0
      %5538 = vmatprep.subr.bf16.mxu0 0
      %5539 = vmatpush1.bf16.msra.mxu0 0
      %5540 = vmatprep.subr.bf16.mxu0 0
      %5541 = vmatpush1.bf16.msra.mxu0 0
      %5542 = vmatprep.subr.bf16.mxu0 0
      %5543 = vmatpush1.bf16.msra.mxu0 0
      %5544 = vmatprep.subr.bf16.mxu0 0
      %5545 = vmatpush1.bf16.msra.mxu0 0
      %5546 = vmatprep.subr.bf16.mxu0 0
      %5547 = vmatpush1.bf16.msra.mxu0 0
      %5548 = vmatprep.subr.bf16.mxu0 0
      %5549 = vmatpush1.bf16.msra.mxu0 0
      %5550 = vmatprep.subr.bf16.mxu0 0
      %5551 = vmatpush1.bf16.msra.mxu0 0
      %5552 = vmatprep.subr.bf16.mxu0 0
      %5553 = vmatpush1.bf16.msra.mxu0 0
      %5554 = vmatprep.subr.bf16.mxu0 0
      %5555 = vmatpush1.bf16.msra.mxu0 0
      %5556 = vmatprep.subr.bf16.mxu0 0
      %5557 = vmatpush1.bf16.msra.mxu0 0
      %5558 = vmatprep.subr.bf16.mxu0 0
      %5559 = vmatpush1.bf16.msra.mxu0 0
      %5560 = vmatprep.mubr.bf16.mxu0 0
      %5561 = vmatmul.mubr.bf16.gmra.mrb[0].mxu0 %v5478
      %v5562 = vpop.f32.mrb[0].mxu0
      %v5563 = vadd.f32 0.0, %v5562
      %v5564 = vpop.f32.mrb[0].mxu0
      %v5565 = vpop.f32.mrb[0].mxu0
      %v5566 = vadd.f32 0.0, %v5565
      %v5567 = vpop.f32.mrb[0].mxu0
      %5568 = vmatprep.mubr.bf16.mxu0 0
      %5569 = vmatmul.mubr.bf16.gmra.mrb[0].mxu0 %v5481
      %v5570 = vpop.f32.mrb[0].mxu0
      %v5571 = vadd.f32 0.0, %v5570
      %v5572 = vpop.f32.mrb[0].mxu0
      %v5573 = vpop.f32.mrb[0].mxu0
      %v5574 = vadd.f32 0.0, %v5573
      %v5575 = vpop.f32.mrb[0].mxu0
      %5576 = vmatprep.mubr.bf16.mxu0 0
      %5577 = vmatmul.mubr.bf16.gmra.mrb[0].mxu0 %v5484
      %v5578 = vpop.f32.mrb[0].mxu0
      %v5579 = vadd.f32 0.0, %v5578
      %v5580 = vpop.f32.mrb[0].mxu0
      %v5581 = vpop.f32.mrb[0].mxu0
      %v5582 = vadd.f32 0.0, %v5581
      %v5583 = vpop.f32.mrb[0].mxu0
      %5584 = vmatprep.mubr.bf16.mxu0 0
      %5585 = vmatmul.mubr.bf16.gmra.mrb[0].mxu0 %v5487
      %v5586 = vpop.f32.mrb[0].mxu0
      %v5587 = vadd.f32 0.0, %v5586
      %v5588 = vpop.f32.mrb[0].mxu0
      %v5589 = vpop.f32.mrb[0].mxu0
      %v5590 = vadd.f32 0.0, %v5589
      %v5591 = vpop.f32.mrb[0].mxu0
      %5592 = vmatprep.mubr.bf16.mxu0 0
      %5593 = vmatmul.mubr.bf16.gmra.mrb[0].mxu0 %v5490
      %v5594 = vpop.f32.mrb[0].mxu0
      %v5595 = vadd.f32 0.0, %v5594
      %v5596 = vpop.f32.mrb[0].mxu0
      %v5597 = vpop.f32.mrb[0].mxu0
      %v5598 = vadd.f32 0.0, %v5597
      %v5599 = vpop.f32.mrb[0].mxu0
      %5600 = vmatprep.mubr.bf16.mxu0 0
      %5601 = vmatmul.mubr.bf16.gmra.mrb[0].mxu0 %v5493
      %v5602 = vpop.f32.mrb[0].mxu0
      %v5603 = vadd.f32 0.0, %v5602
      %v5604 = vpop.f32.mrb[0].mxu0
      %v5605 = vpop.f32.mrb[0].mxu0
      %v5606 = vadd.f32 0.0, %v5605
      %v5607 = vpop.f32.mrb[0].mxu0
      %5608 = vmatprep.mubr.bf16.mxu0 0
      %5609 = vmatmul.mubr.bf16.gmra.mrb[0].mxu0 %v5496
      %v5610 = vpop.f32.mrb[0].mxu0
      %v5611 = vadd.f32 0.0, %v5610
      %v5612 = vpop.f32.mrb[0].mxu0
      %v5613 = vpop.f32.mrb[0].mxu0
      %v5614 = vadd.f32 0.0, %v5613
      %v5615 = vpop.f32.mrb[0].mxu0
      %5616 = vmatprep.mubr.bf16.mxu0 0
      %5617 = vmatmul.mubr.bf16.gmra.mrb[0].mxu0 %v5499
      %v5618 = vpop.f32.mrb[0].mxu0
      %v5619 = vadd.f32 0.0, %v5618
      %v5620 = vpop.f32.mrb[0].mxu0
      %v5621 = vpop.f32.mrb[0].mxu0
      %v5622 = vadd.f32 0.0, %v5621
      %v5623 = vpop.f32.mrb[0].mxu0
      %5624 = vmatprep.mubr.bf16.mxu0 0
      %5625 = vmatmul.mubr.bf16.gmra.mrb[0].mxu0 %v5502
      %v5626 = vpop.f32.mrb[0].mxu0
      %v5627 = vadd.f32 0.0, %v5626
      %v5628 = vpop.f32.mrb[0].mxu0
      %v5629 = vpop.f32.mrb[0].mxu0
      %v5630 = vadd.f32 0.0, %v5629
      %v5631 = vpop.f32.mrb[0].mxu0
      %5632 = vmatprep.mubr.bf16.mxu0 0
      %5633 = vmatmul.mubr.bf16.gmra.mrb[0].mxu0 %v5505
      %v5634 = vpop.f32.mrb[0].mxu0
      %v5635 = vadd.f32 0.0, %v5634
      %v5636 = vpop.f32.mrb[0].mxu0
      %v5637 = vpop.f32.mrb[0].mxu0
      %v5638 = vadd.f32 0.0, %v5637
      %v5639 = vpop.f32.mrb[0].mxu0
      %5640 = vmatprep.mubr.bf16.mxu0 0
      %5641 = vmatmul.mubr.bf16.gmra.mrb[0].mxu0 %v5508
      %v5642 = vpop.f32.mrb[0].mxu0
      %v5643 = vadd.f32 0.0, %v5642
      %v5644 = vpop.f32.mrb[0].mxu0
      %v5645 = vpop.f32.mrb[0].mxu0
      %v5646 = vadd.f32 0.0, %v5645
      %v5647 = vpop.f32.mrb[0].mxu0
      %5648 = vmatprep.mubr.bf16.mxu0 0
      %5649 = vmatmul.mubr.bf16.gmra.mrb[0].mxu0 %v5511
      %v5650 = vpop.f32.mrb[0].mxu0
      %v5651 = vadd.f32 0.0, %v5650
      %v5652 = vpop.f32.mrb[0].mxu0
      %v5653 = vpop.f32.mrb[0].mxu0
      %v5654 = vadd.f32 0.0, %v5653
      %v5655 = vpop.f32.mrb[0].mxu0
      %5656 = vmatprep.mubr.bf16.mxu0 0
      %5657 = vmatmul.mubr.bf16.gmra.mrb[0].mxu0 %v5514
      %v5658 = vpop.f32.mrb[0].mxu0
      %v5659 = vadd.f32 0.0, %v5658
      %v5660 = vpop.f32.mrb[0].mxu0
      %v5661 = vpop.f32.mrb[0].mxu0
      %v5662 = vadd.f32 0.0, %v5661
      %v5663 = vpop.f32.mrb[0].mxu0
      %5664 = vmatprep.mubr.bf16.mxu0 0
      %5665 = vmatmul.mubr.bf16.gmra.mrb[0].mxu0 %v5517
      %v5666 = vpop.f32.mrb[0].mxu0
      %v5667 = vadd.f32 0.0, %v5666
      %v5668 = vpop.f32.mrb[0].mxu0
      %v5669 = vpop.f32.mrb[0].mxu0
      %v5670 = vadd.f32 0.0, %v5669
      %v5671 = vpop.f32.mrb[0].mxu0
      %5672 = vmatprep.mubr.bf16.mxu0 0
      %5673 = vmatmul.mubr.bf16.gmra.mrb[0].mxu0 %v5520
      %v5674 = vpop.f32.mrb[0].mxu0
      %v5675 = vadd.f32 0.0, %v5674
      %v5676 = vpop.f32.mrb[0].mxu0
      %v5677 = vpop.f32.mrb[0].mxu0
      %v5678 = vadd.f32 0.0, %v5677
      %v5679 = vpop.f32.mrb[0].mxu0
      %5680 = vmatprep.mubr.bf16.mxu0 0
      %5681 = vmatmul.mubr.bf16.gmra.mrb[0].mxu0 %v5523
      %v5682 = vpop.f32.mrb[0].mxu0
      %v5683 = vadd.f32 0.0, %v5682
      %v5684 = vpop.f32.mrb[0].mxu0
      %v5685 = vpop.f32.mrb[0].mxu0
      %v5686 = vadd.f32 0.0, %v5685
      %v5687 = vpop.f32.mrb[0].mxu0
      %5688 = vdwg.mxu0
      %v5689 = vadd.f32 %v5219, %v5563
      %v5690 = vadd.f32 %v5220, %v5566
      %v5691 = vadd.f32 %v5221, %v5571
      %v5692 = vadd.f32 %v5222, %v5574
      %v5693 = vadd.f32 %v5223, %v5579
      %v5694 = vadd.f32 %v5224, %v5582
      %v5695 = vadd.f32 %v5225, %v5587
      %v5696 = vadd.f32 %v5226, %v5590
      %v5697 = vadd.f32 %v5227, %v5595
      %v5698 = vadd.f32 %v5228, %v5598
      %v5699 = vadd.f32 %v5229, %v5603
      %v5700 = vadd.f32 %v5230, %v5606
      %v5701 = vadd.f32 %v5231, %v5611
      %v5702 = vadd.f32 %v5232, %v5614
      %v5703 = vadd.f32 %v5233, %v5619
      %v5704 = vadd.f32 %v5234, %v5622
      %v5705 = vadd.f32 %v5235, %v5627
      %v5706 = vadd.f32 %v5236, %v5630
      %v5707 = vadd.f32 %v5237, %v5635
      %v5708 = vadd.f32 %v5238, %v5638
      %v5709 = vadd.f32 %v5239, %v5643
      %v5710 = vadd.f32 %v5240, %v5646
      %v5711 = vadd.f32 %v5241, %v5651
      %v5712 = vadd.f32 %v5242, %v5654
      %v5713 = vadd.f32 %v5243, %v5659
      %v5714 = vadd.f32 %v5244, %v5662
      %v5715 = vadd.f32 %v5245, %v5667
      %v5716 = vadd.f32 %v5246, %v5670
      %v5717 = vadd.f32 %v5247, %v5675
      %v5718 = vadd.f32 %v5248, %v5678
      %v5719 = vadd.f32 %v5249, %v5683
      %v5720 = vadd.f32 %v5250, %v5686
      %v5721 = vpack.c.bf16 %v5690, %v5689
      %v5722 = vpack.c.bf16 %v5692, %v5691
      %v5723 = vpack.c.bf16 %v5694, %v5693
      %v5724 = vpack.c.bf16 %v5696, %v5695
      %v5725 = vpack.c.bf16 %v5698, %v5697
      %v5726 = vpack.c.bf16 %v5700, %v5699
      %v5727 = vpack.c.bf16 %v5702, %v5701
      %v5728 = vpack.c.bf16 %v5704, %v5703
      %v5729 = vpack.c.bf16 %v5706, %v5705
      %v5730 = vpack.c.bf16 %v5708, %v5707
      %v5731 = vpack.c.bf16 %v5710, %v5709
      %v5732 = vpack.c.bf16 %v5712, %v5711
      %v5733 = vpack.c.bf16 %v5714, %v5713
      %v5734 = vpack.c.bf16 %v5716, %v5715
      %v5735 = vpack.c.bf16 %v5718, %v5717
      %v5736 = vpack.c.bf16 %v5720, %v5719
      %v5753 = vunpack.c.l.b16 %v5721
      %v5754 = vunpack.c.h.b16 %v5721
      %v5755 = vunpack.c.l.b16 %v5722
      %v5756 = vunpack.c.h.b16 %v5722
      %v5757 = vunpack.c.l.b16 %v5723
      %v5758 = vunpack.c.h.b16 %v5723
      %v5759 = vunpack.c.l.b16 %v5724
      %v5760 = vunpack.c.h.b16 %v5724
      %v5761 = vunpack.c.l.b16 %v5725
      %v5762 = vunpack.c.h.b16 %v5725
      %v5763 = vunpack.c.l.b16 %v5726
      %v5764 = vunpack.c.h.b16 %v5726
      %v5765 = vunpack.c.l.b16 %v5727
      %v5766 = vunpack.c.h.b16 %v5727
      %v5767 = vunpack.c.l.b16 %v5728
      %v5768 = vunpack.c.h.b16 %v5728
      %v5769 = vunpack.c.l.b16 %v5729
      %v5770 = vunpack.c.h.b16 %v5729
      %v5771 = vunpack.c.l.b16 %v5730
      %v5772 = vunpack.c.h.b16 %v5730
      %v5773 = vunpack.c.l.b16 %v5731
      %v5774 = vunpack.c.h.b16 %v5731
      %v5775 = vunpack.c.l.b16 %v5732
      %v5776 = vunpack.c.h.b16 %v5732
      %v5777 = vunpack.c.l.b16 %v5733
      %v5778 = vunpack.c.h.b16 %v5733
      %v5779 = vunpack.c.l.b16 %v5734
      %v5780 = vunpack.c.h.b16 %v5734
      %v5781 = vunpack.c.l.b16 %v5735
      %v5782 = vunpack.c.h.b16 %v5735
      %v5783 = vunpack.c.l.b16 %v5736
      %v5784 = vunpack.c.h.b16 %v5736
      %v5785 = vpack.c.b16 %v5753, %v5753
      %v5786 = vpack.c.b16 %v5754, %v5754
      %v5787 = vpack.c.b16 %v5755, %v5755
      %v5788 = vpack.c.b16 %v5756, %v5756
      %v5789 = vpack.c.b16 %v5757, %v5757
      %v5790 = vpack.c.b16 %v5758, %v5758
      %v5791 = vpack.c.b16 %v5759, %v5759
      %v5792 = vpack.c.b16 %v5760, %v5760
      %v5793 = vpack.c.b16 %v5761, %v5761
      %v5794 = vpack.c.b16 %v5762, %v5762
      %v5795 = vpack.c.b16 %v5763, %v5763
      %v5796 = vpack.c.b16 %v5764, %v5764
      %v5797 = vpack.c.b16 %v5765, %v5765
      %v5798 = vpack.c.b16 %v5766, %v5766
      %v5799 = vpack.c.b16 %v5767, %v5767
      %v5800 = vpack.c.b16 %v5768, %v5768
      %v5801 = vpack.c.b16 %v5769, %v5769
      %v5802 = vpack.c.b16 %v5770, %v5770
      %v5803 = vpack.c.b16 %v5771, %v5771
      %v5804 = vpack.c.b16 %v5772, %v5772
      %v5805 = vpack.c.b16 %v5773, %v5773
      %v5806 = vpack.c.b16 %v5774, %v5774
      %v5807 = vpack.c.b16 %v5775, %v5775
      %v5808 = vpack.c.b16 %v5776, %v5776
      %v5809 = vpack.c.b16 %v5777, %v5777
      %v5810 = vpack.c.b16 %v5778, %v5778
      %v5811 = vpack.c.b16 %v5779, %v5779
      %v5812 = vpack.c.b16 %v5780, %v5780
      %v5813 = vpack.c.b16 %v5781, %v5781
      %v5814 = vpack.c.b16 %v5782, %v5782
      %v5815 = vpack.c.b16 %v5783, %v5783
      %v5816 = vpack.c.b16 %v5784, %v5784
      %vm5849 = vcmask 125952
      %5850 = vst.msk [vmem:[%s262] sm:$0xf] %vm5849, %v5785
      %5851 = vst.msk [vmem:[%s262 + $0x4] sm:$0xf] %vm5849, %v5786
      %5852 = vst.msk [vmem:[%s262 + $0x8] sm:$0xf] %vm5849, %v5787
      %5853 = vst.msk [vmem:[%s262 + $0xc] sm:$0xf] %vm5849, %v5788
      %5854 = vst.msk [vmem:[%s262 + $0x10] sm:$0xf] %vm5849, %v5789
      %5855 = vst.msk [vmem:[%s262 + $0x14] sm:$0xf] %vm5849, %v5790
      %5856 = vst.msk [vmem:[%s262 + $0x18] sm:$0xf] %vm5849, %v5791
      %5857 = vst.msk [vmem:[%s262 + $0x1c] sm:$0xf] %vm5849, %v5792
      %5858 = vst.msk [vmem:[%s262 + $0x20] sm:$0xf] %vm5849, %v5793
      %5859 = vst.msk [vmem:[%s262 + $0x24] sm:$0xf] %vm5849, %v5794
      %5860 = vst.msk [vmem:[%s262 + $0x28] sm:$0xf] %vm5849, %v5795
      %5861 = vst.msk [vmem:[%s262 + $0x2c] sm:$0xf] %vm5849, %v5796
      %5862 = vst.msk [vmem:[%s262 + $0x30] sm:$0xf] %vm5849, %v5797
      %5863 = vst.msk [vmem:[%s262 + $0x34] sm:$0xf] %vm5849, %v5798
      %5864 = vst.msk [vmem:[%s262 + $0x38] sm:$0xf] %vm5849, %v5799
      %5865 = vst.msk [vmem:[%s262 + $0x3c] sm:$0xf] %vm5849, %v5800
      %5866 = vst.msk [vmem:[%s262 + $0x40] sm:$0xf] %vm5849, %v5801
      %5867 = vst.msk [vmem:[%s262 + $0x44] sm:$0xf] %vm5849, %v5802
      %5868 = vst.msk [vmem:[%s262 + $0x48] sm:$0xf] %vm5849, %v5803
      %5869 = vst.msk [vmem:[%s262 + $0x4c] sm:$0xf] %vm5849, %v5804
      %5870 = vst.msk [vmem:[%s262 + $0x50] sm:$0xf] %vm5849, %v5805
      %5871 = vst.msk [vmem:[%s262 + $0x54] sm:$0xf] %vm5849, %v5806
      %5872 = vst.msk [vmem:[%s262 + $0x58] sm:$0xf] %vm5849, %v5807
      %5873 = vst.msk [vmem:[%s262 + $0x5c] sm:$0xf] %vm5849, %v5808
      %5874 = vst.msk [vmem:[%s262 + $0x60] sm:$0xf] %vm5849, %v5809
      %5875 = vst.msk [vmem:[%s262 + $0x64] sm:$0xf] %vm5849, %v5810
      %5876 = vst.msk [vmem:[%s262 + $0x68] sm:$0xf] %vm5849, %v5811
      %5877 = vst.msk [vmem:[%s262 + $0x6c] sm:$0xf] %vm5849, %v5812
      %5878 = vst.msk [vmem:[%s262 + $0x70] sm:$0xf] %vm5849, %v5813
      %5879 = vst.msk [vmem:[%s262 + $0x74] sm:$0xf] %vm5849, %v5814
      %5880 = vst.msk [vmem:[%s262 + $0x78] sm:$0xf] %vm5849, %v5815
      %5881 = vst.msk [vmem:[%s262 + $0x7c] sm:$0xf] %vm5849, %v5816
      %vm5882 = vcmask 130048
      %v5883 = vsel %vm5882, %v5689, 0.0
      %v5884 = vsel %vm5882, %v5690, 0.0
      %v5885 = vadd.f32 %v5883, %v5884
      %v5886 = vsel %vm5882, %v5691, 0.0
      %v5887 = vadd.f32 %v5885, %v5886
      %v5888 = vsel %vm5882, %v5692, 0.0
      %v5889 = vadd.f32 %v5887, %v5888
      %v5890 = vsel %vm5882, %v5693, 0.0
      %v5891 = vadd.f32 %v5889, %v5890
      %v5892 = vsel %vm5882, %v5694, 0.0
      %v5893 = vadd.f32 %v5891, %v5892
      %v5894 = vsel %vm5882, %v5695, 0.0
      %v5895 = vadd.f32 %v5893, %v5894
      %v5896 = vsel %vm5882, %v5696, 0.0
      %v5897 = vadd.f32 %v5895, %v5896
      %v5898 = vsel %vm5882, %v5697, 0.0
      %v5899 = vadd.f32 %v5897, %v5898
      %v5900 = vsel %vm5882, %v5698, 0.0
      %v5901 = vadd.f32 %v5899, %v5900
      %v5902 = vsel %vm5882, %v5699, 0.0
      %v5903 = vadd.f32 %v5901, %v5902
      %v5904 = vsel %vm5882, %v5700, 0.0
      %v5905 = vadd.f32 %v5903, %v5904
      %v5906 = vsel %vm5882, %v5701, 0.0
      %v5907 = vadd.f32 %v5905, %v5906
      %v5908 = vsel %vm5882, %v5702, 0.0
      %v5909 = vadd.f32 %v5907, %v5908
      %v5910 = vsel %vm5882, %v5703, 0.0
      %v5911 = vadd.f32 %v5909, %v5910
      %v5912 = vsel %vm5882, %v5704, 0.0
      %v5913 = vadd.f32 %v5911, %v5912
      %v5914 = vsel %vm5882, %v5705, 0.0
      %v5915 = vadd.f32 %v5913, %v5914
      %v5916 = vsel %vm5882, %v5706, 0.0
      %v5917 = vadd.f32 %v5915, %v5916
      %v5918 = vsel %vm5882, %v5707, 0.0
      %v5919 = vadd.f32 %v5917, %v5918
      %v5920 = vsel %vm5882, %v5708, 0.0
      %v5921 = vadd.f32 %v5919, %v5920
      %v5922 = vsel %vm5882, %v5709, 0.0
      %v5923 = vadd.f32 %v5921, %v5922
      %v5924 = vsel %vm5882, %v5710, 0.0
      %v5925 = vadd.f32 %v5923, %v5924
      %v5926 = vsel %vm5882, %v5711, 0.0
      %v5927 = vadd.f32 %v5925, %v5926
      %v5928 = vsel %vm5882, %v5712, 0.0
      %v5929 = vadd.f32 %v5927, %v5928
      %v5930 = vsel %vm5882, %v5713, 0.0
      %v5931 = vadd.f32 %v5929, %v5930
      %v5932 = vsel %vm5882, %v5714, 0.0
      %v5933 = vadd.f32 %v5931, %v5932
      %v5934 = vsel %vm5882, %v5715, 0.0
      %v5935 = vadd.f32 %v5933, %v5934
      %v5936 = vsel %vm5882, %v5716, 0.0
      %v5937 = vadd.f32 %v5935, %v5936
      %v5938 = vsel %vm5882, %v5717, 0.0
      %v5939 = vadd.f32 %v5937, %v5938
      %v5940 = vsel %vm5882, %v5718, 0.0
      %v5941 = vadd.f32 %v5939, %v5940
      %v5942 = vsel %vm5882, %v5719, 0.0
      %v5943 = vadd.f32 %v5941, %v5942
      %v5944 = vsel %vm5882, %v5720, 0.0
      %v5945 = vadd.f32 %v5943, %v5944
      %v5946 = vrot.slane %v5945, 4
      %v5947 = vadd.f32 %v5945, %v5946
      %v5948 = vrot.slane %v5947, 2
      %v5949 = vadd.f32 %v5947, %v5948
      %v5950 = vrot.slane %v5949, 1
      %v5951 = vadd.f32 %v5949, %v5950
      %vm5952 = vcmask 122880
      %5953 = vst.msk [vmem:[%s265] sm:$0x1] %vm5952, %v5951
      %v5954 = vmul.f32 %v5689, %v5689
      %v5955 = vmul.f32 %v5690, %v5690
      %v5956 = vmul.f32 %v5691, %v5691
      %v5957 = vmul.f32 %v5692, %v5692
      %v5958 = vmul.f32 %v5693, %v5693
      %v5959 = vmul.f32 %v5694, %v5694
      %v5960 = vmul.f32 %v5695, %v5695
      %v5961 = vmul.f32 %v5696, %v5696
      %v5962 = vmul.f32 %v5697, %v5697
      %v5963 = vmul.f32 %v5698, %v5698
      %v5964 = vmul.f32 %v5699, %v5699
      %v5965 = vmul.f32 %v5700, %v5700
      %v5966 = vmul.f32 %v5701, %v5701
      %v5967 = vmul.f32 %v5702, %v5702
      %v5968 = vmul.f32 %v5703, %v5703
      %v5969 = vmul.f32 %v5704, %v5704
      %v5970 = vmul.f32 %v5705, %v5705
      %v5971 = vmul.f32 %v5706, %v5706
      %v5972 = vmul.f32 %v5707, %v5707
      %v5973 = vmul.f32 %v5708, %v5708
      %v5974 = vmul.f32 %v5709, %v5709
      %v5975 = vmul.f32 %v5710, %v5710
      %v5976 = vmul.f32 %v5711, %v5711
      %v5977 = vmul.f32 %v5712, %v5712
      %v5978 = vmul.f32 %v5713, %v5713
      %v5979 = vmul.f32 %v5714, %v5714
      %v5980 = vmul.f32 %v5715, %v5715
      %v5981 = vmul.f32 %v5716, %v5716
      %v5982 = vmul.f32 %v5717, %v5717
      %v5983 = vmul.f32 %v5718, %v5718
      %v5984 = vmul.f32 %v5719, %v5719
      %v5985 = vmul.f32 %v5720, %v5720
      %v5986 = vsel %vm5882, %v5954, 0.0
      %v5987 = vsel %vm5882, %v5955, 0.0
      %v5988 = vadd.f32 %v5986, %v5987
      %v5989 = vsel %vm5882, %v5956, 0.0
      %v5990 = vadd.f32 %v5988, %v5989
      %v5991 = vsel %vm5882, %v5957, 0.0
      %v5992 = vadd.f32 %v5990, %v5991
      %v5993 = vsel %vm5882, %v5958, 0.0
      %v5994 = vadd.f32 %v5992, %v5993
      %v5995 = vsel %vm5882, %v5959, 0.0
      %v5996 = vadd.f32 %v5994, %v5995
      %v5997 = vsel %vm5882, %v5960, 0.0
      %v5998 = vadd.f32 %v5996, %v5997
      %v5999 = vsel %vm5882, %v5961, 0.0
      %v6000 = vadd.f32 %v5998, %v5999
      %v6001 = vsel %vm5882, %v5962, 0.0
      %v6002 = vadd.f32 %v6000, %v6001
      %v6003 = vsel %vm5882, %v5963, 0.0
      %v6004 = vadd.f32 %v6002, %v6003
      %v6005 = vsel %vm5882, %v5964, 0.0
      %v6006 = vadd.f32 %v6004, %v6005
      %v6007 = vsel %vm5882, %v5965, 0.0
      %v6008 = vadd.f32 %v6006, %v6007
      %v6009 = vsel %vm5882, %v5966, 0.0
      %v6010 = vadd.f32 %v6008, %v6009
      %v6011 = vsel %vm5882, %v5967, 0.0
      %v6012 = vadd.f32 %v6010, %v6011
      %v6013 = vsel %vm5882, %v5968, 0.0
      %v6014 = vadd.f32 %v6012, %v6013
      %v6015 = vsel %vm5882, %v5969, 0.0
      %v6016 = vadd.f32 %v6014, %v6015
      %v6017 = vsel %vm5882, %v5970, 0.0
      %v6018 = vadd.f32 %v6016, %v6017
      %v6019 = vsel %vm5882, %v5971, 0.0
      %v6020 = vadd.f32 %v6018, %v6019
      %v6021 = vsel %vm5882, %v5972, 0.0
      %v6022 = vadd.f32 %v6020, %v6021
      %v6023 = vsel %vm5882, %v5973, 0.0
      %v6024 = vadd.f32 %v6022, %v6023
      %v6025 = vsel %vm5882, %v5974, 0.0
      %v6026 = vadd.f32 %v6024, %v6025
      %v6027 = vsel %vm5882, %v5975, 0.0
      %v6028 = vadd.f32 %v6026, %v6027
      %v6029 = vsel %vm5882, %v5976, 0.0
      %v6030 = vadd.f32 %v6028, %v6029
      %v6031 = vsel %vm5882, %v5977, 0.0
      %v6032 = vadd.f32 %v6030, %v6031
      %v6033 = vsel %vm5882, %v5978, 0.0
      %v6034 = vadd.f32 %v6032, %v6033
      %v6035 = vsel %vm5882, %v5979, 0.0
      %v6036 = vadd.f32 %v6034, %v6035
      %v6037 = vsel %vm5882, %v5980, 0.0
      %v6038 = vadd.f32 %v6036, %v6037
      %v6039 = vsel %vm5882, %v5981, 0.0
      %v6040 = vadd.f32 %v6038, %v6039
      %v6041 = vsel %vm5882, %v5982, 0.0
      %v6042 = vadd.f32 %v6040, %v6041
      %v6043 = vsel %vm5882, %v5983, 0.0
      %v6044 = vadd.f32 %v6042, %v6043
      %v6045 = vsel %vm5882, %v5984, 0.0
      %v6046 = vadd.f32 %v6044, %v6045
      %v6047 = vsel %vm5882, %v5985, 0.0
      %v6048 = vadd.f32 %v6046, %v6047
      %v6049 = vrot.slane %v6048, 4
      %v6050 = vadd.f32 %v6048, %v6049
      %v6051 = vrot.slane %v6050, 2
      %v6052 = vadd.f32 %v6050, %v6051
      %v6053 = vrot.slane %v6052, 1
      %v6054 = vadd.f32 %v6052, %v6053
      %6055 = vst.msk [vmem:[%s268] sm:$0x1] %vm5952, %v6054
      %p6056 = scmp.lt.s32.totalorder %s18, 1
      %s6057 = scalar_select %p6056, %s18, 1
      %s6058 = smul.addr %s6057, 32
      %s6059 = smul.addr %s6058, 4
      %s6060 = scalar_lea.vmem %s4, %s6059
      %p6061 = scmp.lt.s32.totalorder %s18, 1
      %s6062 = scalar_select %p6061, %s18, 1
      %s6063 = scalar_lea.vmem %s5, %s6062
      %p6064 = scmp.lt.s32.totalorder %s18, 1
      %s6065 = scalar_select %p6064, %s18, 1
      %s6066 = scalar_lea.vmem %s6, %s6065
      // Predicated region
      $region37: #{decoder_block_forward.2} parent=35 // pred_check
        %p6067 = pneg %p125
      $region38: #{decoder_block_forward.2} parent=35 // pred_check_branch
        %6069 = sbr.rel (%p6067) target = $region40
      $region39: #{decoder_block_forward.2} parent=35 // pred_region
        _
      $region40: #{decoder_block_forward.2} parent=35 // pred_fallthru
        _
      // Predicated region
      $region41: #{decoder_block_forward.2} parent=35 // pred_check
        %p6070 = pneg %p151
      $region42: #{decoder_block_forward.2} parent=35 // pred_check_branch
        %6072 = sbr.rel (%p6070) target = $region44
      $region43: #{decoder_block_forward.2} parent=35 // pred_region
        _
      $region44: #{decoder_block_forward.2} parent=35 // pred_fallthru
        _
      // Predicated region
      $region45: #{decoder_block_forward.2} parent=35 // pred_check
        %p6073 = pneg %p177
      $region46: #{decoder_block_forward.2} parent=35 // pred_check_branch
        %6075 = sbr.rel (%p6073) target = $region48
      $region47: #{decoder_block_forward.2} parent=35 // pred_region
        _
      $region48: #{decoder_block_forward.2} parent=35 // pred_fallthru
        _
    $region36: #{decoder_block_forward.2} parent=5 // pred_fallthru
      _
    %p6076 = scmp.le.s32.totalorder 2, %s13
    // Predicated region
    $region49: #{decoder_block_forward.2} parent=5 // pred_check
      %p6077 = pneg %p6076
    $region50: #{decoder_block_forward.2} parent=5 // pred_check_branch
      %6079 = sbr.rel (%p6077) target = $region52
    $region51: #{decoder_block_forward.2} parent=5 // pred_region
      %s6080 = ssub.s32 %s13, 2
      // Predicated region
      $region53: #{decoder_block_forward.2} parent=51 // pred_check
        %p6081 = pneg %p131
      $region54: #{decoder_block_forward.2} parent=51 // pred_check_branch
        %6083 = sbr.rel (%p6081) target = $region56
      $region55: #{decoder_block_forward.2} parent=51 // pred_region
        %p6084 = scmp.lt.s32.totalorder %s19, 1
        %s6085 = scalar_select %p6084, %s19, 1
        %s6086 = smul.addr %s6085, 32
        %s6087 = smul.addr %s6086, 4
        %s6088 = scalar_lea.vmem %s4, %s6087
      $region56: #{decoder_block_forward.2} parent=51 // pred_fallthru
        _
      // Predicated region
      $region57: #{decoder_block_forward.2} parent=51 // pred_check
        %p6089 = pneg %p157
      $region58: #{decoder_block_forward.2} parent=51 // pred_check_branch
        %6091 = sbr.rel (%p6089) target = $region60
      $region59: #{decoder_block_forward.2} parent=51 // pred_region
        %p6092 = scmp.lt.s32.totalorder %s19, 1
        %s6093 = scalar_select %p6092, %s19, 1
        %s6094 = scalar_lea.vmem %s5, %s6093
      $region60: #{decoder_block_forward.2} parent=51 // pred_fallthru
        _
      // Predicated region
      $region61: #{decoder_block_forward.2} parent=51 // pred_check
        %p6095 = pneg %p183
      $region62: #{decoder_block_forward.2} parent=51 // pred_check_branch
        %6097 = sbr.rel (%p6095) target = $region64
      $region63: #{decoder_block_forward.2} parent=51 // pred_region
        %p6098 = scmp.lt.s32.totalorder %s19, 1
        %s6099 = scalar_select %p6098, %s19, 1
        %s6100 = scalar_lea.vmem %s6, %s6099
      $region64: #{decoder_block_forward.2} parent=51 // pred_fallthru
        _
    $region52: #{decoder_block_forward.2} parent=5 // pred_fallthru
      _
  $region6: #{decoder_block_forward.2} parent=0 // loop_footer
    %s17 = sadd.s32 1, %s13
  $region7: #{decoder_block_forward.2} parent=0 // loop_footer_branch
    %12 = sbr.rel target = $region3
  $region8: #{decoder_block_forward.2} parent=0 // loop_exit
    _

// kernel: decoder_block_forward.3
$region0: #{decoder_block_forward.3}
  #allocation0 [shape = 'u32[]', space=smem, size = 0x4, offset = 0x4, fixed_abs, tag = 'smem constant byte address 0x4 - core index']
  #allocation1 [shape = 'u32[144,128]{1,0:T(1,128)}', space=vmem, size = 0x12000, scoped, tag = 'internal scratch']
  #allocation2 [shape = 'bf16[18,18,16]{2,1,0:T(8,128)(2,1)}', space=vmem, size = 0x1b000, scoped, tag = 'scratch operand']
  %s0 = inlined_call_operand.vmem [shape: bf16[2,16,16,16], index: 0, kind: input, shape index: {}]
  %s1 = inlined_call_operand.vmem [shape: bf16[2,16,16,8], index: 1, kind: input, shape index: {}]
  %s2 = inlined_call_operand.vmem [shape: f32[1,16], index: 2, kind: input, shape index: {}]
  %s3 = inlined_call_operand.vmem [shape: f32[1,16], index: 3, kind: input, shape index: {}]
  %s4 = inlined_call_operand.vmem [shape: bf16[3,3,16,16], index: 4, kind: input, shape index: {}]
  %s5 = inlined_call_operand.vmem [shape: bf16[8,16], index: 5, kind: input, shape index: {}]
  %s6 = inlined_call_operand.vmem [shape: f32[1,16], index: 6, kind: input, shape index: {}]
  %s7 = inlined_call_operand.hbm [shape: f32[2,16,16,16], index: 7, kind: output, shape index: {}]
  %s8 = sld [smem:[#allocation0]]
  $region61: #{decoder_block_forward.3} parent=0
    _
  %s10 = ssub.s32 1, %s8
  %s11 = scalar_select 0, %s10, %s8
  $region1: #{decoder_block_forward.3} parent=0
    #allocation3 [shape = 'u8[262144]{0}', space=vmem, size = 0x40000, scoped, tag = 'output window, operand 0']
    #allocation4 [shape = 's32[2]{0}', space=sflag, size = 0x8, scoped, tag = 'scoped memory for decoder_block_forward.3']
    %12 = vsyncpa [#allocation4], 0
    %s13 = scalar_lea.sflag [#allocation4], 1
    %14 = vsyncpa %s13, 0
    loop: start=0, step=1, limit=4
    $region2: #{decoder_block_forward.3} parent=1 // loop_pre_header
      _
    $region3: #{decoder_block_forward.3} parent=1 // loop_header
      %s16 = sphi 0, %s20
      %p17 = scmp.ge.s32.totalorder %s16, 4
      %s26 = sphi 0, %s28
      %s29 = sphi 0, %s26
      %s30 = sphi 0, %s29
      %s46 = sphi 0, %s30
      %s52 = sphi 0, %s54
      %s55 = sphi 0, %s52
      %s56 = sphi 0, %s55
      %s72 = sphi 0, %s56
      %s76 = sphi 0, %s76
      %s78 = sphi 0, %s76
      %s79 = sphi 0, %s78
      %s93 = sphi 0, %s79
      %s97 = sphi 0, %s97
      %s99 = sphi 0, %s97
      %s100 = sphi 0, %s99
      %s114 = sphi 0, %s100
      %s118 = sphi 0, %s118
      %s120 = sphi 0, %s118
      %s121 = sphi 0, %s120
      %s135 = sphi 0, %s121
      %s139 = sphi 0, %s139
      %s141 = sphi 0, %s139
      %s142 = sphi 0, %s141
      %s156 = sphi 0, %s142
      %s160 = sphi 0, %s160
      %s162 = sphi 0, %s160
      %s163 = sphi 0, %s162
      %s177 = sphi 0, %s163
      %s183 = sphi 0, %s185
      %s186 = sphi 0, %s183
      %s187 = sphi 0, %s186
      %s203 = sphi 0, %s187
    $region4: #{decoder_block_forward.3} parent=1 // loop_header_branch
      %19 = sbr.rel (%p17) target = $region8
    $region5: #{decoder_block_forward.3} parent=1 // loop_body
      %s21 = ssub.s32 %s16, 1
      %s22 = ssub.s32 %s16, 2
      %s23 = sadd.s32 %s16, 1
      %s24 = ssub.s32 %s16, %s23
      %p25 = scmp.eq.s32.totalorder %s24, 0
      %s27 = sadd.s32 %s26, 1
      %s28 = scalar_select %p25, %s26, %s27
      %p31 = pneg %p25
      %p32 = scmp.eq.s32.totalorder %s16, 1
      %p33 = por %p31, %p32
      %p34 = scmp.ne.s32.totalorder %s26, %s29
      %p35 = scmp.eq.s32.totalorder %s16, 0
      %p36 = por %p34, %p35
      %p37 = scmp.ne.s32.totalorder %s26, %s29
      %p38 = scmp.eq.s32.totalorder %s21, 1
      %p39 = por %p37, %p38
      %p40 = scmp.ne.s32.totalorder %s29, %s30
      %p41 = scmp.eq.s32.totalorder %s21, 0
      %p42 = por %p40, %p41
      %p43 = scmp.ne.s32.totalorder %s29, %s30
      %p44 = scmp.eq.s32.totalorder %s22, 1
      %p45 = por %p43, %p44
      %p47 = scmp.ne.s32.totalorder %s30, %s46
      %p48 = scmp.eq.s32.totalorder %s22, 0
      %p49 = por %p47, %p48
      %s50 = ssub.s32 %s16, %s23
      %p51 = scmp.eq.s32.totalorder %s50, 0
      %s53 = sadd.s32 %s52, 1
      %s54 = scalar_select %p51, %s52, %s53
      %p57 = pneg %p51
      %p58 = scmp.eq.s32.totalorder %s16, 1
      %p59 = por %p57, %p58
      %p60 = scmp.ne.s32.totalorder %s52, %s55
      %p61 = scmp.eq.s32.totalorder %s16, 0
      %p62 = por %p60, %p61
      %p63 = scmp.ne.s32.totalorder %s52, %s55
      %p64 = scmp.eq.s32.totalorder %s21, 1
      %p65 = por %p63, %p64
      %p66 = scmp.ne.s32.totalorder %s55, %s56
      %p67 = scmp.eq.s32.totalorder %s21, 0
      %p68 = por %p66, %p67
      %p69 = scmp.ne.s32.totalorder %s55, %s56
      %p70 = scmp.eq.s32.totalorder %s22, 1
      %p71 = por %p69, %p70
      %p73 = scmp.ne.s32.totalorder %s56, %s72
      %p74 = scmp.eq.s32.totalorder %s22, 0
      %p75 = por %p73, %p74
      %s77 = sadd.s32 %s76, 1
      %p80 = scmp.eq.s32.totalorder %s16, 1
      %p81 = scmp.ne.s32.totalorder %s76, %s78
      %p82 = scmp.eq.s32.totalorder %s16, 0
      %p83 = por %p81, %p82
      %p84 = scmp.ne.s32.totalorder %s76, %s78
      %p85 = scmp.eq.s32.totalorder %s21, 1
      %p86 = por %p84, %p85
      %p87 = scmp.ne.s32.totalorder %s78, %s79
      %p88 = scmp.eq.s32.totalorder %s21, 0
      %p89 = por %p87, %p88
      %p90 = scmp.ne.s32.totalorder %s78, %s79
      %p91 = scmp.eq.s32.totalorder %s22, 1
      %p92 = por %p90, %p91
      %p94 = scmp.ne.s32.totalorder %s79, %s93
      %p95 = scmp.eq.s32.totalorder %s22, 0
      %p96 = por %p94, %p95
      %s98 = sadd.s32 %s97, 1
      %p101 = scmp.eq.s32.totalorder %s16, 1
      %p102 = scmp.ne.s32.totalorder %s97, %s99
      %p103 = scmp.eq.s32.totalorder %s16, 0
      %p104 = por %p102, %p103
      %p105 = scmp.ne.s32.totalorder %s97, %s99
      %p106 = scmp.eq.s32.totalorder %s21, 1
      %p107 = por %p105, %p106
      %p108 = scmp.ne.s32.totalorder %s99, %s100
      %p109 = scmp.eq.s32.totalorder %s21, 0
      %p110 = por %p108, %p109
      %p111 = scmp.ne.s32.totalorder %s99, %s100
      %p112 = scmp.eq.s32.totalorder %s22, 1
      %p113 = por %p111, %p112
      %p115 = scmp.ne.s32.totalorder %s100, %s114
      %p116 = scmp.eq.s32.totalorder %s22, 0
      %p117 = por %p115, %p116
      %s119 = sadd.s32 %s118, 1
      %p122 = scmp.eq.s32.totalorder %s16, 1
      %p123 = scmp.ne.s32.totalorder %s118, %s120
      %p124 = scmp.eq.s32.totalorder %s16, 0
      %p125 = por %p123, %p124
      %p126 = scmp.ne.s32.totalorder %s118, %s120
      %p127 = scmp.eq.s32.totalorder %s21, 1
      %p128 = por %p126, %p127
      %p129 = scmp.ne.s32.totalorder %s120, %s121
      %p130 = scmp.eq.s32.totalorder %s21, 0
      %p131 = por %p129, %p130
      %p132 = scmp.ne.s32.totalorder %s120, %s121
      %p133 = scmp.eq.s32.totalorder %s22, 1
      %p134 = por %p132, %p133
      %p136 = scmp.ne.s32.totalorder %s121, %s135
      %p137 = scmp.eq.s32.totalorder %s22, 0
      %p138 = por %p136, %p137
      %s140 = sadd.s32 %s139, 1
      %p143 = scmp.eq.s32.totalorder %s16, 1
      %p144 = scmp.ne.s32.totalorder %s139, %s141
      %p145 = scmp.eq.s32.totalorder %s16, 0
      %p146 = por %p144, %p145
      %p147 = scmp.ne.s32.totalorder %s139, %s141
      %p148 = scmp.eq.s32.totalorder %s21, 1
      %p149 = por %p147, %p148
      %p150 = scmp.ne.s32.totalorder %s141, %s142
      %p151 = scmp.eq.s32.totalorder %s21, 0
      %p152 = por %p150, %p151
      %p153 = scmp.ne.s32.totalorder %s141, %s142
      %p154 = scmp.eq.s32.totalorder %s22, 1
      %p155 = por %p153, %p154
      %p157 = scmp.ne.s32.totalorder %s142, %s156
      %p158 = scmp.eq.s32.totalorder %s22, 0
      %p159 = por %p157, %p158
      %s161 = sadd.s32 %s160, 1
      %p164 = scmp.eq.s32.totalorder %s16, 1
      %p165 = scmp.ne.s32.totalorder %s160, %s162
      %p166 = scmp.eq.s32.totalorder %s16, 0
      %p167 = por %p165, %p166
      %p168 = scmp.ne.s32.totalorder %s160, %s162
      %p169 = scmp.eq.s32.totalorder %s21, 1
      %p170 = por %p168, %p169
      %p171 = scmp.ne.s32.totalorder %s162, %s163
      %p172 = scmp.eq.s32.totalorder %s21, 0
      %p173 = por %p171, %p172
      %p174 = scmp.ne.s32.totalorder %s162, %s163
      %p175 = scmp.eq.s32.totalorder %s22, 1
      %p176 = por %p174, %p175
      %p178 = scmp.ne.s32.totalorder %s163, %s177
      %p179 = scmp.eq.s32.totalorder %s22, 0
      %p180 = por %p178, %p179
      %s181 = ssub.s32 %s16, %s23
      %p182 = scmp.eq.s32.totalorder %s181, 0
      %s184 = sadd.s32 %s183, 1
      %s185 = scalar_select %p182, %s183, %s184
      %p188 = pneg %p182
      %p189 = scmp.eq.s32.totalorder %s16, 1
      %p190 = por %p188, %p189
      %p191 = scmp.ne.s32.totalorder %s183, %s186
      %p192 = scmp.eq.s32.totalorder %s16, 0
      %p193 = por %p191, %p192
      %p194 = scmp.ne.s32.totalorder %s183, %s186
      %p195 = scmp.eq.s32.totalorder %s21, 1
      %p196 = por %p194, %p195
      %p197 = scmp.ne.s32.totalorder %s186, %s187
      %p198 = scmp.eq.s32.totalorder %s21, 0
      %p199 = por %p197, %p198
      %p200 = scmp.ne.s32.totalorder %s186, %s187
      %p201 = scmp.eq.s32.totalorder %s22, 1
      %p202 = por %p200, %p201
      %p204 = scmp.ne.s32.totalorder %s187, %s203
      %p205 = scmp.eq.s32.totalorder %s22, 0
      %p206 = por %p204, %p205
      %p207 = scmp.le.s32.totalorder 1, %s16
      %p208 = scmp.lt.s32.totalorder %s16, 3
      %p209 = pnand %p207, %p208
      %p210 = pneg %p209
      // Predicated region
      $region9: #{decoder_block_forward.3} parent=5 // pred_check
        _
      $region10: #{decoder_block_forward.3} parent=5 // pred_check_branch
        %212 = sbr.rel (%p209) target = $region12
      $region11: #{decoder_block_forward.3} parent=5 // pred_region
        %s213 = ssub.s32 %s16, 1
        // Predicated region
        $region13: #{decoder_block_forward.3} parent=11 // pred_check
          %p214 = pneg %p89
        $region14: #{decoder_block_forward.3} parent=11 // pred_check_branch
          %216 = sbr.rel (%p214) target = $region16
        $region15: #{decoder_block_forward.3} parent=11 // pred_region
          _
        $region16: #{decoder_block_forward.3} parent=11 // pred_fallthru
          _
        // Predicated region
        $region17: #{decoder_block_forward.3} parent=11 // pred_check
          %p217 = pneg %p110
        $region18: #{decoder_block_forward.3} parent=11 // pred_check_branch
          %219 = sbr.rel (%p217) target = $region20
        $region19: #{decoder_block_forward.3} parent=11 // pred_region
          _
        $region20: #{decoder_block_forward.3} parent=11 // pred_fallthru
          _
        // Predicated region
        $region21: #{decoder_block_forward.3} parent=11 // pred_check
          %p220 = pneg %p131
        $region22: #{decoder_block_forward.3} parent=11 // pred_check_branch
          %222 = sbr.rel (%p220) target = $region24
        $region23: #{decoder_block_forward.3} parent=11 // pred_region
          _
        $region24: #{decoder_block_forward.3} parent=11 // pred_fallthru
          _
        // Predicated region
        $region25: #{decoder_block_forward.3} parent=11 // pred_check
          %p223 = pneg %p152
        $region26: #{decoder_block_forward.3} parent=11 // pred_check_branch
          %225 = sbr.rel (%p223) target = $region28
        $region27: #{decoder_block_forward.3} parent=11 // pred_region
          _
        $region28: #{decoder_block_forward.3} parent=11 // pred_fallthru
          _
        // Predicated region
        $region29: #{decoder_block_forward.3} parent=11 // pred_check
          %p226 = pneg %p173
        $region30: #{decoder_block_forward.3} parent=11 // pred_check_branch
          %228 = sbr.rel (%p226) target = $region32
        $region31: #{decoder_block_forward.3} parent=11 // pred_region
          _
        $region32: #{decoder_block_forward.3} parent=11 // pred_fallthru
          _
      $region12: #{decoder_block_forward.3} parent=5 // pred_fallthru
        _
      %p229 = scmp.lt.s32.totalorder %s16, 2
      // Predicated region
      $region33: #{decoder_block_forward.3} parent=5 // pred_check
        %p230 = pneg %p229
      $region34: #{decoder_block_forward.3} parent=5 // pred_check_branch
        %232 = sbr.rel (%p230) target = $region36
      $region35: #{decoder_block_forward.3} parent=5 // pred_region
        // Predicated region
        $region37: #{decoder_block_forward.3} parent=35 // pred_check
          %p233 = pneg %p36
        $region38: #{decoder_block_forward.3} parent=35 // pred_check_branch
          %235 = sbr.rel (%p233) target = $region40
        $region39: #{decoder_block_forward.3} parent=35 // pred_region
          %p236 = scmp.lt.s32.totalorder %s16, 1
          %s237 = scalar_select %p236, %s16, 1
          %s238 = smul.addr %s237, 32
          %s239 = smul.addr %s238, 4
          %s240 = scalar_lea.vmem %s0, %s239
        $region40: #{decoder_block_forward.3} parent=35 // pred_fallthru
          _
        // Predicated region
        $region41: #{decoder_block_forward.3} parent=35 // pred_check
          %p241 = pneg %p62
        $region42: #{decoder_block_forward.3} parent=35 // pred_check_branch
          %243 = sbr.rel (%p241) target = $region44
        $region43: #{decoder_block_forward.3} parent=35 // pred_region
          %p244 = scmp.lt.s32.totalorder %s16, 1
          %s245 = scalar_select %p244, %s16, 1
          %s246 = smul.addr %s245, 32
          %s247 = smul.addr %s246, 4
          %s248 = scalar_lea.vmem %s1, %s247
        $region44: #{decoder_block_forward.3} parent=35 // pred_fallthru
          _
      $region36: #{decoder_block_forward.3} parent=5 // pred_fallthru
        _
      %p249 = scmp.le.s32.totalorder 1, %s16
      %p250 = scmp.lt.s32.totalorder %s16, 3
      %p251 = pnand %p249, %p250
      %p252 = pneg %p251
      // Predicated region
      $region45: #{decoder_block_forward.3} parent=5 // pred_check
        _
      $region46: #{decoder_block_forward.3} parent=5 // pred_check_branch
        %254 = sbr.rel (%p251) target = $region48
      $region47: #{decoder_block_forward.3} parent=5 // pred_region
        %s255 = ssub.s32 %s16, 1
        %p256 = scmp.lt.s32.totalorder %s21, 1
        %s257 = scalar_select %p256, %s21, 1
        %s258 = smul.addr %s257, 32
        %s259 = smul.addr %s258, 4
        %s260 = scalar_lea.vmem %s0, %s259
        %p261 = pneg %p42
        %p262 = pneg %p39
        %p263 = scmp.lt.s32.totalorder %s21, 1
        %s264 = scalar_select %p263, %s21, 1
        %s265 = smul.addr %s264, 32
        %s266 = smul.addr %s265, 4
        %s267 = scalar_lea.vmem %s1, %s266
        %p268 = pneg %p68
        %p269 = pneg %p65
        %p270 = pneg %p89
        %p271 = pneg %p86
        %p272 = pneg %p110
        %p273 = pneg %p107
        %p274 = pneg %p131
        %p275 = pneg %p128
        %p276 = pneg %p152
        %p277 = pneg %p149
        %p278 = pneg %p173
        %p279 = pneg %p170
        %p280 = pneg %p199
        %p281 = pneg %p196
        %s282 = sand.u32 %s186, 1
        %s283 = scalar_lea.sflag [#allocation4], %s282
        %s284 = sand.u32 %s186, 1
        %s285 = smul.addr %s284, 256
        %s286 = scalar_lea.vmem [#allocation3], %s285
        %p287 = scmp.lt.s32.totalorder %s21, 1
        %s288 = scalar_select %p287, %s21, 1
        %s289 = smul.addr %s288, 32
        %s290 = smul.addr %s289, 4
        %s291 = scalar_lea.vmem %s0, %s290
        %p292 = scmp.lt.s32.totalorder %s21, 1
        %s293 = scalar_select %p292, %s21, 1
        %s294 = smul.addr %s293, 32
        %s295 = smul.addr %s294, 4
        %s296 = scalar_lea.vmem %s1, %s295
        %v298 = vld [vmem:[%s2] sm:$0x1]
        %v299 = vld [vmem:[%s3] sm:$0x1]
        %v300 = vld [vmem:[%s291] sm:$0xf]
        %v301 = vld [vmem:[%s291 + $0x4] sm:$0xf]
        %v302 = vld [vmem:[%s291 + $0x8] sm:$0xf]
        %v303 = vld [vmem:[%s291 + $0xc] sm:$0xf]
        %v304 = vld [vmem:[%s291 + $0x10] sm:$0xf]
        %v305 = vld [vmem:[%s291 + $0x14] sm:$0xf]
        %v306 = vld [vmem:[%s291 + $0x18] sm:$0xf]
        %v307 = vld [vmem:[%s291 + $0x1c] sm:$0xf]
        %v308 = vld [vmem:[%s291 + $0x20] sm:$0xf]
        %v309 = vld [vmem:[%s291 + $0x24] sm:$0xf]
        %v310 = vld [vmem:[%s291 + $0x28] sm:$0xf]
        %v311 = vld [vmem:[%s291 + $0x2c] sm:$0xf]
        %v312 = vld [vmem:[%s291 + $0x30] sm:$0xf]
        %v313 = vld [vmem:[%s291 + $0x34] sm:$0xf]
        %v314 = vld [vmem:[%s291 + $0x38] sm:$0xf]
        %v315 = vld [vmem:[%s291 + $0x3c] sm:$0xf]
        %v316 = vld [vmem:[%s291 + $0x40] sm:$0xf]
        %v317 = vld [vmem:[%s291 + $0x44] sm:$0xf]
        %v318 = vld [vmem:[%s291 + $0x48] sm:$0xf]
        %v319 = vld [vmem:[%s291 + $0x4c] sm:$0xf]
        %v320 = vld [vmem:[%s291 + $0x50] sm:$0xf]
        %v321 = vld [vmem:[%s291 + $0x54] sm:$0xf]
        %v322 = vld [vmem:[%s291 + $0x58] sm:$0xf]
        %v323 = vld [vmem:[%s291 + $0x5c] sm:$0xf]
        %v324 = vld [vmem:[%s291 + $0x60] sm:$0xf]
        %v325 = vld [vmem:[%s291 + $0x64] sm:$0xf]
        %v326 = vld [vmem:[%s291 + $0x68] sm:$0xf]
        %v327 = vld [vmem:[%s291 + $0x6c] sm:$0xf]
        %v328 = vld [vmem:[%s291 + $0x70] sm:$0xf]
        %v329 = vld [vmem:[%s291 + $0x74] sm:$0xf]
        %v330 = vld [vmem:[%s291 + $0x78] sm:$0xf]
        %v331 = vld [vmem:[%s291 + $0x7c] sm:$0xf]
        %v332 = vunpack.c.l.bf16 %v300
        %v333 = vunpack.c.l.bf16 %v301
        %v334 = vunpack.c.l.bf16 %v302
        %v335 = vunpack.c.l.bf16 %v303
        %v336 = vunpack.c.l.bf16 %v304
        %v337 = vunpack.c.l.bf16 %v305
        %v338 = vunpack.c.l.bf16 %v306
        %v339 = vunpack.c.l.bf16 %v307
        %v340 = vunpack.c.l.bf16 %v308
        %v341 = vunpack.c.l.bf16 %v309
        %v342 = vunpack.c.l.bf16 %v310
        %v343 = vunpack.c.l.bf16 %v311
        %v344 = vunpack.c.l.bf16 %v312
        %v345 = vunpack.c.l.bf16 %v313
        %v346 = vunpack.c.l.bf16 %v314
        %v347 = vunpack.c.l.bf16 %v315
        %v348 = vunpack.c.l.bf16 %v316
        %v349 = vunpack.c.l.bf16 %v317
        %v350 = vunpack.c.l.bf16 %v318
        %v351 = vunpack.c.l.bf16 %v319
        %v352 = vunpack.c.l.bf16 %v320
        %v353 = vunpack.c.l.bf16 %v321
        %v354 = vunpack.c.l.bf16 %v322
        %v355 = vunpack.c.l.bf16 %v323
        %v356 = vunpack.c.l.bf16 %v324
        %v357 = vunpack.c.l.bf16 %v325
        %v358 = vunpack.c.l.bf16 %v326
        %v359 = vunpack.c.l.bf16 %v327
        %v360 = vunpack.c.l.bf16 %v328
        %v361 = vunpack.c.l.bf16 %v329
        %v362 = vunpack.c.l.bf16 %v330
        %v363 = vunpack.c.l.bf16 %v331
        %v365 = vlaneseq
        %v366 = vshrl.u32 %v365, 7
        %v367 = vsub.s32 0, %v366
        %v368 = vrot.slane %v298, %v367
        %v370 = vmul.f32 %v332, %v368
        %v371 = vmul.f32 %v333, %v368
        %v372 = vmul.f32 %v334, %v368
        %v373 = vmul.f32 %v335, %v368
        %v374 = vmul.f32 %v336, %v368
        %v375 = vmul.f32 %v337, %v368
        %v376 = vmul.f32 %v338, %v368
        %v377 = vmul.f32 %v339, %v368
        %v378 = vmul.f32 %v340, %v368
        %v379 = vmul.f32 %v341, %v368
        %v380 = vmul.f32 %v342, %v368
        %v381 = vmul.f32 %v343, %v368
        %v382 = vmul.f32 %v344, %v368
        %v383 = vmul.f32 %v345, %v368
        %v384 = vmul.f32 %v346, %v368
        %v385 = vmul.f32 %v347, %v368
        %v386 = vmul.f32 %v348, %v368
        %v387 = vmul.f32 %v349, %v368
        %v388 = vmul.f32 %v350, %v368
        %v389 = vmul.f32 %v351, %v368
        %v390 = vmul.f32 %v352, %v368
        %v391 = vmul.f32 %v353, %v368
        %v392 = vmul.f32 %v354, %v368
        %v393 = vmul.f32 %v355, %v368
        %v394 = vmul.f32 %v356, %v368
        %v395 = vmul.f32 %v357, %v368
        %v396 = vmul.f32 %v358, %v368
        %v397 = vmul.f32 %v359, %v368
        %v398 = vmul.f32 %v360, %v368
        %v399 = vmul.f32 %v361, %v368
        %v400 = vmul.f32 %v362, %v368
        %v401 = vmul.f32 %v363, %v368
        %v403 = vlaneseq
        %v404 = vshrl.u32 %v403, 7
        %v405 = vsub.s32 0, %v404
        %v406 = vrot.slane %v299, %v405
        %v408 = vadd.f32 %v370, %v406
        %v409 = vadd.f32 %v371, %v406
        %v410 = vadd.f32 %v372, %v406
        %v411 = vadd.f32 %v373, %v406
        %v412 = vadd.f32 %v374, %v406
        %v413 = vadd.f32 %v375, %v406
        %v414 = vadd.f32 %v376, %v406
        %v415 = vadd.f32 %v377, %v406
        %v416 = vadd.f32 %v378, %v406
        %v417 = vadd.f32 %v379, %v406
        %v418 = vadd.f32 %v380, %v406
        %v419 = vadd.f32 %v381, %v406
        %v420 = vadd.f32 %v382, %v406
        %v421 = vadd.f32 %v383, %v406
        %v422 = vadd.f32 %v384, %v406
        %v423 = vadd.f32 %v385, %v406
        %v424 = vadd.f32 %v386, %v406
        %v425 = vadd.f32 %v387, %v406
        %v426 = vadd.f32 %v388, %v406
        %v427 = vadd.f32 %v389, %v406
        %v428 = vadd.f32 %v390, %v406
        %v429 = vadd.f32 %v391, %v406
        %v430 = vadd.f32 %v392, %v406
        %v431 = vadd.f32 %v393, %v406
        %v432 = vadd.f32 %v394, %v406
        %v433 = vadd.f32 %v395, %v406
        %v434 = vadd.f32 %v396, %v406
        %v435 = vadd.f32 %v397, %v406
        %v436 = vadd.f32 %v398, %v406
        %v437 = vadd.f32 %v399, %v406
        %v438 = vadd.f32 %v400, %v406
        %v439 = vadd.f32 %v401, %v406
        %vm440 = vcmp.ge.f32.partialorder %v408, 0.0
        %vm441 = vcmp.ge.f32.partialorder %v409, 0.0
        %vm442 = vcmp.ge.f32.partialorder %v410, 0.0
        %vm443 = vcmp.ge.f32.partialorder %v411, 0.0
        %vm444 = vcmp.ge.f32.partialorder %v412, 0.0
        %vm445 = vcmp.ge.f32.partialorder %v413, 0.0
        %vm446 = vcmp.ge.f32.partialorder %v414, 0.0
        %vm447 = vcmp.ge.f32.partialorder %v415, 0.0
        %vm448 = vcmp.ge.f32.partialorder %v416, 0.0
        %vm449 = vcmp.ge.f32.partialorder %v417, 0.0
        %vm450 = vcmp.ge.f32.partialorder %v418, 0.0
        %vm451 = vcmp.ge.f32.partialorder %v419, 0.0
        %vm452 = vcmp.ge.f32.partialorder %v420, 0.0
        %vm453 = vcmp.ge.f32.partialorder %v421, 0.0
        %vm454 = vcmp.ge.f32.partialorder %v422, 0.0
        %vm455 = vcmp.ge.f32.partialorder %v423, 0.0
        %vm456 = vcmp.ge.f32.partialorder %v424, 0.0
        %vm457 = vcmp.ge.f32.partialorder %v425, 0.0
        %vm458 = vcmp.ge.f32.partialorder %v426, 0.0
        %vm459 = vcmp.ge.f32.partialorder %v427, 0.0
        %vm460 = vcmp.ge.f32.partialorder %v428, 0.0
        %vm461 = vcmp.ge.f32.partialorder %v429, 0.0
        %vm462 = vcmp.ge.f32.partialorder %v430, 0.0
        %vm463 = vcmp.ge.f32.partialorder %v431, 0.0
        %vm464 = vcmp.ge.f32.partialorder %v432, 0.0
        %vm465 = vcmp.ge.f32.partialorder %v433, 0.0
        %vm466 = vcmp.ge.f32.partialorder %v434, 0.0
        %vm467 = vcmp.ge.f32.partialorder %v435, 0.0
        %vm468 = vcmp.ge.f32.partialorder %v436, 0.0
        %vm469 = vcmp.ge.f32.partialorder %v437, 0.0
        %vm470 = vcmp.ge.f32.partialorder %v438, 0.0
        %vm471 = vcmp.ge.f32.partialorder %v439, 0.0
        %v472 = vmul.f32 %v408, 0.01
        %v473 = vmul.f32 %v409, 0.01
        %v474 = vmul.f32 %v410, 0.01
        %v475 = vmul.f32 %v411, 0.01
        %v476 = vmul.f32 %v412, 0.01
        %v477 = vmul.f32 %v413, 0.01
        %v478 = vmul.f32 %v414, 0.01
        %v479 = vmul.f32 %v415, 0.01
        %v480 = vmul.f32 %v416, 0.01
        %v481 = vmul.f32 %v417, 0.01
        %v482 = vmul.f32 %v418, 0.01
        %v483 = vmul.f32 %v419, 0.01
        %v484 = vmul.f32 %v420, 0.01
        %v485 = vmul.f32 %v421, 0.01
        %v486 = vmul.f32 %v422, 0.01
        %v487 = vmul.f32 %v423, 0.01
        %v488 = vmul.f32 %v424, 0.01
        %v489 = vmul.f32 %v425, 0.01
        %v490 = vmul.f32 %v426, 0.01
        %v491 = vmul.f32 %v427, 0.01
        %v492 = vmul.f32 %v428, 0.01
        %v493 = vmul.f32 %v429, 0.01
        %v494 = vmul.f32 %v430, 0.01
        %v495 = vmul.f32 %v431, 0.01
        %v496 = vmul.f32 %v432, 0.01
        %v497 = vmul.f32 %v433, 0.01
        %v498 = vmul.f32 %v434, 0.01
        %v499 = vmul.f32 %v435, 0.01
        %v500 = vmul.f32 %v436, 0.01
        %v501 = vmul.f32 %v437, 0.01
        %v502 = vmul.f32 %v438, 0.01
        %v503 = vmul.f32 %v439, 0.01
        %v504 = vsel %vm440, %v408, %v472
        %v505 = vsel %vm441, %v409, %v473
        %v506 = vsel %vm442, %v410, %v474
        %v507 = vsel %vm443, %v411, %v475
        %v508 = vsel %vm444, %v412, %v476
        %v509 = vsel %vm445, %v413, %v477
        %v510 = vsel %vm446, %v414, %v478
        %v511 = vsel %vm447, %v415, %v479
        %v512 = vsel %vm448, %v416, %v480
        %v513 = vsel %vm449, %v417, %v481
        %v514 = vsel %vm450, %v418, %v482
        %v515 = vsel %vm451, %v419, %v483
        %v516 = vsel %vm452, %v420, %v484
        %v517 = vsel %vm453, %v421, %v485
        %v518 = vsel %vm454, %v422, %v486
        %v519 = vsel %vm455, %v423, %v487
        %v520 = vsel %vm456, %v424, %v488
        %v521 = vsel %vm457, %v425, %v489
        %v522 = vsel %vm458, %v426, %v490
        %v523 = vsel %vm459, %v427, %v491
        %v524 = vsel %vm460, %v428, %v492
        %v525 = vsel %vm461, %v429, %v493
        %v526 = vsel %vm462, %v430, %v494
        %v527 = vsel %vm463, %v431, %v495
        %v528 = vsel %vm464, %v432, %v496
        %v529 = vsel %vm465, %v433, %v497
        %v530 = vsel %vm466, %v434, %v498
        %v531 = vsel %vm467, %v435, %v499
        %v532 = vsel %vm468, %v436, %v500
        %v533 = vsel %vm469, %v437, %v501
        %v534 = vsel %vm470, %v438, %v502
        %v535 = vsel %vm471, %v439, %v503
        %vm536 = vcmask 125952
        %537 = vst.msk [vmem:[#allocation2] sm:$0xf] %vm536, 0
        %538 = vst.msk [vmem:[#allocation2 + $0x4] sm:$0xf] %vm536, 0
        %vm539 = vcmask 122880
        %540 = vst.msk [vmem:[#allocation2 + $0x8] sm:$0x1] %vm539, 0
        %s541 = scalar_lea.vmem [#allocation2], 204
        %542 = vst.msk [vmem:[%s541] sm:$0xf] %vm536, 0
        %543 = vst.msk [vmem:[%s541 + $0x4] sm:$0xf] %vm536, 0
        %544 = vst.msk [vmem:[%s541 + $0x8] sm:$0x1] %vm539, 0
        %vm545 = vcmask 122880
        %vm546 = vsmask.f32 256
        %vm547 = vmand %vm545, %vm546
        %v548 = vld [vmem:[#allocation2] sm:$0x1]
        %v549 = vsel %vm547, 0, %v548
        %550 = vst [vmem:[#allocation2] sm:$0x1] %v549
        %v551 = vld [vmem:[#allocation2 + $0xc] sm:$0x1]
        %v552 = vsel %vm547, 0, %v551
        %553 = vst [vmem:[#allocation2 + $0xc] sm:$0x1] %v552
        %v554 = vld [vmem:[#allocation2 + $0x18] sm:$0x1]
        %v555 = vsel %vm547, 0, %v554
        %556 = vst [vmem:[#allocation2 + $0x18] sm:$0x1] %v555
        %v557 = vld [vmem:[#allocation2 + $0x24] sm:$0x1]
        %v558 = vsel %vm547, 0, %v557
        %559 = vst [vmem:[#allocation2 + $0x24] sm:$0x1] %v558
        %v560 = vld [vmem:[#allocation2 + $0x30] sm:$0x1]
        %v561 = vsel %vm547, 0, %v560
        %562 = vst [vmem:[#allocation2 + $0x30] sm:$0x1] %v561
        %v563 = vld [vmem:[#allocation2 + $0x3c] sm:$0x1]
        %v564 = vsel %vm547, 0, %v563
        %565 = vst [vmem:[#allocation2 + $0x3c] sm:$0x1] %v564
        %v566 = vld [vmem:[#allocation2 + $0x48] sm:$0x1]
        %v567 = vsel %vm547, 0, %v566
        %568 = vst [vmem:[#allocation2 + $0x48] sm:$0x1] %v567
        %v569 = vld [vmem:[#allocation2 + $0x54] sm:$0x1]
        %v570 = vsel %vm547, 0, %v569
        %571 = vst [vmem:[#allocation2 + $0x54] sm:$0x1] %v570
        %v572 = vld [vmem:[#allocation2 + $0x60] sm:$0x1]
        %v573 = vsel %vm547, 0, %v572
        %574 = vst [vmem:[#allocation2 + $0x60] sm:$0x1] %v573
        %v575 = vld [vmem:[#allocation2 + $0x6c] sm:$0x1]
        %v576 = vsel %vm547, 0, %v575
        %577 = vst [vmem:[#allocation2 + $0x6c] sm:$0x1] %v576
        %v578 = vld [vmem:[#allocation2 + $0x78] sm:$0x1]
        %v579 = vsel %vm547, 0, %v578
        %580 = vst [vmem:[#allocation2 + $0x78] sm:$0x1] %v579
        %v581 = vld [vmem:[#allocation2 + $0x84] sm:$0x1]
        %v582 = vsel %vm547, 0, %v581
        %583 = vst [vmem:[#allocation2 + $0x84] sm:$0x1] %v582
        %v584 = vld [vmem:[#allocation2 + $0x90] sm:$0x1]
        %v585 = vsel %vm547, 0, %v584
        %586 = vst [vmem:[#allocation2 + $0x90] sm:$0x1] %v585
        %v587 = vld [vmem:[#allocation2 + $0x9c] sm:$0x1]
        %v588 = vsel %vm547, 0, %v587
        %589 = vst [vmem:[#allocation2 + $0x9c] sm:$0x1] %v588
        %v590 = vld [vmem:[#allocation2 + $0xa8] sm:$0x1]
        %v591 = vsel %vm547, 0, %v590
        %592 = vst [vmem:[#allocation2 + $0xa8] sm:$0x1] %v591
        %v593 = vld [vmem:[#allocation2 + $0xb4] sm:$0x1]
        %v594 = vsel %vm547, 0, %v593
        %595 = vst [vmem:[#allocation2 + $0xb4] sm:$0x1] %v594
        %v596 = vld [vmem:[#allocation2 + $0xc0] sm:$0x1]
        %v597 = vsel %vm547, 0, %v596
        %598 = vst [vmem:[#allocation2 + $0xc0] sm:$0x1] %v597
        %v599 = vld [vmem:[#allocation2 + $0xcc] sm:$0x1]
        %v600 = vsel %vm547, 0, %v599
        %601 = vst [vmem:[#allocation2 + $0xcc] sm:$0x1] %v600
        %vm602 = vsmask.f32 7938
        %vm603 = vmand %vm545, %vm602
        %v604 = vld [vmem:[#allocation2 + $0x8] sm:$0x1]
        %v605 = vsel %vm603, 0, %v604
        %606 = vst [vmem:[#allocation2 + $0x8] sm:$0x1] %v605
        %v607 = vld [vmem:[#allocation2 + $0x14] sm:$0x1]
        %v608 = vsel %vm603, 0, %v607
        %609 = vst [vmem:[#allocation2 + $0x14] sm:$0x1] %v608
        %v610 = vld [vmem:[#allocation2 + $0x20] sm:$0x1]
        %v611 = vsel %vm603, 0, %v610
        %612 = vst [vmem:[#allocation2 + $0x20] sm:$0x1] %v611
        %v613 = vld [vmem:[#allocation2 + $0x2c] sm:$0x1]
        %v614 = vsel %vm603, 0, %v613
        %615 = vst [vmem:[#allocation2 + $0x2c] sm:$0x1] %v614
        %v616 = vld [vmem:[#allocation2 + $0x38] sm:$0x1]
        %v617 = vsel %vm603, 0, %v616
        %618 = vst [vmem:[#allocation2 + $0x38] sm:$0x1] %v617
        %v619 = vld [vmem:[#allocation2 + $0x44] sm:$0x1]
        %v620 = vsel %vm603, 0, %v619
        %621 = vst [vmem:[#allocation2 + $0x44] sm:$0x1] %v620
        %v622 = vld [vmem:[#allocation2 + $0x50] sm:$0x1]
        %v623 = vsel %vm603, 0, %v622
        %624 = vst [vmem:[#allocation2 + $0x50] sm:$0x1] %v623
        %v625 = vld [vmem:[#allocation2 + $0x5c] sm:$0x1]
        %v626 = vsel %vm603, 0, %v625
        %627 = vst [vmem:[#allocation2 + $0x5c] sm:$0x1] %v626
        %v628 = vld [vmem:[#allocation2 + $0x68] sm:$0x1]
        %v629 = vsel %vm603, 0, %v628
        %630 = vst [vmem:[#allocation2 + $0x68] sm:$0x1] %v629
        %v631 = vld [vmem:[#allocation2 + $0x74] sm:$0x1]
        %v632 = vsel %vm603, 0, %v631
        %633 = vst [vmem:[#allocation2 + $0x74] sm:$0x1] %v632
        %v634 = vld [vmem:[#allocation2 + $0x80] sm:$0x1]
        %v635 = vsel %vm603, 0, %v634
        %636 = vst [vmem:[#allocation2 + $0x80] sm:$0x1] %v635
        %v637 = vld [vmem:[#allocation2 + $0x8c] sm:$0x1]
        %v638 = vsel %vm603, 0, %v637
        %639 = vst [vmem:[#allocation2 + $0x8c] sm:$0x1] %v638
        %v640 = vld [vmem:[#allocation2 + $0x98] sm:$0x1]
        %v641 = vsel %vm603, 0, %v640
        %642 = vst [vmem:[#allocation2 + $0x98] sm:$0x1] %v641
        %v643 = vld [vmem:[#allocation2 + $0xa4] sm:$0x1]
        %v644 = vsel %vm603, 0, %v643
        %645 = vst [vmem:[#allocation2 + $0xa4] sm:$0x1] %v644
        %v646 = vld [vmem:[#allocation2 + $0xb0] sm:$0x1]
        %v647 = vsel %vm603, 0, %v646
        %648 = vst [vmem:[#allocation2 + $0xb0] sm:$0x1] %v647
        %v649 = vld [vmem:[#allocation2 + $0xbc] sm:$0x1]
        %v650 = vsel %vm603, 0, %v649
        %651 = vst [vmem:[#allocation2 + $0xbc] sm:$0x1] %v650
        %v652 = vld [vmem:[#allocation2 + $0xc8] sm:$0x1]
        %v653 = vsel %vm603, 0, %v652
        %654 = vst [vmem:[#allocation2 + $0xc8] sm:$0x1] %v653
        %v655 = vld [vmem:[#allocation2 + $0xd4] sm:$0x1]
        %v656 = vsel %vm603, 0, %v655
        %657 = vst [vmem:[#allocation2 + $0xd4] sm:$0x1] %v656
        %v658 = vpack.c.bf16 %v505, %v504
        %v659 = vpack.c.bf16 %v507, %v506
        %v660 = vpack.c.bf16 %v509, %v508
        %v661 = vpack.c.bf16 %v511, %v510
        %v662 = vpack.c.bf16 %v513, %v512
        %v663 = vpack.c.bf16 %v515, %v514
        %v664 = vpack.c.bf16 %v517, %v516
        %v665 = vpack.c.bf16 %v519, %v518
        %v666 = vpack.c.bf16 %v521, %v520
        %v667 = vpack.c.bf16 %v523, %v522
        %v668 = vpack.c.bf16 %v525, %v524
        %v669 = vpack.c.bf16 %v527, %v526
        %v670 = vpack.c.bf16 %v529, %v528
        %v671 = vpack.c.bf16 %v531, %v530
        %v672 = vpack.c.bf16 %v533, %v532
        %v673 = vpack.c.bf16 %v535, %v534
        %v690 = vunpack.c.l.b16 %v658
        %v691 = vunpack.c.h.b16 %v658
        %v692 = vunpack.c.l.b16 %v659
        %v693 = vunpack.c.h.b16 %v659
        %v694 = vunpack.c.l.b16 %v660
        %v695 = vunpack.c.h.b16 %v660
        %v696 = vunpack.c.l.b16 %v661
        %v697 = vunpack.c.h.b16 %v661
        %v698 = vunpack.c.l.b16 %v662
        %v699 = vunpack.c.h.b16 %v662
        %v700 = vunpack.c.l.b16 %v663
        %v701 = vunpack.c.h.b16 %v663
        %v702 = vunpack.c.l.b16 %v664
        %v703 = vunpack.c.h.b16 %v664
        %v704 = vunpack.c.l.b16 %v665
        %v705 = vunpack.c.h.b16 %v665
        %v706 = vunpack.c.l.b16 %v666
        %v707 = vunpack.c.h.b16 %v666
        %v708 = vunpack.c.l.b16 %v667
        %v709 = vunpack.c.h.b16 %v667
        %v710 = vunpack.c.l.b16 %v668
        %v711 = vunpack.c.h.b16 %v668
        %v712 = vunpack.c.l.b16 %v669
        %v713 = vunpack.c.h.b16 %v669
        %v714 = vunpack.c.l.b16 %v670
        %v715 = vunpack.c.h.b16 %v670
        %v716 = vunpack.c.l.b16 %v671
        %v717 = vunpack.c.h.b16 %v671
        %v718 = vunpack.c.l.b16 %v672
        %v719 = vunpack.c.h.b16 %v672
        %v720 = vunpack.c.l.b16 %v673
        %v721 = vunpack.c.h.b16 %v673
        %v722 = vpack.c.b16 %v690, %v690
        %v723 = vpack.c.b16 %v691, %v691
        %v724 = vpack.c.b16 %v692, %v692
        %v725 = vpack.c.b16 %v693, %v693
        %v726 = vpack.c.b16 %v694, %v694
        %v727 = vpack.c.b16 %v695, %v695
        %v728 = vpack.c.b16 %v696, %v696
        %v729 = vpack.c.b16 %v697, %v697
        %v730 = vpack.c.b16 %v698, %v698
        %v731 = vpack.c.b16 %v699, %v699
        %v732 = vpack.c.b16 %v700, %v700
        %v733 = vpack.c.b16 %v701, %v701
        %v734 = vpack.c.b16 %v702, %v702
        %v735 = vpack.c.b16 %v703, %v703
        %v736 = vpack.c.b16 %v704, %v704
        %v737 = vpack.c.b16 %v705, %v705
        %v738 = vpack.c.b16 %v706, %v706
        %v739 = vpack.c.b16 %v707, %v707
        %v740 = vpack.c.b16 %v708, %v708
        %v741 = vpack.c.b16 %v709, %v709
        %v742 = vpack.c.b16 %v710, %v710
        %v743 = vpack.c.b16 %v711, %v711
        %v744 = vpack.c.b16 %v712, %v712
        %v745 = vpack.c.b16 %v713, %v713
        %v746 = vpack.c.b16 %v714, %v714
        %v747 = vpack.c.b16 %v715, %v715
        %v748 = vpack.c.b16 %v716, %v716
        %v749 = vpack.c.b16 %v717, %v717
        %v750 = vpack.c.b16 %v718, %v718
        %v751 = vpack.c.b16 %v719, %v719
        %v752 = vpack.c.b16 %v720, %v720
        %v753 = vpack.c.b16 %v721, %v721
        %vm754 = vsmask.f32 4368
        %vm755 = vmor %vm546, %vm754
        %v757 = vshrl.u32 %v722, 16
        %v759 = vrot.slane %v757, 7
        %v760 = vshll.u32 %v722, 16
        %v762 = vor.u32 %v759, %v760
        %v763 = vrot.slane %v759, 4
        %v765 = vshrl.u32 %v723, 16
        %v767 = vrot.slane %v765, 7
        %v768 = vshll.u32 %v723, 16
        %v770 = vor.u32 %v767, %v768
        %v771 = vsel %vm755, %v763, %v770
        %v772 = vrot.slane %v767, 4
        %v774 = vshrl.u32 %v724, 16
        %v776 = vrot.slane %v774, 7
        %v777 = vshll.u32 %v724, 16
        %v779 = vor.u32 %v776, %v777
        %v780 = vrot.slane %v776, 4
        %v782 = vshrl.u32 %v725, 16
        %v784 = vrot.slane %v782, 7
        %v785 = vshll.u32 %v725, 16
        %v787 = vor.u32 %v784, %v785
        %v788 = vsel %vm755, %v780, %v787
        %v789 = vrot.slane %v784, 4
        %v791 = vshrl.u32 %v726, 16
        %v793 = vrot.slane %v791, 7
        %v794 = vshll.u32 %v726, 16
        %v796 = vor.u32 %v793, %v794
        %v797 = vrot.slane %v793, 4
        %v799 = vshrl.u32 %v727, 16
        %v801 = vrot.slane %v799, 7
        %v802 = vshll.u32 %v727, 16
        %v804 = vor.u32 %v801, %v802
        %v805 = vsel %vm755, %v797, %v804
        %v806 = vrot.slane %v801, 4
        %v808 = vshrl.u32 %v728, 16
        %v810 = vrot.slane %v808, 7
        %v811 = vshll.u32 %v728, 16
        %v813 = vor.u32 %v810, %v811
        %v814 = vrot.slane %v810, 4
        %v816 = vshrl.u32 %v729, 16
        %v818 = vrot.slane %v816, 7
        %v819 = vshll.u32 %v729, 16
        %v821 = vor.u32 %v818, %v819
        %v822 = vsel %vm755, %v814, %v821
        %v823 = vrot.slane %v818, 4
        %v825 = vshrl.u32 %v730, 16
        %v827 = vrot.slane %v825, 7
        %v828 = vshll.u32 %v730, 16
        %v830 = vor.u32 %v827, %v828
        %v831 = vrot.slane %v827, 4
        %v833 = vshrl.u32 %v731, 16
        %v835 = vrot.slane %v833, 7
        %v836 = vshll.u32 %v731, 16
        %v838 = vor.u32 %v835, %v836
        %v839 = vsel %vm755, %v831, %v838
        %v840 = vrot.slane %v835, 4
        %v842 = vshrl.u32 %v732, 16
        %v844 = vrot.slane %v842, 7
        %v845 = vshll.u32 %v732, 16
        %v847 = vor.u32 %v844, %v845
        %v848 = vrot.slane %v844, 4
        %v850 = vshrl.u32 %v733, 16
        %v852 = vrot.slane %v850, 7
        %v853 = vshll.u32 %v733, 16
        %v855 = vor.u32 %v852, %v853
        %v856 = vsel %vm755, %v848, %v855
        %v857 = vrot.slane %v852, 4
        %v859 = vshrl.u32 %v734, 16
        %v861 = vrot.slane %v859, 7
        %v862 = vshll.u32 %v734, 16
        %v864 = vor.u32 %v861, %v862
        %v865 = vrot.slane %v861, 4
        %v867 = vshrl.u32 %v735, 16
        %v869 = vrot.slane %v867, 7
        %v870 = vshll.u32 %v735, 16
        %v872 = vor.u32 %v869, %v870
        %v873 = vsel %vm755, %v865, %v872
        %v874 = vrot.slane %v869, 4
        %v876 = vshrl.u32 %v736, 16
        %v878 = vrot.slane %v876, 7
        %v879 = vshll.u32 %v736, 16
        %v881 = vor.u32 %v878, %v879
        %v882 = vrot.slane %v878, 4
        %v884 = vshrl.u32 %v737, 16
        %v886 = vrot.slane %v884, 7
        %v887 = vshll.u32 %v737, 16
        %v889 = vor.u32 %v886, %v887
        %v890 = vsel %vm755, %v882, %v889
        %v891 = vrot.slane %v886, 4
        %v893 = vshrl.u32 %v738, 16
        %v895 = vrot.slane %v893, 7
        %v896 = vshll.u32 %v738, 16
        %v898 = vor.u32 %v895, %v896
        %v899 = vrot.slane %v895, 4
        %v901 = vshrl.u32 %v739, 16
        %v903 = vrot.slane %v901, 7
        %v904 = vshll.u32 %v739, 16
        %v906 = vor.u32 %v903, %v904
        %v907 = vsel %vm755, %v899, %v906
        %v908 = vrot.slane %v903, 4
        %v910 = vshrl.u32 %v740, 16
        %v912 = vrot.slane %v910, 7
        %v913 = vshll.u32 %v740, 16
        %v915 = vor.u32 %v912, %v913
        %v916 = vrot.slane %v912, 4
        %v918 = vshrl.u32 %v741, 16
        %v920 = vrot.slane %v918, 7
        %v921 = vshll.u32 %v741, 16
        %v923 = vor.u32 %v920, %v921
        %v924 = vsel %vm755, %v916, %v923
        %v925 = vrot.slane %v920, 4
        %v927 = vshrl.u32 %v742, 16
        %v929 = vrot.slane %v927, 7
        %v930 = vshll.u32 %v742, 16
        %v932 = vor.u32 %v929, %v930
        %v933 = vrot.slane %v929, 4
        %v935 = vshrl.u32 %v743, 16
        %v937 = vrot.slane %v935, 7
        %v938 = vshll.u32 %v743, 16
        %v940 = vor.u32 %v937, %v938
        %v941 = vsel %vm755, %v933, %v940
        %v942 = vrot.slane %v937, 4
        %v944 = vshrl.u32 %v744, 16
        %v946 = vrot.slane %v944, 7
        %v947 = vshll.u32 %v744, 16
        %v949 = vor.u32 %v946, %v947
        %v950 = vrot.slane %v946, 4
        %v952 = vshrl.u32 %v745, 16
        %v954 = vrot.slane %v952, 7
        %v955 = vshll.u32 %v745, 16
        %v957 = vor.u32 %v954, %v955
        %v958 = vsel %vm755, %v950, %v957
        %v959 = vrot.slane %v954, 4
        %v961 = vshrl.u32 %v746, 16
        %v963 = vrot.slane %v961, 7
        %v964 = vshll.u32 %v746, 16
        %v966 = vor.u32 %v963, %v964
        %v967 = vrot.slane %v963, 4
        %v969 = vshrl.u32 %v747, 16
        %v971 = vrot.slane %v969, 7
        %v972 = vshll.u32 %v747, 16
        %v974 = vor.u32 %v971, %v972
        %v975 = vsel %vm755, %v967, %v974
        %v976 = vrot.slane %v971, 4
        %v978 = vshrl.u32 %v748, 16
        %v980 = vrot.slane %v978, 7
        %v981 = vshll.u32 %v748, 16
        %v983 = vor.u32 %v980, %v981
        %v984 = vrot.slane %v980, 4
        %v986 = vshrl.u32 %v749, 16
        %v988 = vrot.slane %v986, 7
        %v989 = vshll.u32 %v749, 16
        %v991 = vor.u32 %v988, %v989
        %v992 = vsel %vm755, %v984, %v991
        %v993 = vrot.slane %v988, 4
        %v995 = vshrl.u32 %v750, 16
        %v997 = vrot.slane %v995, 7
        %v998 = vshll.u32 %v750, 16
        %v1000 = vor.u32 %v997, %v998
        %v1001 = vrot.slane %v997, 4
        %v1003 = vshrl.u32 %v751, 16
        %v1005 = vrot.slane %v1003, 7
        %v1006 = vshll.u32 %v751, 16
        %v1008 = vor.u32 %v1005, %v1006
        %v1009 = vsel %vm755, %v1001, %v1008
        %v1010 = vrot.slane %v1005, 4
        %v1012 = vshrl.u32 %v752, 16
        %v1014 = vrot.slane %v1012, 7
        %v1015 = vshll.u32 %v752, 16
        %v1017 = vor.u32 %v1014, %v1015
        %v1018 = vrot.slane %v1014, 4
        %v1020 = vshrl.u32 %v753, 16
        %v1022 = vrot.slane %v1020, 7
        %v1023 = vshll.u32 %v753, 16
        %v1025 = vor.u32 %v1022, %v1023
        %v1026 = vsel %vm755, %v1018, %v1025
        %v1027 = vrot.slane %v1022, 4
        %s1076 = scalar_lea.vmem [#allocation2], 12
        %vm1077 = vcmask 125952
        %vm1078 = vmand %vm1077, %vm602
        %v1079 = vld [vmem:[%s1076] sm:$0xf]
        %v1080 = vsel %vm1078, %v762, %v1079
        %1081 = vst [vmem:[%s1076] sm:$0xf] %v1080
        %1082 = vst.msk [vmem:[%s1076 + $0x4] sm:$0xf] %vm536, %v771
        %v1083 = vld [vmem:[%s1076 + $0x8] sm:$0x1]
        %v1084 = vsel %vm547, %v772, %v1083
        %1085 = vst [vmem:[%s1076 + $0x8] sm:$0x1] %v1084
        %v1086 = vld [vmem:[%s1076 + $0xc] sm:$0xf]
        %v1087 = vsel %vm1078, %v779, %v1086
        %1088 = vst [vmem:[%s1076 + $0xc] sm:$0xf] %v1087
        %1089 = vst.msk [vmem:[%s1076 + $0x10] sm:$0xf] %vm536, %v788
        %v1090 = vld [vmem:[%s1076 + $0x14] sm:$0x1]
        %v1091 = vsel %vm547, %v789, %v1090
        %1092 = vst [vmem:[%s1076 + $0x14] sm:$0x1] %v1091
        %v1093 = vld [vmem:[%s1076 + $0x18] sm:$0xf]
        %v1094 = vsel %vm1078, %v796, %v1093
        %1095 = vst [vmem:[%s1076 + $0x18] sm:$0xf] %v1094
        %1096 = vst.msk [vmem:[%s1076 + $0x1c] sm:$0xf] %vm536, %v805
        %v1097 = vld [vmem:[%s1076 + $0x20] sm:$0x1]
        %v1098 = vsel %vm547, %v806, %v1097
        %1099 = vst [vmem:[%s1076 + $0x20] sm:$0x1] %v1098
        %v1100 = vld [vmem:[%s1076 + $0x24] sm:$0xf]
        %v1101 = vsel %vm1078, %v813, %v1100
        %1102 = vst [vmem:[%s1076 + $0x24] sm:$0xf] %v1101
        %1103 = vst.msk [vmem:[%s1076 + $0x28] sm:$0xf] %vm536, %v822
        %v1104 = vld [vmem:[%s1076 + $0x2c] sm:$0x1]
        %v1105 = vsel %vm547, %v823, %v1104
        %1106 = vst [vmem:[%s1076 + $0x2c] sm:$0x1] %v1105
        %v1107 = vld [vmem:[%s1076 + $0x30] sm:$0xf]
        %v1108 = vsel %vm1078, %v830, %v1107
        %1109 = vst [vmem:[%s1076 + $0x30] sm:$0xf] %v1108
        %1110 = vst.msk [vmem:[%s1076 + $0x34] sm:$0xf] %vm536, %v839
        %v1111 = vld [vmem:[%s1076 + $0x38] sm:$0x1]
        %v1112 = vsel %vm547, %v840, %v1111
        %1113 = vst [vmem:[%s1076 + $0x38] sm:$0x1] %v1112
        %v1114 = vld [vmem:[%s1076 + $0x3c] sm:$0xf]
        %v1115 = vsel %vm1078, %v847, %v1114
        %1116 = vst [vmem:[%s1076 + $0x3c] sm:$0xf] %v1115
        %1117 = vst.msk [vmem:[%s1076 + $0x40] sm:$0xf] %vm536, %v856
        %v1118 = vld [vmem:[%s1076 + $0x44] sm:$0x1]
        %v1119 = vsel %vm547, %v857, %v1118
        %1120 = vst [vmem:[%s1076 + $0x44] sm:$0x1] %v1119
        %v1121 = vld [vmem:[%s1076 + $0x48] sm:$0xf]
        %v1122 = vsel %vm1078, %v864, %v1121
        %1123 = vst [vmem:[%s1076 + $0x48] sm:$0xf] %v1122
        %1124 = vst.msk [vmem:[%s1076 + $0x4c] sm:$0xf] %vm536, %v873
        %v1125 = vld [vmem:[%s1076 + $0x50] sm:$0x1]
        %v1126 = vsel %vm547, %v874, %v1125
        %1127 = vst [vmem:[%s1076 + $0x50] sm:$0x1] %v1126
        %v1128 = vld [vmem:[%s1076 + $0x54] sm:$0xf]
        %v1129 = vsel %vm1078, %v881, %v1128
        %1130 = vst [vmem:[%s1076 + $0x54] sm:$0xf] %v1129
        %1131 = vst.msk [vmem:[%s1076 + $0x58] sm:$0xf] %vm536, %v890
        %v1132 = vld [vmem:[%s1076 + $0x5c] sm:$0x1]
        %v1133 = vsel %vm547, %v891, %v1132
        %1134 = vst [vmem:[%s1076 + $0x5c] sm:$0x1] %v1133
        %v1135 = vld [vmem:[%s1076 + $0x60] sm:$0xf]
        %v1136 = vsel %vm1078, %v898, %v1135
        %1137 = vst [vmem:[%s1076 + $0x60] sm:$0xf] %v1136
        %1138 = vst.msk [vmem:[%s1076 + $0x64] sm:$0xf] %vm536, %v907
        %v1139 = vld [vmem:[%s1076 + $0x68] sm:$0x1]
        %v1140 = vsel %vm547, %v908, %v1139
        %1141 = vst [vmem:[%s1076 + $0x68] sm:$0x1] %v1140
        %v1142 = vld [vmem:[%s1076 + $0x6c] sm:$0xf]
        %v1143 = vsel %vm1078, %v915, %v1142
        %1144 = vst [vmem:[%s1076 + $0x6c] sm:$0xf] %v1143
        %1145 = vst.msk [vmem:[%s1076 + $0x70] sm:$0xf] %vm536, %v924
        %v1146 = vld [vmem:[%s1076 + $0x74] sm:$0x1]
        %v1147 = vsel %vm547, %v925, %v1146
        %1148 = vst [vmem:[%s1076 + $0x74] sm:$0x1] %v1147
        %v1149 = vld [vmem:[%s1076 + $0x78] sm:$0xf]
        %v1150 = vsel %vm1078, %v932, %v1149
        %1151 = vst [vmem:[%s1076 + $0x78] sm:$0xf] %v1150
        %1152 = vst.msk [vmem:[%s1076 + $0x7c] sm:$0xf] %vm536, %v941
        %v1153 = vld [vmem:[%s1076 + $0x80] sm:$0x1]
        %v1154 = vsel %vm547, %v942, %v1153
        %1155 = vst [vmem:[%s1076 + $0x80] sm:$0x1] %v1154
        %v1156 = vld [vmem:[%s1076 + $0x84] sm:$0xf]
        %v1157 = vsel %vm1078, %v949, %v1156
        %1158 = vst [vmem:[%s1076 + $0x84] sm:$0xf] %v1157
        %1159 = vst.msk [vmem:[%s1076 + $0x88] sm:$0xf] %vm536, %v958
        %v1160 = vld [vmem:[%s1076 + $0x8c] sm:$0x1]
        %v1161 = vsel %vm547, %v959, %v1160
        %1162 = vst [vmem:[%s1076 + $0x8c] sm:$0x1] %v1161
        %v1163 = vld [vmem:[%s1076 + $0x90] sm:$0xf]
        %v1164 = vsel %vm1078, %v966, %v1163
        %1165 = vst [vmem:[%s1076 + $0x90] sm:$0xf] %v1164
        %1166 = vst.msk [vmem:[%s1076 + $0x94] sm:$0xf] %vm536, %v975
        %v1167 = vld [vmem:[%s1076 + $0x98] sm:$0x1]
        %v1168 = vsel %vm547, %v976, %v1167
        %1169 = vst [vmem:[%s1076 + $0x98] sm:$0x1] %v1168
        %v1170 = vld [vmem:[%s1076 + $0x9c] sm:$0xf]
        %v1171 = vsel %vm1078, %v983, %v1170
        %1172 = vst [vmem:[%s1076 + $0x9c] sm:$0xf] %v1171
        %1173 = vst.msk [vmem:[%s1076 + $0xa0] sm:$0xf] %vm536, %v992
        %v1174 = vld [vmem:[%s1076 + $0xa4] sm:$0x1]
        %v1175 = vsel %vm547, %v993, %v1174
        %1176 = vst [vmem:[%s1076 + $0xa4] sm:$0x1] %v1175
        %v1177 = vld [vmem:[%s1076 + $0xa8] sm:$0xf]
        %v1178 = vsel %vm1078, %v1000, %v1177
        %1179 = vst [vmem:[%s1076 + $0xa8] sm:$0xf] %v1178
        %1180 = vst.msk [vmem:[%s1076 + $0xac] sm:$0xf] %vm536, %v1009
        %v1181 = vld [vmem:[%s1076 + $0xb0] sm:$0x1]
        %v1182 = vsel %vm547, %v1010, %v1181
        %1183 = vst [vmem:[%s1076 + $0xb0] sm:$0x1] %v1182
        %v1184 = vld [vmem:[%s1076 + $0xb4] sm:$0xf]
        %v1185 = vsel %vm1078, %v1017, %v1184
        %1186 = vst [vmem:[%s1076 + $0xb4] sm:$0xf] %v1185
        %1187 = vst.msk [vmem:[%s1076 + $0xb8] sm:$0xf] %vm536, %v1026
        %v1188 = vld [vmem:[%s1076 + $0xbc] sm:$0x1]
        %v1189 = vsel %vm547, %v1027, %v1188
        %1190 = vst [vmem:[%s1076 + $0xbc] sm:$0x1] %v1189
        %v1191 = vld [vmem:[#allocation2] sm:$0xf]
        %v1192 = vld [vmem:[#allocation2 + $0x4] sm:$0xf]
        %v1193 = vld [vmem:[#allocation2 + $0xc] sm:$0xf]
        %v1194 = vld [vmem:[#allocation2 + $0x10] sm:$0xf]
        %v1195 = vld [vmem:[#allocation2 + $0x18] sm:$0xf]
        %v1196 = vld [vmem:[#allocation2 + $0x1c] sm:$0xf]
        %v1197 = vld [vmem:[#allocation2 + $0x24] sm:$0xf]
        %v1198 = vld [vmem:[#allocation2 + $0x28] sm:$0xf]
        %v1199 = vld [vmem:[#allocation2 + $0x30] sm:$0xf]
        %v1200 = vld [vmem:[#allocation2 + $0x34] sm:$0xf]
        %v1201 = vld [vmem:[#allocation2 + $0x3c] sm:$0xf]
        %v1202 = vld [vmem:[#allocation2 + $0x40] sm:$0xf]
        %v1203 = vld [vmem:[#allocation2 + $0x48] sm:$0xf]
        %v1204 = vld [vmem:[#allocation2 + $0x4c] sm:$0xf]
        %v1205 = vld [vmem:[#allocation2 + $0x54] sm:$0xf]
        %v1206 = vld [vmem:[#allocation2 + $0x58] sm:$0xf]
        %v1207 = vld [vmem:[#allocation2 + $0x60] sm:$0xf]
        %v1208 = vld [vmem:[#allocation2 + $0x64] sm:$0xf]
        %v1209 = vld [vmem:[#allocation2 + $0x6c] sm:$0xf]
        %v1210 = vld [vmem:[#allocation2 + $0x70] sm:$0xf]
        %v1211 = vld [vmem:[#allocation2 + $0x78] sm:$0xf]
        %v1212 = vld [vmem:[#allocation2 + $0x7c] sm:$0xf]
        %v1213 = vld [vmem:[#allocation2 + $0x84] sm:$0xf]
        %v1214 = vld [vmem:[#allocation2 + $0x88] sm:$0xf]
        %v1215 = vld [vmem:[#allocation2 + $0x90] sm:$0xf]
        %v1216 = vld [vmem:[#allocation2 + $0x94] sm:$0xf]
        %v1217 = vld [vmem:[#allocation2 + $0x9c] sm:$0xf]
        %v1218 = vld [vmem:[#allocation2 + $0xa0] sm:$0xf]
        %v1219 = vld [vmem:[#allocation2 + $0xa8] sm:$0xf]
        %v1220 = vld [vmem:[#allocation2 + $0xac] sm:$0xf]
        %v1221 = vld [vmem:[#allocation2 + $0xb4] sm:$0xf]
        %v1222 = vld [vmem:[#allocation2 + $0xb8] sm:$0xf]
        %v1223 = vld [vmem:[%s4] sm:$0xf]
        %v1224 = vld [vmem:[%s4 + $0x4] sm:$0xf]
        %v1225 = vld [vmem:[#allocation2 + $0x8] sm:$0x1]
        %v1226 = vld [vmem:[#allocation2 + $0x14] sm:$0x1]
        %v1227 = vld [vmem:[#allocation2 + $0x20] sm:$0x1]
        %v1228 = vld [vmem:[#allocation2 + $0x2c] sm:$0x1]
        %v1229 = vld [vmem:[#allocation2 + $0x38] sm:$0x1]
        %v1230 = vld [vmem:[#allocation2 + $0x44] sm:$0x1]
        %v1231 = vld [vmem:[#allocation2 + $0x50] sm:$0x1]
        %v1232 = vld [vmem:[#allocation2 + $0x5c] sm:$0x1]
        %v1233 = vld [vmem:[#allocation2 + $0x68] sm:$0x1]
        %v1234 = vld [vmem:[#allocation2 + $0x74] sm:$0x1]
        %v1235 = vld [vmem:[#allocation2 + $0x80] sm:$0x1]
        %v1236 = vld [vmem:[#allocation2 + $0x8c] sm:$0x1]
        %v1237 = vld [vmem:[#allocation2 + $0x98] sm:$0x1]
        %v1238 = vld [vmem:[#allocation2 + $0xa4] sm:$0x1]
        %v1239 = vld [vmem:[#allocation2 + $0xb0] sm:$0x1]
        %v1240 = vld [vmem:[#allocation2 + $0xbc] sm:$0x1]
        %vm1241 = vsmask.f32 3328
        %vm1242 = vsmask.f32 7440
        %vm1243 = vmor %vm1241, %vm1242
        %v1245 = vshrl.u32 %v1191, 16
        %v1247 = vrot.slane %v1245, 4
        %v1248 = vshll.u32 %v1191, 16
        %v1250 = vrot.slane %v1248, 5
        %v1251 = vor.u32 %v1247, %v1250
        %v1252 = vrot.slane %v1251, 4
        %v1254 = vshll.u32 %v1192, 16
        %v1256 = vrot.slane %v1254, 5
        %v1257 = vsel %vm1243, %v1252, %v1256
        %v1258 = vshrl.u32 %v1192, 16
        %v1260 = vrot.slane %v1258, 4
        %v1261 = vor.u32 %v1260, %v1256
        %v1262 = vrot.slane %v1261, 4
        %v1264 = vshll.u32 %v1225, 16
        %v1266 = vrot.slane %v1264, 5
        %v1267 = vsel %vm1243, %v1262, %v1266
        %v1269 = vshrl.u32 %v1193, 16
        %v1271 = vrot.slane %v1269, 4
        %v1272 = vshll.u32 %v1193, 16
        %v1274 = vrot.slane %v1272, 5
        %v1275 = vor.u32 %v1271, %v1274
        %v1276 = vrot.slane %v1275, 4
        %v1278 = vshll.u32 %v1194, 16
        %v1280 = vrot.slane %v1278, 5
        %v1281 = vsel %vm1243, %v1276, %v1280
        %v1282 = vshrl.u32 %v1194, 16
        %v1284 = vrot.slane %v1282, 4
        %v1285 = vor.u32 %v1284, %v1280
        %v1286 = vrot.slane %v1285, 4
        %v1288 = vshll.u32 %v1226, 16
        %v1290 = vrot.slane %v1288, 5
        %v1291 = vsel %vm1243, %v1286, %v1290
        %v1293 = vshrl.u32 %v1195, 16
        %v1295 = vrot.slane %v1293, 4
        %v1296 = vshll.u32 %v1195, 16
        %v1298 = vrot.slane %v1296, 5
        %v1299 = vor.u32 %v1295, %v1298
        %v1300 = vrot.slane %v1299, 4
        %v1302 = vshll.u32 %v1196, 16
        %v1304 = vrot.slane %v1302, 5
        %v1305 = vsel %vm1243, %v1300, %v1304
        %v1306 = vshrl.u32 %v1196, 16
        %v1308 = vrot.slane %v1306, 4
        %v1309 = vor.u32 %v1308, %v1304
        %v1310 = vrot.slane %v1309, 4
        %v1312 = vshll.u32 %v1227, 16
        %v1314 = vrot.slane %v1312, 5
        %v1315 = vsel %vm1243, %v1310, %v1314
        %v1317 = vshrl.u32 %v1197, 16
        %v1319 = vrot.slane %v1317, 4
        %v1320 = vshll.u32 %v1197, 16
        %v1322 = vrot.slane %v1320, 5
        %v1323 = vor.u32 %v1319, %v1322
        %v1324 = vrot.slane %v1323, 4
        %v1326 = vshll.u32 %v1198, 16
        %v1328 = vrot.slane %v1326, 5
        %v1329 = vsel %vm1243, %v1324, %v1328
        %v1330 = vshrl.u32 %v1198, 16
        %v1332 = vrot.slane %v1330, 4
        %v1333 = vor.u32 %v1332, %v1328
        %v1334 = vrot.slane %v1333, 4
        %v1336 = vshll.u32 %v1228, 16
        %v1338 = vrot.slane %v1336, 5
        %v1339 = vsel %vm1243, %v1334, %v1338
        %v1341 = vshrl.u32 %v1199, 16
        %v1343 = vrot.slane %v1341, 4
        %v1344 = vshll.u32 %v1199, 16
        %v1346 = vrot.slane %v1344, 5
        %v1347 = vor.u32 %v1343, %v1346
        %v1348 = vrot.slane %v1347, 4
        %v1350 = vshll.u32 %v1200, 16
        %v1352 = vrot.slane %v1350, 5
        %v1353 = vsel %vm1243, %v1348, %v1352
        %v1354 = vshrl.u32 %v1200, 16
        %v1356 = vrot.slane %v1354, 4
        %v1357 = vor.u32 %v1356, %v1352
        %v1358 = vrot.slane %v1357, 4
        %v1360 = vshll.u32 %v1229, 16
        %v1362 = vrot.slane %v1360, 5
        %v1363 = vsel %vm1243, %v1358, %v1362
        %v1365 = vshrl.u32 %v1201, 16
        %v1367 = vrot.slane %v1365, 4
        %v1368 = vshll.u32 %v1201, 16
        %v1370 = vrot.slane %v1368, 5
        %v1371 = vor.u32 %v1367, %v1370
        %v1372 = vrot.slane %v1371, 4
        %v1374 = vshll.u32 %v1202, 16
        %v1376 = vrot.slane %v1374, 5
        %v1377 = vsel %vm1243, %v1372, %v1376
        %v1378 = vshrl.u32 %v1202, 16
        %v1380 = vrot.slane %v1378, 4
        %v1381 = vor.u32 %v1380, %v1376
        %v1382 = vrot.slane %v1381, 4
        %v1384 = vshll.u32 %v1230, 16
        %v1386 = vrot.slane %v1384, 5
        %v1387 = vsel %vm1243, %v1382, %v1386
        %v1389 = vshrl.u32 %v1203, 16
        %v1391 = vrot.slane %v1389, 4
        %v1392 = vshll.u32 %v1203, 16
        %v1394 = vrot.slane %v1392, 5
        %v1395 = vor.u32 %v1391, %v1394
        %v1396 = vrot.slane %v1395, 4
        %v1398 = vshll.u32 %v1204, 16
        %v1400 = vrot.slane %v1398, 5
        %v1401 = vsel %vm1243, %v1396, %v1400
        %v1402 = vshrl.u32 %v1204, 16
        %v1404 = vrot.slane %v1402, 4
        %v1405 = vor.u32 %v1404, %v1400
        %v1406 = vrot.slane %v1405, 4
        %v1408 = vshll.u32 %v1231, 16
        %v1410 = vrot.slane %v1408, 5
        %v1411 = vsel %vm1243, %v1406, %v1410
        %v1413 = vshrl.u32 %v1205, 16
        %v1415 = vrot.slane %v1413, 4
        %v1416 = vshll.u32 %v1205, 16
        %v1418 = vrot.slane %v1416, 5
        %v1419 = vor.u32 %v1415, %v1418
        %v1420 = vrot.slane %v1419, 4
        %v1422 = vshll.u32 %v1206, 16
        %v1424 = vrot.slane %v1422, 5
        %v1425 = vsel %vm1243, %v1420, %v1424
        %v1426 = vshrl.u32 %v1206, 16
        %v1428 = vrot.slane %v1426, 4
        %v1429 = vor.u32 %v1428, %v1424
        %v1430 = vrot.slane %v1429, 4
        %v1432 = vshll.u32 %v1232, 16
        %v1434 = vrot.slane %v1432, 5
        %v1435 = vsel %vm1243, %v1430, %v1434
        %v1437 = vshrl.u32 %v1207, 16
        %v1439 = vrot.slane %v1437, 4
        %v1440 = vshll.u32 %v1207, 16
        %v1442 = vrot.slane %v1440, 5
        %v1443 = vor.u32 %v1439, %v1442
        %v1444 = vrot.slane %v1443, 4
        %v1446 = vshll.u32 %v1208, 16
        %v1448 = vrot.slane %v1446, 5
        %v1449 = vsel %vm1243, %v1444, %v1448
        %v1450 = vshrl.u32 %v1208, 16
        %v1452 = vrot.slane %v1450, 4
        %v1453 = vor.u32 %v1452, %v1448
        %v1454 = vrot.slane %v1453, 4
        %v1456 = vshll.u32 %v1233, 16
        %v1458 = vrot.slane %v1456, 5
        %v1459 = vsel %vm1243, %v1454, %v1458
        %v1461 = vshrl.u32 %v1209, 16
        %v1463 = vrot.slane %v1461, 4
        %v1464 = vshll.u32 %v1209, 16
        %v1466 = vrot.slane %v1464, 5
        %v1467 = vor.u32 %v1463, %v1466
        %v1468 = vrot.slane %v1467, 4
        %v1470 = vshll.u32 %v1210, 16
        %v1472 = vrot.slane %v1470, 5
        %v1473 = vsel %vm1243, %v1468, %v1472
        %v1474 = vshrl.u32 %v1210, 16
        %v1476 = vrot.slane %v1474, 4
        %v1477 = vor.u32 %v1476, %v1472
        %v1478 = vrot.slane %v1477, 4
        %v1480 = vshll.u32 %v1234, 16
        %v1482 = vrot.slane %v1480, 5
        %v1483 = vsel %vm1243, %v1478, %v1482
        %v1485 = vshrl.u32 %v1211, 16
        %v1487 = vrot.slane %v1485, 4
        %v1488 = vshll.u32 %v1211, 16
        %v1490 = vrot.slane %v1488, 5
        %v1491 = vor.u32 %v1487, %v1490
        %v1492 = vrot.slane %v1491, 4
        %v1494 = vshll.u32 %v1212, 16
        %v1496 = vrot.slane %v1494, 5
        %v1497 = vsel %vm1243, %v1492, %v1496
        %v1498 = vshrl.u32 %v1212, 16
        %v1500 = vrot.slane %v1498, 4
        %v1501 = vor.u32 %v1500, %v1496
        %v1502 = vrot.slane %v1501, 4
        %v1504 = vshll.u32 %v1235, 16
        %v1506 = vrot.slane %v1504, 5
        %v1507 = vsel %vm1243, %v1502, %v1506
        %v1509 = vshrl.u32 %v1213, 16
        %v1511 = vrot.slane %v1509, 4
        %v1512 = vshll.u32 %v1213, 16
        %v1514 = vrot.slane %v1512, 5
        %v1515 = vor.u32 %v1511, %v1514
        %v1516 = vrot.slane %v1515, 4
        %v1518 = vshll.u32 %v1214, 16
        %v1520 = vrot.slane %v1518, 5
        %v1521 = vsel %vm1243, %v1516, %v1520
        %v1522 = vshrl.u32 %v1214, 16
        %v1524 = vrot.slane %v1522, 4
        %v1525 = vor.u32 %v1524, %v1520
        %v1526 = vrot.slane %v1525, 4
        %v1528 = vshll.u32 %v1236, 16
        %v1530 = vrot.slane %v1528, 5
        %v1531 = vsel %vm1243, %v1526, %v1530
        %v1533 = vshrl.u32 %v1215, 16
        %v1535 = vrot.slane %v1533, 4
        %v1536 = vshll.u32 %v1215, 16
        %v1538 = vrot.slane %v1536, 5
        %v1539 = vor.u32 %v1535, %v1538
        %v1540 = vrot.slane %v1539, 4
        %v1542 = vshll.u32 %v1216, 16
        %v1544 = vrot.slane %v1542, 5
        %v1545 = vsel %vm1243, %v1540, %v1544
        %v1546 = vshrl.u32 %v1216, 16
        %v1548 = vrot.slane %v1546, 4
        %v1549 = vor.u32 %v1548, %v1544
        %v1550 = vrot.slane %v1549, 4
        %v1552 = vshll.u32 %v1237, 16
        %v1554 = vrot.slane %v1552, 5
        %v1555 = vsel %vm1243, %v1550, %v1554
        %v1557 = vshrl.u32 %v1217, 16
        %v1559 = vrot.slane %v1557, 4
        %v1560 = vshll.u32 %v1217, 16
        %v1562 = vrot.slane %v1560, 5
        %v1563 = vor.u32 %v1559, %v1562
        %v1564 = vrot.slane %v1563, 4
        %v1566 = vshll.u32 %v1218, 16
        %v1568 = vrot.slane %v1566, 5
        %v1569 = vsel %vm1243, %v1564, %v1568
        %v1570 = vshrl.u32 %v1218, 16
        %v1572 = vrot.slane %v1570, 4
        %v1573 = vor.u32 %v1572, %v1568
        %v1574 = vrot.slane %v1573, 4
        %v1576 = vshll.u32 %v1238, 16
        %v1578 = vrot.slane %v1576, 5
        %v1579 = vsel %vm1243, %v1574, %v1578
        %v1581 = vshrl.u32 %v1219, 16
        %v1583 = vrot.slane %v1581, 4
        %v1584 = vshll.u32 %v1219, 16
        %v1586 = vrot.slane %v1584, 5
        %v1587 = vor.u32 %v1583, %v1586
        %v1588 = vrot.slane %v1587, 4
        %v1590 = vshll.u32 %v1220, 16
        %v1592 = vrot.slane %v1590, 5
        %v1593 = vsel %vm1243, %v1588, %v1592
        %v1594 = vshrl.u32 %v1220, 16
        %v1596 = vrot.slane %v1594, 4
        %v1597 = vor.u32 %v1596, %v1592
        %v1598 = vrot.slane %v1597, 4
        %v1600 = vshll.u32 %v1239, 16
        %v1602 = vrot.slane %v1600, 5
        %v1603 = vsel %vm1243, %v1598, %v1602
        %v1605 = vshrl.u32 %v1221, 16
        %v1607 = vrot.slane %v1605, 4
        %v1608 = vshll.u32 %v1221, 16
        %v1610 = vrot.slane %v1608, 5
        %v1611 = vor.u32 %v1607, %v1610
        %v1612 = vrot.slane %v1611, 4
        %v1614 = vshll.u32 %v1222, 16
        %v1616 = vrot.slane %v1614, 5
        %v1617 = vsel %vm1243, %v1612, %v1616
        %v1618 = vshrl.u32 %v1222, 16
        %v1620 = vrot.slane %v1618, 4
        %v1621 = vor.u32 %v1620, %v1616
        %v1622 = vrot.slane %v1621, 4
        %v1624 = vshll.u32 %v1240, 16
        %v1626 = vrot.slane %v1624, 5
        %v1627 = vsel %vm1243, %v1622, %v1626
        %s1628 = scalar_lea.vmem %s4, 8
        %v1629 = vld [vmem:[%s1628] sm:$0xf]
        %v1630 = vld [vmem:[%s1628 + $0x4] sm:$0xf]
        %v1631 = vunpack.c.l.b16 %v1257
        %v1632 = vunpack.c.l.b16 %v1267
        %v1633 = vunpack.c.l.b16 %v1281
        %v1634 = vunpack.c.l.b16 %v1291
        %v1635 = vunpack.c.l.b16 %v1305
        %v1636 = vunpack.c.l.b16 %v1315
        %v1637 = vunpack.c.l.b16 %v1329
        %v1638 = vunpack.c.l.b16 %v1339
        %v1639 = vunpack.c.l.b16 %v1353
        %v1640 = vunpack.c.l.b16 %v1363
        %v1641 = vunpack.c.l.b16 %v1377
        %v1642 = vunpack.c.l.b16 %v1387
        %v1643 = vunpack.c.l.b16 %v1401
        %v1644 = vunpack.c.l.b16 %v1411
        %v1645 = vunpack.c.l.b16 %v1425
        %v1646 = vunpack.c.l.b16 %v1435
        %v1647 = vunpack.c.l.b16 %v1449
        %v1648 = vunpack.c.l.b16 %v1459
        %v1649 = vunpack.c.l.b16 %v1473
        %v1650 = vunpack.c.l.b16 %v1483
        %v1651 = vunpack.c.l.b16 %v1497
        %v1652 = vunpack.c.l.b16 %v1507
        %v1653 = vunpack.c.l.b16 %v1521
        %v1654 = vunpack.c.l.b16 %v1531
        %v1655 = vunpack.c.l.b16 %v1545
        %v1656 = vunpack.c.l.b16 %v1555
        %v1657 = vunpack.c.l.b16 %v1569
        %v1658 = vunpack.c.l.b16 %v1579
        %v1659 = vunpack.c.l.b16 %v1593
        %v1660 = vunpack.c.l.b16 %v1603
        %v1661 = vunpack.c.l.b16 %v1617
        %v1662 = vunpack.c.l.b16 %v1627
        %v1663 = vpack.c.b16 %v1632, %v1631
        %v1664 = vpack.c.b16 %v1634, %v1633
        %v1665 = vpack.c.b16 %v1636, %v1635
        %v1666 = vpack.c.b16 %v1638, %v1637
        %v1667 = vpack.c.b16 %v1640, %v1639
        %v1668 = vpack.c.b16 %v1642, %v1641
        %v1669 = vpack.c.b16 %v1644, %v1643
        %v1670 = vpack.c.b16 %v1646, %v1645
        %v1671 = vpack.c.b16 %v1648, %v1647
        %v1672 = vpack.c.b16 %v1650, %v1649
        %v1673 = vpack.c.b16 %v1652, %v1651
        %v1674 = vpack.c.b16 %v1654, %v1653
        %v1675 = vpack.c.b16 %v1656, %v1655
        %v1676 = vpack.c.b16 %v1658, %v1657
        %v1677 = vpack.c.b16 %v1660, %v1659
        %v1678 = vpack.c.b16 %v1662, %v1661
        %v1681 = vunpack.c.l.b16 %v1629
        %v1682 = vunpack.c.l.b16 %v1630
        %v1683 = vpack.c.b16 %v1682, %v1681
        %vm1685 = vcmask 130048
        %v1687 = vsel %vm1685, %v1663, 0
        %v1690 = vsel %vm1685, %v1664, 0
        %v1693 = vsel %vm1685, %v1665, 0
        %v1696 = vsel %vm1685, %v1666, 0
        %v1699 = vsel %vm1685, %v1667, 0
        %v1702 = vsel %vm1685, %v1668, 0
        %v1705 = vsel %vm1685, %v1669, 0
        %v1708 = vsel %vm1685, %v1670, 0
        %v1711 = vsel %vm1685, %v1671, 0
        %v1714 = vsel %vm1685, %v1672, 0
        %v1717 = vsel %vm1685, %v1673, 0
        %v1720 = vsel %vm1685, %v1674, 0
        %v1723 = vsel %vm1685, %v1675, 0
        %v1726 = vsel %vm1685, %v1676, 0
        %v1729 = vsel %vm1685, %v1677, 0
        %v1732 = vsel %vm1685, %v1678, 0
        %1734 = vmatprep.subr.bf16.mxu0 0
        %1735 = vmatpush1.bf16.msra.mxu0 %v1683
        %1736 = vmatprep.subr.bf16.mxu0 0
        %1737 = vmatpush1.bf16.msra.mxu0 0
        %1738 = vmatprep.subr.bf16.mxu0 0
        %1739 = vmatpush1.bf16.msra.mxu0 0
        %1740 = vmatprep.subr.bf16.mxu0 0
        %1741 = vmatpush1.bf16.msra.mxu0 0
        %1742 = vmatprep.subr.bf16.mxu0 0
        %1743 = vmatpush1.bf16.msra.mxu0 0
        %1744 = vmatprep.subr.bf16.mxu0 0
        %1745 = vmatpush1.bf16.msra.mxu0 0
        %1746 = vmatprep.subr.bf16.mxu0 0
        %1747 = vmatpush1.bf16.msra.mxu0 0
        %1748 = vmatprep.subr.bf16.mxu0 0
        %1749 = vmatpush1.bf16.msra.mxu0 0
        %1750 = vmatprep.subr.bf16.mxu0 0
        %1751 = vmatpush1.bf16.msra.mxu0 0
        %1752 = vmatprep.subr.bf16.mxu0 0
        %1753 = vmatpush1.bf16.msra.mxu0 0
        %1754 = vmatprep.subr.bf16.mxu0 0
        %1755 = vmatpush1.bf16.msra.mxu0 0
        %1756 = vmatprep.subr.bf16.mxu0 0
        %1757 = vmatpush1.bf16.msra.mxu0 0
        %1758 = vmatprep.subr.bf16.mxu0 0
        %1759 = vmatpush1.bf16.msra.mxu0 0
        %1760 = vmatprep.subr.bf16.mxu0 0
        %1761 = vmatpush1.bf16.msra.mxu0 0
        %1762 = vmatprep.subr.bf16.mxu0 0
        %1763 = vmatpush1.bf16.msra.mxu0 0
        %1764 = vmatprep.subr.bf16.mxu0 0
        %1765 = vmatpush1.bf16.msra.mxu0 0
        %1766 = vmatprep.mubr.bf16.mxu0 0
        %1767 = vmatmul.mubr.bf16.gmra.mrb[0].mxu0 %v1687
        %v1768 = vpop.f32.mrb[0].mxu0
        %v1769 = vadd.f32 0.0, %v1768
        %v1770 = vpop.f32.mrb[0].mxu0
        %v1771 = vpop.f32.mrb[0].mxu0
        %v1772 = vadd.f32 0.0, %v1771
        %v1773 = vpop.f32.mrb[0].mxu0
        %1774 = vmatprep.mubr.bf16.mxu0 0
        %1775 = vmatmul.mubr.bf16.gmra.mrb[0].mxu0 %v1690
        %v1776 = vpop.f32.mrb[0].mxu0
        %v1777 = vadd.f32 0.0, %v1776
        %v1778 = vpop.f32.mrb[0].mxu0
        %v1779 = vpop.f32.mrb[0].mxu0
        %v1780 = vadd.f32 0.0, %v1779
        %v1781 = vpop.f32.mrb[0].mxu0
        %1782 = vmatprep.mubr.bf16.mxu0 0
        %1783 = vmatmul.mubr.bf16.gmra.mrb[0].mxu0 %v1693
        %v1784 = vpop.f32.mrb[0].mxu0
        %v1785 = vadd.f32 0.0, %v1784
        %v1786 = vpop.f32.mrb[0].mxu0
        %v1787 = vpop.f32.mrb[0].mxu0
        %v1788 = vadd.f32 0.0, %v1787
        %v1789 = vpop.f32.mrb[0].mxu0
        %1790 = vmatprep.mubr.bf16.mxu0 0
        %1791 = vmatmul.mubr.bf16.gmra.mrb[0].mxu0 %v1696
        %v1792 = vpop.f32.mrb[0].mxu0
        %v1793 = vadd.f32 0.0, %v1792
        %v1794 = vpop.f32.mrb[0].mxu0
        %v1795 = vpop.f32.mrb[0].mxu0
        %v1796 = vadd.f32 0.0, %v1795
        %v1797 = vpop.f32.mrb[0].mxu0
        %1798 = vmatprep.mubr.bf16.mxu0 0
        %1799 = vmatmul.mubr.bf16.gmra.mrb[0].mxu0 %v1699
        %v1800 = vpop.f32.mrb[0].mxu0
        %v1801 = vadd.f32 0.0, %v1800
        %v1802 = vpop.f32.mrb[0].mxu0
        %v1803 = vpop.f32.mrb[0].mxu0
        %v1804 = vadd.f32 0.0, %v1803
        %v1805 = vpop.f32.mrb[0].mxu0
        %1806 = vmatprep.mubr.bf16.mxu0 0
        %1807 = vmatmul.mubr.bf16.gmra.mrb[0].mxu0 %v1702
        %v1808 = vpop.f32.mrb[0].mxu0
        %v1809 = vadd.f32 0.0, %v1808
        %v1810 = vpop.f32.mrb[0].mxu0
        %v1811 = vpop.f32.mrb[0].mxu0
        %v1812 = vadd.f32 0.0, %v1811
        %v1813 = vpop.f32.mrb[0].mxu0
        %1814 = vmatprep.mubr.bf16.mxu0 0
        %1815 = vmatmul.mubr.bf16.gmra.mrb[0].mxu0 %v1705
        %v1816 = vpop.f32.mrb[0].mxu0
        %v1817 = vadd.f32 0.0, %v1816
        %v1818 = vpop.f32.mrb[0].mxu0
        %v1819 = vpop.f32.mrb[0].mxu0
        %v1820 = vadd.f32 0.0, %v1819
        %v1821 = vpop.f32.mrb[0].mxu0
        %1822 = vmatprep.mubr.bf16.mxu0 0
        %1823 = vmatmul.mubr.bf16.gmra.mrb[0].mxu0 %v1708
        %v1824 = vpop.f32.mrb[0].mxu0
        %v1825 = vadd.f32 0.0, %v1824
        %v1826 = vpop.f32.mrb[0].mxu0
        %v1827 = vpop.f32.mrb[0].mxu0
        %v1828 = vadd.f32 0.0, %v1827
        %v1829 = vpop.f32.mrb[0].mxu0
        %1830 = vmatprep.mubr.bf16.mxu0 0
        %1831 = vmatmul.mubr.bf16.gmra.mrb[0].mxu0 %v1711
        %v1832 = vpop.f32.mrb[0].mxu0
        %v1833 = vadd.f32 0.0, %v1832
        %v1834 = vpop.f32.mrb[0].mxu0
        %v1835 = vpop.f32.mrb[0].mxu0
        %v1836 = vadd.f32 0.0, %v1835
        %v1837 = vpop.f32.mrb[0].mxu0
        %1838 = vmatprep.mubr.bf16.mxu0 0
        %1839 = vmatmul.mubr.bf16.gmra.mrb[0].mxu0 %v1714
        %v1840 = vpop.f32.mrb[0].mxu0
        %v1841 = vadd.f32 0.0, %v1840
        %v1842 = vpop.f32.mrb[0].mxu0
        %v1843 = vpop.f32.mrb[0].mxu0
        %v1844 = vadd.f32 0.0, %v1843
        %v1845 = vpop.f32.mrb[0].mxu0
        %1846 = vmatprep.mubr.bf16.mxu0 0
        %1847 = vmatmul.mubr.bf16.gmra.mrb[0].mxu0 %v1717
        %v1848 = vpop.f32.mrb[0].mxu0
        %v1849 = vadd.f32 0.0, %v1848
        %v1850 = vpop.f32.mrb[0].mxu0
        %v1851 = vpop.f32.mrb[0].mxu0
        %v1852 = vadd.f32 0.0, %v1851
        %v1853 = vpop.f32.mrb[0].mxu0
        %1854 = vmatprep.mubr.bf16.mxu0 0
        %1855 = vmatmul.mubr.bf16.gmra.mrb[0].mxu0 %v1720
        %v1856 = vpop.f32.mrb[0].mxu0
        %v1857 = vadd.f32 0.0, %v1856
        %v1858 = vpop.f32.mrb[0].mxu0
        %v1859 = vpop.f32.mrb[0].mxu0
        %v1860 = vadd.f32 0.0, %v1859
        %v1861 = vpop.f32.mrb[0].mxu0
        %1862 = vmatprep.mubr.bf16.mxu0 0
        %1863 = vmatmul.mubr.bf16.gmra.mrb[0].mxu0 %v1723
        %v1864 = vpop.f32.mrb[0].mxu0
        %v1865 = vadd.f32 0.0, %v1864
        %v1866 = vpop.f32.mrb[0].mxu0
        %v1867 = vpop.f32.mrb[0].mxu0
        %v1868 = vadd.f32 0.0, %v1867
        %v1869 = vpop.f32.mrb[0].mxu0
        %1870 = vmatprep.mubr.bf16.mxu0 0
        %1871 = vmatmul.mubr.bf16.gmra.mrb[0].mxu0 %v1726
        %v1872 = vpop.f32.mrb[0].mxu0
        %v1873 = vadd.f32 0.0, %v1872
        %v1874 = vpop.f32.mrb[0].mxu0
        %v1875 = vpop.f32.mrb[0].mxu0
        %v1876 = vadd.f32 0.0, %v1875
        %v1877 = vpop.f32.mrb[0].mxu0
        %1878 = vmatprep.mubr.bf16.mxu0 0
        %1879 = vmatmul.mubr.bf16.gmra.mrb[0].mxu0 %v1729
        %v1880 = vpop.f32.mrb[0].mxu0
        %v1881 = vadd.f32 0.0, %v1880
        %v1882 = vpop.f32.mrb[0].mxu0
        %v1883 = vpop.f32.mrb[0].mxu0
        %v1884 = vadd.f32 0.0, %v1883
        %v1885 = vpop.f32.mrb[0].mxu0
        %1886 = vmatprep.mubr.bf16.mxu0 0
        %1887 = vmatmul.mubr.bf16.gmra.mrb[0].mxu0 %v1732
        %v1888 = vpop.f32.mrb[0].mxu0
        %v1889 = vadd.f32 0.0, %v1888
        %v1890 = vpop.f32.mrb[0].mxu0
        %v1891 = vpop.f32.mrb[0].mxu0
        %v1892 = vadd.f32 0.0, %v1891
        %v1893 = vpop.f32.mrb[0].mxu0
        %1894 = vdwg.mxu0
        %v1927 = vunpack.c.l.b16 %v1191
        %v1928 = vunpack.c.l.b16 %v1192
        %v1929 = vunpack.c.l.b16 %v1193
        %v1930 = vunpack.c.l.b16 %v1194
        %v1931 = vunpack.c.l.b16 %v1195
        %v1932 = vunpack.c.l.b16 %v1196
        %v1933 = vunpack.c.l.b16 %v1197
        %v1934 = vunpack.c.l.b16 %v1198
        %v1935 = vunpack.c.l.b16 %v1199
        %v1936 = vunpack.c.l.b16 %v1200
        %v1937 = vunpack.c.l.b16 %v1201
        %v1938 = vunpack.c.l.b16 %v1202
        %v1939 = vunpack.c.l.b16 %v1203
        %v1940 = vunpack.c.l.b16 %v1204
        %v1941 = vunpack.c.l.b16 %v1205
        %v1942 = vunpack.c.l.b16 %v1206
        %v1943 = vunpack.c.l.b16 %v1207
        %v1944 = vunpack.c.l.b16 %v1208
        %v1945 = vunpack.c.l.b16 %v1209
        %v1946 = vunpack.c.l.b16 %v1210
        %v1947 = vunpack.c.l.b16 %v1211
        %v1948 = vunpack.c.l.b16 %v1212
        %v1949 = vunpack.c.l.b16 %v1213
        %v1950 = vunpack.c.l.b16 %v1214
        %v1951 = vunpack.c.l.b16 %v1215
        %v1952 = vunpack.c.l.b16 %v1216
        %v1953 = vunpack.c.l.b16 %v1217
        %v1954 = vunpack.c.l.b16 %v1218
        %v1955 = vunpack.c.l.b16 %v1219
        %v1956 = vunpack.c.l.b16 %v1220
        %v1957 = vunpack.c.l.b16 %v1221
        %v1958 = vunpack.c.l.b16 %v1222
        %v1959 = vpack.c.b16 %v1928, %v1927
        %v1960 = vpack.c.b16 %v1930, %v1929
        %v1961 = vpack.c.b16 %v1932, %v1931
        %v1962 = vpack.c.b16 %v1934, %v1933
        %v1963 = vpack.c.b16 %v1936, %v1935
        %v1964 = vpack.c.b16 %v1938, %v1937
        %v1965 = vpack.c.b16 %v1940, %v1939
        %v1966 = vpack.c.b16 %v1942, %v1941
        %v1967 = vpack.c.b16 %v1944, %v1943
        %v1968 = vpack.c.b16 %v1946, %v1945
        %v1969 = vpack.c.b16 %v1948, %v1947
        %v1970 = vpack.c.b16 %v1950, %v1949
        %v1971 = vpack.c.b16 %v1952, %v1951
        %v1972 = vpack.c.b16 %v1954, %v1953
        %v1973 = vpack.c.b16 %v1956, %v1955
        %v1974 = vpack.c.b16 %v1958, %v1957
        %v1977 = vunpack.c.l.b16 %v1223
        %v1978 = vunpack.c.l.b16 %v1224
        %v1979 = vpack.c.b16 %v1978, %v1977
        %v1982 = vsel %vm1685, %v1959, 0
        %v1985 = vsel %vm1685, %v1960, 0
        %v1988 = vsel %vm1685, %v1961, 0
        %v1991 = vsel %vm1685, %v1962, 0
        %v1994 = vsel %vm1685, %v1963, 0
        %v1997 = vsel %vm1685, %v1964, 0
        %v2000 = vsel %vm1685, %v1965, 0
        %v2003 = vsel %vm1685, %v1966, 0
        %v2006 = vsel %vm1685, %v1967, 0
        %v2009 = vsel %vm1685, %v1968, 0
        %v2012 = vsel %vm1685, %v1969, 0
        %v2015 = vsel %vm1685, %v1970, 0
        %v2018 = vsel %vm1685, %v1971, 0
        %v2021 = vsel %vm1685, %v1972, 0
        %v2024 = vsel %vm1685, %v1973, 0
        %v2027 = vsel %vm1685, %v1974, 0
        %2029 = vmatprep.subr.bf16.mxu0 0
        %2030 = vmatpush1.bf16.msra.mxu0 %v1979
        %2031 = vmatprep.subr.bf16.mxu0 0
        %2032 = vmatpush1.bf16.msra.mxu0 0
        %2033 = vmatprep.subr.bf16.mxu0 0
        %2034 = vmatpush1.bf16.msra.mxu0 0
        %2035 = vmatprep.subr.bf16.mxu0 0
        %2036 = vmatpush1.bf16.msra.mxu0 0
        %2037 = vmatprep.subr.bf16.mxu0 0
        %2038 = vmatpush1.bf16.msra.mxu0 0
        %2039 = vmatprep.subr.bf16.mxu0 0
        %2040 = vmatpush1.bf16.msra.mxu0 0
        %2041 = vmatprep.subr.bf16.mxu0 0
        %2042 = vmatpush1.bf16.msra.mxu0 0
        %2043 = vmatprep.subr.bf16.mxu0 0
        %2044 = vmatpush1.bf16.msra.mxu0 0
        %2045 = vmatprep.subr.bf16.mxu0 0
        %2046 = vmatpush1.bf16.msra.mxu0 0
        %2047 = vmatprep.subr.bf16.mxu0 0
        %2048 = vmatpush1.bf16.msra.mxu0 0
        %2049 = vmatprep.subr.bf16.mxu0 0
        %2050 = vmatpush1.bf16.msra.mxu0 0
        %2051 = vmatprep.subr.bf16.mxu0 0
        %2052 = vmatpush1.bf16.msra.mxu0 0
        %2053 = vmatprep.subr.bf16.mxu0 0
        %2054 = vmatpush1.bf16.msra.mxu0 0
        %2055 = vmatprep.subr.bf16.mxu0 0
        %2056 = vmatpush1.bf16.msra.mxu0 0
        %2057 = vmatprep.subr.bf16.mxu0 0
        %2058 = vmatpush1.bf16.msra.mxu0 0
        %2059 = vmatprep.subr.bf16.mxu0 0
        %2060 = vmatpush1.bf16.msra.mxu0 0
        %2061 = vmatprep.mubr.bf16.mxu0 0
        %2062 = vmatmul.mubr.bf16.gmra.mrb[0].mxu0 %v1982
        %v2063 = vpop.f32.mrb[0].mxu0
        %v2064 = vadd.f32 %v1769, %v2063
        %v2065 = vpop.f32.mrb[0].mxu0
        %v2066 = vpop.f32.mrb[0].mxu0
        %v2067 = vadd.f32 %v1772, %v2066
        %v2068 = vpop.f32.mrb[0].mxu0
        %2069 = vmatprep.mubr.bf16.mxu0 0
        %2070 = vmatmul.mubr.bf16.gmra.mrb[0].mxu0 %v1985
        %v2071 = vpop.f32.mrb[0].mxu0
        %v2072 = vadd.f32 %v1777, %v2071
        %v2073 = vpop.f32.mrb[0].mxu0
        %v2074 = vpop.f32.mrb[0].mxu0
        %v2075 = vadd.f32 %v1780, %v2074
        %v2076 = vpop.f32.mrb[0].mxu0
        %2077 = vmatprep.mubr.bf16.mxu0 0
        %2078 = vmatmul.mubr.bf16.gmra.mrb[0].mxu0 %v1988
        %v2079 = vpop.f32.mrb[0].mxu0
        %v2080 = vadd.f32 %v1785, %v2079
        %v2081 = vpop.f32.mrb[0].mxu0
        %v2082 = vpop.f32.mrb[0].mxu0
        %v2083 = vadd.f32 %v1788, %v2082
        %v2084 = vpop.f32.mrb[0].mxu0
        %2085 = vmatprep.mubr.bf16.mxu0 0
        %2086 = vmatmul.mubr.bf16.gmra.mrb[0].mxu0 %v1991
        %v2087 = vpop.f32.mrb[0].mxu0
        %v2088 = vadd.f32 %v1793, %v2087
        %v2089 = vpop.f32.mrb[0].mxu0
        %v2090 = vpop.f32.mrb[0].mxu0
        %v2091 = vadd.f32 %v1796, %v2090
        %v2092 = vpop.f32.mrb[0].mxu0
        %2093 = vmatprep.mubr.bf16.mxu0 0
        %2094 = vmatmul.mubr.bf16.gmra.mrb[0].mxu0 %v1994
        %v2095 = vpop.f32.mrb[0].mxu0
        %v2096 = vadd.f32 %v1801, %v2095
        %v2097 = vpop.f32.mrb[0].mxu0
        %v2098 = vpop.f32.mrb[0].mxu0
        %v2099 = vadd.f32 %v1804, %v2098
        %v2100 = vpop.f32.mrb[0].mxu0
        %2101 = vmatprep.mubr.bf16.mxu0 0
        %2102 = vmatmul.mubr.bf16.gmra.mrb[0].mxu0 %v1997
        %v2103 = vpop.f32.mrb[0].mxu0
        %v2104 = vadd.f32 %v1809, %v2103
        %v2105 = vpop.f32.mrb[0].mxu0
        %v2106 = vpop.f32.mrb[0].mxu0
        %v2107 = vadd.f32 %v1812, %v2106
        %v2108 = vpop.f32.mrb[0].mxu0
        %2109 = vmatprep.mubr.bf16.mxu0 0
        %2110 = vmatmul.mubr.bf16.gmra.mrb[0].mxu0 %v2000
        %v2111 = vpop.f32.mrb[0].mxu0
        %v2112 = vadd.f32 %v1817, %v2111
        %v2113 = vpop.f32.mrb[0].mxu0
        %v2114 = vpop.f32.mrb[0].mxu0
        %v2115 = vadd.f32 %v1820, %v2114
        %v2116 = vpop.f32.mrb[0].mxu0
        %2117 = vmatprep.mubr.bf16.mxu0 0
        %2118 = vmatmul.mubr.bf16.gmra.mrb[0].mxu0 %v2003
        %v2119 = vpop.f32.mrb[0].mxu0
        %v2120 = vadd.f32 %v1825, %v2119
        %v2121 = vpop.f32.mrb[0].mxu0
        %v2122 = vpop.f32.mrb[0].mxu0
        %v2123 = vadd.f32 %v1828, %v2122
        %v2124 = vpop.f32.mrb[0].mxu0
        %2125 = vmatprep.mubr.bf16.mxu0 0
        %2126 = vmatmul.mubr.bf16.gmra.mrb[0].mxu0 %v2006
        %v2127 = vpop.f32.mrb[0].mxu0
        %v2128 = vadd.f32 %v1833, %v2127
        %v2129 = vpop.f32.mrb[0].mxu0
        %v2130 = vpop.f32.mrb[0].mxu0
        %v2131 = vadd.f32 %v1836, %v2130
        %v2132 = vpop.f32.mrb[0].mxu0
        %2133 = vmatprep.mubr.bf16.mxu0 0
        %2134 = vmatmul.mubr.bf16.gmra.mrb[0].mxu0 %v2009
        %v2135 = vpop.f32.mrb[0].mxu0
        %v2136 = vadd.f32 %v1841, %v2135
        %v2137 = vpop.f32.mrb[0].mxu0
        %v2138 = vpop.f32.mrb[0].mxu0
        %v2139 = vadd.f32 %v1844, %v2138
        %v2140 = vpop.f32.mrb[0].mxu0
        %2141 = vmatprep.mubr.bf16.mxu0 0
        %2142 = vmatmul.mubr.bf16.gmra.mrb[0].mxu0 %v2012
        %v2143 = vpop.f32.mrb[0].mxu0
        %v2144 = vadd.f32 %v1849, %v2143
        %v2145 = vpop.f32.mrb[0].mxu0
        %v2146 = vpop.f32.mrb[0].mxu0
        %v2147 = vadd.f32 %v1852, %v2146
        %v2148 = vpop.f32.mrb[0].mxu0
        %2149 = vmatprep.mubr.bf16.mxu0 0
        %2150 = vmatmul.mubr.bf16.gmra.mrb[0].mxu0 %v2015
        %v2151 = vpop.f32.mrb[0].mxu0
        %v2152 = vadd.f32 %v1857, %v2151
        %v2153 = vpop.f32.mrb[0].mxu0
        %v2154 = vpop.f32.mrb[0].mxu0
        %v2155 = vadd.f32 %v1860, %v2154
        %v2156 = vpop.f32.mrb[0].mxu0
        %2157 = vmatprep.mubr.bf16.mxu0 0
        %2158 = vmatmul.mubr.bf16.gmra.mrb[0].mxu0 %v2018
        %v2159 = vpop.f32.mrb[0].mxu0
        %v2160 = vadd.f32 %v1865, %v2159
        %v2161 = vpop.f32.mrb[0].mxu0
        %v2162 = vpop.f32.mrb[0].mxu0
        %v2163 = vadd.f32 %v1868, %v2162
        %v2164 = vpop.f32.mrb[0].mxu0
        %2165 = vmatprep.mubr.bf16.mxu0 0
        %2166 = vmatmul.mubr.bf16.gmra.mrb[0].mxu0 %v2021
        %v2167 = vpop.f32.mrb[0].mxu0
        %v2168 = vadd.f32 %v1873, %v2167
        %v2169 = vpop.f32.mrb[0].mxu0
        %v2170 = vpop.f32.mrb[0].mxu0
        %v2171 = vadd.f32 %v1876, %v2170
        %v2172 = vpop.f32.mrb[0].mxu0
        %2173 = vmatprep.mubr.bf16.mxu0 0
        %2174 = vmatmul.mubr.bf16.gmra.mrb[0].mxu0 %v2024
        %v2175 = vpop.f32.mrb[0].mxu0
        %v2176 = vadd.f32 %v1881, %v2175
        %v2177 = vpop.f32.mrb[0].mxu0
        %v2178 = vpop.f32.mrb[0].mxu0
        %v2179 = vadd.f32 %v1884, %v2178
        %v2180 = vpop.f32.mrb[0].mxu0
        %2181 = vmatprep.mubr.bf16.mxu0 0
        %2182 = vmatmul.mubr.bf16.gmra.mrb[0].mxu0 %v2027
        %v2183 = vpop.f32.mrb[0].mxu0
        %v2184 = vadd.f32 %v1889, %v2183
        %v2185 = vpop.f32.mrb[0].mxu0
        %v2186 = vpop.f32.mrb[0].mxu0
        %v2187 = vadd.f32 %v1892, %v2186
        %v2188 = vpop.f32.mrb[0].mxu0
        %2189 = vdwg.mxu0
        %v2190 = vld [vmem:[#allocation2] sm:$0xe]
        %v2191 = vld [vmem:[#allocation2 + $0xc] sm:$0xe]
        %v2192 = vld [vmem:[#allocation2 + $0x18] sm:$0xe]
        %v2193 = vld [vmem:[#allocation2 + $0x24] sm:$0xe]
        %v2194 = vld [vmem:[#allocation2 + $0x30] sm:$0xe]
        %v2195 = vld [vmem:[#allocation2 + $0x3c] sm:$0xe]
        %v2196 = vld [vmem:[#allocation2 + $0x48] sm:$0xe]
        %v2197 = vld [vmem:[#allocation2 + $0x54] sm:$0xe]
        %v2198 = vld [vmem:[#allocation2 + $0x60] sm:$0xe]
        %v2199 = vld [vmem:[#allocation2 + $0x6c] sm:$0xe]
        %v2200 = vld [vmem:[#allocation2 + $0x78] sm:$0xe]
        %v2201 = vld [vmem:[#allocation2 + $0x84] sm:$0xe]
        %v2202 = vld [vmem:[#allocation2 + $0x90] sm:$0xe]
        %v2203 = vld [vmem:[#allocation2 + $0x9c] sm:$0xe]
        %v2204 = vld [vmem:[#allocation2 + $0xa8] sm:$0xe]
        %v2205 = vld [vmem:[#allocation2 + $0xb4] sm:$0xe]
        %vm2238 = vcmask 1042432
        %vm2239 = vcmask 1046532
        %vm2240 = vmor %vm2238, %vm2239
        %v2241 = vrot.slane %v2190, 5
        %v2242 = vrot.slane %v2241, 4
        %v2243 = vrot.slane %v1192, 5
        %v2244 = vsel %vm2240, %v2242, %v2243
        %v2245 = vrot.slane %v2243, 4
        %v2246 = vrot.slane %v1225, 5
        %v2247 = vsel %vm2240, %v2245, %v2246
        %v2248 = vrot.slane %v2191, 5
        %v2249 = vrot.slane %v2248, 4
        %v2250 = vrot.slane %v1194, 5
        %v2251 = vsel %vm2240, %v2249, %v2250
        %v2252 = vrot.slane %v2250, 4
        %v2253 = vrot.slane %v1226, 5
        %v2254 = vsel %vm2240, %v2252, %v2253
        %v2255 = vrot.slane %v2192, 5
        %v2256 = vrot.slane %v2255, 4
        %v2257 = vrot.slane %v1196, 5
        %v2258 = vsel %vm2240, %v2256, %v2257
        %v2259 = vrot.slane %v2257, 4
        %v2260 = vrot.slane %v1227, 5
        %v2261 = vsel %vm2240, %v2259, %v2260
        %v2262 = vrot.slane %v2193, 5
        %v2263 = vrot.slane %v2262, 4
        %v2264 = vrot.slane %v1198, 5
        %v2265 = vsel %vm2240, %v2263, %v2264
        %v2266 = vrot.slane %v2264, 4
        %v2267 = vrot.slane %v1228, 5
        %v2268 = vsel %vm2240, %v2266, %v2267
        %v2269 = vrot.slane %v2194, 5
        %v2270 = vrot.slane %v2269, 4
        %v2271 = vrot.slane %v1200, 5
        %v2272 = vsel %vm2240, %v2270, %v2271
        %v2273 = vrot.slane %v2271, 4
        %v2274 = vrot.slane %v1229, 5
        %v2275 = vsel %vm2240, %v2273, %v2274
        %v2276 = vrot.slane %v2195, 5
        %v2277 = vrot.slane %v2276, 4
        %v2278 = vrot.slane %v1202, 5
        %v2279 = vsel %vm2240, %v2277, %v2278
        %v2280 = vrot.slane %v2278, 4
        %v2281 = vrot.slane %v1230, 5
        %v2282 = vsel %vm2240, %v2280, %v2281
        %v2283 = vrot.slane %v2196, 5
        %v2284 = vrot.slane %v2283, 4
        %v2285 = vrot.slane %v1204, 5
        %v2286 = vsel %vm2240, %v2284, %v2285
        %v2287 = vrot.slane %v2285, 4
        %v2288 = vrot.slane %v1231, 5
        %v2289 = vsel %vm2240, %v2287, %v2288
        %v2290 = vrot.slane %v2197, 5
        %v2291 = vrot.slane %v2290, 4
        %v2292 = vrot.slane %v1206, 5
        %v2293 = vsel %vm2240, %v2291, %v2292
        %v2294 = vrot.slane %v2292, 4
        %v2295 = vrot.slane %v1232, 5
        %v2296 = vsel %vm2240, %v2294, %v2295
        %v2297 = vrot.slane %v2198, 5
        %v2298 = vrot.slane %v2297, 4
        %v2299 = vrot.slane %v1208, 5
        %v2300 = vsel %vm2240, %v2298, %v2299
        %v2301 = vrot.slane %v2299, 4
        %v2302 = vrot.slane %v1233, 5
        %v2303 = vsel %vm2240, %v2301, %v2302
        %v2304 = vrot.slane %v2199, 5
        %v2305 = vrot.slane %v2304, 4
        %v2306 = vrot.slane %v1210, 5
        %v2307 = vsel %vm2240, %v2305, %v2306
        %v2308 = vrot.slane %v2306, 4
        %v2309 = vrot.slane %v1234, 5
        %v2310 = vsel %vm2240, %v2308, %v2309
        %v2311 = vrot.slane %v2200, 5
        %v2312 = vrot.slane %v2311, 4
        %v2313 = vrot.slane %v1212, 5
        %v2314 = vsel %vm2240, %v2312, %v2313
        %v2315 = vrot.slane %v2313, 4
        %v2316 = vrot.slane %v1235, 5
        %v2317 = vsel %vm2240, %v2315, %v2316
        %v2318 = vrot.slane %v2201, 5
        %v2319 = vrot.slane %v2318, 4
        %v2320 = vrot.slane %v1214, 5
        %v2321 = vsel %vm2240, %v2319, %v2320
        %v2322 = vrot.slane %v2320, 4
        %v2323 = vrot.slane %v1236, 5
        %v2324 = vsel %vm2240, %v2322, %v2323
        %v2325 = vrot.slane %v2202, 5
        %v2326 = vrot.slane %v2325, 4
        %v2327 = vrot.slane %v1216, 5
        %v2328 = vsel %vm2240, %v2326, %v2327
        %v2329 = vrot.slane %v2327, 4
        %v2330 = vrot.slane %v1237, 5
        %v2331 = vsel %vm2240, %v2329, %v2330
        %v2332 = vrot.slane %v2203, 5
        %v2333 = vrot.slane %v2332, 4
        %v2334 = vrot.slane %v1218, 5
        %v2335 = vsel %vm2240, %v2333, %v2334
        %v2336 = vrot.slane %v2334, 4
        %v2337 = vrot.slane %v1238, 5
        %v2338 = vsel %vm2240, %v2336, %v2337
        %v2339 = vrot.slane %v2204, 5
        %v2340 = vrot.slane %v2339, 4
        %v2341 = vrot.slane %v1220, 5
        %v2342 = vsel %vm2240, %v2340, %v2341
        %v2343 = vrot.slane %v2341, 4
        %v2344 = vrot.slane %v1239, 5
        %v2345 = vsel %vm2240, %v2343, %v2344
        %v2346 = vrot.slane %v2205, 5
        %v2347 = vrot.slane %v2346, 4
        %v2348 = vrot.slane %v1222, 5
        %v2349 = vsel %vm2240, %v2347, %v2348
        %v2350 = vrot.slane %v2348, 4
        %v2351 = vrot.slane %v1240, 5
        %v2352 = vsel %vm2240, %v2350, %v2351
        %s2353 = scalar_lea.vmem %s4, 16
        %v2354 = vld [vmem:[%s2353] sm:$0xf]
        %v2355 = vld [vmem:[%s2353 + $0x4] sm:$0xf]
        %v2356 = vunpack.c.l.b16 %v2244
        %v2357 = vunpack.c.l.b16 %v2247
        %v2358 = vunpack.c.l.b16 %v2251
        %v2359 = vunpack.c.l.b16 %v2254
        %v2360 = vunpack.c.l.b16 %v2258
        %v2361 = vunpack.c.l.b16 %v2261
        %v2362 = vunpack.c.l.b16 %v2265
        %v2363 = vunpack.c.l.b16 %v2268
        %v2364 = vunpack.c.l.b16 %v2272
        %v2365 = vunpack.c.l.b16 %v2275
        %v2366 = vunpack.c.l.b16 %v2279
        %v2367 = vunpack.c.l.b16 %v2282
        %v2368 = vunpack.c.l.b16 %v2286
        %v2369 = vunpack.c.l.b16 %v2289
        %v2370 = vunpack.c.l.b16 %v2293
        %v2371 = vunpack.c.l.b16 %v2296
        %v2372 = vunpack.c.l.b16 %v2300
        %v2373 = vunpack.c.l.b16 %v2303
        %v2374 = vunpack.c.l.b16 %v2307
        %v2375 = vunpack.c.l.b16 %v2310
        %v2376 = vunpack.c.l.b16 %v2314
        %v2377 = vunpack.c.l.b16 %v2317
        %v2378 = vunpack.c.l.b16 %v2321
        %v2379 = vunpack.c.l.b16 %v2324
        %v2380 = vunpack.c.l.b16 %v2328
        %v2381 = vunpack.c.l.b16 %v2331
        %v2382 = vunpack.c.l.b16 %v2335
        %v2383 = vunpack.c.l.b16 %v2338
        %v2384 = vunpack.c.l.b16 %v2342
        %v2385 = vunpack.c.l.b16 %v2345
        %v2386 = vunpack.c.l.b16 %v2349
        %v2387 = vunpack.c.l.b16 %v2352
        %v2388 = vpack.c.b16 %v2357, %v2356
        %v2389 = vpack.c.b16 %v2359, %v2358
        %v2390 = vpack.c.b16 %v2361, %v2360
        %v2391 = vpack.c.b16 %v2363, %v2362
        %v2392 = vpack.c.b16 %v2365, %v2364
        %v2393 = vpack.c.b16 %v2367, %v2366
        %v2394 = vpack.c.b16 %v2369, %v2368
        %v2395 = vpack.c.b16 %v2371, %v2370
        %v2396 = vpack.c.b16 %v2373, %v2372
        %v2397 = vpack.c.b16 %v2375, %v2374
        %v2398 = vpack.c.b16 %v2377, %v2376
        %v2399 = vpack.c.b16 %v2379, %v2378
        %v2400 = vpack.c.b16 %v2381, %v2380
        %v2401 = vpack.c.b16 %v2383, %v2382
        %v2402 = vpack.c.b16 %v2385, %v2384
        %v2403 = vpack.c.b16 %v2387, %v2386
        %v2406 = vunpack.c.l.b16 %v2354
        %v2407 = vunpack.c.l.b16 %v2355
        %v2408 = vpack.c.b16 %v2407, %v2406
        %v2411 = vsel %vm1685, %v2388, 0
        %v2414 = vsel %vm1685, %v2389, 0
        %v2417 = vsel %vm1685, %v2390, 0
        %v2420 = vsel %vm1685, %v2391, 0
        %v2423 = vsel %vm1685, %v2392, 0
        %v2426 = vsel %vm1685, %v2393, 0
        %v2429 = vsel %vm1685, %v2394, 0
        %v2432 = vsel %vm1685, %v2395, 0
        %v2435 = vsel %vm1685, %v2396, 0
        %v2438 = vsel %vm1685, %v2397, 0
        %v2441 = vsel %vm1685, %v2398, 0
        %v2444 = vsel %vm1685, %v2399, 0
        %v2447 = vsel %vm1685, %v2400, 0
        %v2450 = vsel %vm1685, %v2401, 0
        %v2453 = vsel %vm1685, %v2402, 0
        %v2456 = vsel %vm1685, %v2403, 0
        %2458 = vmatprep.subr.bf16.mxu0 0
        %2459 = vmatpush1.bf16.msra.mxu0 %v2408
        %2460 = vmatprep.subr.bf16.mxu0 0
        %2461 = vmatpush1.bf16.msra.mxu0 0
        %2462 = vmatprep.subr.bf16.mxu0 0
        %2463 = vmatpush1.bf16.msra.mxu0 0
        %2464 = vmatprep.subr.bf16.mxu0 0
        %2465 = vmatpush1.bf16.msra.mxu0 0
        %2466 = vmatprep.subr.bf16.mxu0 0
        %2467 = vmatpush1.bf16.msra.mxu0 0
        %2468 = vmatprep.subr.bf16.mxu0 0
        %2469 = vmatpush1.bf16.msra.mxu0 0
        %2470 = vmatprep.subr.bf16.mxu0 0
        %2471 = vmatpush1.bf16.msra.mxu0 0
        %2472 = vmatprep.subr.bf16.mxu0 0
        %2473 = vmatpush1.bf16.msra.mxu0 0
        %2474 = vmatprep.subr.bf16.mxu0 0
        %2475 = vmatpush1.bf16.msra.mxu0 0
        %2476 = vmatprep.subr.bf16.mxu0 0
        %2477 = vmatpush1.bf16.msra.mxu0 0
        %2478 = vmatprep.subr.bf16.mxu0 0
        %2479 = vmatpush1.bf16.msra.mxu0 0
        %2480 = vmatprep.subr.bf16.mxu0 0
        %2481 = vmatpush1.bf16.msra.mxu0 0
        %2482 = vmatprep.subr.bf16.mxu0 0
        %2483 = vmatpush1.bf16.msra.mxu0 0
        %2484 = vmatprep.subr.bf16.mxu0 0
        %2485 = vmatpush1.bf16.msra.mxu0 0
        %2486 = vmatprep.subr.bf16.mxu0 0
        %2487 = vmatpush1.bf16.msra.mxu0 0
        %2488 = vmatprep.subr.bf16.mxu0 0
        %2489 = vmatpush1.bf16.msra.mxu0 0
        %2490 = vmatprep.mubr.bf16.mxu0 0
        %2491 = vmatmul.mubr.bf16.gmra.mrb[0].mxu0 %v2411
        %v2492 = vpop.f32.mrb[0].mxu0
        %v2493 = vadd.f32 0.0, %v2492
        %v2494 = vpop.f32.mrb[0].mxu0
        %v2495 = vpop.f32.mrb[0].mxu0
        %v2496 = vadd.f32 0.0, %v2495
        %v2497 = vpop.f32.mrb[0].mxu0
        %2498 = vmatprep.mubr.bf16.mxu0 0
        %2499 = vmatmul.mubr.bf16.gmra.mrb[0].mxu0 %v2414
        %v2500 = vpop.f32.mrb[0].mxu0
        %v2501 = vadd.f32 0.0, %v2500
        %v2502 = vpop.f32.mrb[0].mxu0
        %v2503 = vpop.f32.mrb[0].mxu0
        %v2504 = vadd.f32 0.0, %v2503
        %v2505 = vpop.f32.mrb[0].mxu0
        %2506 = vmatprep.mubr.bf16.mxu0 0
        %2507 = vmatmul.mubr.bf16.gmra.mrb[0].mxu0 %v2417
        %v2508 = vpop.f32.mrb[0].mxu0
        %v2509 = vadd.f32 0.0, %v2508
        %v2510 = vpop.f32.mrb[0].mxu0
        %v2511 = vpop.f32.mrb[0].mxu0
        %v2512 = vadd.f32 0.0, %v2511
        %v2513 = vpop.f32.mrb[0].mxu0
        %2514 = vmatprep.mubr.bf16.mxu0 0
        %2515 = vmatmul.mubr.bf16.gmra.mrb[0].mxu0 %v2420
        %v2516 = vpop.f32.mrb[0].mxu0
        %v2517 = vadd.f32 0.0, %v2516
        %v2518 = vpop.f32.mrb[0].mxu0
        %v2519 = vpop.f32.mrb[0].mxu0
        %v2520 = vadd.f32 0.0, %v2519
        %v2521 = vpop.f32.mrb[0].mxu0
        %2522 = vmatprep.mubr.bf16.mxu0 0
        %2523 = vmatmul.mubr.bf16.gmra.mrb[0].mxu0 %v2423
        %v2524 = vpop.f32.mrb[0].mxu0
        %v2525 = vadd.f32 0.0, %v2524
        %v2526 = vpop.f32.mrb[0].mxu0
        %v2527 = vpop.f32.mrb[0].mxu0
        %v2528 = vadd.f32 0.0, %v2527
        %v2529 = vpop.f32.mrb[0].mxu0
        %2530 = vmatprep.mubr.bf16.mxu0 0
        %2531 = vmatmul.mubr.bf16.gmra.mrb[0].mxu0 %v2426
        %v2532 = vpop.f32.mrb[0].mxu0
        %v2533 = vadd.f32 0.0, %v2532
        %v2534 = vpop.f32.mrb[0].mxu0
        %v2535 = vpop.f32.mrb[0].mxu0
        %v2536 = vadd.f32 0.0, %v2535
        %v2537 = vpop.f32.mrb[0].mxu0
        %2538 = vmatprep.mubr.bf16.mxu0 0
        %2539 = vmatmul.mubr.bf16.gmra.mrb[0].mxu0 %v2429
        %v2540 = vpop.f32.mrb[0].mxu0
        %v2541 = vadd.f32 0.0, %v2540
        %v2542 = vpop.f32.mrb[0].mxu0
        %v2543 = vpop.f32.mrb[0].mxu0
        %v2544 = vadd.f32 0.0, %v2543
        %v2545 = vpop.f32.mrb[0].mxu0
        %2546 = vmatprep.mubr.bf16.mxu0 0
        %2547 = vmatmul.mubr.bf16.gmra.mrb[0].mxu0 %v2432
        %v2548 = vpop.f32.mrb[0].mxu0
        %v2549 = vadd.f32 0.0, %v2548
        %v2550 = vpop.f32.mrb[0].mxu0
        %v2551 = vpop.f32.mrb[0].mxu0
        %v2552 = vadd.f32 0.0, %v2551
        %v2553 = vpop.f32.mrb[0].mxu0
        %2554 = vmatprep.mubr.bf16.mxu0 0
        %2555 = vmatmul.mubr.bf16.gmra.mrb[0].mxu0 %v2435
        %v2556 = vpop.f32.mrb[0].mxu0
        %v2557 = vadd.f32 0.0, %v2556
        %v2558 = vpop.f32.mrb[0].mxu0
        %v2559 = vpop.f32.mrb[0].mxu0
        %v2560 = vadd.f32 0.0, %v2559
        %v2561 = vpop.f32.mrb[0].mxu0
        %2562 = vmatprep.mubr.bf16.mxu0 0
        %2563 = vmatmul.mubr.bf16.gmra.mrb[0].mxu0 %v2438
        %v2564 = vpop.f32.mrb[0].mxu0
        %v2565 = vadd.f32 0.0, %v2564
        %v2566 = vpop.f32.mrb[0].mxu0
        %v2567 = vpop.f32.mrb[0].mxu0
        %v2568 = vadd.f32 0.0, %v2567
        %v2569 = vpop.f32.mrb[0].mxu0
        %2570 = vmatprep.mubr.bf16.mxu0 0
        %2571 = vmatmul.mubr.bf16.gmra.mrb[0].mxu0 %v2441
        %v2572 = vpop.f32.mrb[0].mxu0
        %v2573 = vadd.f32 0.0, %v2572
        %v2574 = vpop.f32.mrb[0].mxu0
        %v2575 = vpop.f32.mrb[0].mxu0
        %v2576 = vadd.f32 0.0, %v2575
        %v2577 = vpop.f32.mrb[0].mxu0
        %2578 = vmatprep.mubr.bf16.mxu0 0
        %2579 = vmatmul.mubr.bf16.gmra.mrb[0].mxu0 %v2444
        %v2580 = vpop.f32.mrb[0].mxu0
        %v2581 = vadd.f32 0.0, %v2580
        %v2582 = vpop.f32.mrb[0].mxu0
        %v2583 = vpop.f32.mrb[0].mxu0
        %v2584 = vadd.f32 0.0, %v2583
        %v2585 = vpop.f32.mrb[0].mxu0
        %2586 = vmatprep.mubr.bf16.mxu0 0
        %2587 = vmatmul.mubr.bf16.gmra.mrb[0].mxu0 %v2447
        %v2588 = vpop.f32.mrb[0].mxu0
        %v2589 = vadd.f32 0.0, %v2588
        %v2590 = vpop.f32.mrb[0].mxu0
        %v2591 = vpop.f32.mrb[0].mxu0
        %v2592 = vadd.f32 0.0, %v2591
        %v2593 = vpop.f32.mrb[0].mxu0
        %2594 = vmatprep.mubr.bf16.mxu0 0
        %2595 = vmatmul.mubr.bf16.gmra.mrb[0].mxu0 %v2450
        %v2596 = vpop.f32.mrb[0].mxu0
        %v2597 = vadd.f32 0.0, %v2596
        %v2598 = vpop.f32.mrb[0].mxu0
        %v2599 = vpop.f32.mrb[0].mxu0
        %v2600 = vadd.f32 0.0, %v2599
        %v2601 = vpop.f32.mrb[0].mxu0
        %2602 = vmatprep.mubr.bf16.mxu0 0
        %2603 = vmatmul.mubr.bf16.gmra.mrb[0].mxu0 %v2453
        %v2604 = vpop.f32.mrb[0].mxu0
        %v2605 = vadd.f32 0.0, %v2604
        %v2606 = vpop.f32.mrb[0].mxu0
        %v2607 = vpop.f32.mrb[0].mxu0
        %v2608 = vadd.f32 0.0, %v2607
        %v2609 = vpop.f32.mrb[0].mxu0
        %2610 = vmatprep.mubr.bf16.mxu0 0
        %2611 = vmatmul.mubr.bf16.gmra.mrb[0].mxu0 %v2456
        %v2612 = vpop.f32.mrb[0].mxu0
        %v2613 = vadd.f32 0.0, %v2612
        %v2614 = vpop.f32.mrb[0].mxu0
        %v2615 = vpop.f32.mrb[0].mxu0
        %v2616 = vadd.f32 0.0, %v2615
        %v2617 = vpop.f32.mrb[0].mxu0
        %2618 = vdwg.mxu0
        %v2619 = vadd.f32 %v2064, %v2493
        %v2620 = vadd.f32 %v2067, %v2496
        %v2621 = vadd.f32 %v2072, %v2501
        %v2622 = vadd.f32 %v2075, %v2504
        %v2623 = vadd.f32 %v2080, %v2509
        %v2624 = vadd.f32 %v2083, %v2512
        %v2625 = vadd.f32 %v2088, %v2517
        %v2626 = vadd.f32 %v2091, %v2520
        %v2627 = vadd.f32 %v2096, %v2525
        %v2628 = vadd.f32 %v2099, %v2528
        %v2629 = vadd.f32 %v2104, %v2533
        %v2630 = vadd.f32 %v2107, %v2536
        %v2631 = vadd.f32 %v2112, %v2541
        %v2632 = vadd.f32 %v2115, %v2544
        %v2633 = vadd.f32 %v2120, %v2549
        %v2634 = vadd.f32 %v2123, %v2552
        %v2635 = vadd.f32 %v2128, %v2557
        %v2636 = vadd.f32 %v2131, %v2560
        %v2637 = vadd.f32 %v2136, %v2565
        %v2638 = vadd.f32 %v2139, %v2568
        %v2639 = vadd.f32 %v2144, %v2573
        %v2640 = vadd.f32 %v2147, %v2576
        %v2641 = vadd.f32 %v2152, %v2581
        %v2642 = vadd.f32 %v2155, %v2584
        %v2643 = vadd.f32 %v2160, %v2589
        %v2644 = vadd.f32 %v2163, %v2592
        %v2645 = vadd.f32 %v2168, %v2597
        %v2646 = vadd.f32 %v2171, %v2600
        %v2647 = vadd.f32 %v2176, %v2605
        %v2648 = vadd.f32 %v2179, %v2608
        %v2649 = vadd.f32 %v2184, %v2613
        %v2650 = vadd.f32 %v2187, %v2616
        %v2651 = vld [vmem:[%s1076] sm:$0xf]
        %v2652 = vld [vmem:[%s1076 + $0x4] sm:$0xf]
        %v2653 = vld [vmem:[%s1076 + $0xc] sm:$0xf]
        %v2654 = vld [vmem:[%s1076 + $0x10] sm:$0xf]
        %v2655 = vld [vmem:[%s1076 + $0x18] sm:$0xf]
        %v2656 = vld [vmem:[%s1076 + $0x1c] sm:$0xf]
        %v2657 = vld [vmem:[%s1076 + $0x24] sm:$0xf]
        %v2658 = vld [vmem:[%s1076 + $0x28] sm:$0xf]
        %v2659 = vld [vmem:[%s1076 + $0x30] sm:$0xf]
        %v2660 = vld [vmem:[%s1076 + $0x34] sm:$0xf]
        %v2661 = vld [vmem:[%s1076 + $0x3c] sm:$0xf]
        %v2662 = vld [vmem:[%s1076 + $0x40] sm:$0xf]
        %v2663 = vld [vmem:[%s1076 + $0x48] sm:$0xf]
        %v2664 = vld [vmem:[%s1076 + $0x4c] sm:$0xf]
        %v2665 = vld [vmem:[%s1076 + $0x54] sm:$0xf]
        %v2666 = vld [vmem:[%s1076 + $0x58] sm:$0xf]
        %v2667 = vld [vmem:[%s1076 + $0x60] sm:$0xf]
        %v2668 = vld [vmem:[%s1076 + $0x64] sm:$0xf]
        %v2669 = vld [vmem:[%s1076 + $0x6c] sm:$0xf]
        %v2670 = vld [vmem:[%s1076 + $0x70] sm:$0xf]
        %v2671 = vld [vmem:[%s1076 + $0x78] sm:$0xf]
        %v2672 = vld [vmem:[%s1076 + $0x7c] sm:$0xf]
        %v2673 = vld [vmem:[%s1076 + $0x84] sm:$0xf]
        %v2674 = vld [vmem:[%s1076 + $0x88] sm:$0xf]
        %v2675 = vld [vmem:[%s1076 + $0x90] sm:$0xf]
        %v2676 = vld [vmem:[%s1076 + $0x94] sm:$0xf]
        %v2677 = vld [vmem:[%s1076 + $0x9c] sm:$0xf]
        %v2678 = vld [vmem:[%s1076 + $0xa0] sm:$0xf]
        %v2679 = vld [vmem:[%s1076 + $0xa8] sm:$0xf]
        %v2680 = vld [vmem:[%s1076 + $0xac] sm:$0xf]
        %v2681 = vld [vmem:[%s1076 + $0xb4] sm:$0xf]
        %v2682 = vld [vmem:[%s1076 + $0xb8] sm:$0xf]
        %s2683 = scalar_lea.vmem %s4, 24
        %v2684 = vld [vmem:[%s2683] sm:$0xf]
        %v2685 = vld [vmem:[%s2683 + $0x4] sm:$0xf]
        %v2718 = vunpack.c.l.b16 %v2651
        %v2719 = vunpack.c.l.b16 %v2652
        %v2720 = vunpack.c.l.b16 %v2653
        %v2721 = vunpack.c.l.b16 %v2654
        %v2722 = vunpack.c.l.b16 %v2655
        %v2723 = vunpack.c.l.b16 %v2656
        %v2724 = vunpack.c.l.b16 %v2657
        %v2725 = vunpack.c.l.b16 %v2658
        %v2726 = vunpack.c.l.b16 %v2659
        %v2727 = vunpack.c.l.b16 %v2660
        %v2728 = vunpack.c.l.b16 %v2661
        %v2729 = vunpack.c.l.b16 %v2662
        %v2730 = vunpack.c.l.b16 %v2663
        %v2731 = vunpack.c.l.b16 %v2664
        %v2732 = vunpack.c.l.b16 %v2665
        %v2733 = vunpack.c.l.b16 %v2666
        %v2734 = vunpack.c.l.b16 %v2667
        %v2735 = vunpack.c.l.b16 %v2668
        %v2736 = vunpack.c.l.b16 %v2669
        %v2737 = vunpack.c.l.b16 %v2670
        %v2738 = vunpack.c.l.b16 %v2671
        %v2739 = vunpack.c.l.b16 %v2672
        %v2740 = vunpack.c.l.b16 %v2673
        %v2741 = vunpack.c.l.b16 %v2674
        %v2742 = vunpack.c.l.b16 %v2675
        %v2743 = vunpack.c.l.b16 %v2676
        %v2744 = vunpack.c.l.b16 %v2677
        %v2745 = vunpack.c.l.b16 %v2678
        %v2746 = vunpack.c.l.b16 %v2679
        %v2747 = vunpack.c.l.b16 %v2680
        %v2748 = vunpack.c.l.b16 %v2681
        %v2749 = vunpack.c.l.b16 %v2682
        %v2750 = vpack.c.b16 %v2719, %v2718
        %v2751 = vpack.c.b16 %v2721, %v2720
        %v2752 = vpack.c.b16 %v2723, %v2722
        %v2753 = vpack.c.b16 %v2725, %v2724
        %v2754 = vpack.c.b16 %v2727, %v2726
        %v2755 = vpack.c.b16 %v2729, %v2728
        %v2756 = vpack.c.b16 %v2731, %v2730
        %v2757 = vpack.c.b16 %v2733, %v2732
        %v2758 = vpack.c.b16 %v2735, %v2734
        %v2759 = vpack.c.b16 %v2737, %v2736
        %v2760 = vpack.c.b16 %v2739, %v2738
        %v2761 = vpack.c.b16 %v2741, %v2740
        %v2762 = vpack.c.b16 %v2743, %v2742
        %v2763 = vpack.c.b16 %v2745, %v2744
        %v2764 = vpack.c.b16 %v2747, %v2746
        %v2765 = vpack.c.b16 %v2749, %v2748
        %v2768 = vunpack.c.l.b16 %v2684
        %v2769 = vunpack.c.l.b16 %v2685
        %v2770 = vpack.c.b16 %v2769, %v2768
        %v2773 = vsel %vm1685, %v2750, 0
        %v2776 = vsel %vm1685, %v2751, 0
        %v2779 = vsel %vm1685, %v2752, 0
        %v2782 = vsel %vm1685, %v2753, 0
        %v2785 = vsel %vm1685, %v2754, 0
        %v2788 = vsel %vm1685, %v2755, 0
        %v2791 = vsel %vm1685, %v2756, 0
        %v2794 = vsel %vm1685, %v2757, 0
        %v2797 = vsel %vm1685, %v2758, 0
        %v2800 = vsel %vm1685, %v2759, 0
        %v2803 = vsel %vm1685, %v2760, 0
        %v2806 = vsel %vm1685, %v2761, 0
        %v2809 = vsel %vm1685, %v2762, 0
        %v2812 = vsel %vm1685, %v2763, 0
        %v2815 = vsel %vm1685, %v2764, 0
        %v2818 = vsel %vm1685, %v2765, 0
        %2820 = vmatprep.subr.bf16.mxu0 0
        %2821 = vmatpush1.bf16.msra.mxu0 %v2770
        %2822 = vmatprep.subr.bf16.mxu0 0
        %2823 = vmatpush1.bf16.msra.mxu0 0
        %2824 = vmatprep.subr.bf16.mxu0 0
        %2825 = vmatpush1.bf16.msra.mxu0 0
        %2826 = vmatprep.subr.bf16.mxu0 0
        %2827 = vmatpush1.bf16.msra.mxu0 0
        %2828 = vmatprep.subr.bf16.mxu0 0
        %2829 = vmatpush1.bf16.msra.mxu0 0
        %2830 = vmatprep.subr.bf16.mxu0 0
        %2831 = vmatpush1.bf16.msra.mxu0 0
        %2832 = vmatprep.subr.bf16.mxu0 0
        %2833 = vmatpush1.bf16.msra.mxu0 0
        %2834 = vmatprep.subr.bf16.mxu0 0
        %2835 = vmatpush1.bf16.msra.mxu0 0
        %2836 = vmatprep.subr.bf16.mxu0 0
        %2837 = vmatpush1.bf16.msra.mxu0 0
        %2838 = vmatprep.subr.bf16.mxu0 0
        %2839 = vmatpush1.bf16.msra.mxu0 0
        %2840 = vmatprep.subr.bf16.mxu0 0
        %2841 = vmatpush1.bf16.msra.mxu0 0
        %2842 = vmatprep.subr.bf16.mxu0 0
        %2843 = vmatpush1.bf16.msra.mxu0 0
        %2844 = vmatprep.subr.bf16.mxu0 0
        %2845 = vmatpush1.bf16.msra.mxu0 0
        %2846 = vmatprep.subr.bf16.mxu0 0
        %2847 = vmatpush1.bf16.msra.mxu0 0
        %2848 = vmatprep.subr.bf16.mxu0 0
        %2849 = vmatpush1.bf16.msra.mxu0 0
        %2850 = vmatprep.subr.bf16.mxu0 0
        %2851 = vmatpush1.bf16.msra.mxu0 0
        %2852 = vmatprep.mubr.bf16.mxu0 0
        %2853 = vmatmul.mubr.bf16.gmra.mrb[0].mxu0 %v2773
        %v2854 = vpop.f32.mrb[0].mxu0
        %v2855 = vadd.f32 0.0, %v2854
        %v2856 = vpop.f32.mrb[0].mxu0
        %v2857 = vpop.f32.mrb[0].mxu0
        %v2858 = vadd.f32 0.0, %v2857
        %v2859 = vpop.f32.mrb[0].mxu0
        %2860 = vmatprep.mubr.bf16.mxu0 0
        %2861 = vmatmul.mubr.bf16.gmra.mrb[0].mxu0 %v2776
        %v2862 = vpop.f32.mrb[0].mxu0
        %v2863 = vadd.f32 0.0, %v2862
        %v2864 = vpop.f32.mrb[0].mxu0
        %v2865 = vpop.f32.mrb[0].mxu0
        %v2866 = vadd.f32 0.0, %v2865
        %v2867 = vpop.f32.mrb[0].mxu0
        %2868 = vmatprep.mubr.bf16.mxu0 0
        %2869 = vmatmul.mubr.bf16.gmra.mrb[0].mxu0 %v2779
        %v2870 = vpop.f32.mrb[0].mxu0
        %v2871 = vadd.f32 0.0, %v2870
        %v2872 = vpop.f32.mrb[0].mxu0
        %v2873 = vpop.f32.mrb[0].mxu0
        %v2874 = vadd.f32 0.0, %v2873
        %v2875 = vpop.f32.mrb[0].mxu0
        %2876 = vmatprep.mubr.bf16.mxu0 0
        %2877 = vmatmul.mubr.bf16.gmra.mrb[0].mxu0 %v2782
        %v2878 = vpop.f32.mrb[0].mxu0
        %v2879 = vadd.f32 0.0, %v2878
        %v2880 = vpop.f32.mrb[0].mxu0
        %v2881 = vpop.f32.mrb[0].mxu0
        %v2882 = vadd.f32 0.0, %v2881
        %v2883 = vpop.f32.mrb[0].mxu0
        %2884 = vmatprep.mubr.bf16.mxu0 0
        %2885 = vmatmul.mubr.bf16.gmra.mrb[0].mxu0 %v2785
        %v2886 = vpop.f32.mrb[0].mxu0
        %v2887 = vadd.f32 0.0, %v2886
        %v2888 = vpop.f32.mrb[0].mxu0
        %v2889 = vpop.f32.mrb[0].mxu0
        %v2890 = vadd.f32 0.0, %v2889
        %v2891 = vpop.f32.mrb[0].mxu0
        %2892 = vmatprep.mubr.bf16.mxu0 0
        %2893 = vmatmul.mubr.bf16.gmra.mrb[0].mxu0 %v2788
        %v2894 = vpop.f32.mrb[0].mxu0
        %v2895 = vadd.f32 0.0, %v2894
        %v2896 = vpop.f32.mrb[0].mxu0
        %v2897 = vpop.f32.mrb[0].mxu0
        %v2898 = vadd.f32 0.0, %v2897
        %v2899 = vpop.f32.mrb[0].mxu0
        %2900 = vmatprep.mubr.bf16.mxu0 0
        %2901 = vmatmul.mubr.bf16.gmra.mrb[0].mxu0 %v2791
        %v2902 = vpop.f32.mrb[0].mxu0
        %v2903 = vadd.f32 0.0, %v2902
        %v2904 = vpop.f32.mrb[0].mxu0
        %v2905 = vpop.f32.mrb[0].mxu0
        %v2906 = vadd.f32 0.0, %v2905
        %v2907 = vpop.f32.mrb[0].mxu0
        %2908 = vmatprep.mubr.bf16.mxu0 0
        %2909 = vmatmul.mubr.bf16.gmra.mrb[0].mxu0 %v2794
        %v2910 = vpop.f32.mrb[0].mxu0
        %v2911 = vadd.f32 0.0, %v2910
        %v2912 = vpop.f32.mrb[0].mxu0
        %v2913 = vpop.f32.mrb[0].mxu0
        %v2914 = vadd.f32 0.0, %v2913
        %v2915 = vpop.f32.mrb[0].mxu0
        %2916 = vmatprep.mubr.bf16.mxu0 0
        %2917 = vmatmul.mubr.bf16.gmra.mrb[0].mxu0 %v2797
        %v2918 = vpop.f32.mrb[0].mxu0
        %v2919 = vadd.f32 0.0, %v2918
        %v2920 = vpop.f32.mrb[0].mxu0
        %v2921 = vpop.f32.mrb[0].mxu0
        %v2922 = vadd.f32 0.0, %v2921
        %v2923 = vpop.f32.mrb[0].mxu0
        %2924 = vmatprep.mubr.bf16.mxu0 0
        %2925 = vmatmul.mubr.bf16.gmra.mrb[0].mxu0 %v2800
        %v2926 = vpop.f32.mrb[0].mxu0
        %v2927 = vadd.f32 0.0, %v2926
        %v2928 = vpop.f32.mrb[0].mxu0
        %v2929 = vpop.f32.mrb[0].mxu0
        %v2930 = vadd.f32 0.0, %v2929
        %v2931 = vpop.f32.mrb[0].mxu0
        %2932 = vmatprep.mubr.bf16.mxu0 0
        %2933 = vmatmul.mubr.bf16.gmra.mrb[0].mxu0 %v2803
        %v2934 = vpop.f32.mrb[0].mxu0
        %v2935 = vadd.f32 0.0, %v2934
        %v2936 = vpop.f32.mrb[0].mxu0
        %v2937 = vpop.f32.mrb[0].mxu0
        %v2938 = vadd.f32 0.0, %v2937
        %v2939 = vpop.f32.mrb[0].mxu0
        %2940 = vmatprep.mubr.bf16.mxu0 0
        %2941 = vmatmul.mubr.bf16.gmra.mrb[0].mxu0 %v2806
        %v2942 = vpop.f32.mrb[0].mxu0
        %v2943 = vadd.f32 0.0, %v2942
        %v2944 = vpop.f32.mrb[0].mxu0
        %v2945 = vpop.f32.mrb[0].mxu0
        %v2946 = vadd.f32 0.0, %v2945
        %v2947 = vpop.f32.mrb[0].mxu0
        %2948 = vmatprep.mubr.bf16.mxu0 0
        %2949 = vmatmul.mubr.bf16.gmra.mrb[0].mxu0 %v2809
        %v2950 = vpop.f32.mrb[0].mxu0
        %v2951 = vadd.f32 0.0, %v2950
        %v2952 = vpop.f32.mrb[0].mxu0
        %v2953 = vpop.f32.mrb[0].mxu0
        %v2954 = vadd.f32 0.0, %v2953
        %v2955 = vpop.f32.mrb[0].mxu0
        %2956 = vmatprep.mubr.bf16.mxu0 0
        %2957 = vmatmul.mubr.bf16.gmra.mrb[0].mxu0 %v2812
        %v2958 = vpop.f32.mrb[0].mxu0
        %v2959 = vadd.f32 0.0, %v2958
        %v2960 = vpop.f32.mrb[0].mxu0
        %v2961 = vpop.f32.mrb[0].mxu0
        %v2962 = vadd.f32 0.0, %v2961
        %v2963 = vpop.f32.mrb[0].mxu0
        %2964 = vmatprep.mubr.bf16.mxu0 0
        %2965 = vmatmul.mubr.bf16.gmra.mrb[0].mxu0 %v2815
        %v2966 = vpop.f32.mrb[0].mxu0
        %v2967 = vadd.f32 0.0, %v2966
        %v2968 = vpop.f32.mrb[0].mxu0
        %v2969 = vpop.f32.mrb[0].mxu0
        %v2970 = vadd.f32 0.0, %v2969
        %v2971 = vpop.f32.mrb[0].mxu0
        %2972 = vmatprep.mubr.bf16.mxu0 0
        %2973 = vmatmul.mubr.bf16.gmra.mrb[0].mxu0 %v2818
        %v2974 = vpop.f32.mrb[0].mxu0
        %v2975 = vadd.f32 0.0, %v2974
        %v2976 = vpop.f32.mrb[0].mxu0
        %v2977 = vpop.f32.mrb[0].mxu0
        %v2978 = vadd.f32 0.0, %v2977
        %v2979 = vpop.f32.mrb[0].mxu0
        %2980 = vdwg.mxu0
        %v2981 = vadd.f32 %v2619, %v2855
        %v2982 = vadd.f32 %v2620, %v2858
        %v2983 = vadd.f32 %v2621, %v2863
        %v2984 = vadd.f32 %v2622, %v2866
        %v2985 = vadd.f32 %v2623, %v2871
        %v2986 = vadd.f32 %v2624, %v2874
        %v2987 = vadd.f32 %v2625, %v2879
        %v2988 = vadd.f32 %v2626, %v2882
        %v2989 = vadd.f32 %v2627, %v2887
        %v2990 = vadd.f32 %v2628, %v2890
        %v2991 = vadd.f32 %v2629, %v2895
        %v2992 = vadd.f32 %v2630, %v2898
        %v2993 = vadd.f32 %v2631, %v2903
        %v2994 = vadd.f32 %v2632, %v2906
        %v2995 = vadd.f32 %v2633, %v2911
        %v2996 = vadd.f32 %v2634, %v2914
        %v2997 = vadd.f32 %v2635, %v2919
        %v2998 = vadd.f32 %v2636, %v2922
        %v2999 = vadd.f32 %v2637, %v2927
        %v3000 = vadd.f32 %v2638, %v2930
        %v3001 = vadd.f32 %v2639, %v2935
        %v3002 = vadd.f32 %v2640, %v2938
        %v3003 = vadd.f32 %v2641, %v2943
        %v3004 = vadd.f32 %v2642, %v2946
        %v3005 = vadd.f32 %v2643, %v2951
        %v3006 = vadd.f32 %v2644, %v2954
        %v3007 = vadd.f32 %v2645, %v2959
        %v3008 = vadd.f32 %v2646, %v2962
        %v3009 = vadd.f32 %v2647, %v2967
        %v3010 = vadd.f32 %v2648, %v2970
        %v3011 = vadd.f32 %v2649, %v2975
        %v3012 = vadd.f32 %v2650, %v2978
        %v3013 = vld [vmem:[%s1076] sm:$0xf]
        %v3014 = vld [vmem:[%s1076 + $0x4] sm:$0xf]
        %v3015 = vld [vmem:[%s1076 + $0x8] sm:$0x1]
        %v3016 = vld [vmem:[%s1076 + $0xc] sm:$0xf]
        %v3017 = vld [vmem:[%s1076 + $0x10] sm:$0xf]
        %v3018 = vld [vmem:[%s1076 + $0x14] sm:$0x1]
        %v3019 = vld [vmem:[%s1076 + $0x18] sm:$0xf]
        %v3020 = vld [vmem:[%s1076 + $0x1c] sm:$0xf]
        %v3021 = vld [vmem:[%s1076 + $0x20] sm:$0x1]
        %v3022 = vld [vmem:[%s1076 + $0x24] sm:$0xf]
        %v3023 = vld [vmem:[%s1076 + $0x28] sm:$0xf]
        %v3024 = vld [vmem:[%s1076 + $0x2c] sm:$0x1]
        %v3025 = vld [vmem:[%s1076 + $0x30] sm:$0xf]
        %v3026 = vld [vmem:[%s1076 + $0x34] sm:$0xf]
        %v3027 = vld [vmem:[%s1076 + $0x38] sm:$0x1]
        %v3028 = vld [vmem:[%s1076 + $0x3c] sm:$0xf]
        %v3029 = vld [vmem:[%s1076 + $0x40] sm:$0xf]
        %v3030 = vld [vmem:[%s1076 + $0x44] sm:$0x1]
        %v3031 = vld [vmem:[%s1076 + $0x48] sm:$0xf]
        %v3032 = vld [vmem:[%s1076 + $0x4c] sm:$0xf]
        %v3033 = vld [vmem:[%s1076 + $0x50] sm:$0x1]
        %v3034 = vld [vmem:[%s1076 + $0x54] sm:$0xf]
        %v3035 = vld [vmem:[%s1076 + $0x58] sm:$0xf]
        %v3036 = vld [vmem:[%s1076 + $0x5c] sm:$0x1]
        %v3037 = vld [vmem:[%s1076 + $0x60] sm:$0xf]
        %v3038 = vld [vmem:[%s1076 + $0x64] sm:$0xf]
        %v3039 = vld [vmem:[%s1076 + $0x68] sm:$0x1]
        %v3040 = vld [vmem:[%s1076 + $0x6c] sm:$0xf]
        %v3041 = vld [vmem:[%s1076 + $0x70] sm:$0xf]
        %v3042 = vld [vmem:[%s1076 + $0x74] sm:$0x1]
        %v3043 = vld [vmem:[%s1076 + $0x78] sm:$0xf]
        %v3044 = vld [vmem:[%s1076 + $0x7c] sm:$0xf]
        %v3045 = vld [vmem:[%s1076 + $0x80] sm:$0x1]
        %v3046 = vld [vmem:[%s1076 + $0x84] sm:$0xf]
        %v3047 = vld [vmem:[%s1076 + $0x88] sm:$0xf]
        %v3048 = vld [vmem:[%s1076 + $0x8c] sm:$0x1]
        %v3049 = vld [vmem:[%s1076 + $0x90] sm:$0xf]
        %v3050 = vld [vmem:[%s1076 + $0x94] sm:$0xf]
        %v3051 = vld [vmem:[%s1076 + $0x98] sm:$0x1]
        %v3052 = vld [vmem:[%s1076 + $0x9c] sm:$0xf]
        %v3053 = vld [vmem:[%s1076 + $0xa0] sm:$0xf]
        %v3054 = vld [vmem:[%s1076 + $0xa4] sm:$0x1]
        %v3055 = vld [vmem:[%s1076 + $0xa8] sm:$0xf]
        %v3056 = vld [vmem:[%s1076 + $0xac] sm:$0xf]
        %v3057 = vld [vmem:[%s1076 + $0xb0] sm:$0x1]
        %v3058 = vld [vmem:[%s1076 + $0xb4] sm:$0xf]
        %v3059 = vld [vmem:[%s1076 + $0xb8] sm:$0xf]
        %v3060 = vld [vmem:[%s1076 + $0xbc] sm:$0x1]
        %v3062 = vshrl.u32 %v3013, 16
        %v3064 = vrot.slane %v3062, 4
        %v3065 = vshll.u32 %v3013, 16
        %v3067 = vrot.slane %v3065, 5
        %v3068 = vor.u32 %v3064, %v3067
        %v3069 = vrot.slane %v3068, 4
        %v3071 = vshll.u32 %v3014, 16
        %v3073 = vrot.slane %v3071, 5
        %v3074 = vsel %vm1243, %v3069, %v3073
        %v3075 = vshrl.u32 %v3014, 16
        %v3077 = vrot.slane %v3075, 4
        %v3078 = vor.u32 %v3077, %v3073
        %v3079 = vrot.slane %v3078, 4
        %v3081 = vshll.u32 %v3015, 16
        %v3083 = vrot.slane %v3081, 5
        %v3084 = vsel %vm1243, %v3079, %v3083
        %v3086 = vshrl.u32 %v3016, 16
        %v3088 = vrot.slane %v3086, 4
        %v3089 = vshll.u32 %v3016, 16
        %v3091 = vrot.slane %v3089, 5
        %v3092 = vor.u32 %v3088, %v3091
        %v3093 = vrot.slane %v3092, 4
        %v3095 = vshll.u32 %v3017, 16
        %v3097 = vrot.slane %v3095, 5
        %v3098 = vsel %vm1243, %v3093, %v3097
        %v3099 = vshrl.u32 %v3017, 16
        %v3101 = vrot.slane %v3099, 4
        %v3102 = vor.u32 %v3101, %v3097
        %v3103 = vrot.slane %v3102, 4
        %v3105 = vshll.u32 %v3018, 16
        %v3107 = vrot.slane %v3105, 5
        %v3108 = vsel %vm1243, %v3103, %v3107
        %v3110 = vshrl.u32 %v3019, 16
        %v3112 = vrot.slane %v3110, 4
        %v3113 = vshll.u32 %v3019, 16
        %v3115 = vrot.slane %v3113, 5
        %v3116 = vor.u32 %v3112, %v3115
        %v3117 = vrot.slane %v3116, 4
        %v3119 = vshll.u32 %v3020, 16
        %v3121 = vrot.slane %v3119, 5
        %v3122 = vsel %vm1243, %v3117, %v3121
        %v3123 = vshrl.u32 %v3020, 16
        %v3125 = vrot.slane %v3123, 4
        %v3126 = vor.u32 %v3125, %v3121
        %v3127 = vrot.slane %v3126, 4
        %v3129 = vshll.u32 %v3021, 16
        %v3131 = vrot.slane %v3129, 5
        %v3132 = vsel %vm1243, %v3127, %v3131
        %v3134 = vshrl.u32 %v3022, 16
        %v3136 = vrot.slane %v3134, 4
        %v3137 = vshll.u32 %v3022, 16
        %v3139 = vrot.slane %v3137, 5
        %v3140 = vor.u32 %v3136, %v3139
        %v3141 = vrot.slane %v3140, 4
        %v3143 = vshll.u32 %v3023, 16
        %v3145 = vrot.slane %v3143, 5
        %v3146 = vsel %vm1243, %v3141, %v3145
        %v3147 = vshrl.u32 %v3023, 16
        %v3149 = vrot.slane %v3147, 4
        %v3150 = vor.u32 %v3149, %v3145
        %v3151 = vrot.slane %v3150, 4
        %v3153 = vshll.u32 %v3024, 16
        %v3155 = vrot.slane %v3153, 5
        %v3156 = vsel %vm1243, %v3151, %v3155
        %v3158 = vshrl.u32 %v3025, 16
        %v3160 = vrot.slane %v3158, 4
        %v3161 = vshll.u32 %v3025, 16
        %v3163 = vrot.slane %v3161, 5
        %v3164 = vor.u32 %v3160, %v3163
        %v3165 = vrot.slane %v3164, 4
        %v3167 = vshll.u32 %v3026, 16
        %v3169 = vrot.slane %v3167, 5
        %v3170 = vsel %vm1243, %v3165, %v3169
        %v3171 = vshrl.u32 %v3026, 16
        %v3173 = vrot.slane %v3171, 4
        %v3174 = vor.u32 %v3173, %v3169
        %v3175 = vrot.slane %v3174, 4
        %v3177 = vshll.u32 %v3027, 16
        %v3179 = vrot.slane %v3177, 5
        %v3180 = vsel %vm1243, %v3175, %v3179
        %v3182 = vshrl.u32 %v3028, 16
        %v3184 = vrot.slane %v3182, 4
        %v3185 = vshll.u32 %v3028, 16
        %v3187 = vrot.slane %v3185, 5
        %v3188 = vor.u32 %v3184, %v3187
        %v3189 = vrot.slane %v3188, 4
        %v3191 = vshll.u32 %v3029, 16
        %v3193 = vrot.slane %v3191, 5
        %v3194 = vsel %vm1243, %v3189, %v3193
        %v3195 = vshrl.u32 %v3029, 16
        %v3197 = vrot.slane %v3195, 4
        %v3198 = vor.u32 %v3197, %v3193
        %v3199 = vrot.slane %v3198, 4
        %v3201 = vshll.u32 %v3030, 16
        %v3203 = vrot.slane %v3201, 5
        %v3204 = vsel %vm1243, %v3199, %v3203
        %v3206 = vshrl.u32 %v3031, 16
        %v3208 = vrot.slane %v3206, 4
        %v3209 = vshll.u32 %v3031, 16
        %v3211 = vrot.slane %v3209, 5
        %v3212 = vor.u32 %v3208, %v3211
        %v3213 = vrot.slane %v3212, 4
        %v3215 = vshll.u32 %v3032, 16
        %v3217 = vrot.slane %v3215, 5
        %v3218 = vsel %vm1243, %v3213, %v3217
        %v3219 = vshrl.u32 %v3032, 16
        %v3221 = vrot.slane %v3219, 4
        %v3222 = vor.u32 %v3221, %v3217
        %v3223 = vrot.slane %v3222, 4
        %v3225 = vshll.u32 %v3033, 16
        %v3227 = vrot.slane %v3225, 5
        %v3228 = vsel %vm1243, %v3223, %v3227
        %v3230 = vshrl.u32 %v3034, 16
        %v3232 = vrot.slane %v3230, 4
        %v3233 = vshll.u32 %v3034, 16
        %v3235 = vrot.slane %v3233, 5
        %v3236 = vor.u32 %v3232, %v3235
        %v3237 = vrot.slane %v3236, 4
        %v3239 = vshll.u32 %v3035, 16
        %v3241 = vrot.slane %v3239, 5
        %v3242 = vsel %vm1243, %v3237, %v3241
        %v3243 = vshrl.u32 %v3035, 16
        %v3245 = vrot.slane %v3243, 4
        %v3246 = vor.u32 %v3245, %v3241
        %v3247 = vrot.slane %v3246, 4
        %v3249 = vshll.u32 %v3036, 16
        %v3251 = vrot.slane %v3249, 5
        %v3252 = vsel %vm1243, %v3247, %v3251
        %v3254 = vshrl.u32 %v3037, 16
        %v3256 = vrot.slane %v3254, 4
        %v3257 = vshll.u32 %v3037, 16
        %v3259 = vrot.slane %v3257, 5
        %v3260 = vor.u32 %v3256, %v3259
        %v3261 = vrot.slane %v3260, 4
        %v3263 = vshll.u32 %v3038, 16
        %v3265 = vrot.slane %v3263, 5
        %v3266 = vsel %vm1243, %v3261, %v3265
        %v3267 = vshrl.u32 %v3038, 16
        %v3269 = vrot.slane %v3267, 4
        %v3270 = vor.u32 %v3269, %v3265
        %v3271 = vrot.slane %v3270, 4
        %v3273 = vshll.u32 %v3039, 16
        %v3275 = vrot.slane %v3273, 5
        %v3276 = vsel %vm1243, %v3271, %v3275
        %v3278 = vshrl.u32 %v3040, 16
        %v3280 = vrot.slane %v3278, 4
        %v3281 = vshll.u32 %v3040, 16
        %v3283 = vrot.slane %v3281, 5
        %v3284 = vor.u32 %v3280, %v3283
        %v3285 = vrot.slane %v3284, 4
        %v3287 = vshll.u32 %v3041, 16
        %v3289 = vrot.slane %v3287, 5
        %v3290 = vsel %vm1243, %v3285, %v3289
        %v3291 = vshrl.u32 %v3041, 16
        %v3293 = vrot.slane %v3291, 4
        %v3294 = vor.u32 %v3293, %v3289
        %v3295 = vrot.slane %v3294, 4
        %v3297 = vshll.u32 %v3042, 16
        %v3299 = vrot.slane %v3297, 5
        %v3300 = vsel %vm1243, %v3295, %v3299
        %v3302 = vshrl.u32 %v3043, 16
        %v3304 = vrot.slane %v3302, 4
        %v3305 = vshll.u32 %v3043, 16
        %v3307 = vrot.slane %v3305, 5
        %v3308 = vor.u32 %v3304, %v3307
        %v3309 = vrot.slane %v3308, 4
        %v3311 = vshll.u32 %v3044, 16
        %v3313 = vrot.slane %v3311, 5
        %v3314 = vsel %vm1243, %v3309, %v3313
        %v3315 = vshrl.u32 %v3044, 16
        %v3317 = vrot.slane %v3315, 4
        %v3318 = vor.u32 %v3317, %v3313
        %v3319 = vrot.slane %v3318, 4
        %v3321 = vshll.u32 %v3045, 16
        %v3323 = vrot.slane %v3321, 5
        %v3324 = vsel %vm1243, %v3319, %v3323
        %v3326 = vshrl.u32 %v3046, 16
        %v3328 = vrot.slane %v3326, 4
        %v3329 = vshll.u32 %v3046, 16
        %v3331 = vrot.slane %v3329, 5
        %v3332 = vor.u32 %v3328, %v3331
        %v3333 = vrot.slane %v3332, 4
        %v3335 = vshll.u32 %v3047, 16
        %v3337 = vrot.slane %v3335, 5
        %v3338 = vsel %vm1243, %v3333, %v3337
        %v3339 = vshrl.u32 %v3047, 16
        %v3341 = vrot.slane %v3339, 4
        %v3342 = vor.u32 %v3341, %v3337
        %v3343 = vrot.slane %v3342, 4
        %v3345 = vshll.u32 %v3048, 16
        %v3347 = vrot.slane %v3345, 5
        %v3348 = vsel %vm1243, %v3343, %v3347
        %v3350 = vshrl.u32 %v3049, 16
        %v3352 = vrot.slane %v3350, 4
        %v3353 = vshll.u32 %v3049, 16
        %v3355 = vrot.slane %v3353, 5
        %v3356 = vor.u32 %v3352, %v3355
        %v3357 = vrot.slane %v3356, 4
        %v3359 = vshll.u32 %v3050, 16
        %v3361 = vrot.slane %v3359, 5
        %v3362 = vsel %vm1243, %v3357, %v3361
        %v3363 = vshrl.u32 %v3050, 16
        %v3365 = vrot.slane %v3363, 4
        %v3366 = vor.u32 %v3365, %v3361
        %v3367 = vrot.slane %v3366, 4
        %v3369 = vshll.u32 %v3051, 16
        %v3371 = vrot.slane %v3369, 5
        %v3372 = vsel %vm1243, %v3367, %v3371
        %v3374 = vshrl.u32 %v3052, 16
        %v3376 = vrot.slane %v3374, 4
        %v3377 = vshll.u32 %v3052, 16
        %v3379 = vrot.slane %v3377, 5
        %v3380 = vor.u32 %v3376, %v3379
        %v3381 = vrot.slane %v3380, 4
        %v3383 = vshll.u32 %v3053, 16
        %v3385 = vrot.slane %v3383, 5
        %v3386 = vsel %vm1243, %v3381, %v3385
        %v3387 = vshrl.u32 %v3053, 16
        %v3389 = vrot.slane %v3387, 4
        %v3390 = vor.u32 %v3389, %v3385
        %v3391 = vrot.slane %v3390, 4
        %v3393 = vshll.u32 %v3054, 16
        %v3395 = vrot.slane %v3393, 5
        %v3396 = vsel %vm1243, %v3391, %v3395
        %v3398 = vshrl.u32 %v3055, 16
        %v3400 = vrot.slane %v3398, 4
        %v3401 = vshll.u32 %v3055, 16
        %v3403 = vrot.slane %v3401, 5
        %v3404 = vor.u32 %v3400, %v3403
        %v3405 = vrot.slane %v3404, 4
        %v3407 = vshll.u32 %v3056, 16
        %v3409 = vrot.slane %v3407, 5
        %v3410 = vsel %vm1243, %v3405, %v3409
        %v3411 = vshrl.u32 %v3056, 16
        %v3413 = vrot.slane %v3411, 4
        %v3414 = vor.u32 %v3413, %v3409
        %v3415 = vrot.slane %v3414, 4
        %v3417 = vshll.u32 %v3057, 16
        %v3419 = vrot.slane %v3417, 5
        %v3420 = vsel %vm1243, %v3415, %v3419
        %v3422 = vshrl.u32 %v3058, 16
        %v3424 = vrot.slane %v3422, 4
        %v3425 = vshll.u32 %v3058, 16
        %v3427 = vrot.slane %v3425, 5
        %v3428 = vor.u32 %v3424, %v3427
        %v3429 = vrot.slane %v3428, 4
        %v3431 = vshll.u32 %v3059, 16
        %v3433 = vrot.slane %v3431, 5
        %v3434 = vsel %vm1243, %v3429, %v3433
        %v3435 = vshrl.u32 %v3059, 16
        %v3437 = vrot.slane %v3435, 4
        %v3438 = vor.u32 %v3437, %v3433
        %v3439 = vrot.slane %v3438, 4
        %v3441 = vshll.u32 %v3060, 16
        %v3443 = vrot.slane %v3441, 5
        %v3444 = vsel %vm1243, %v3439, %v3443
        %s3445 = scalar_lea.vmem %s4, 32
        %v3446 = vld [vmem:[%s3445] sm:$0xf]
        %v3447 = vld [vmem:[%s3445 + $0x4] sm:$0xf]
        %v3448 = vunpack.c.l.b16 %v3074
        %v3449 = vunpack.c.l.b16 %v3084
        %v3450 = vunpack.c.l.b16 %v3098
        %v3451 = vunpack.c.l.b16 %v3108
        %v3452 = vunpack.c.l.b16 %v3122
        %v3453 = vunpack.c.l.b16 %v3132
        %v3454 = vunpack.c.l.b16 %v3146
        %v3455 = vunpack.c.l.b16 %v3156
        %v3456 = vunpack.c.l.b16 %v3170
        %v3457 = vunpack.c.l.b16 %v3180
        %v3458 = vunpack.c.l.b16 %v3194
        %v3459 = vunpack.c.l.b16 %v3204
        %v3460 = vunpack.c.l.b16 %v3218
        %v3461 = vunpack.c.l.b16 %v3228
        %v3462 = vunpack.c.l.b16 %v3242
        %v3463 = vunpack.c.l.b16 %v3252
        %v3464 = vunpack.c.l.b16 %v3266
        %v3465 = vunpack.c.l.b16 %v3276
        %v3466 = vunpack.c.l.b16 %v3290
        %v3467 = vunpack.c.l.b16 %v3300
        %v3468 = vunpack.c.l.b16 %v3314
        %v3469 = vunpack.c.l.b16 %v3324
        %v3470 = vunpack.c.l.b16 %v3338
        %v3471 = vunpack.c.l.b16 %v3348
        %v3472 = vunpack.c.l.b16 %v3362
        %v3473 = vunpack.c.l.b16 %v3372
        %v3474 = vunpack.c.l.b16 %v3386
        %v3475 = vunpack.c.l.b16 %v3396
        %v3476 = vunpack.c.l.b16 %v3410
        %v3477 = vunpack.c.l.b16 %v3420
        %v3478 = vunpack.c.l.b16 %v3434
        %v3479 = vunpack.c.l.b16 %v3444
        %v3480 = vpack.c.b16 %v3449, %v3448
        %v3481 = vpack.c.b16 %v3451, %v3450
        %v3482 = vpack.c.b16 %v3453, %v3452
        %v3483 = vpack.c.b16 %v3455, %v3454
        %v3484 = vpack.c.b16 %v3457, %v3456
        %v3485 = vpack.c.b16 %v3459, %v3458
        %v3486 = vpack.c.b16 %v3461, %v3460
        %v3487 = vpack.c.b16 %v3463, %v3462
        %v3488 = vpack.c.b16 %v3465, %v3464
        %v3489 = vpack.c.b16 %v3467, %v3466
        %v3490 = vpack.c.b16 %v3469, %v3468
        %v3491 = vpack.c.b16 %v3471, %v3470
        %v3492 = vpack.c.b16 %v3473, %v3472
        %v3493 = vpack.c.b16 %v3475, %v3474
        %v3494 = vpack.c.b16 %v3477, %v3476
        %v3495 = vpack.c.b16 %v3479, %v3478
        %v3498 = vunpack.c.l.b16 %v3446
        %v3499 = vunpack.c.l.b16 %v3447
        %v3500 = vpack.c.b16 %v3499, %v3498
        %v3503 = vsel %vm1685, %v3480, 0
        %v3506 = vsel %vm1685, %v3481, 0
        %v3509 = vsel %vm1685, %v3482, 0
        %v3512 = vsel %vm1685, %v3483, 0
        %v3515 = vsel %vm1685, %v3484, 0
        %v3518 = vsel %vm1685, %v3485, 0
        %v3521 = vsel %vm1685, %v3486, 0
        %v3524 = vsel %vm1685, %v3487, 0
        %v3527 = vsel %vm1685, %v3488, 0
        %v3530 = vsel %vm1685, %v3489, 0
        %v3533 = vsel %vm1685, %v3490, 0
        %v3536 = vsel %vm1685, %v3491, 0
        %v3539 = vsel %vm1685, %v3492, 0
        %v3542 = vsel %vm1685, %v3493, 0
        %v3545 = vsel %vm1685, %v3494, 0
        %v3548 = vsel %vm1685, %v3495, 0
        %3550 = vmatprep.subr.bf16.mxu0 0
        %3551 = vmatpush1.bf16.msra.mxu0 %v3500
        %3552 = vmatprep.subr.bf16.mxu0 0
        %3553 = vmatpush1.bf16.msra.mxu0 0
        %3554 = vmatprep.subr.bf16.mxu0 0
        %3555 = vmatpush1.bf16.msra.mxu0 0
        %3556 = vmatprep.subr.bf16.mxu0 0
        %3557 = vmatpush1.bf16.msra.mxu0 0
        %3558 = vmatprep.subr.bf16.mxu0 0
        %3559 = vmatpush1.bf16.msra.mxu0 0
        %3560 = vmatprep.subr.bf16.mxu0 0
        %3561 = vmatpush1.bf16.msra.mxu0 0
        %3562 = vmatprep.subr.bf16.mxu0 0
        %3563 = vmatpush1.bf16.msra.mxu0 0
        %3564 = vmatprep.subr.bf16.mxu0 0
        %3565 = vmatpush1.bf16.msra.mxu0 0
        %3566 = vmatprep.subr.bf16.mxu0 0
        %3567 = vmatpush1.bf16.msra.mxu0 0
        %3568 = vmatprep.subr.bf16.mxu0 0
        %3569 = vmatpush1.bf16.msra.mxu0 0
        %3570 = vmatprep.subr.bf16.mxu0 0
        %3571 = vmatpush1.bf16.msra.mxu0 0
        %3572 = vmatprep.subr.bf16.mxu0 0
        %3573 = vmatpush1.bf16.msra.mxu0 0
        %3574 = vmatprep.subr.bf16.mxu0 0
        %3575 = vmatpush1.bf16.msra.mxu0 0
        %3576 = vmatprep.subr.bf16.mxu0 0
        %3577 = vmatpush1.bf16.msra.mxu0 0
        %3578 = vmatprep.subr.bf16.mxu0 0
        %3579 = vmatpush1.bf16.msra.mxu0 0
        %3580 = vmatprep.subr.bf16.mxu0 0
        %3581 = vmatpush1.bf16.msra.mxu0 0
        %3582 = vmatprep.mubr.bf16.mxu0 0
        %3583 = vmatmul.mubr.bf16.gmra.mrb[0].mxu0 %v3503
        %v3584 = vpop.f32.mrb[0].mxu0
        %v3585 = vadd.f32 0.0, %v3584
        %v3586 = vpop.f32.mrb[0].mxu0
        %v3587 = vpop.f32.mrb[0].mxu0
        %v3588 = vadd.f32 0.0, %v3587
        %v3589 = vpop.f32.mrb[0].mxu0
        %3590 = vmatprep.mubr.bf16.mxu0 0
        %3591 = vmatmul.mubr.bf16.gmra.mrb[0].mxu0 %v3506
        %v3592 = vpop.f32.mrb[0].mxu0
        %v3593 = vadd.f32 0.0, %v3592
        %v3594 = vpop.f32.mrb[0].mxu0
        %v3595 = vpop.f32.mrb[0].mxu0
        %v3596 = vadd.f32 0.0, %v3595
        %v3597 = vpop.f32.mrb[0].mxu0
        %3598 = vmatprep.mubr.bf16.mxu0 0
        %3599 = vmatmul.mubr.bf16.gmra.mrb[0].mxu0 %v3509
        %v3600 = vpop.f32.mrb[0].mxu0
        %v3601 = vadd.f32 0.0, %v3600
        %v3602 = vpop.f32.mrb[0].mxu0
        %v3603 = vpop.f32.mrb[0].mxu0
        %v3604 = vadd.f32 0.0, %v3603
        %v3605 = vpop.f32.mrb[0].mxu0
        %3606 = vmatprep.mubr.bf16.mxu0 0
        %3607 = vmatmul.mubr.bf16.gmra.mrb[0].mxu0 %v3512
        %v3608 = vpop.f32.mrb[0].mxu0
        %v3609 = vadd.f32 0.0, %v3608
        %v3610 = vpop.f32.mrb[0].mxu0
        %v3611 = vpop.f32.mrb[0].mxu0
        %v3612 = vadd.f32 0.0, %v3611
        %v3613 = vpop.f32.mrb[0].mxu0
        %3614 = vmatprep.mubr.bf16.mxu0 0
        %3615 = vmatmul.mubr.bf16.gmra.mrb[0].mxu0 %v3515
        %v3616 = vpop.f32.mrb[0].mxu0
        %v3617 = vadd.f32 0.0, %v3616
        %v3618 = vpop.f32.mrb[0].mxu0
        %v3619 = vpop.f32.mrb[0].mxu0
        %v3620 = vadd.f32 0.0, %v3619
        %v3621 = vpop.f32.mrb[0].mxu0
        %3622 = vmatprep.mubr.bf16.mxu0 0
        %3623 = vmatmul.mubr.bf16.gmra.mrb[0].mxu0 %v3518
        %v3624 = vpop.f32.mrb[0].mxu0
        %v3625 = vadd.f32 0.0, %v3624
        %v3626 = vpop.f32.mrb[0].mxu0
        %v3627 = vpop.f32.mrb[0].mxu0
        %v3628 = vadd.f32 0.0, %v3627
        %v3629 = vpop.f32.mrb[0].mxu0
        %3630 = vmatprep.mubr.bf16.mxu0 0
        %3631 = vmatmul.mubr.bf16.gmra.mrb[0].mxu0 %v3521
        %v3632 = vpop.f32.mrb[0].mxu0
        %v3633 = vadd.f32 0.0, %v3632
        %v3634 = vpop.f32.mrb[0].mxu0
        %v3635 = vpop.f32.mrb[0].mxu0
        %v3636 = vadd.f32 0.0, %v3635
        %v3637 = vpop.f32.mrb[0].mxu0
        %3638 = vmatprep.mubr.bf16.mxu0 0
        %3639 = vmatmul.mubr.bf16.gmra.mrb[0].mxu0 %v3524
        %v3640 = vpop.f32.mrb[0].mxu0
        %v3641 = vadd.f32 0.0, %v3640
        %v3642 = vpop.f32.mrb[0].mxu0
        %v3643 = vpop.f32.mrb[0].mxu0
        %v3644 = vadd.f32 0.0, %v3643
        %v3645 = vpop.f32.mrb[0].mxu0
        %3646 = vmatprep.mubr.bf16.mxu0 0
        %3647 = vmatmul.mubr.bf16.gmra.mrb[0].mxu0 %v3527
        %v3648 = vpop.f32.mrb[0].mxu0
        %v3649 = vadd.f32 0.0, %v3648
        %v3650 = vpop.f32.mrb[0].mxu0
        %v3651 = vpop.f32.mrb[0].mxu0
        %v3652 = vadd.f32 0.0, %v3651
        %v3653 = vpop.f32.mrb[0].mxu0
        %3654 = vmatprep.mubr.bf16.mxu0 0
        %3655 = vmatmul.mubr.bf16.gmra.mrb[0].mxu0 %v3530
        %v3656 = vpop.f32.mrb[0].mxu0
        %v3657 = vadd.f32 0.0, %v3656
        %v3658 = vpop.f32.mrb[0].mxu0
        %v3659 = vpop.f32.mrb[0].mxu0
        %v3660 = vadd.f32 0.0, %v3659
        %v3661 = vpop.f32.mrb[0].mxu0
        %3662 = vmatprep.mubr.bf16.mxu0 0
        %3663 = vmatmul.mubr.bf16.gmra.mrb[0].mxu0 %v3533
        %v3664 = vpop.f32.mrb[0].mxu0
        %v3665 = vadd.f32 0.0, %v3664
        %v3666 = vpop.f32.mrb[0].mxu0
        %v3667 = vpop.f32.mrb[0].mxu0
        %v3668 = vadd.f32 0.0, %v3667
        %v3669 = vpop.f32.mrb[0].mxu0
        %3670 = vmatprep.mubr.bf16.mxu0 0
        %3671 = vmatmul.mubr.bf16.gmra.mrb[0].mxu0 %v3536
        %v3672 = vpop.f32.mrb[0].mxu0
        %v3673 = vadd.f32 0.0, %v3672
        %v3674 = vpop.f32.mrb[0].mxu0
        %v3675 = vpop.f32.mrb[0].mxu0
        %v3676 = vadd.f32 0.0, %v3675
        %v3677 = vpop.f32.mrb[0].mxu0
        %3678 = vmatprep.mubr.bf16.mxu0 0
        %3679 = vmatmul.mubr.bf16.gmra.mrb[0].mxu0 %v3539
        %v3680 = vpop.f32.mrb[0].mxu0
        %v3681 = vadd.f32 0.0, %v3680
        %v3682 = vpop.f32.mrb[0].mxu0
        %v3683 = vpop.f32.mrb[0].mxu0
        %v3684 = vadd.f32 0.0, %v3683
        %v3685 = vpop.f32.mrb[0].mxu0
        %3686 = vmatprep.mubr.bf16.mxu0 0
        %3687 = vmatmul.mubr.bf16.gmra.mrb[0].mxu0 %v3542
        %v3688 = vpop.f32.mrb[0].mxu0
        %v3689 = vadd.f32 0.0, %v3688
        %v3690 = vpop.f32.mrb[0].mxu0
        %v3691 = vpop.f32.mrb[0].mxu0
        %v3692 = vadd.f32 0.0, %v3691
        %v3693 = vpop.f32.mrb[0].mxu0
        %3694 = vmatprep.mubr.bf16.mxu0 0
        %3695 = vmatmul.mubr.bf16.gmra.mrb[0].mxu0 %v3545
        %v3696 = vpop.f32.mrb[0].mxu0
        %v3697 = vadd.f32 0.0, %v3696
        %v3698 = vpop.f32.mrb[0].mxu0
        %v3699 = vpop.f32.mrb[0].mxu0
        %v3700 = vadd.f32 0.0, %v3699
        %v3701 = vpop.f32.mrb[0].mxu0
        %3702 = vmatprep.mubr.bf16.mxu0 0
        %3703 = vmatmul.mubr.bf16.gmra.mrb[0].mxu0 %v3548
        %v3704 = vpop.f32.mrb[0].mxu0
        %v3705 = vadd.f32 0.0, %v3704
        %v3706 = vpop.f32.mrb[0].mxu0
        %v3707 = vpop.f32.mrb[0].mxu0
        %v3708 = vadd.f32 0.0, %v3707
        %v3709 = vpop.f32.mrb[0].mxu0
        %3710 = vdwg.mxu0
        %v3711 = vadd.f32 %v2981, %v3585
        %v3712 = vadd.f32 %v2982, %v3588
        %v3713 = vadd.f32 %v2983, %v3593
        %v3714 = vadd.f32 %v2984, %v3596
        %v3715 = vadd.f32 %v2985, %v3601
        %v3716 = vadd.f32 %v2986, %v3604
        %v3717 = vadd.f32 %v2987, %v3609
        %v3718 = vadd.f32 %v2988, %v3612
        %v3719 = vadd.f32 %v2989, %v3617
        %v3720 = vadd.f32 %v2990, %v3620
        %v3721 = vadd.f32 %v2991, %v3625
        %v3722 = vadd.f32 %v2992, %v3628
        %v3723 = vadd.f32 %v2993, %v3633
        %v3724 = vadd.f32 %v2994, %v3636
        %v3725 = vadd.f32 %v2995, %v3641
        %v3726 = vadd.f32 %v2996, %v3644
        %v3727 = vadd.f32 %v2997, %v3649
        %v3728 = vadd.f32 %v2998, %v3652
        %v3729 = vadd.f32 %v2999, %v3657
        %v3730 = vadd.f32 %v3000, %v3660
        %v3731 = vadd.f32 %v3001, %v3665
        %v3732 = vadd.f32 %v3002, %v3668
        %v3733 = vadd.f32 %v3003, %v3673
        %v3734 = vadd.f32 %v3004, %v3676
        %v3735 = vadd.f32 %v3005, %v3681
        %v3736 = vadd.f32 %v3006, %v3684
        %v3737 = vadd.f32 %v3007, %v3689
        %v3738 = vadd.f32 %v3008, %v3692
        %v3739 = vadd.f32 %v3009, %v3697
        %v3740 = vadd.f32 %v3010, %v3700
        %v3741 = vadd.f32 %v3011, %v3705
        %v3742 = vadd.f32 %v3012, %v3708
        %v3743 = vld [vmem:[%s1076] sm:$0xe]
        %v3744 = vld [vmem:[%s1076 + $0xc] sm:$0xe]
        %v3745 = vld [vmem:[%s1076 + $0x18] sm:$0xe]
        %v3746 = vld [vmem:[%s1076 + $0x24] sm:$0xe]
        %v3747 = vld [vmem:[%s1076 + $0x30] sm:$0xe]
        %v3748 = vld [vmem:[%s1076 + $0x3c] sm:$0xe]
        %v3749 = vld [vmem:[%s1076 + $0x48] sm:$0xe]
        %v3750 = vld [vmem:[%s1076 + $0x54] sm:$0xe]
        %v3751 = vld [vmem:[%s1076 + $0x60] sm:$0xe]
        %v3752 = vld [vmem:[%s1076 + $0x6c] sm:$0xe]
        %v3753 = vld [vmem:[%s1076 + $0x78] sm:$0xe]
        %v3754 = vld [vmem:[%s1076 + $0x84] sm:$0xe]
        %v3755 = vld [vmem:[%s1076 + $0x90] sm:$0xe]
        %v3756 = vld [vmem:[%s1076 + $0x9c] sm:$0xe]
        %v3757 = vld [vmem:[%s1076 + $0xa8] sm:$0xe]
        %v3758 = vld [vmem:[%s1076 + $0xb4] sm:$0xe]
        %v3807 = vrot.slane %v3743, 5
        %v3808 = vrot.slane %v3807, 4
        %v3809 = vrot.slane %v3014, 5
        %v3810 = vsel %vm2240, %v3808, %v3809
        %v3811 = vrot.slane %v3809, 4
        %v3812 = vrot.slane %v3015, 5
        %v3813 = vsel %vm2240, %v3811, %v3812
        %v3814 = vrot.slane %v3744, 5
        %v3815 = vrot.slane %v3814, 4
        %v3816 = vrot.slane %v3017, 5
        %v3817 = vsel %vm2240, %v3815, %v3816
        %v3818 = vrot.slane %v3816, 4
        %v3819 = vrot.slane %v3018, 5
        %v3820 = vsel %vm2240, %v3818, %v3819
        %v3821 = vrot.slane %v3745, 5
        %v3822 = vrot.slane %v3821, 4
        %v3823 = vrot.slane %v3020, 5
        %v3824 = vsel %vm2240, %v3822, %v3823
        %v3825 = vrot.slane %v3823, 4
        %v3826 = vrot.slane %v3021, 5
        %v3827 = vsel %vm2240, %v3825, %v3826
        %v3828 = vrot.slane %v3746, 5
        %v3829 = vrot.slane %v3828, 4
        %v3830 = vrot.slane %v3023, 5
        %v3831 = vsel %vm2240, %v3829, %v3830
        %v3832 = vrot.slane %v3830, 4
        %v3833 = vrot.slane %v3024, 5
        %v3834 = vsel %vm2240, %v3832, %v3833
        %v3835 = vrot.slane %v3747, 5
        %v3836 = vrot.slane %v3835, 4
        %v3837 = vrot.slane %v3026, 5
        %v3838 = vsel %vm2240, %v3836, %v3837
        %v3839 = vrot.slane %v3837, 4
        %v3840 = vrot.slane %v3027, 5
        %v3841 = vsel %vm2240, %v3839, %v3840
        %v3842 = vrot.slane %v3748, 5
        %v3843 = vrot.slane %v3842, 4
        %v3844 = vrot.slane %v3029, 5
        %v3845 = vsel %vm2240, %v3843, %v3844
        %v3846 = vrot.slane %v3844, 4
        %v3847 = vrot.slane %v3030, 5
        %v3848 = vsel %vm2240, %v3846, %v3847
        %v3849 = vrot.slane %v3749, 5
        %v3850 = vrot.slane %v3849, 4
        %v3851 = vrot.slane %v3032, 5
        %v3852 = vsel %vm2240, %v3850, %v3851
        %v3853 = vrot.slane %v3851, 4
        %v3854 = vrot.slane %v3033, 5
        %v3855 = vsel %vm2240, %v3853, %v3854
        %v3856 = vrot.slane %v3750, 5
        %v3857 = vrot.slane %v3856, 4
        %v3858 = vrot.slane %v3035, 5
        %v3859 = vsel %vm2240, %v3857, %v3858
        %v3860 = vrot.slane %v3858, 4
        %v3861 = vrot.slane %v3036, 5
        %v3862 = vsel %vm2240, %v3860, %v3861
        %v3863 = vrot.slane %v3751, 5
        %v3864 = vrot.slane %v3863, 4
        %v3865 = vrot.slane %v3038, 5
        %v3866 = vsel %vm2240, %v3864, %v3865
        %v3867 = vrot.slane %v3865, 4
        %v3868 = vrot.slane %v3039, 5
        %v3869 = vsel %vm2240, %v3867, %v3868
        %v3870 = vrot.slane %v3752, 5
        %v3871 = vrot.slane %v3870, 4
        %v3872 = vrot.slane %v3041, 5
        %v3873 = vsel %vm2240, %v3871, %v3872
        %v3874 = vrot.slane %v3872, 4
        %v3875 = vrot.slane %v3042, 5
        %v3876 = vsel %vm2240, %v3874, %v3875
        %v3877 = vrot.slane %v3753, 5
        %v3878 = vrot.slane %v3877, 4
        %v3879 = vrot.slane %v3044, 5
        %v3880 = vsel %vm2240, %v3878, %v3879
        %v3881 = vrot.slane %v3879, 4
        %v3882 = vrot.slane %v3045, 5
        %v3883 = vsel %vm2240, %v3881, %v3882
        %v3884 = vrot.slane %v3754, 5
        %v3885 = vrot.slane %v3884, 4
        %v3886 = vrot.slane %v3047, 5
        %v3887 = vsel %vm2240, %v3885, %v3886
        %v3888 = vrot.slane %v3886, 4
        %v3889 = vrot.slane %v3048, 5
        %v3890 = vsel %vm2240, %v3888, %v3889
        %v3891 = vrot.slane %v3755, 5
        %v3892 = vrot.slane %v3891, 4
        %v3893 = vrot.slane %v3050, 5
        %v3894 = vsel %vm2240, %v3892, %v3893
        %v3895 = vrot.slane %v3893, 4
        %v3896 = vrot.slane %v3051, 5
        %v3897 = vsel %vm2240, %v3895, %v3896
        %v3898 = vrot.slane %v3756, 5
        %v3899 = vrot.slane %v3898, 4
        %v3900 = vrot.slane %v3053, 5
        %v3901 = vsel %vm2240, %v3899, %v3900
        %v3902 = vrot.slane %v3900, 4
        %v3903 = vrot.slane %v3054, 5
        %v3904 = vsel %vm2240, %v3902, %v3903
        %v3905 = vrot.slane %v3757, 5
        %v3906 = vrot.slane %v3905, 4
        %v3907 = vrot.slane %v3056, 5
        %v3908 = vsel %vm2240, %v3906, %v3907
        %v3909 = vrot.slane %v3907, 4
        %v3910 = vrot.slane %v3057, 5
        %v3911 = vsel %vm2240, %v3909, %v3910
        %v3912 = vrot.slane %v3758, 5
        %v3913 = vrot.slane %v3912, 4
        %v3914 = vrot.slane %v3059, 5
        %v3915 = vsel %vm2240, %v3913, %v3914
        %v3916 = vrot.slane %v3914, 4
        %v3917 = vrot.slane %v3060, 5
        %v3918 = vsel %vm2240, %v3916, %v3917
        %s3919 = scalar_lea.vmem %s4, 40
        %v3920 = vld [vmem:[%s3919] sm:$0xf]
        %v3921 = vld [vmem:[%s3919 + $0x4] sm:$0xf]
        %v3922 = vunpack.c.l.b16 %v3810
        %v3923 = vunpack.c.l.b16 %v3813
        %v3924 = vunpack.c.l.b16 %v3817
        %v3925 = vunpack.c.l.b16 %v3820
        %v3926 = vunpack.c.l.b16 %v3824
        %v3927 = vunpack.c.l.b16 %v3827
        %v3928 = vunpack.c.l.b16 %v3831
        %v3929 = vunpack.c.l.b16 %v3834
        %v3930 = vunpack.c.l.b16 %v3838
        %v3931 = vunpack.c.l.b16 %v3841
        %v3932 = vunpack.c.l.b16 %v3845
        %v3933 = vunpack.c.l.b16 %v3848
        %v3934 = vunpack.c.l.b16 %v3852
        %v3935 = vunpack.c.l.b16 %v3855
        %v3936 = vunpack.c.l.b16 %v3859
        %v3937 = vunpack.c.l.b16 %v3862
        %v3938 = vunpack.c.l.b16 %v3866
        %v3939 = vunpack.c.l.b16 %v3869
        %v3940 = vunpack.c.l.b16 %v3873
        %v3941 = vunpack.c.l.b16 %v3876
        %v3942 = vunpack.c.l.b16 %v3880
        %v3943 = vunpack.c.l.b16 %v3883
        %v3944 = vunpack.c.l.b16 %v3887
        %v3945 = vunpack.c.l.b16 %v3890
        %v3946 = vunpack.c.l.b16 %v3894
        %v3947 = vunpack.c.l.b16 %v3897
        %v3948 = vunpack.c.l.b16 %v3901
        %v3949 = vunpack.c.l.b16 %v3904
        %v3950 = vunpack.c.l.b16 %v3908
        %v3951 = vunpack.c.l.b16 %v3911
        %v3952 = vunpack.c.l.b16 %v3915
        %v3953 = vunpack.c.l.b16 %v3918
        %v3954 = vpack.c.b16 %v3923, %v3922
        %v3955 = vpack.c.b16 %v3925, %v3924
        %v3956 = vpack.c.b16 %v3927, %v3926
        %v3957 = vpack.c.b16 %v3929, %v3928
        %v3958 = vpack.c.b16 %v3931, %v3930
        %v3959 = vpack.c.b16 %v3933, %v3932
        %v3960 = vpack.c.b16 %v3935, %v3934
        %v3961 = vpack.c.b16 %v3937, %v3936
        %v3962 = vpack.c.b16 %v3939, %v3938
        %v3963 = vpack.c.b16 %v3941, %v3940
        %v3964 = vpack.c.b16 %v3943, %v3942
        %v3965 = vpack.c.b16 %v3945, %v3944
        %v3966 = vpack.c.b16 %v3947, %v3946
        %v3967 = vpack.c.b16 %v3949, %v3948
        %v3968 = vpack.c.b16 %v3951, %v3950
        %v3969 = vpack.c.b16 %v3953, %v3952
        %v3972 = vunpack.c.l.b16 %v3920
        %v3973 = vunpack.c.l.b16 %v3921
        %v3974 = vpack.c.b16 %v3973, %v3972
        %v3977 = vsel %vm1685, %v3954, 0
        %v3980 = vsel %vm1685, %v3955, 0
        %v3983 = vsel %vm1685, %v3956, 0
        %v3986 = vsel %vm1685, %v3957, 0
        %v3989 = vsel %vm1685, %v3958, 0
        %v3992 = vsel %vm1685, %v3959, 0
        %v3995 = vsel %vm1685, %v3960, 0
        %v3998 = vsel %vm1685, %v3961, 0
        %v4001 = vsel %vm1685, %v3962, 0
        %v4004 = vsel %vm1685, %v3963, 0
        %v4007 = vsel %vm1685, %v3964, 0
        %v4010 = vsel %vm1685, %v3965, 0
        %v4013 = vsel %vm1685, %v3966, 0
        %v4016 = vsel %vm1685, %v3967, 0
        %v4019 = vsel %vm1685, %v3968, 0
        %v4022 = vsel %vm1685, %v3969, 0
        %4024 = vmatprep.subr.bf16.mxu0 0
        %4025 = vmatpush1.bf16.msra.mxu0 %v3974
        %4026 = vmatprep.subr.bf16.mxu0 0
        %4027 = vmatpush1.bf16.msra.mxu0 0
        %4028 = vmatprep.subr.bf16.mxu0 0
        %4029 = vmatpush1.bf16.msra.mxu0 0
        %4030 = vmatprep.subr.bf16.mxu0 0
        %4031 = vmatpush1.bf16.msra.mxu0 0
        %4032 = vmatprep.subr.bf16.mxu0 0
        %4033 = vmatpush1.bf16.msra.mxu0 0
        %4034 = vmatprep.subr.bf16.mxu0 0
        %4035 = vmatpush1.bf16.msra.mxu0 0
        %4036 = vmatprep.subr.bf16.mxu0 0
        %4037 = vmatpush1.bf16.msra.mxu0 0
        %4038 = vmatprep.subr.bf16.mxu0 0
        %4039 = vmatpush1.bf16.msra.mxu0 0
        %4040 = vmatprep.subr.bf16.mxu0 0
        %4041 = vmatpush1.bf16.msra.mxu0 0
        %4042 = vmatprep.subr.bf16.mxu0 0
        %4043 = vmatpush1.bf16.msra.mxu0 0
        %4044 = vmatprep.subr.bf16.mxu0 0
        %4045 = vmatpush1.bf16.msra.mxu0 0
        %4046 = vmatprep.subr.bf16.mxu0 0
        %4047 = vmatpush1.bf16.msra.mxu0 0
        %4048 = vmatprep.subr.bf16.mxu0 0
        %4049 = vmatpush1.bf16.msra.mxu0 0
        %4050 = vmatprep.subr.bf16.mxu0 0
        %4051 = vmatpush1.bf16.msra.mxu0 0
        %4052 = vmatprep.subr.bf16.mxu0 0
        %4053 = vmatpush1.bf16.msra.mxu0 0
        %4054 = vmatprep.subr.bf16.mxu0 0
        %4055 = vmatpush1.bf16.msra.mxu0 0
        %4056 = vmatprep.mubr.bf16.mxu0 0
        %4057 = vmatmul.mubr.bf16.gmra.mrb[0].mxu0 %v3977
        %v4058 = vpop.f32.mrb[0].mxu0
        %v4059 = vadd.f32 0.0, %v4058
        %v4060 = vpop.f32.mrb[0].mxu0
        %v4061 = vpop.f32.mrb[0].mxu0
        %v4062 = vadd.f32 0.0, %v4061
        %v4063 = vpop.f32.mrb[0].mxu0
        %4064 = vmatprep.mubr.bf16.mxu0 0
        %4065 = vmatmul.mubr.bf16.gmra.mrb[0].mxu0 %v3980
        %v4066 = vpop.f32.mrb[0].mxu0
        %v4067 = vadd.f32 0.0, %v4066
        %v4068 = vpop.f32.mrb[0].mxu0
        %v4069 = vpop.f32.mrb[0].mxu0
        %v4070 = vadd.f32 0.0, %v4069
        %v4071 = vpop.f32.mrb[0].mxu0
        %4072 = vmatprep.mubr.bf16.mxu0 0
        %4073 = vmatmul.mubr.bf16.gmra.mrb[0].mxu0 %v3983
        %v4074 = vpop.f32.mrb[0].mxu0
        %v4075 = vadd.f32 0.0, %v4074
        %v4076 = vpop.f32.mrb[0].mxu0
        %v4077 = vpop.f32.mrb[0].mxu0
        %v4078 = vadd.f32 0.0, %v4077
        %v4079 = vpop.f32.mrb[0].mxu0
        %4080 = vmatprep.mubr.bf16.mxu0 0
        %4081 = vmatmul.mubr.bf16.gmra.mrb[0].mxu0 %v3986
        %v4082 = vpop.f32.mrb[0].mxu0
        %v4083 = vadd.f32 0.0, %v4082
        %v4084 = vpop.f32.mrb[0].mxu0
        %v4085 = vpop.f32.mrb[0].mxu0
        %v4086 = vadd.f32 0.0, %v4085
        %v4087 = vpop.f32.mrb[0].mxu0
        %4088 = vmatprep.mubr.bf16.mxu0 0
        %4089 = vmatmul.mubr.bf16.gmra.mrb[0].mxu0 %v3989
        %v4090 = vpop.f32.mrb[0].mxu0
        %v4091 = vadd.f32 0.0, %v4090
        %v4092 = vpop.f32.mrb[0].mxu0
        %v4093 = vpop.f32.mrb[0].mxu0
        %v4094 = vadd.f32 0.0, %v4093
        %v4095 = vpop.f32.mrb[0].mxu0
        %4096 = vmatprep.mubr.bf16.mxu0 0
        %4097 = vmatmul.mubr.bf16.gmra.mrb[0].mxu0 %v3992
        %v4098 = vpop.f32.mrb[0].mxu0
        %v4099 = vadd.f32 0.0, %v4098
        %v4100 = vpop.f32.mrb[0].mxu0
        %v4101 = vpop.f32.mrb[0].mxu0
        %v4102 = vadd.f32 0.0, %v4101
        %v4103 = vpop.f32.mrb[0].mxu0
        %4104 = vmatprep.mubr.bf16.mxu0 0
        %4105 = vmatmul.mubr.bf16.gmra.mrb[0].mxu0 %v3995
        %v4106 = vpop.f32.mrb[0].mxu0
        %v4107 = vadd.f32 0.0, %v4106
        %v4108 = vpop.f32.mrb[0].mxu0
        %v4109 = vpop.f32.mrb[0].mxu0
        %v4110 = vadd.f32 0.0, %v4109
        %v4111 = vpop.f32.mrb[0].mxu0
        %4112 = vmatprep.mubr.bf16.mxu0 0
        %4113 = vmatmul.mubr.bf16.gmra.mrb[0].mxu0 %v3998
        %v4114 = vpop.f32.mrb[0].mxu0
        %v4115 = vadd.f32 0.0, %v4114
        %v4116 = vpop.f32.mrb[0].mxu0
        %v4117 = vpop.f32.mrb[0].mxu0
        %v4118 = vadd.f32 0.0, %v4117
        %v4119 = vpop.f32.mrb[0].mxu0
        %4120 = vmatprep.mubr.bf16.mxu0 0
        %4121 = vmatmul.mubr.bf16.gmra.mrb[0].mxu0 %v4001
        %v4122 = vpop.f32.mrb[0].mxu0
        %v4123 = vadd.f32 0.0, %v4122
        %v4124 = vpop.f32.mrb[0].mxu0
        %v4125 = vpop.f32.mrb[0].mxu0
        %v4126 = vadd.f32 0.0, %v4125
        %v4127 = vpop.f32.mrb[0].mxu0
        %4128 = vmatprep.mubr.bf16.mxu0 0
        %4129 = vmatmul.mubr.bf16.gmra.mrb[0].mxu0 %v4004
        %v4130 = vpop.f32.mrb[0].mxu0
        %v4131 = vadd.f32 0.0, %v4130
        %v4132 = vpop.f32.mrb[0].mxu0
        %v4133 = vpop.f32.mrb[0].mxu0
        %v4134 = vadd.f32 0.0, %v4133
        %v4135 = vpop.f32.mrb[0].mxu0
        %4136 = vmatprep.mubr.bf16.mxu0 0
        %4137 = vmatmul.mubr.bf16.gmra.mrb[0].mxu0 %v4007
        %v4138 = vpop.f32.mrb[0].mxu0
        %v4139 = vadd.f32 0.0, %v4138
        %v4140 = vpop.f32.mrb[0].mxu0
        %v4141 = vpop.f32.mrb[0].mxu0
        %v4142 = vadd.f32 0.0, %v4141
        %v4143 = vpop.f32.mrb[0].mxu0
        %4144 = vmatprep.mubr.bf16.mxu0 0
        %4145 = vmatmul.mubr.bf16.gmra.mrb[0].mxu0 %v4010
        %v4146 = vpop.f32.mrb[0].mxu0
        %v4147 = vadd.f32 0.0, %v4146
        %v4148 = vpop.f32.mrb[0].mxu0
        %v4149 = vpop.f32.mrb[0].mxu0
        %v4150 = vadd.f32 0.0, %v4149
        %v4151 = vpop.f32.mrb[0].mxu0
        %4152 = vmatprep.mubr.bf16.mxu0 0
        %4153 = vmatmul.mubr.bf16.gmra.mrb[0].mxu0 %v4013
        %v4154 = vpop.f32.mrb[0].mxu0
        %v4155 = vadd.f32 0.0, %v4154
        %v4156 = vpop.f32.mrb[0].mxu0
        %v4157 = vpop.f32.mrb[0].mxu0
        %v4158 = vadd.f32 0.0, %v4157
        %v4159 = vpop.f32.mrb[0].mxu0
        %4160 = vmatprep.mubr.bf16.mxu0 0
        %4161 = vmatmul.mubr.bf16.gmra.mrb[0].mxu0 %v4016
        %v4162 = vpop.f32.mrb[0].mxu0
        %v4163 = vadd.f32 0.0, %v4162
        %v4164 = vpop.f32.mrb[0].mxu0
        %v4165 = vpop.f32.mrb[0].mxu0
        %v4166 = vadd.f32 0.0, %v4165
        %v4167 = vpop.f32.mrb[0].mxu0
        %4168 = vmatprep.mubr.bf16.mxu0 0
        %4169 = vmatmul.mubr.bf16.gmra.mrb[0].mxu0 %v4019
        %v4170 = vpop.f32.mrb[0].mxu0
        %v4171 = vadd.f32 0.0, %v4170
        %v4172 = vpop.f32.mrb[0].mxu0
        %v4173 = vpop.f32.mrb[0].mxu0
        %v4174 = vadd.f32 0.0, %v4173
        %v4175 = vpop.f32.mrb[0].mxu0
        %4176 = vmatprep.mubr.bf16.mxu0 0
        %4177 = vmatmul.mubr.bf16.gmra.mrb[0].mxu0 %v4022
        %v4178 = vpop.f32.mrb[0].mxu0
        %v4179 = vadd.f32 0.0, %v4178
        %v4180 = vpop.f32.mrb[0].mxu0
        %v4181 = vpop.f32.mrb[0].mxu0
        %v4182 = vadd.f32 0.0, %v4181
        %v4183 = vpop.f32.mrb[0].mxu0
        %4184 = vdwg.mxu0
        %v4185 = vadd.f32 %v3711, %v4059
        %v4186 = vadd.f32 %v3712, %v4062
        %v4187 = vadd.f32 %v3713, %v4067
        %v4188 = vadd.f32 %v3714, %v4070
        %v4189 = vadd.f32 %v3715, %v4075
        %v4190 = vadd.f32 %v3716, %v4078
        %v4191 = vadd.f32 %v3717, %v4083
        %v4192 = vadd.f32 %v3718, %v4086
        %v4193 = vadd.f32 %v3719, %v4091
        %v4194 = vadd.f32 %v3720, %v4094
        %v4195 = vadd.f32 %v3721, %v4099
        %v4196 = vadd.f32 %v3722, %v4102
        %v4197 = vadd.f32 %v3723, %v4107
        %v4198 = vadd.f32 %v3724, %v4110
        %v4199 = vadd.f32 %v3725, %v4115
        %v4200 = vadd.f32 %v3726, %v4118
        %v4201 = vadd.f32 %v3727, %v4123
        %v4202 = vadd.f32 %v3728, %v4126
        %v4203 = vadd.f32 %v3729, %v4131
        %v4204 = vadd.f32 %v3730, %v4134
        %v4205 = vadd.f32 %v3731, %v4139
        %v4206 = vadd.f32 %v3732, %v4142
        %v4207 = vadd.f32 %v3733, %v4147
        %v4208 = vadd.f32 %v3734, %v4150
        %v4209 = vadd.f32 %v3735, %v4155
        %v4210 = vadd.f32 %v3736, %v4158
        %v4211 = vadd.f32 %v3737, %v4163
        %v4212 = vadd.f32 %v3738, %v4166
        %v4213 = vadd.f32 %v3739, %v4171
        %v4214 = vadd.f32 %v3740, %v4174
        %v4215 = vadd.f32 %v3741, %v4179
        %v4216 = vadd.f32 %v3742, %v4182
        %s4217 = scalar_lea.vmem [#allocation2], 24
        %v4218 = vld [vmem:[%s4217] sm:$0xf]
        %v4219 = vld [vmem:[%s4217 + $0x4] sm:$0xf]
        %v4220 = vld [vmem:[%s4217 + $0xc] sm:$0xf]
        %v4221 = vld [vmem:[%s4217 + $0x10] sm:$0xf]
        %v4222 = vld [vmem:[%s4217 + $0x18] sm:$0xf]
        %v4223 = vld [vmem:[%s4217 + $0x1c] sm:$0xf]
        %v4224 = vld [vmem:[%s4217 + $0x24] sm:$0xf]
        %v4225 = vld [vmem:[%s4217 + $0x28] sm:$0xf]
        %v4226 = vld [vmem:[%s4217 + $0x30] sm:$0xf]
        %v4227 = vld [vmem:[%s4217 + $0x34] sm:$0xf]
        %v4228 = vld [vmem:[%s4217 + $0x3c] sm:$0xf]
        %v4229 = vld [vmem:[%s4217 + $0x40] sm:$0xf]
        %v4230 = vld [vmem:[%s4217 + $0x48] sm:$0xf]
        %v4231 = vld [vmem:[%s4217 + $0x4c] sm:$0xf]
        %v4232 = vld [vmem:[%s4217 + $0x54] sm:$0xf]
        %v4233 = vld [vmem:[%s4217 + $0x58] sm:$0xf]
        %v4234 = vld [vmem:[%s4217 + $0x60] sm:$0xf]
        %v4235 = vld [vmem:[%s4217 + $0x64] sm:$0xf]
        %v4236 = vld [vmem:[%s4217 + $0x6c] sm:$0xf]
        %v4237 = vld [vmem:[%s4217 + $0x70] sm:$0xf]
        %v4238 = vld [vmem:[%s4217 + $0x78] sm:$0xf]
        %v4239 = vld [vmem:[%s4217 + $0x7c] sm:$0xf]
        %v4240 = vld [vmem:[%s4217 + $0x84] sm:$0xf]
        %v4241 = vld [vmem:[%s4217 + $0x88] sm:$0xf]
        %v4242 = vld [vmem:[%s4217 + $0x90] sm:$0xf]
        %v4243 = vld [vmem:[%s4217 + $0x94] sm:$0xf]
        %v4244 = vld [vmem:[%s4217 + $0x9c] sm:$0xf]
        %v4245 = vld [vmem:[%s4217 + $0xa0] sm:$0xf]
        %v4246 = vld [vmem:[%s4217 + $0xa8] sm:$0xf]
        %v4247 = vld [vmem:[%s4217 + $0xac] sm:$0xf]
        %v4248 = vld [vmem:[%s4217 + $0xb4] sm:$0xf]
        %v4249 = vld [vmem:[%s4217 + $0xb8] sm:$0xf]
        %s4250 = scalar_lea.vmem %s4, 48
        %v4251 = vld [vmem:[%s4250] sm:$0xf]
        %v4252 = vld [vmem:[%s4250 + $0x4] sm:$0xf]
        %v4285 = vunpack.c.l.b16 %v4218
        %v4286 = vunpack.c.l.b16 %v4219
        %v4287 = vunpack.c.l.b16 %v4220
        %v4288 = vunpack.c.l.b16 %v4221
        %v4289 = vunpack.c.l.b16 %v4222
        %v4290 = vunpack.c.l.b16 %v4223
        %v4291 = vunpack.c.l.b16 %v4224
        %v4292 = vunpack.c.l.b16 %v4225
        %v4293 = vunpack.c.l.b16 %v4226
        %v4294 = vunpack.c.l.b16 %v4227
        %v4295 = vunpack.c.l.b16 %v4228
        %v4296 = vunpack.c.l.b16 %v4229
        %v4297 = vunpack.c.l.b16 %v4230
        %v4298 = vunpack.c.l.b16 %v4231
        %v4299 = vunpack.c.l.b16 %v4232
        %v4300 = vunpack.c.l.b16 %v4233
        %v4301 = vunpack.c.l.b16 %v4234
        %v4302 = vunpack.c.l.b16 %v4235
        %v4303 = vunpack.c.l.b16 %v4236
        %v4304 = vunpack.c.l.b16 %v4237
        %v4305 = vunpack.c.l.b16 %v4238
        %v4306 = vunpack.c.l.b16 %v4239
        %v4307 = vunpack.c.l.b16 %v4240
        %v4308 = vunpack.c.l.b16 %v4241
        %v4309 = vunpack.c.l.b16 %v4242
        %v4310 = vunpack.c.l.b16 %v4243
        %v4311 = vunpack.c.l.b16 %v4244
        %v4312 = vunpack.c.l.b16 %v4245
        %v4313 = vunpack.c.l.b16 %v4246
        %v4314 = vunpack.c.l.b16 %v4247
        %v4315 = vunpack.c.l.b16 %v4248
        %v4316 = vunpack.c.l.b16 %v4249
        %v4317 = vpack.c.b16 %v4286, %v4285
        %v4318 = vpack.c.b16 %v4288, %v4287
        %v4319 = vpack.c.b16 %v4290, %v4289
        %v4320 = vpack.c.b16 %v4292, %v4291
        %v4321 = vpack.c.b16 %v4294, %v4293
        %v4322 = vpack.c.b16 %v4296, %v4295
        %v4323 = vpack.c.b16 %v4298, %v4297
        %v4324 = vpack.c.b16 %v4300, %v4299
        %v4325 = vpack.c.b16 %v4302, %v4301
        %v4326 = vpack.c.b16 %v4304, %v4303
        %v4327 = vpack.c.b16 %v4306, %v4305
        %v4328 = vpack.c.b16 %v4308, %v4307
        %v4329 = vpack.c.b16 %v4310, %v4309
        %v4330 = vpack.c.b16 %v4312, %v4311
        %v4331 = vpack.c.b16 %v4314, %v4313
        %v4332 = vpack.c.b16 %v4316, %v4315
        %v4335 = vunpack.c.l.b16 %v4251
        %v4336 = vunpack.c.l.b16 %v4252
        %v4337 = vpack.c.b16 %v4336, %v4335
        %v4340 = vsel %vm1685, %v4317, 0
        %v4343 = vsel %vm1685, %v4318, 0
        %v4346 = vsel %vm1685, %v4319, 0
        %v4349 = vsel %vm1685, %v4320, 0
        %v4352 = vsel %vm1685, %v4321, 0
        %v4355 = vsel %vm1685, %v4322, 0
        %v4358 = vsel %vm1685, %v4323, 0
        %v4361 = vsel %vm1685, %v4324, 0
        %v4364 = vsel %vm1685, %v4325, 0
        %v4367 = vsel %vm1685, %v4326, 0
        %v4370 = vsel %vm1685, %v4327, 0
        %v4373 = vsel %vm1685, %v4328, 0
        %v4376 = vsel %vm1685, %v4329, 0
        %v4379 = vsel %vm1685, %v4330, 0
        %v4382 = vsel %vm1685, %v4331, 0
        %v4385 = vsel %vm1685, %v4332, 0
        %4387 = vmatprep.subr.bf16.mxu0 0
        %4388 = vmatpush1.bf16.msra.mxu0 %v4337
        %4389 = vmatprep.subr.bf16.mxu0 0
        %4390 = vmatpush1.bf16.msra.mxu0 0
        %4391 = vmatprep.subr.bf16.mxu0 0
        %4392 = vmatpush1.bf16.msra.mxu0 0
        %4393 = vmatprep.subr.bf16.mxu0 0
        %4394 = vmatpush1.bf16.msra.mxu0 0
        %4395 = vmatprep.subr.bf16.mxu0 0
        %4396 = vmatpush1.bf16.msra.mxu0 0
        %4397 = vmatprep.subr.bf16.mxu0 0
        %4398 = vmatpush1.bf16.msra.mxu0 0
        %4399 = vmatprep.subr.bf16.mxu0 0
        %4400 = vmatpush1.bf16.msra.mxu0 0
        %4401 = vmatprep.subr.bf16.mxu0 0
        %4402 = vmatpush1.bf16.msra.mxu0 0
        %4403 = vmatprep.subr.bf16.mxu0 0
        %4404 = vmatpush1.bf16.msra.mxu0 0
        %4405 = vmatprep.subr.bf16.mxu0 0
        %4406 = vmatpush1.bf16.msra.mxu0 0
        %4407 = vmatprep.subr.bf16.mxu0 0
        %4408 = vmatpush1.bf16.msra.mxu0 0
        %4409 = vmatprep.subr.bf16.mxu0 0
        %4410 = vmatpush1.bf16.msra.mxu0 0
        %4411 = vmatprep.subr.bf16.mxu0 0
        %4412 = vmatpush1.bf16.msra.mxu0 0
        %4413 = vmatprep.subr.bf16.mxu0 0
        %4414 = vmatpush1.bf16.msra.mxu0 0
        %4415 = vmatprep.subr.bf16.mxu0 0
        %4416 = vmatpush1.bf16.msra.mxu0 0
        %4417 = vmatprep.subr.bf16.mxu0 0
        %4418 = vmatpush1.bf16.msra.mxu0 0
        %4419 = vmatprep.mubr.bf16.mxu0 0
        %4420 = vmatmul.mubr.bf16.gmra.mrb[0].mxu0 %v4340
        %v4421 = vpop.f32.mrb[0].mxu0
        %v4422 = vadd.f32 0.0, %v4421
        %v4423 = vpop.f32.mrb[0].mxu0
        %v4424 = vpop.f32.mrb[0].mxu0
        %v4425 = vadd.f32 0.0, %v4424
        %v4426 = vpop.f32.mrb[0].mxu0
        %4427 = vmatprep.mubr.bf16.mxu0 0
        %4428 = vmatmul.mubr.bf16.gmra.mrb[0].mxu0 %v4343
        %v4429 = vpop.f32.mrb[0].mxu0
        %v4430 = vadd.f32 0.0, %v4429
        %v4431 = vpop.f32.mrb[0].mxu0
        %v4432 = vpop.f32.mrb[0].mxu0
        %v4433 = vadd.f32 0.0, %v4432
        %v4434 = vpop.f32.mrb[0].mxu0
        %4435 = vmatprep.mubr.bf16.mxu0 0
        %4436 = vmatmul.mubr.bf16.gmra.mrb[0].mxu0 %v4346
        %v4437 = vpop.f32.mrb[0].mxu0
        %v4438 = vadd.f32 0.0, %v4437
        %v4439 = vpop.f32.mrb[0].mxu0
        %v4440 = vpop.f32.mrb[0].mxu0
        %v4441 = vadd.f32 0.0, %v4440
        %v4442 = vpop.f32.mrb[0].mxu0
        %4443 = vmatprep.mubr.bf16.mxu0 0
        %4444 = vmatmul.mubr.bf16.gmra.mrb[0].mxu0 %v4349
        %v4445 = vpop.f32.mrb[0].mxu0
        %v4446 = vadd.f32 0.0, %v4445
        %v4447 = vpop.f32.mrb[0].mxu0
        %v4448 = vpop.f32.mrb[0].mxu0
        %v4449 = vadd.f32 0.0, %v4448
        %v4450 = vpop.f32.mrb[0].mxu0
        %4451 = vmatprep.mubr.bf16.mxu0 0
        %4452 = vmatmul.mubr.bf16.gmra.mrb[0].mxu0 %v4352
        %v4453 = vpop.f32.mrb[0].mxu0
        %v4454 = vadd.f32 0.0, %v4453
        %v4455 = vpop.f32.mrb[0].mxu0
        %v4456 = vpop.f32.mrb[0].mxu0
        %v4457 = vadd.f32 0.0, %v4456
        %v4458 = vpop.f32.mrb[0].mxu0
        %4459 = vmatprep.mubr.bf16.mxu0 0
        %4460 = vmatmul.mubr.bf16.gmra.mrb[0].mxu0 %v4355
        %v4461 = vpop.f32.mrb[0].mxu0
        %v4462 = vadd.f32 0.0, %v4461
        %v4463 = vpop.f32.mrb[0].mxu0
        %v4464 = vpop.f32.mrb[0].mxu0
        %v4465 = vadd.f32 0.0, %v4464
        %v4466 = vpop.f32.mrb[0].mxu0
        %4467 = vmatprep.mubr.bf16.mxu0 0
        %4468 = vmatmul.mubr.bf16.gmra.mrb[0].mxu0 %v4358
        %v4469 = vpop.f32.mrb[0].mxu0
        %v4470 = vadd.f32 0.0, %v4469
        %v4471 = vpop.f32.mrb[0].mxu0
        %v4472 = vpop.f32.mrb[0].mxu0
        %v4473 = vadd.f32 0.0, %v4472
        %v4474 = vpop.f32.mrb[0].mxu0
        %4475 = vmatprep.mubr.bf16.mxu0 0
        %4476 = vmatmul.mubr.bf16.gmra.mrb[0].mxu0 %v4361
        %v4477 = vpop.f32.mrb[0].mxu0
        %v4478 = vadd.f32 0.0, %v4477
        %v4479 = vpop.f32.mrb[0].mxu0
        %v4480 = vpop.f32.mrb[0].mxu0
        %v4481 = vadd.f32 0.0, %v4480
        %v4482 = vpop.f32.mrb[0].mxu0
        %4483 = vmatprep.mubr.bf16.mxu0 0
        %4484 = vmatmul.mubr.bf16.gmra.mrb[0].mxu0 %v4364
        %v4485 = vpop.f32.mrb[0].mxu0
        %v4486 = vadd.f32 0.0, %v4485
        %v4487 = vpop.f32.mrb[0].mxu0
        %v4488 = vpop.f32.mrb[0].mxu0
        %v4489 = vadd.f32 0.0, %v4488
        %v4490 = vpop.f32.mrb[0].mxu0
        %4491 = vmatprep.mubr.bf16.mxu0 0
        %4492 = vmatmul.mubr.bf16.gmra.mrb[0].mxu0 %v4367
        %v4493 = vpop.f32.mrb[0].mxu0
        %v4494 = vadd.f32 0.0, %v4493
        %v4495 = vpop.f32.mrb[0].mxu0
        %v4496 = vpop.f32.mrb[0].mxu0
        %v4497 = vadd.f32 0.0, %v4496
        %v4498 = vpop.f32.mrb[0].mxu0
        %4499 = vmatprep.mubr.bf16.mxu0 0
        %4500 = vmatmul.mubr.bf16.gmra.mrb[0].mxu0 %v4370
        %v4501 = vpop.f32.mrb[0].mxu0
        %v4502 = vadd.f32 0.0, %v4501
        %v4503 = vpop.f32.mrb[0].mxu0
        %v4504 = vpop.f32.mrb[0].mxu0
        %v4505 = vadd.f32 0.0, %v4504
        %v4506 = vpop.f32.mrb[0].mxu0
        %4507 = vmatprep.mubr.bf16.mxu0 0
        %4508 = vmatmul.mubr.bf16.gmra.mrb[0].mxu0 %v4373
        %v4509 = vpop.f32.mrb[0].mxu0
        %v4510 = vadd.f32 0.0, %v4509
        %v4511 = vpop.f32.mrb[0].mxu0
        %v4512 = vpop.f32.mrb[0].mxu0
        %v4513 = vadd.f32 0.0, %v4512
        %v4514 = vpop.f32.mrb[0].mxu0
        %4515 = vmatprep.mubr.bf16.mxu0 0
        %4516 = vmatmul.mubr.bf16.gmra.mrb[0].mxu0 %v4376
        %v4517 = vpop.f32.mrb[0].mxu0
        %v4518 = vadd.f32 0.0, %v4517
        %v4519 = vpop.f32.mrb[0].mxu0
        %v4520 = vpop.f32.mrb[0].mxu0
        %v4521 = vadd.f32 0.0, %v4520
        %v4522 = vpop.f32.mrb[0].mxu0
        %4523 = vmatprep.mubr.bf16.mxu0 0
        %4524 = vmatmul.mubr.bf16.gmra.mrb[0].mxu0 %v4379
        %v4525 = vpop.f32.mrb[0].mxu0
        %v4526 = vadd.f32 0.0, %v4525
        %v4527 = vpop.f32.mrb[0].mxu0
        %v4528 = vpop.f32.mrb[0].mxu0
        %v4529 = vadd.f32 0.0, %v4528
        %v4530 = vpop.f32.mrb[0].mxu0
        %4531 = vmatprep.mubr.bf16.mxu0 0
        %4532 = vmatmul.mubr.bf16.gmra.mrb[0].mxu0 %v4382
        %v4533 = vpop.f32.mrb[0].mxu0
        %v4534 = vadd.f32 0.0, %v4533
        %v4535 = vpop.f32.mrb[0].mxu0
        %v4536 = vpop.f32.mrb[0].mxu0
        %v4537 = vadd.f32 0.0, %v4536
        %v4538 = vpop.f32.mrb[0].mxu0
        %4539 = vmatprep.mubr.bf16.mxu0 0
        %4540 = vmatmul.mubr.bf16.gmra.mrb[0].mxu0 %v4385
        %v4541 = vpop.f32.mrb[0].mxu0
        %v4542 = vadd.f32 0.0, %v4541
        %v4543 = vpop.f32.mrb[0].mxu0
        %v4544 = vpop.f32.mrb[0].mxu0
        %v4545 = vadd.f32 0.0, %v4544
        %v4546 = vpop.f32.mrb[0].mxu0
        %4547 = vdwg.mxu0
        %v4548 = vadd.f32 %v4185, %v4422
        %v4549 = vadd.f32 %v4186, %v4425
        %v4550 = vadd.f32 %v4187, %v4430
        %v4551 = vadd.f32 %v4188, %v4433
        %v4552 = vadd.f32 %v4189, %v4438
        %v4553 = vadd.f32 %v4190, %v4441
        %v4554 = vadd.f32 %v4191, %v4446
        %v4555 = vadd.f32 %v4192, %v4449
        %v4556 = vadd.f32 %v4193, %v4454
        %v4557 = vadd.f32 %v4194, %v4457
        %v4558 = vadd.f32 %v4195, %v4462
        %v4559 = vadd.f32 %v4196, %v4465
        %v4560 = vadd.f32 %v4197, %v4470
        %v4561 = vadd.f32 %v4198, %v4473
        %v4562 = vadd.f32 %v4199, %v4478
        %v4563 = vadd.f32 %v4200, %v4481
        %v4564 = vadd.f32 %v4201, %v4486
        %v4565 = vadd.f32 %v4202, %v4489
        %v4566 = vadd.f32 %v4203, %v4494
        %v4567 = vadd.f32 %v4204, %v4497
        %v4568 = vadd.f32 %v4205, %v4502
        %v4569 = vadd.f32 %v4206, %v4505
        %v4570 = vadd.f32 %v4207, %v4510
        %v4571 = vadd.f32 %v4208, %v4513
        %v4572 = vadd.f32 %v4209, %v4518
        %v4573 = vadd.f32 %v4210, %v4521
        %v4574 = vadd.f32 %v4211, %v4526
        %v4575 = vadd.f32 %v4212, %v4529
        %v4576 = vadd.f32 %v4213, %v4534
        %v4577 = vadd.f32 %v4214, %v4537
        %v4578 = vadd.f32 %v4215, %v4542
        %v4579 = vadd.f32 %v4216, %v4545
        %v4580 = vld [vmem:[%s4217] sm:$0xf]
        %v4581 = vld [vmem:[%s4217 + $0x4] sm:$0xf]
        %v4582 = vld [vmem:[%s4217 + $0x8] sm:$0x1]
        %v4583 = vld [vmem:[%s4217 + $0xc] sm:$0xf]
        %v4584 = vld [vmem:[%s4217 + $0x10] sm:$0xf]
        %v4585 = vld [vmem:[%s4217 + $0x14] sm:$0x1]
        %v4586 = vld [vmem:[%s4217 + $0x18] sm:$0xf]
        %v4587 = vld [vmem:[%s4217 + $0x1c] sm:$0xf]
        %v4588 = vld [vmem:[%s4217 + $0x20] sm:$0x1]
        %v4589 = vld [vmem:[%s4217 + $0x24] sm:$0xf]
        %v4590 = vld [vmem:[%s4217 + $0x28] sm:$0xf]
        %v4591 = vld [vmem:[%s4217 + $0x2c] sm:$0x1]
        %v4592 = vld [vmem:[%s4217 + $0x30] sm:$0xf]
        %v4593 = vld [vmem:[%s4217 + $0x34] sm:$0xf]
        %v4594 = vld [vmem:[%s4217 + $0x38] sm:$0x1]
        %v4595 = vld [vmem:[%s4217 + $0x3c] sm:$0xf]
        %v4596 = vld [vmem:[%s4217 + $0x40] sm:$0xf]
        %v4597 = vld [vmem:[%s4217 + $0x44] sm:$0x1]
        %v4598 = vld [vmem:[%s4217 + $0x48] sm:$0xf]
        %v4599 = vld [vmem:[%s4217 + $0x4c] sm:$0xf]
        %v4600 = vld [vmem:[%s4217 + $0x50] sm:$0x1]
        %v4601 = vld [vmem:[%s4217 + $0x54] sm:$0xf]
        %v4602 = vld [vmem:[%s4217 + $0x58] sm:$0xf]
        %v4603 = vld [vmem:[%s4217 + $0x5c] sm:$0x1]
        %v4604 = vld [vmem:[%s4217 + $0x60] sm:$0xf]
        %v4605 = vld [vmem:[%s4217 + $0x64] sm:$0xf]
        %v4606 = vld [vmem:[%s4217 + $0x68] sm:$0x1]
        %v4607 = vld [vmem:[%s4217 + $0x6c] sm:$0xf]
        %v4608 = vld [vmem:[%s4217 + $0x70] sm:$0xf]
        %v4609 = vld [vmem:[%s4217 + $0x74] sm:$0x1]
        %v4610 = vld [vmem:[%s4217 + $0x78] sm:$0xf]
        %v4611 = vld [vmem:[%s4217 + $0x7c] sm:$0xf]
        %v4612 = vld [vmem:[%s4217 + $0x80] sm:$0x1]
        %v4613 = vld [vmem:[%s4217 + $0x84] sm:$0xf]
        %v4614 = vld [vmem:[%s4217 + $0x88] sm:$0xf]
        %v4615 = vld [vmem:[%s4217 + $0x8c] sm:$0x1]
        %v4616 = vld [vmem:[%s4217 + $0x90] sm:$0xf]
        %v4617 = vld [vmem:[%s4217 + $0x94] sm:$0xf]
        %v4618 = vld [vmem:[%s4217 + $0x98] sm:$0x1]
        %v4619 = vld [vmem:[%s4217 + $0x9c] sm:$0xf]
        %v4620 = vld [vmem:[%s4217 + $0xa0] sm:$0xf]
        %v4621 = vld [vmem:[%s4217 + $0xa4] sm:$0x1]
        %v4622 = vld [vmem:[%s4217 + $0xa8] sm:$0xf]
        %v4623 = vld [vmem:[%s4217 + $0xac] sm:$0xf]
        %v4624 = vld [vmem:[%s4217 + $0xb0] sm:$0x1]
        %v4625 = vld [vmem:[%s4217 + $0xb4] sm:$0xf]
        %v4626 = vld [vmem:[%s4217 + $0xb8] sm:$0xf]
        %v4627 = vld [vmem:[%s4217 + $0xbc] sm:$0x1]
        %v4629 = vshrl.u32 %v4580, 16
        %v4631 = vrot.slane %v4629, 4
        %v4632 = vshll.u32 %v4580, 16
        %v4634 = vrot.slane %v4632, 5
        %v4635 = vor.u32 %v4631, %v4634
        %v4636 = vrot.slane %v4635, 4
        %v4638 = vshll.u32 %v4581, 16
        %v4640 = vrot.slane %v4638, 5
        %v4641 = vsel %vm1243, %v4636, %v4640
        %v4642 = vshrl.u32 %v4581, 16
        %v4644 = vrot.slane %v4642, 4
        %v4645 = vor.u32 %v4644, %v4640
        %v4646 = vrot.slane %v4645, 4
        %v4648 = vshll.u32 %v4582, 16
        %v4650 = vrot.slane %v4648, 5
        %v4651 = vsel %vm1243, %v4646, %v4650
        %v4653 = vshrl.u32 %v4583, 16
        %v4655 = vrot.slane %v4653, 4
        %v4656 = vshll.u32 %v4583, 16
        %v4658 = vrot.slane %v4656, 5
        %v4659 = vor.u32 %v4655, %v4658
        %v4660 = vrot.slane %v4659, 4
        %v4662 = vshll.u32 %v4584, 16
        %v4664 = vrot.slane %v4662, 5
        %v4665 = vsel %vm1243, %v4660, %v4664
        %v4666 = vshrl.u32 %v4584, 16
        %v4668 = vrot.slane %v4666, 4
        %v4669 = vor.u32 %v4668, %v4664
        %v4670 = vrot.slane %v4669, 4
        %v4672 = vshll.u32 %v4585, 16
        %v4674 = vrot.slane %v4672, 5
        %v4675 = vsel %vm1243, %v4670, %v4674
        %v4677 = vshrl.u32 %v4586, 16
        %v4679 = vrot.slane %v4677, 4
        %v4680 = vshll.u32 %v4586, 16
        %v4682 = vrot.slane %v4680, 5
        %v4683 = vor.u32 %v4679, %v4682
        %v4684 = vrot.slane %v4683, 4
        %v4686 = vshll.u32 %v4587, 16
        %v4688 = vrot.slane %v4686, 5
        %v4689 = vsel %vm1243, %v4684, %v4688
        %v4690 = vshrl.u32 %v4587, 16
        %v4692 = vrot.slane %v4690, 4
        %v4693 = vor.u32 %v4692, %v4688
        %v4694 = vrot.slane %v4693, 4
        %v4696 = vshll.u32 %v4588, 16
        %v4698 = vrot.slane %v4696, 5
        %v4699 = vsel %vm1243, %v4694, %v4698
        %v4701 = vshrl.u32 %v4589, 16
        %v4703 = vrot.slane %v4701, 4
        %v4704 = vshll.u32 %v4589, 16
        %v4706 = vrot.slane %v4704, 5
        %v4707 = vor.u32 %v4703, %v4706
        %v4708 = vrot.slane %v4707, 4
        %v4710 = vshll.u32 %v4590, 16
        %v4712 = vrot.slane %v4710, 5
        %v4713 = vsel %vm1243, %v4708, %v4712
        %v4714 = vshrl.u32 %v4590, 16
        %v4716 = vrot.slane %v4714, 4
        %v4717 = vor.u32 %v4716, %v4712
        %v4718 = vrot.slane %v4717, 4
        %v4720 = vshll.u32 %v4591, 16
        %v4722 = vrot.slane %v4720, 5
        %v4723 = vsel %vm1243, %v4718, %v4722
        %v4725 = vshrl.u32 %v4592, 16
        %v4727 = vrot.slane %v4725, 4
        %v4728 = vshll.u32 %v4592, 16
        %v4730 = vrot.slane %v4728, 5
        %v4731 = vor.u32 %v4727, %v4730
        %v4732 = vrot.slane %v4731, 4
        %v4734 = vshll.u32 %v4593, 16
        %v4736 = vrot.slane %v4734, 5
        %v4737 = vsel %vm1243, %v4732, %v4736
        %v4738 = vshrl.u32 %v4593, 16
        %v4740 = vrot.slane %v4738, 4
        %v4741 = vor.u32 %v4740, %v4736
        %v4742 = vrot.slane %v4741, 4
        %v4744 = vshll.u32 %v4594, 16
        %v4746 = vrot.slane %v4744, 5
        %v4747 = vsel %vm1243, %v4742, %v4746
        %v4749 = vshrl.u32 %v4595, 16
        %v4751 = vrot.slane %v4749, 4
        %v4752 = vshll.u32 %v4595, 16
        %v4754 = vrot.slane %v4752, 5
        %v4755 = vor.u32 %v4751, %v4754
        %v4756 = vrot.slane %v4755, 4
        %v4758 = vshll.u32 %v4596, 16
        %v4760 = vrot.slane %v4758, 5
        %v4761 = vsel %vm1243, %v4756, %v4760
        %v4762 = vshrl.u32 %v4596, 16
        %v4764 = vrot.slane %v4762, 4
        %v4765 = vor.u32 %v4764, %v4760
        %v4766 = vrot.slane %v4765, 4
        %v4768 = vshll.u32 %v4597, 16
        %v4770 = vrot.slane %v4768, 5
        %v4771 = vsel %vm1243, %v4766, %v4770
        %v4773 = vshrl.u32 %v4598, 16
        %v4775 = vrot.slane %v4773, 4
        %v4776 = vshll.u32 %v4598, 16
        %v4778 = vrot.slane %v4776, 5
        %v4779 = vor.u32 %v4775, %v4778
        %v4780 = vrot.slane %v4779, 4
        %v4782 = vshll.u32 %v4599, 16
        %v4784 = vrot.slane %v4782, 5
        %v4785 = vsel %vm1243, %v4780, %v4784
        %v4786 = vshrl.u32 %v4599, 16
        %v4788 = vrot.slane %v4786, 4
        %v4789 = vor.u32 %v4788, %v4784
        %v4790 = vrot.slane %v4789, 4
        %v4792 = vshll.u32 %v4600, 16
        %v4794 = vrot.slane %v4792, 5
        %v4795 = vsel %vm1243, %v4790, %v4794
        %v4797 = vshrl.u32 %v4601, 16
        %v4799 = vrot.slane %v4797, 4
        %v4800 = vshll.u32 %v4601, 16
        %v4802 = vrot.slane %v4800, 5
        %v4803 = vor.u32 %v4799, %v4802
        %v4804 = vrot.slane %v4803, 4
        %v4806 = vshll.u32 %v4602, 16
        %v4808 = vrot.slane %v4806, 5
        %v4809 = vsel %vm1243, %v4804, %v4808
        %v4810 = vshrl.u32 %v4602, 16
        %v4812 = vrot.slane %v4810, 4
        %v4813 = vor.u32 %v4812, %v4808
        %v4814 = vrot.slane %v4813, 4
        %v4816 = vshll.u32 %v4603, 16
        %v4818 = vrot.slane %v4816, 5
        %v4819 = vsel %vm1243, %v4814, %v4818
        %v4821 = vshrl.u32 %v4604, 16
        %v4823 = vrot.slane %v4821, 4
        %v4824 = vshll.u32 %v4604, 16
        %v4826 = vrot.slane %v4824, 5
        %v4827 = vor.u32 %v4823, %v4826
        %v4828 = vrot.slane %v4827, 4
        %v4830 = vshll.u32 %v4605, 16
        %v4832 = vrot.slane %v4830, 5
        %v4833 = vsel %vm1243, %v4828, %v4832
        %v4834 = vshrl.u32 %v4605, 16
        %v4836 = vrot.slane %v4834, 4
        %v4837 = vor.u32 %v4836, %v4832
        %v4838 = vrot.slane %v4837, 4
        %v4840 = vshll.u32 %v4606, 16
        %v4842 = vrot.slane %v4840, 5
        %v4843 = vsel %vm1243, %v4838, %v4842
        %v4845 = vshrl.u32 %v4607, 16
        %v4847 = vrot.slane %v4845, 4
        %v4848 = vshll.u32 %v4607, 16
        %v4850 = vrot.slane %v4848, 5
        %v4851 = vor.u32 %v4847, %v4850
        %v4852 = vrot.slane %v4851, 4
        %v4854 = vshll.u32 %v4608, 16
        %v4856 = vrot.slane %v4854, 5
        %v4857 = vsel %vm1243, %v4852, %v4856
        %v4858 = vshrl.u32 %v4608, 16
        %v4860 = vrot.slane %v4858, 4
        %v4861 = vor.u32 %v4860, %v4856
        %v4862 = vrot.slane %v4861, 4
        %v4864 = vshll.u32 %v4609, 16
        %v4866 = vrot.slane %v4864, 5
        %v4867 = vsel %vm1243, %v4862, %v4866
        %v4869 = vshrl.u32 %v4610, 16
        %v4871 = vrot.slane %v4869, 4
        %v4872 = vshll.u32 %v4610, 16
        %v4874 = vrot.slane %v4872, 5
        %v4875 = vor.u32 %v4871, %v4874
        %v4876 = vrot.slane %v4875, 4
        %v4878 = vshll.u32 %v4611, 16
        %v4880 = vrot.slane %v4878, 5
        %v4881 = vsel %vm1243, %v4876, %v4880
        %v4882 = vshrl.u32 %v4611, 16
        %v4884 = vrot.slane %v4882, 4
        %v4885 = vor.u32 %v4884, %v4880
        %v4886 = vrot.slane %v4885, 4
        %v4888 = vshll.u32 %v4612, 16
        %v4890 = vrot.slane %v4888, 5
        %v4891 = vsel %vm1243, %v4886, %v4890
        %v4893 = vshrl.u32 %v4613, 16
        %v4895 = vrot.slane %v4893, 4
        %v4896 = vshll.u32 %v4613, 16
        %v4898 = vrot.slane %v4896, 5
        %v4899 = vor.u32 %v4895, %v4898
        %v4900 = vrot.slane %v4899, 4
        %v4902 = vshll.u32 %v4614, 16
        %v4904 = vrot.slane %v4902, 5
        %v4905 = vsel %vm1243, %v4900, %v4904
        %v4906 = vshrl.u32 %v4614, 16
        %v4908 = vrot.slane %v4906, 4
        %v4909 = vor.u32 %v4908, %v4904
        %v4910 = vrot.slane %v4909, 4
        %v4912 = vshll.u32 %v4615, 16
        %v4914 = vrot.slane %v4912, 5
        %v4915 = vsel %vm1243, %v4910, %v4914
        %v4917 = vshrl.u32 %v4616, 16
        %v4919 = vrot.slane %v4917, 4
        %v4920 = vshll.u32 %v4616, 16
        %v4922 = vrot.slane %v4920, 5
        %v4923 = vor.u32 %v4919, %v4922
        %v4924 = vrot.slane %v4923, 4
        %v4926 = vshll.u32 %v4617, 16
        %v4928 = vrot.slane %v4926, 5
        %v4929 = vsel %vm1243, %v4924, %v4928
        %v4930 = vshrl.u32 %v4617, 16
        %v4932 = vrot.slane %v4930, 4
        %v4933 = vor.u32 %v4932, %v4928
        %v4934 = vrot.slane %v4933, 4
        %v4936 = vshll.u32 %v4618, 16
        %v4938 = vrot.slane %v4936, 5
        %v4939 = vsel %vm1243, %v4934, %v4938
        %v4941 = vshrl.u32 %v4619, 16
        %v4943 = vrot.slane %v4941, 4
        %v4944 = vshll.u32 %v4619, 16
        %v4946 = vrot.slane %v4944, 5
        %v4947 = vor.u32 %v4943, %v4946
        %v4948 = vrot.slane %v4947, 4
        %v4950 = vshll.u32 %v4620, 16
        %v4952 = vrot.slane %v4950, 5
        %v4953 = vsel %vm1243, %v4948, %v4952
        %v4954 = vshrl.u32 %v4620, 16
        %v4956 = vrot.slane %v4954, 4
        %v4957 = vor.u32 %v4956, %v4952
        %v4958 = vrot.slane %v4957, 4
        %v4960 = vshll.u32 %v4621, 16
        %v4962 = vrot.slane %v4960, 5
        %v4963 = vsel %vm1243, %v4958, %v4962
        %v4965 = vshrl.u32 %v4622, 16
        %v4967 = vrot.slane %v4965, 4
        %v4968 = vshll.u32 %v4622, 16
        %v4970 = vrot.slane %v4968, 5
        %v4971 = vor.u32 %v4967, %v4970
        %v4972 = vrot.slane %v4971, 4
        %v4974 = vshll.u32 %v4623, 16
        %v4976 = vrot.slane %v4974, 5
        %v4977 = vsel %vm1243, %v4972, %v4976
        %v4978 = vshrl.u32 %v4623, 16
        %v4980 = vrot.slane %v4978, 4
        %v4981 = vor.u32 %v4980, %v4976
        %v4982 = vrot.slane %v4981, 4
        %v4984 = vshll.u32 %v4624, 16
        %v4986 = vrot.slane %v4984, 5
        %v4987 = vsel %vm1243, %v4982, %v4986
        %v4989 = vshrl.u32 %v4625, 16
        %v4991 = vrot.slane %v4989, 4
        %v4992 = vshll.u32 %v4625, 16
        %v4994 = vrot.slane %v4992, 5
        %v4995 = vor.u32 %v4991, %v4994
        %v4996 = vrot.slane %v4995, 4
        %v4998 = vshll.u32 %v4626, 16
        %v5000 = vrot.slane %v4998, 5
        %v5001 = vsel %vm1243, %v4996, %v5000
        %v5002 = vshrl.u32 %v4626, 16
        %v5004 = vrot.slane %v5002, 4
        %v5005 = vor.u32 %v5004, %v5000
        %v5006 = vrot.slane %v5005, 4
        %v5008 = vshll.u32 %v4627, 16
        %v5010 = vrot.slane %v5008, 5
        %v5011 = vsel %vm1243, %v5006, %v5010
        %s5012 = scalar_lea.vmem %s4, 56
        %v5013 = vld [vmem:[%s5012] sm:$0xf]
        %v5014 = vld [vmem:[%s5012 + $0x4] sm:$0xf]
        %v5015 = vunpack.c.l.b16 %v4641
        %v5016 = vunpack.c.l.b16 %v4651
        %v5017 = vunpack.c.l.b16 %v4665
        %v5018 = vunpack.c.l.b16 %v4675
        %v5019 = vunpack.c.l.b16 %v4689
        %v5020 = vunpack.c.l.b16 %v4699
        %v5021 = vunpack.c.l.b16 %v4713
        %v5022 = vunpack.c.l.b16 %v4723
        %v5023 = vunpack.c.l.b16 %v4737
        %v5024 = vunpack.c.l.b16 %v4747
        %v5025 = vunpack.c.l.b16 %v4761
        %v5026 = vunpack.c.l.b16 %v4771
        %v5027 = vunpack.c.l.b16 %v4785
        %v5028 = vunpack.c.l.b16 %v4795
        %v5029 = vunpack.c.l.b16 %v4809
        %v5030 = vunpack.c.l.b16 %v4819
        %v5031 = vunpack.c.l.b16 %v4833
        %v5032 = vunpack.c.l.b16 %v4843
        %v5033 = vunpack.c.l.b16 %v4857
        %v5034 = vunpack.c.l.b16 %v4867
        %v5035 = vunpack.c.l.b16 %v4881
        %v5036 = vunpack.c.l.b16 %v4891
        %v5037 = vunpack.c.l.b16 %v4905
        %v5038 = vunpack.c.l.b16 %v4915
        %v5039 = vunpack.c.l.b16 %v4929
        %v5040 = vunpack.c.l.b16 %v4939
        %v5041 = vunpack.c.l.b16 %v4953
        %v5042 = vunpack.c.l.b16 %v4963
        %v5043 = vunpack.c.l.b16 %v4977
        %v5044 = vunpack.c.l.b16 %v4987
        %v5045 = vunpack.c.l.b16 %v5001
        %v5046 = vunpack.c.l.b16 %v5011
        %v5047 = vpack.c.b16 %v5016, %v5015
        %v5048 = vpack.c.b16 %v5018, %v5017
        %v5049 = vpack.c.b16 %v5020, %v5019
        %v5050 = vpack.c.b16 %v5022, %v5021
        %v5051 = vpack.c.b16 %v5024, %v5023
        %v5052 = vpack.c.b16 %v5026, %v5025
        %v5053 = vpack.c.b16 %v5028, %v5027
        %v5054 = vpack.c.b16 %v5030, %v5029
        %v5055 = vpack.c.b16 %v5032, %v5031
        %v5056 = vpack.c.b16 %v5034, %v5033
        %v5057 = vpack.c.b16 %v5036, %v5035
        %v5058 = vpack.c.b16 %v5038, %v5037
        %v5059 = vpack.c.b16 %v5040, %v5039
        %v5060 = vpack.c.b16 %v5042, %v5041
        %v5061 = vpack.c.b16 %v5044, %v5043
        %v5062 = vpack.c.b16 %v5046, %v5045
        %v5065 = vunpack.c.l.b16 %v5013
        %v5066 = vunpack.c.l.b16 %v5014
        %v5067 = vpack.c.b16 %v5066, %v5065
        %v5070 = vsel %vm1685, %v5047, 0
        %v5073 = vsel %vm1685, %v5048, 0
        %v5076 = vsel %vm1685, %v5049, 0
        %v5079 = vsel %vm1685, %v5050, 0
        %v5082 = vsel %vm1685, %v5051, 0
        %v5085 = vsel %vm1685, %v5052, 0
        %v5088 = vsel %vm1685, %v5053, 0
        %v5091 = vsel %vm1685, %v5054, 0
        %v5094 = vsel %vm1685, %v5055, 0
        %v5097 = vsel %vm1685, %v5056, 0
        %v5100 = vsel %vm1685, %v5057, 0
        %v5103 = vsel %vm1685, %v5058, 0
        %v5106 = vsel %vm1685, %v5059, 0
        %v5109 = vsel %vm1685, %v5060, 0
        %v5112 = vsel %vm1685, %v5061, 0
        %v5115 = vsel %vm1685, %v5062, 0
        %5117 = vmatprep.subr.bf16.mxu0 0
        %5118 = vmatpush1.bf16.msra.mxu0 %v5067
        %5119 = vmatprep.subr.bf16.mxu0 0
        %5120 = vmatpush1.bf16.msra.mxu0 0
        %5121 = vmatprep.subr.bf16.mxu0 0
        %5122 = vmatpush1.bf16.msra.mxu0 0
        %5123 = vmatprep.subr.bf16.mxu0 0
        %5124 = vmatpush1.bf16.msra.mxu0 0
        %5125 = vmatprep.subr.bf16.mxu0 0
        %5126 = vmatpush1.bf16.msra.mxu0 0
        %5127 = vmatprep.subr.bf16.mxu0 0
        %5128 = vmatpush1.bf16.msra.mxu0 0
        %5129 = vmatprep.subr.bf16.mxu0 0
        %5130 = vmatpush1.bf16.msra.mxu0 0
        %5131 = vmatprep.subr.bf16.mxu0 0
        %5132 = vmatpush1.bf16.msra.mxu0 0
        %5133 = vmatprep.subr.bf16.mxu0 0
        %5134 = vmatpush1.bf16.msra.mxu0 0
        %5135 = vmatprep.subr.bf16.mxu0 0
        %5136 = vmatpush1.bf16.msra.mxu0 0
        %5137 = vmatprep.subr.bf16.mxu0 0
        %5138 = vmatpush1.bf16.msra.mxu0 0
        %5139 = vmatprep.subr.bf16.mxu0 0
        %5140 = vmatpush1.bf16.msra.mxu0 0
        %5141 = vmatprep.subr.bf16.mxu0 0
        %5142 = vmatpush1.bf16.msra.mxu0 0
        %5143 = vmatprep.subr.bf16.mxu0 0
        %5144 = vmatpush1.bf16.msra.mxu0 0
        %5145 = vmatprep.subr.bf16.mxu0 0
        %5146 = vmatpush1.bf16.msra.mxu0 0
        %5147 = vmatprep.subr.bf16.mxu0 0
        %5148 = vmatpush1.bf16.msra.mxu0 0
        %5149 = vmatprep.mubr.bf16.mxu0 0
        %5150 = vmatmul.mubr.bf16.gmra.mrb[0].mxu0 %v5070
        %v5151 = vpop.f32.mrb[0].mxu0
        %v5152 = vadd.f32 0.0, %v5151
        %v5153 = vpop.f32.mrb[0].mxu0
        %v5154 = vpop.f32.mrb[0].mxu0
        %v5155 = vadd.f32 0.0, %v5154
        %v5156 = vpop.f32.mrb[0].mxu0
        %5157 = vmatprep.mubr.bf16.mxu0 0
        %5158 = vmatmul.mubr.bf16.gmra.mrb[0].mxu0 %v5073
        %v5159 = vpop.f32.mrb[0].mxu0
        %v5160 = vadd.f32 0.0, %v5159
        %v5161 = vpop.f32.mrb[0].mxu0
        %v5162 = vpop.f32.mrb[0].mxu0
        %v5163 = vadd.f32 0.0, %v5162
        %v5164 = vpop.f32.mrb[0].mxu0
        %5165 = vmatprep.mubr.bf16.mxu0 0
        %5166 = vmatmul.mubr.bf16.gmra.mrb[0].mxu0 %v5076
        %v5167 = vpop.f32.mrb[0].mxu0
        %v5168 = vadd.f32 0.0, %v5167
        %v5169 = vpop.f32.mrb[0].mxu0
        %v5170 = vpop.f32.mrb[0].mxu0
        %v5171 = vadd.f32 0.0, %v5170
        %v5172 = vpop.f32.mrb[0].mxu0
        %5173 = vmatprep.mubr.bf16.mxu0 0
        %5174 = vmatmul.mubr.bf16.gmra.mrb[0].mxu0 %v5079
        %v5175 = vpop.f32.mrb[0].mxu0
        %v5176 = vadd.f32 0.0, %v5175
        %v5177 = vpop.f32.mrb[0].mxu0
        %v5178 = vpop.f32.mrb[0].mxu0
        %v5179 = vadd.f32 0.0, %v5178
        %v5180 = vpop.f32.mrb[0].mxu0
        %5181 = vmatprep.mubr.bf16.mxu0 0
        %5182 = vmatmul.mubr.bf16.gmra.mrb[0].mxu0 %v5082
        %v5183 = vpop.f32.mrb[0].mxu0
        %v5184 = vadd.f32 0.0, %v5183
        %v5185 = vpop.f32.mrb[0].mxu0
        %v5186 = vpop.f32.mrb[0].mxu0
        %v5187 = vadd.f32 0.0, %v5186
        %v5188 = vpop.f32.mrb[0].mxu0
        %5189 = vmatprep.mubr.bf16.mxu0 0
        %5190 = vmatmul.mubr.bf16.gmra.mrb[0].mxu0 %v5085
        %v5191 = vpop.f32.mrb[0].mxu0
        %v5192 = vadd.f32 0.0, %v5191
        %v5193 = vpop.f32.mrb[0].mxu0
        %v5194 = vpop.f32.mrb[0].mxu0
        %v5195 = vadd.f32 0.0, %v5194
        %v5196 = vpop.f32.mrb[0].mxu0
        %5197 = vmatprep.mubr.bf16.mxu0 0
        %5198 = vmatmul.mubr.bf16.gmra.mrb[0].mxu0 %v5088
        %v5199 = vpop.f32.mrb[0].mxu0
        %v5200 = vadd.f32 0.0, %v5199
        %v5201 = vpop.f32.mrb[0].mxu0
        %v5202 = vpop.f32.mrb[0].mxu0
        %v5203 = vadd.f32 0.0, %v5202
        %v5204 = vpop.f32.mrb[0].mxu0
        %5205 = vmatprep.mubr.bf16.mxu0 0
        %5206 = vmatmul.mubr.bf16.gmra.mrb[0].mxu0 %v5091
        %v5207 = vpop.f32.mrb[0].mxu0
        %v5208 = vadd.f32 0.0, %v5207
        %v5209 = vpop.f32.mrb[0].mxu0
        %v5210 = vpop.f32.mrb[0].mxu0
        %v5211 = vadd.f32 0.0, %v5210
        %v5212 = vpop.f32.mrb[0].mxu0
        %5213 = vmatprep.mubr.bf16.mxu0 0
        %5214 = vmatmul.mubr.bf16.gmra.mrb[0].mxu0 %v5094
        %v5215 = vpop.f32.mrb[0].mxu0
        %v5216 = vadd.f32 0.0, %v5215
        %v5217 = vpop.f32.mrb[0].mxu0
        %v5218 = vpop.f32.mrb[0].mxu0
        %v5219 = vadd.f32 0.0, %v5218
        %v5220 = vpop.f32.mrb[0].mxu0
        %5221 = vmatprep.mubr.bf16.mxu0 0
        %5222 = vmatmul.mubr.bf16.gmra.mrb[0].mxu0 %v5097
        %v5223 = vpop.f32.mrb[0].mxu0
        %v5224 = vadd.f32 0.0, %v5223
        %v5225 = vpop.f32.mrb[0].mxu0
        %v5226 = vpop.f32.mrb[0].mxu0
        %v5227 = vadd.f32 0.0, %v5226
        %v5228 = vpop.f32.mrb[0].mxu0
        %5229 = vmatprep.mubr.bf16.mxu0 0
        %5230 = vmatmul.mubr.bf16.gmra.mrb[0].mxu0 %v5100
        %v5231 = vpop.f32.mrb[0].mxu0
        %v5232 = vadd.f32 0.0, %v5231
        %v5233 = vpop.f32.mrb[0].mxu0
        %v5234 = vpop.f32.mrb[0].mxu0
        %v5235 = vadd.f32 0.0, %v5234
        %v5236 = vpop.f32.mrb[0].mxu0
        %5237 = vmatprep.mubr.bf16.mxu0 0
        %5238 = vmatmul.mubr.bf16.gmra.mrb[0].mxu0 %v5103
        %v5239 = vpop.f32.mrb[0].mxu0
        %v5240 = vadd.f32 0.0, %v5239
        %v5241 = vpop.f32.mrb[0].mxu0
        %v5242 = vpop.f32.mrb[0].mxu0
        %v5243 = vadd.f32 0.0, %v5242
        %v5244 = vpop.f32.mrb[0].mxu0
        %5245 = vmatprep.mubr.bf16.mxu0 0
        %5246 = vmatmul.mubr.bf16.gmra.mrb[0].mxu0 %v5106
        %v5247 = vpop.f32.mrb[0].mxu0
        %v5248 = vadd.f32 0.0, %v5247
        %v5249 = vpop.f32.mrb[0].mxu0
        %v5250 = vpop.f32.mrb[0].mxu0
        %v5251 = vadd.f32 0.0, %v5250
        %v5252 = vpop.f32.mrb[0].mxu0
        %5253 = vmatprep.mubr.bf16.mxu0 0
        %5254 = vmatmul.mubr.bf16.gmra.mrb[0].mxu0 %v5109
        %v5255 = vpop.f32.mrb[0].mxu0
        %v5256 = vadd.f32 0.0, %v5255
        %v5257 = vpop.f32.mrb[0].mxu0
        %v5258 = vpop.f32.mrb[0].mxu0
        %v5259 = vadd.f32 0.0, %v5258
        %v5260 = vpop.f32.mrb[0].mxu0
        %5261 = vmatprep.mubr.bf16.mxu0 0
        %5262 = vmatmul.mubr.bf16.gmra.mrb[0].mxu0 %v5112
        %v5263 = vpop.f32.mrb[0].mxu0
        %v5264 = vadd.f32 0.0, %v5263
        %v5265 = vpop.f32.mrb[0].mxu0
        %v5266 = vpop.f32.mrb[0].mxu0
        %v5267 = vadd.f32 0.0, %v5266
        %v5268 = vpop.f32.mrb[0].mxu0
        %5269 = vmatprep.mubr.bf16.mxu0 0
        %5270 = vmatmul.mubr.bf16.gmra.mrb[0].mxu0 %v5115
        %v5271 = vpop.f32.mrb[0].mxu0
        %v5272 = vadd.f32 0.0, %v5271
        %v5273 = vpop.f32.mrb[0].mxu0
        %v5274 = vpop.f32.mrb[0].mxu0
        %v5275 = vadd.f32 0.0, %v5274
        %v5276 = vpop.f32.mrb[0].mxu0
        %5277 = vdwg.mxu0
        %v5278 = vadd.f32 %v4548, %v5152
        %v5279 = vadd.f32 %v4549, %v5155
        %v5280 = vadd.f32 %v4550, %v5160
        %v5281 = vadd.f32 %v4551, %v5163
        %v5282 = vadd.f32 %v4552, %v5168
        %v5283 = vadd.f32 %v4553, %v5171
        %v5284 = vadd.f32 %v4554, %v5176
        %v5285 = vadd.f32 %v4555, %v5179
        %v5286 = vadd.f32 %v4556, %v5184
        %v5287 = vadd.f32 %v4557, %v5187
        %v5288 = vadd.f32 %v4558, %v5192
        %v5289 = vadd.f32 %v4559, %v5195
        %v5290 = vadd.f32 %v4560, %v5200
        %v5291 = vadd.f32 %v4561, %v5203
        %v5292 = vadd.f32 %v4562, %v5208
        %v5293 = vadd.f32 %v4563, %v5211
        %v5294 = vadd.f32 %v4564, %v5216
        %v5295 = vadd.f32 %v4565, %v5219
        %v5296 = vadd.f32 %v4566, %v5224
        %v5297 = vadd.f32 %v4567, %v5227
        %v5298 = vadd.f32 %v4568, %v5232
        %v5299 = vadd.f32 %v4569, %v5235
        %v5300 = vadd.f32 %v4570, %v5240
        %v5301 = vadd.f32 %v4571, %v5243
        %v5302 = vadd.f32 %v4572, %v5248
        %v5303 = vadd.f32 %v4573, %v5251
        %v5304 = vadd.f32 %v4574, %v5256
        %v5305 = vadd.f32 %v4575, %v5259
        %v5306 = vadd.f32 %v4576, %v5264
        %v5307 = vadd.f32 %v4577, %v5267
        %v5308 = vadd.f32 %v4578, %v5272
        %v5309 = vadd.f32 %v4579, %v5275
        %v5310 = vld [vmem:[%s4217] sm:$0xe]
        %v5311 = vld [vmem:[%s4217 + $0xc] sm:$0xe]
        %v5312 = vld [vmem:[%s4217 + $0x18] sm:$0xe]
        %v5313 = vld [vmem:[%s4217 + $0x24] sm:$0xe]
        %v5314 = vld [vmem:[%s4217 + $0x30] sm:$0xe]
        %v5315 = vld [vmem:[%s4217 + $0x3c] sm:$0xe]
        %v5316 = vld [vmem:[%s4217 + $0x48] sm:$0xe]
        %v5317 = vld [vmem:[%s4217 + $0x54] sm:$0xe]
        %v5318 = vld [vmem:[%s4217 + $0x60] sm:$0xe]
        %v5319 = vld [vmem:[%s4217 + $0x6c] sm:$0xe]
        %v5320 = vld [vmem:[%s4217 + $0x78] sm:$0xe]
        %v5321 = vld [vmem:[%s4217 + $0x84] sm:$0xe]
        %v5322 = vld [vmem:[%s4217 + $0x90] sm:$0xe]
        %v5323 = vld [vmem:[%s4217 + $0x9c] sm:$0xe]
        %v5324 = vld [vmem:[%s4217 + $0xa8] sm:$0xe]
        %v5325 = vld [vmem:[%s4217 + $0xb4] sm:$0xe]
        %v5374 = vrot.slane %v5310, 5
        %v5375 = vrot.slane %v5374, 4
        %v5376 = vrot.slane %v4581, 5
        %v5377 = vsel %vm2240, %v5375, %v5376
        %v5378 = vrot.slane %v5376, 4
        %v5379 = vrot.slane %v4582, 5
        %v5380 = vsel %vm2240, %v5378, %v5379
        %v5381 = vrot.slane %v5311, 5
        %v5382 = vrot.slane %v5381, 4
        %v5383 = vrot.slane %v4584, 5
        %v5384 = vsel %vm2240, %v5382, %v5383
        %v5385 = vrot.slane %v5383, 4
        %v5386 = vrot.slane %v4585, 5
        %v5387 = vsel %vm2240, %v5385, %v5386
        %v5388 = vrot.slane %v5312, 5
        %v5389 = vrot.slane %v5388, 4
        %v5390 = vrot.slane %v4587, 5
        %v5391 = vsel %vm2240, %v5389, %v5390
        %v5392 = vrot.slane %v5390, 4
        %v5393 = vrot.slane %v4588, 5
        %v5394 = vsel %vm2240, %v5392, %v5393
        %v5395 = vrot.slane %v5313, 5
        %v5396 = vrot.slane %v5395, 4
        %v5397 = vrot.slane %v4590, 5
        %v5398 = vsel %vm2240, %v5396, %v5397
        %v5399 = vrot.slane %v5397, 4
        %v5400 = vrot.slane %v4591, 5
        %v5401 = vsel %vm2240, %v5399, %v5400
        %v5402 = vrot.slane %v5314, 5
        %v5403 = vrot.slane %v5402, 4
        %v5404 = vrot.slane %v4593, 5
        %v5405 = vsel %vm2240, %v5403, %v5404
        %v5406 = vrot.slane %v5404, 4
        %v5407 = vrot.slane %v4594, 5
        %v5408 = vsel %vm2240, %v5406, %v5407
        %v5409 = vrot.slane %v5315, 5
        %v5410 = vrot.slane %v5409, 4
        %v5411 = vrot.slane %v4596, 5
        %v5412 = vsel %vm2240, %v5410, %v5411
        %v5413 = vrot.slane %v5411, 4
        %v5414 = vrot.slane %v4597, 5
        %v5415 = vsel %vm2240, %v5413, %v5414
        %v5416 = vrot.slane %v5316, 5
        %v5417 = vrot.slane %v5416, 4
        %v5418 = vrot.slane %v4599, 5
        %v5419 = vsel %vm2240, %v5417, %v5418
        %v5420 = vrot.slane %v5418, 4
        %v5421 = vrot.slane %v4600, 5
        %v5422 = vsel %vm2240, %v5420, %v5421
        %v5423 = vrot.slane %v5317, 5
        %v5424 = vrot.slane %v5423, 4
        %v5425 = vrot.slane %v4602, 5
        %v5426 = vsel %vm2240, %v5424, %v5425
        %v5427 = vrot.slane %v5425, 4
        %v5428 = vrot.slane %v4603, 5
        %v5429 = vsel %vm2240, %v5427, %v5428
        %v5430 = vrot.slane %v5318, 5
        %v5431 = vrot.slane %v5430, 4
        %v5432 = vrot.slane %v4605, 5
        %v5433 = vsel %vm2240, %v5431, %v5432
        %v5434 = vrot.slane %v5432, 4
        %v5435 = vrot.slane %v4606, 5
        %v5436 = vsel %vm2240, %v5434, %v5435
        %v5437 = vrot.slane %v5319, 5
        %v5438 = vrot.slane %v5437, 4
        %v5439 = vrot.slane %v4608, 5
        %v5440 = vsel %vm2240, %v5438, %v5439
        %v5441 = vrot.slane %v5439, 4
        %v5442 = vrot.slane %v4609, 5
        %v5443 = vsel %vm2240, %v5441, %v5442
        %v5444 = vrot.slane %v5320, 5
        %v5445 = vrot.slane %v5444, 4
        %v5446 = vrot.slane %v4611, 5
        %v5447 = vsel %vm2240, %v5445, %v5446
        %v5448 = vrot.slane %v5446, 4
        %v5449 = vrot.slane %v4612, 5
        %v5450 = vsel %vm2240, %v5448, %v5449
        %v5451 = vrot.slane %v5321, 5
        %v5452 = vrot.slane %v5451, 4
        %v5453 = vrot.slane %v4614, 5
        %v5454 = vsel %vm2240, %v5452, %v5453
        %v5455 = vrot.slane %v5453, 4
        %v5456 = vrot.slane %v4615, 5
        %v5457 = vsel %vm2240, %v5455, %v5456
        %v5458 = vrot.slane %v5322, 5
        %v5459 = vrot.slane %v5458, 4
        %v5460 = vrot.slane %v4617, 5
        %v5461 = vsel %vm2240, %v5459, %v5460
        %v5462 = vrot.slane %v5460, 4
        %v5463 = vrot.slane %v4618, 5
        %v5464 = vsel %vm2240, %v5462, %v5463
        %v5465 = vrot.slane %v5323, 5
        %v5466 = vrot.slane %v5465, 4
        %v5467 = vrot.slane %v4620, 5
        %v5468 = vsel %vm2240, %v5466, %v5467
        %v5469 = vrot.slane %v5467, 4
        %v5470 = vrot.slane %v4621, 5
        %v5471 = vsel %vm2240, %v5469, %v5470
        %v5472 = vrot.slane %v5324, 5
        %v5473 = vrot.slane %v5472, 4
        %v5474 = vrot.slane %v4623, 5
        %v5475 = vsel %vm2240, %v5473, %v5474
        %v5476 = vrot.slane %v5474, 4
        %v5477 = vrot.slane %v4624, 5
        %v5478 = vsel %vm2240, %v5476, %v5477
        %v5479 = vrot.slane %v5325, 5
        %v5480 = vrot.slane %v5479, 4
        %v5481 = vrot.slane %v4626, 5
        %v5482 = vsel %vm2240, %v5480, %v5481
        %v5483 = vrot.slane %v5481, 4
        %v5484 = vrot.slane %v4627, 5
        %v5485 = vsel %vm2240, %v5483, %v5484
        %s5486 = scalar_lea.vmem %s4, 64
        %v5487 = vld [vmem:[%s5486] sm:$0xf]
        %v5488 = vld [vmem:[%s5486 + $0x4] sm:$0xf]
        %v5489 = vunpack.c.l.b16 %v5377
        %v5490 = vunpack.c.l.b16 %v5380
        %v5491 = vunpack.c.l.b16 %v5384
        %v5492 = vunpack.c.l.b16 %v5387
        %v5493 = vunpack.c.l.b16 %v5391
        %v5494 = vunpack.c.l.b16 %v5394
        %v5495 = vunpack.c.l.b16 %v5398
        %v5496 = vunpack.c.l.b16 %v5401
        %v5497 = vunpack.c.l.b16 %v5405
        %v5498 = vunpack.c.l.b16 %v5408
        %v5499 = vunpack.c.l.b16 %v5412
        %v5500 = vunpack.c.l.b16 %v5415
        %v5501 = vunpack.c.l.b16 %v5419
        %v5502 = vunpack.c.l.b16 %v5422
        %v5503 = vunpack.c.l.b16 %v5426
        %v5504 = vunpack.c.l.b16 %v5429
        %v5505 = vunpack.c.l.b16 %v5433
        %v5506 = vunpack.c.l.b16 %v5436
        %v5507 = vunpack.c.l.b16 %v5440
        %v5508 = vunpack.c.l.b16 %v5443
        %v5509 = vunpack.c.l.b16 %v5447
        %v5510 = vunpack.c.l.b16 %v5450
        %v5511 = vunpack.c.l.b16 %v5454
        %v5512 = vunpack.c.l.b16 %v5457
        %v5513 = vunpack.c.l.b16 %v5461
        %v5514 = vunpack.c.l.b16 %v5464
        %v5515 = vunpack.c.l.b16 %v5468
        %v5516 = vunpack.c.l.b16 %v5471
        %v5517 = vunpack.c.l.b16 %v5475
        %v5518 = vunpack.c.l.b16 %v5478
        %v5519 = vunpack.c.l.b16 %v5482
        %v5520 = vunpack.c.l.b16 %v5485
        %v5521 = vpack.c.b16 %v5490, %v5489
        %v5522 = vpack.c.b16 %v5492, %v5491
        %v5523 = vpack.c.b16 %v5494, %v5493
        %v5524 = vpack.c.b16 %v5496, %v5495
        %v5525 = vpack.c.b16 %v5498, %v5497
        %v5526 = vpack.c.b16 %v5500, %v5499
        %v5527 = vpack.c.b16 %v5502, %v5501
        %v5528 = vpack.c.b16 %v5504, %v5503
        %v5529 = vpack.c.b16 %v5506, %v5505
        %v5530 = vpack.c.b16 %v5508, %v5507
        %v5531 = vpack.c.b16 %v5510, %v5509
        %v5532 = vpack.c.b16 %v5512, %v5511
        %v5533 = vpack.c.b16 %v5514, %v5513
        %v5534 = vpack.c.b16 %v5516, %v5515
        %v5535 = vpack.c.b16 %v5518, %v5517
        %v5536 = vpack.c.b16 %v5520, %v5519
        %v5539 = vunpack.c.l.b16 %v5487
        %v5540 = vunpack.c.l.b16 %v5488
        %v5541 = vpack.c.b16 %v5540, %v5539
        %v5544 = vsel %vm1685, %v5521, 0
        %v5547 = vsel %vm1685, %v5522, 0
        %v5550 = vsel %vm1685, %v5523, 0
        %v5553 = vsel %vm1685, %v5524, 0
        %v5556 = vsel %vm1685, %v5525, 0
        %v5559 = vsel %vm1685, %v5526, 0
        %v5562 = vsel %vm1685, %v5527, 0
        %v5565 = vsel %vm1685, %v5528, 0
        %v5568 = vsel %vm1685, %v5529, 0
        %v5571 = vsel %vm1685, %v5530, 0
        %v5574 = vsel %vm1685, %v5531, 0
        %v5577 = vsel %vm1685, %v5532, 0
        %v5580 = vsel %vm1685, %v5533, 0
        %v5583 = vsel %vm1685, %v5534, 0
        %v5586 = vsel %vm1685, %v5535, 0
        %v5589 = vsel %vm1685, %v5536, 0
        %5591 = vmatprep.subr.bf16.mxu0 0
        %5592 = vmatpush1.bf16.msra.mxu0 %v5541
        %5593 = vmatprep.subr.bf16.mxu0 0
        %5594 = vmatpush1.bf16.msra.mxu0 0
        %5595 = vmatprep.subr.bf16.mxu0 0
        %5596 = vmatpush1.bf16.msra.mxu0 0
        %5597 = vmatprep.subr.bf16.mxu0 0
        %5598 = vmatpush1.bf16.msra.mxu0 0
        %5599 = vmatprep.subr.bf16.mxu0 0
        %5600 = vmatpush1.bf16.msra.mxu0 0
        %5601 = vmatprep.subr.bf16.mxu0 0
        %5602 = vmatpush1.bf16.msra.mxu0 0
        %5603 = vmatprep.subr.bf16.mxu0 0
        %5604 = vmatpush1.bf16.msra.mxu0 0
        %5605 = vmatprep.subr.bf16.mxu0 0
        %5606 = vmatpush1.bf16.msra.mxu0 0
        %5607 = vmatprep.subr.bf16.mxu0 0
        %5608 = vmatpush1.bf16.msra.mxu0 0
        %5609 = vmatprep.subr.bf16.mxu0 0
        %5610 = vmatpush1.bf16.msra.mxu0 0
        %5611 = vmatprep.subr.bf16.mxu0 0
        %5612 = vmatpush1.bf16.msra.mxu0 0
        %5613 = vmatprep.subr.bf16.mxu0 0
        %5614 = vmatpush1.bf16.msra.mxu0 0
        %5615 = vmatprep.subr.bf16.mxu0 0
        %5616 = vmatpush1.bf16.msra.mxu0 0
        %5617 = vmatprep.subr.bf16.mxu0 0
        %5618 = vmatpush1.bf16.msra.mxu0 0
        %5619 = vmatprep.subr.bf16.mxu0 0
        %5620 = vmatpush1.bf16.msra.mxu0 0
        %5621 = vmatprep.subr.bf16.mxu0 0
        %5622 = vmatpush1.bf16.msra.mxu0 0
        %5623 = vmatprep.mubr.bf16.mxu0 0
        %5624 = vmatmul.mubr.bf16.gmra.mrb[0].mxu0 %v5544
        %v5625 = vpop.f32.mrb[0].mxu0
        %v5626 = vadd.f32 0.0, %v5625
        %v5627 = vpop.f32.mrb[0].mxu0
        %v5628 = vpop.f32.mrb[0].mxu0
        %v5629 = vadd.f32 0.0, %v5628
        %v5630 = vpop.f32.mrb[0].mxu0
        %5631 = vmatprep.mubr.bf16.mxu0 0
        %5632 = vmatmul.mubr.bf16.gmra.mrb[0].mxu0 %v5547
        %v5633 = vpop.f32.mrb[0].mxu0
        %v5634 = vadd.f32 0.0, %v5633
        %v5635 = vpop.f32.mrb[0].mxu0
        %v5636 = vpop.f32.mrb[0].mxu0
        %v5637 = vadd.f32 0.0, %v5636
        %v5638 = vpop.f32.mrb[0].mxu0
        %5639 = vmatprep.mubr.bf16.mxu0 0
        %5640 = vmatmul.mubr.bf16.gmra.mrb[0].mxu0 %v5550
        %v5641 = vpop.f32.mrb[0].mxu0
        %v5642 = vadd.f32 0.0, %v5641
        %v5643 = vpop.f32.mrb[0].mxu0
        %v5644 = vpop.f32.mrb[0].mxu0
        %v5645 = vadd.f32 0.0, %v5644
        %v5646 = vpop.f32.mrb[0].mxu0
        %5647 = vmatprep.mubr.bf16.mxu0 0
        %5648 = vmatmul.mubr.bf16.gmra.mrb[0].mxu0 %v5553
        %v5649 = vpop.f32.mrb[0].mxu0
        %v5650 = vadd.f32 0.0, %v5649
        %v5651 = vpop.f32.mrb[0].mxu0
        %v5652 = vpop.f32.mrb[0].mxu0
        %v5653 = vadd.f32 0.0, %v5652
        %v5654 = vpop.f32.mrb[0].mxu0
        %5655 = vmatprep.mubr.bf16.mxu0 0
        %5656 = vmatmul.mubr.bf16.gmra.mrb[0].mxu0 %v5556
        %v5657 = vpop.f32.mrb[0].mxu0
        %v5658 = vadd.f32 0.0, %v5657
        %v5659 = vpop.f32.mrb[0].mxu0
        %v5660 = vpop.f32.mrb[0].mxu0
        %v5661 = vadd.f32 0.0, %v5660
        %v5662 = vpop.f32.mrb[0].mxu0
        %5663 = vmatprep.mubr.bf16.mxu0 0
        %5664 = vmatmul.mubr.bf16.gmra.mrb[0].mxu0 %v5559
        %v5665 = vpop.f32.mrb[0].mxu0
        %v5666 = vadd.f32 0.0, %v5665
        %v5667 = vpop.f32.mrb[0].mxu0
        %v5668 = vpop.f32.mrb[0].mxu0
        %v5669 = vadd.f32 0.0, %v5668
        %v5670 = vpop.f32.mrb[0].mxu0
        %5671 = vmatprep.mubr.bf16.mxu0 0
        %5672 = vmatmul.mubr.bf16.gmra.mrb[0].mxu0 %v5562
        %v5673 = vpop.f32.mrb[0].mxu0
        %v5674 = vadd.f32 0.0, %v5673
        %v5675 = vpop.f32.mrb[0].mxu0
        %v5676 = vpop.f32.mrb[0].mxu0
        %v5677 = vadd.f32 0.0, %v5676
        %v5678 = vpop.f32.mrb[0].mxu0
        %5679 = vmatprep.mubr.bf16.mxu0 0
        %5680 = vmatmul.mubr.bf16.gmra.mrb[0].mxu0 %v5565
        %v5681 = vpop.f32.mrb[0].mxu0
        %v5682 = vadd.f32 0.0, %v5681
        %v5683 = vpop.f32.mrb[0].mxu0
        %v5684 = vpop.f32.mrb[0].mxu0
        %v5685 = vadd.f32 0.0, %v5684
        %v5686 = vpop.f32.mrb[0].mxu0
        %5687 = vmatprep.mubr.bf16.mxu0 0
        %5688 = vmatmul.mubr.bf16.gmra.mrb[0].mxu0 %v5568
        %v5689 = vpop.f32.mrb[0].mxu0
        %v5690 = vadd.f32 0.0, %v5689
        %v5691 = vpop.f32.mrb[0].mxu0
        %v5692 = vpop.f32.mrb[0].mxu0
        %v5693 = vadd.f32 0.0, %v5692
        %v5694 = vpop.f32.mrb[0].mxu0
        %5695 = vmatprep.mubr.bf16.mxu0 0
        %5696 = vmatmul.mubr.bf16.gmra.mrb[0].mxu0 %v5571
        %v5697 = vpop.f32.mrb[0].mxu0
        %v5698 = vadd.f32 0.0, %v5697
        %v5699 = vpop.f32.mrb[0].mxu0
        %v5700 = vpop.f32.mrb[0].mxu0
        %v5701 = vadd.f32 0.0, %v5700
        %v5702 = vpop.f32.mrb[0].mxu0
        %5703 = vmatprep.mubr.bf16.mxu0 0
        %5704 = vmatmul.mubr.bf16.gmra.mrb[0].mxu0 %v5574
        %v5705 = vpop.f32.mrb[0].mxu0
        %v5706 = vadd.f32 0.0, %v5705
        %v5707 = vpop.f32.mrb[0].mxu0
        %v5708 = vpop.f32.mrb[0].mxu0
        %v5709 = vadd.f32 0.0, %v5708
        %v5710 = vpop.f32.mrb[0].mxu0
        %5711 = vmatprep.mubr.bf16.mxu0 0
        %5712 = vmatmul.mubr.bf16.gmra.mrb[0].mxu0 %v5577
        %v5713 = vpop.f32.mrb[0].mxu0
        %v5714 = vadd.f32 0.0, %v5713
        %v5715 = vpop.f32.mrb[0].mxu0
        %v5716 = vpop.f32.mrb[0].mxu0
        %v5717 = vadd.f32 0.0, %v5716
        %v5718 = vpop.f32.mrb[0].mxu0
        %5719 = vmatprep.mubr.bf16.mxu0 0
        %5720 = vmatmul.mubr.bf16.gmra.mrb[0].mxu0 %v5580
        %v5721 = vpop.f32.mrb[0].mxu0
        %v5722 = vadd.f32 0.0, %v5721
        %v5723 = vpop.f32.mrb[0].mxu0
        %v5724 = vpop.f32.mrb[0].mxu0
        %v5725 = vadd.f32 0.0, %v5724
        %v5726 = vpop.f32.mrb[0].mxu0
        %5727 = vmatprep.mubr.bf16.mxu0 0
        %5728 = vmatmul.mubr.bf16.gmra.mrb[0].mxu0 %v5583
        %v5729 = vpop.f32.mrb[0].mxu0
        %v5730 = vadd.f32 0.0, %v5729
        %v5731 = vpop.f32.mrb[0].mxu0
        %v5732 = vpop.f32.mrb[0].mxu0
        %v5733 = vadd.f32 0.0, %v5732
        %v5734 = vpop.f32.mrb[0].mxu0
        %5735 = vmatprep.mubr.bf16.mxu0 0
        %5736 = vmatmul.mubr.bf16.gmra.mrb[0].mxu0 %v5586
        %v5737 = vpop.f32.mrb[0].mxu0
        %v5738 = vadd.f32 0.0, %v5737
        %v5739 = vpop.f32.mrb[0].mxu0
        %v5740 = vpop.f32.mrb[0].mxu0
        %v5741 = vadd.f32 0.0, %v5740
        %v5742 = vpop.f32.mrb[0].mxu0
        %5743 = vmatprep.mubr.bf16.mxu0 0
        %5744 = vmatmul.mubr.bf16.gmra.mrb[0].mxu0 %v5589
        %v5745 = vpop.f32.mrb[0].mxu0
        %v5746 = vadd.f32 0.0, %v5745
        %v5747 = vpop.f32.mrb[0].mxu0
        %v5748 = vpop.f32.mrb[0].mxu0
        %v5749 = vadd.f32 0.0, %v5748
        %v5750 = vpop.f32.mrb[0].mxu0
        %5751 = vdwg.mxu0
        %v5752 = vadd.f32 %v5278, %v5626
        %v5753 = vadd.f32 %v5279, %v5629
        %v5754 = vadd.f32 %v5280, %v5634
        %v5755 = vadd.f32 %v5281, %v5637
        %v5756 = vadd.f32 %v5282, %v5642
        %v5757 = vadd.f32 %v5283, %v5645
        %v5758 = vadd.f32 %v5284, %v5650
        %v5759 = vadd.f32 %v5285, %v5653
        %v5760 = vadd.f32 %v5286, %v5658
        %v5761 = vadd.f32 %v5287, %v5661
        %v5762 = vadd.f32 %v5288, %v5666
        %v5763 = vadd.f32 %v5289, %v5669
        %v5764 = vadd.f32 %v5290, %v5674
        %v5765 = vadd.f32 %v5291, %v5677
        %v5766 = vadd.f32 %v5292, %v5682
        %v5767 = vadd.f32 %v5293, %v5685
        %v5768 = vadd.f32 %v5294, %v5690
        %v5769 = vadd.f32 %v5295, %v5693
        %v5770 = vadd.f32 %v5296, %v5698
        %v5771 = vadd.f32 %v5297, %v5701
        %v5772 = vadd.f32 %v5298, %v5706
        %v5773 = vadd.f32 %v5299, %v5709
        %v5774 = vadd.f32 %v5300, %v5714
        %v5775 = vadd.f32 %v5301, %v5717
        %v5776 = vadd.f32 %v5302, %v5722
        %v5777 = vadd.f32 %v5303, %v5725
        %v5778 = vadd.f32 %v5304, %v5730
        %v5779 = vadd.f32 %v5305, %v5733
        %v5780 = vadd.f32 %v5306, %v5738
        %v5781 = vadd.f32 %v5307, %v5741
        %v5782 = vadd.f32 %v5308, %v5746
        %v5783 = vadd.f32 %v5309, %v5749
        %v5784 = vld [vmem:[%s296] sm:$0xf]
        %v5785 = vld [vmem:[%s296 + $0x4] sm:$0xf]
        %v5786 = vld [vmem:[%s296 + $0x8] sm:$0xf]
        %v5787 = vld [vmem:[%s296 + $0xc] sm:$0xf]
        %v5788 = vld [vmem:[%s296 + $0x10] sm:$0xf]
        %v5789 = vld [vmem:[%s296 + $0x14] sm:$0xf]
        %v5790 = vld [vmem:[%s296 + $0x18] sm:$0xf]
        %v5791 = vld [vmem:[%s296 + $0x1c] sm:$0xf]
        %v5792 = vld [vmem:[%s296 + $0x20] sm:$0xf]
        %v5793 = vld [vmem:[%s296 + $0x24] sm:$0xf]
        %v5794 = vld [vmem:[%s296 + $0x28] sm:$0xf]
        %v5795 = vld [vmem:[%s296 + $0x2c] sm:$0xf]
        %v5796 = vld [vmem:[%s296 + $0x30] sm:$0xf]
        %v5797 = vld [vmem:[%s296 + $0x34] sm:$0xf]
        %v5798 = vld [vmem:[%s296 + $0x38] sm:$0xf]
        %v5799 = vld [vmem:[%s296 + $0x3c] sm:$0xf]
        %v5800 = vld [vmem:[%s296 + $0x40] sm:$0xf]
        %v5801 = vld [vmem:[%s296 + $0x44] sm:$0xf]
        %v5802 = vld [vmem:[%s296 + $0x48] sm:$0xf]
        %v5803 = vld [vmem:[%s296 + $0x4c] sm:$0xf]
        %v5804 = vld [vmem:[%s296 + $0x50] sm:$0xf]
        %v5805 = vld [vmem:[%s296 + $0x54] sm:$0xf]
        %v5806 = vld [vmem:[%s296 + $0x58] sm:$0xf]
        %v5807 = vld [vmem:[%s296 + $0x5c] sm:$0xf]
        %v5808 = vld [vmem:[%s296 + $0x60] sm:$0xf]
        %v5809 = vld [vmem:[%s296 + $0x64] sm:$0xf]
        %v5810 = vld [vmem:[%s296 + $0x68] sm:$0xf]
        %v5811 = vld [vmem:[%s296 + $0x6c] sm:$0xf]
        %v5812 = vld [vmem:[%s296 + $0x70] sm:$0xf]
        %v5813 = vld [vmem:[%s296 + $0x74] sm:$0xf]
        %v5814 = vld [vmem:[%s296 + $0x78] sm:$0xf]
        %v5815 = vld [vmem:[%s296 + $0x7c] sm:$0xf]
        %v5816 = vld [vmem:[%s5] sm:$0xf]
        %v5849 = vunpack.c.l.b16 %v5784
        %v5850 = vunpack.c.l.b16 %v5785
        %v5851 = vunpack.c.l.b16 %v5786
        %v5852 = vunpack.c.l.b16 %v5787
        %v5853 = vunpack.c.l.b16 %v5788
        %v5854 = vunpack.c.l.b16 %v5789
        %v5855 = vunpack.c.l.b16 %v5790
        %v5856 = vunpack.c.l.b16 %v5791
        %v5857 = vunpack.c.l.b16 %v5792
        %v5858 = vunpack.c.l.b16 %v5793
        %v5859 = vunpack.c.l.b16 %v5794
        %v5860 = vunpack.c.l.b16 %v5795
        %v5861 = vunpack.c.l.b16 %v5796
        %v5862 = vunpack.c.l.b16 %v5797
        %v5863 = vunpack.c.l.b16 %v5798
        %v5864 = vunpack.c.l.b16 %v5799
        %v5865 = vunpack.c.l.b16 %v5800
        %v5866 = vunpack.c.l.b16 %v5801
        %v5867 = vunpack.c.l.b16 %v5802
        %v5868 = vunpack.c.l.b16 %v5803
        %v5869 = vunpack.c.l.b16 %v5804
        %v5870 = vunpack.c.l.b16 %v5805
        %v5871 = vunpack.c.l.b16 %v5806
        %v5872 = vunpack.c.l.b16 %v5807
        %v5873 = vunpack.c.l.b16 %v5808
        %v5874 = vunpack.c.l.b16 %v5809
        %v5875 = vunpack.c.l.b16 %v5810
        %v5876 = vunpack.c.l.b16 %v5811
        %v5877 = vunpack.c.l.b16 %v5812
        %v5878 = vunpack.c.l.b16 %v5813
        %v5879 = vunpack.c.l.b16 %v5814
        %v5880 = vunpack.c.l.b16 %v5815
        %v5881 = vpack.c.b16 %v5850, %v5849
        %v5882 = vpack.c.b16 %v5852, %v5851
        %v5883 = vpack.c.b16 %v5854, %v5853
        %v5884 = vpack.c.b16 %v5856, %v5855
        %v5885 = vpack.c.b16 %v5858, %v5857
        %v5886 = vpack.c.b16 %v5860, %v5859
        %v5887 = vpack.c.b16 %v5862, %v5861
        %v5888 = vpack.c.b16 %v5864, %v5863
        %v5889 = vpack.c.b16 %v5866, %v5865
        %v5890 = vpack.c.b16 %v5868, %v5867
        %v5891 = vpack.c.b16 %v5870, %v5869
        %v5892 = vpack.c.b16 %v5872, %v5871
        %v5893 = vpack.c.b16 %v5874, %v5873
        %v5894 = vpack.c.b16 %v5876, %v5875
        %v5895 = vpack.c.b16 %v5878, %v5877
        %v5896 = vpack.c.b16 %v5880, %v5879
        %vm5897 = vcmask 64512
        %v5899 = vsel %vm5897, %v5881, 0
        %v5902 = vsel %vm5897, %v5882, 0
        %v5905 = vsel %vm5897, %v5883, 0
        %v5908 = vsel %vm5897, %v5884, 0
        %v5911 = vsel %vm5897, %v5885, 0
        %v5914 = vsel %vm5897, %v5886, 0
        %v5917 = vsel %vm5897, %v5887, 0
        %v5920 = vsel %vm5897, %v5888, 0
        %v5923 = vsel %vm5897, %v5889, 0
        %v5926 = vsel %vm5897, %v5890, 0
        %v5929 = vsel %vm5897, %v5891, 0
        %v5932 = vsel %vm5897, %v5892, 0
        %v5935 = vsel %vm5897, %v5893, 0
        %v5938 = vsel %vm5897, %v5894, 0
        %v5941 = vsel %vm5897, %v5895, 0
        %v5944 = vsel %vm5897, %v5896, 0
        %vm5946 = vcmask 1043456
        %v5948 = vsel %vm5946, %v5816, 0
        %5950 = vmatprep.subr.bf16.mxu0 0
        %5951 = vmatpush1.bf16.msra.mxu0 %v5948
        %5952 = vmatprep.subr.bf16.mxu0 0
        %5953 = vmatpush1.bf16.msra.mxu0 0
        %5954 = vmatprep.subr.bf16.mxu0 0
        %5955 = vmatpush1.bf16.msra.mxu0 0
        %5956 = vmatprep.subr.bf16.mxu0 0
        %5957 = vmatpush1.bf16.msra.mxu0 0
        %5958 = vmatprep.subr.bf16.mxu0 0
        %5959 = vmatpush1.bf16.msra.mxu0 0
        %5960 = vmatprep.subr.bf16.mxu0 0
        %5961 = vmatpush1.bf16.msra.mxu0 0
        %5962 = vmatprep.subr.bf16.mxu0 0
        %5963 = vmatpush1.bf16.msra.mxu0 0
        %5964 = vmatprep.subr.bf16.mxu0 0
        %5965 = vmatpush1.bf16.msra.mxu0 0
        %5966 = vmatprep.subr.bf16.mxu0 0
        %5967 = vmatpush1.bf16.msra.mxu0 0
        %5968 = vmatprep.subr.bf16.mxu0 0
        %5969 = vmatpush1.bf16.msra.mxu0 0
        %5970 = vmatprep.subr.bf16.mxu0 0
        %5971 = vmatpush1.bf16.msra.mxu0 0
        %5972 = vmatprep.subr.bf16.mxu0 0
        %5973 = vmatpush1.bf16.msra.mxu0 0
        %5974 = vmatprep.subr.bf16.mxu0 0
        %5975 = vmatpush1.bf16.msra.mxu0 0
        %5976 = vmatprep.subr.bf16.mxu0 0
        %5977 = vmatpush1.bf16.msra.mxu0 0
        %5978 = vmatprep.subr.bf16.mxu0 0
        %5979 = vmatpush1.bf16.msra.mxu0 0
        %5980 = vmatprep.subr.bf16.mxu0 0
        %5981 = vmatpush1.bf16.msra.mxu0 0
        %5982 = vmatprep.mubr.bf16.mxu0 0
        %5983 = vmatmul.mubr.bf16.gmra.mrb[0].mxu0 %v5899
        %v5984 = vpop.f32.mrb[0].mxu0
        %v5985 = vadd.f32 0.0, %v5984
        %v5986 = vpop.f32.mrb[0].mxu0
        %v5987 = vpop.f32.mrb[0].mxu0
        %v5988 = vadd.f32 0.0, %v5987
        %v5989 = vpop.f32.mrb[0].mxu0
        %5990 = vmatprep.mubr.bf16.mxu0 0
        %5991 = vmatmul.mubr.bf16.gmra.mrb[0].mxu0 %v5902
        %v5992 = vpop.f32.mrb[0].mxu0
        %v5993 = vadd.f32 0.0, %v5992
        %v5994 = vpop.f32.mrb[0].mxu0
        %v5995 = vpop.f32.mrb[0].mxu0
        %v5996 = vadd.f32 0.0, %v5995
        %v5997 = vpop.f32.mrb[0].mxu0
        %5998 = vmatprep.mubr.bf16.mxu0 0
        %5999 = vmatmul.mubr.bf16.gmra.mrb[0].mxu0 %v5905
        %v6000 = vpop.f32.mrb[0].mxu0
        %v6001 = vadd.f32 0.0, %v6000
        %v6002 = vpop.f32.mrb[0].mxu0
        %v6003 = vpop.f32.mrb[0].mxu0
        %v6004 = vadd.f32 0.0, %v6003
        %v6005 = vpop.f32.mrb[0].mxu0
        %6006 = vmatprep.mubr.bf16.mxu0 0
        %6007 = vmatmul.mubr.bf16.gmra.mrb[0].mxu0 %v5908
        %v6008 = vpop.f32.mrb[0].mxu0
        %v6009 = vadd.f32 0.0, %v6008
        %v6010 = vpop.f32.mrb[0].mxu0
        %v6011 = vpop.f32.mrb[0].mxu0
        %v6012 = vadd.f32 0.0, %v6011
        %v6013 = vpop.f32.mrb[0].mxu0
        %6014 = vmatprep.mubr.bf16.mxu0 0
        %6015 = vmatmul.mubr.bf16.gmra.mrb[0].mxu0 %v5911
        %v6016 = vpop.f32.mrb[0].mxu0
        %v6017 = vadd.f32 0.0, %v6016
        %v6018 = vpop.f32.mrb[0].mxu0
        %v6019 = vpop.f32.mrb[0].mxu0
        %v6020 = vadd.f32 0.0, %v6019
        %v6021 = vpop.f32.mrb[0].mxu0
        %6022 = vmatprep.mubr.bf16.mxu0 0
        %6023 = vmatmul.mubr.bf16.gmra.mrb[0].mxu0 %v5914
        %v6024 = vpop.f32.mrb[0].mxu0
        %v6025 = vadd.f32 0.0, %v6024
        %v6026 = vpop.f32.mrb[0].mxu0
        %v6027 = vpop.f32.mrb[0].mxu0
        %v6028 = vadd.f32 0.0, %v6027
        %v6029 = vpop.f32.mrb[0].mxu0
        %6030 = vmatprep.mubr.bf16.mxu0 0
        %6031 = vmatmul.mubr.bf16.gmra.mrb[0].mxu0 %v5917
        %v6032 = vpop.f32.mrb[0].mxu0
        %v6033 = vadd.f32 0.0, %v6032
        %v6034 = vpop.f32.mrb[0].mxu0
        %v6035 = vpop.f32.mrb[0].mxu0
        %v6036 = vadd.f32 0.0, %v6035
        %v6037 = vpop.f32.mrb[0].mxu0
        %6038 = vmatprep.mubr.bf16.mxu0 0
        %6039 = vmatmul.mubr.bf16.gmra.mrb[0].mxu0 %v5920
        %v6040 = vpop.f32.mrb[0].mxu0
        %v6041 = vadd.f32 0.0, %v6040
        %v6042 = vpop.f32.mrb[0].mxu0
        %v6043 = vpop.f32.mrb[0].mxu0
        %v6044 = vadd.f32 0.0, %v6043
        %v6045 = vpop.f32.mrb[0].mxu0
        %6046 = vmatprep.mubr.bf16.mxu0 0
        %6047 = vmatmul.mubr.bf16.gmra.mrb[0].mxu0 %v5923
        %v6048 = vpop.f32.mrb[0].mxu0
        %v6049 = vadd.f32 0.0, %v6048
        %v6050 = vpop.f32.mrb[0].mxu0
        %v6051 = vpop.f32.mrb[0].mxu0
        %v6052 = vadd.f32 0.0, %v6051
        %v6053 = vpop.f32.mrb[0].mxu0
        %6054 = vmatprep.mubr.bf16.mxu0 0
        %6055 = vmatmul.mubr.bf16.gmra.mrb[0].mxu0 %v5926
        %v6056 = vpop.f32.mrb[0].mxu0
        %v6057 = vadd.f32 0.0, %v6056
        %v6058 = vpop.f32.mrb[0].mxu0
        %v6059 = vpop.f32.mrb[0].mxu0
        %v6060 = vadd.f32 0.0, %v6059
        %v6061 = vpop.f32.mrb[0].mxu0
        %6062 = vmatprep.mubr.bf16.mxu0 0
        %6063 = vmatmul.mubr.bf16.gmra.mrb[0].mxu0 %v5929
        %v6064 = vpop.f32.mrb[0].mxu0
        %v6065 = vadd.f32 0.0, %v6064
        %v6066 = vpop.f32.mrb[0].mxu0
        %v6067 = vpop.f32.mrb[0].mxu0
        %v6068 = vadd.f32 0.0, %v6067
        %v6069 = vpop.f32.mrb[0].mxu0
        %6070 = vmatprep.mubr.bf16.mxu0 0
        %6071 = vmatmul.mubr.bf16.gmra.mrb[0].mxu0 %v5932
        %v6072 = vpop.f32.mrb[0].mxu0
        %v6073 = vadd.f32 0.0, %v6072
        %v6074 = vpop.f32.mrb[0].mxu0
        %v6075 = vpop.f32.mrb[0].mxu0
        %v6076 = vadd.f32 0.0, %v6075
        %v6077 = vpop.f32.mrb[0].mxu0
        %6078 = vmatprep.mubr.bf16.mxu0 0
        %6079 = vmatmul.mubr.bf16.gmra.mrb[0].mxu0 %v5935
        %v6080 = vpop.f32.mrb[0].mxu0
        %v6081 = vadd.f32 0.0, %v6080
        %v6082 = vpop.f32.mrb[0].mxu0
        %v6083 = vpop.f32.mrb[0].mxu0
        %v6084 = vadd.f32 0.0, %v6083
        %v6085 = vpop.f32.mrb[0].mxu0
        %6086 = vmatprep.mubr.bf16.mxu0 0
        %6087 = vmatmul.mubr.bf16.gmra.mrb[0].mxu0 %v5938
        %v6088 = vpop.f32.mrb[0].mxu0
        %v6089 = vadd.f32 0.0, %v6088
        %v6090 = vpop.f32.mrb[0].mxu0
        %v6091 = vpop.f32.mrb[0].mxu0
        %v6092 = vadd.f32 0.0, %v6091
        %v6093 = vpop.f32.mrb[0].mxu0
        %6094 = vmatprep.mubr.bf16.mxu0 0
        %6095 = vmatmul.mubr.bf16.gmra.mrb[0].mxu0 %v5941
        %v6096 = vpop.f32.mrb[0].mxu0
        %v6097 = vadd.f32 0.0, %v6096
        %v6098 = vpop.f32.mrb[0].mxu0
        %v6099 = vpop.f32.mrb[0].mxu0
        %v6100 = vadd.f32 0.0, %v6099
        %v6101 = vpop.f32.mrb[0].mxu0
        %6102 = vmatprep.mubr.bf16.mxu0 0
        %6103 = vmatmul.mubr.bf16.gmra.mrb[0].mxu0 %v5944
        %v6104 = vpop.f32.mrb[0].mxu0
        %v6105 = vadd.f32 0.0, %v6104
        %v6106 = vpop.f32.mrb[0].mxu0
        %v6107 = vpop.f32.mrb[0].mxu0
        %v6108 = vadd.f32 0.0, %v6107
        %v6109 = vpop.f32.mrb[0].mxu0
        %6110 = vdwg.mxu0
        %v6111 = vadd.f32 %v5752, %v5985
        %v6112 = vadd.f32 %v5753, %v5988
        %v6113 = vadd.f32 %v5754, %v5993
        %v6114 = vadd.f32 %v5755, %v5996
        %v6115 = vadd.f32 %v5756, %v6001
        %v6116 = vadd.f32 %v5757, %v6004
        %v6117 = vadd.f32 %v5758, %v6009
        %v6118 = vadd.f32 %v5759, %v6012
        %v6119 = vadd.f32 %v5760, %v6017
        %v6120 = vadd.f32 %v5761, %v6020
        %v6121 = vadd.f32 %v5762, %v6025
        %v6122 = vadd.f32 %v5763, %v6028
        %v6123 = vadd.f32 %v5764, %v6033
        %v6124 = vadd.f32 %v5765, %v6036
        %v6125 = vadd.f32 %v5766, %v6041
        %v6126 = vadd.f32 %v5767, %v6044
        %v6127 = vadd.f32 %v5768, %v6049
        %v6128 = vadd.f32 %v5769, %v6052
        %v6129 = vadd.f32 %v5770, %v6057
        %v6130 = vadd.f32 %v5771, %v6060
        %v6131 = vadd.f32 %v5772, %v6065
        %v6132 = vadd.f32 %v5773, %v6068
        %v6133 = vadd.f32 %v5774, %v6073
        %v6134 = vadd.f32 %v5775, %v6076
        %v6135 = vadd.f32 %v5776, %v6081
        %v6136 = vadd.f32 %v5777, %v6084
        %v6137 = vadd.f32 %v5778, %v6089
        %v6138 = vadd.f32 %v5779, %v6092
        %v6139 = vadd.f32 %v5780, %v6097
        %v6140 = vadd.f32 %v5781, %v6100
        %v6141 = vadd.f32 %v5782, %v6105
        %v6142 = vadd.f32 %v5783, %v6108
        %v6143 = vld [vmem:[%s6] sm:$0x1]
        %v6145 = vlaneseq
        %v6146 = vshrl.u32 %v6145, 7
        %v6147 = vsub.s32 0, %v6146
        %v6148 = vrot.slane %v6143, %v6147
        %v6150 = vadd.f32 %v6111, %v6148
        %v6151 = vadd.f32 %v6112, %v6148
        %v6152 = vadd.f32 %v6113, %v6148
        %v6153 = vadd.f32 %v6114, %v6148
        %v6154 = vadd.f32 %v6115, %v6148
        %v6155 = vadd.f32 %v6116, %v6148
        %v6156 = vadd.f32 %v6117, %v6148
        %v6157 = vadd.f32 %v6118, %v6148
        %v6158 = vadd.f32 %v6119, %v6148
        %v6159 = vadd.f32 %v6120, %v6148
        %v6160 = vadd.f32 %v6121, %v6148
        %v6161 = vadd.f32 %v6122, %v6148
        %v6162 = vadd.f32 %v6123, %v6148
        %v6163 = vadd.f32 %v6124, %v6148
        %v6164 = vadd.f32 %v6125, %v6148
        %v6165 = vadd.f32 %v6126, %v6148
        %v6166 = vadd.f32 %v6127, %v6148
        %v6167 = vadd.f32 %v6128, %v6148
        %v6168 = vadd.f32 %v6129, %v6148
        %v6169 = vadd.f32 %v6130, %v6148
        %v6170 = vadd.f32 %v6131, %v6148
        %v6171 = vadd.f32 %v6132, %v6148
        %v6172 = vadd.f32 %v6133, %v6148
        %v6173 = vadd.f32 %v6134, %v6148
        %v6174 = vadd.f32 %v6135, %v6148
        %v6175 = vadd.f32 %v6136, %v6148
        %v6176 = vadd.f32 %v6137, %v6148
        %v6177 = vadd.f32 %v6138, %v6148
        %v6178 = vadd.f32 %v6139, %v6148
        %v6179 = vadd.f32 %v6140, %v6148
        %v6180 = vadd.f32 %v6141, %v6148
        %v6181 = vadd.f32 %v6142, %v6148
        %6182 = vst.msk [vmem:[%s286] sm:$0xff] %vm1685, %v6150
        %6183 = vst.msk [vmem:[%s286 + $0x8] sm:$0xff] %vm1685, %v6151
        %6184 = vst.msk [vmem:[%s286 + $0x10] sm:$0xff] %vm1685, %v6152
        %6185 = vst.msk [vmem:[%s286 + $0x18] sm:$0xff] %vm1685, %v6153
        %6186 = vst.msk [vmem:[%s286 + $0x20] sm:$0xff] %vm1685, %v6154
        %6187 = vst.msk [vmem:[%s286 + $0x28] sm:$0xff] %vm1685, %v6155
        %6188 = vst.msk [vmem:[%s286 + $0x30] sm:$0xff] %vm1685, %v6156
        %6189 = vst.msk [vmem:[%s286 + $0x38] sm:$0xff] %vm1685, %v6157
        %6190 = vst.msk [vmem:[%s286 + $0x40] sm:$0xff] %vm1685, %v6158
        %6191 = vst.msk [vmem:[%s286 + $0x48] sm:$0xff] %vm1685, %v6159
        %6192 = vst.msk [vmem:[%s286 + $0x50] sm:$0xff] %vm1685, %v6160
        %6193 = vst.msk [vmem:[%s286 + $0x58] sm:$0xff] %vm1685, %v6161
        %6194 = vst.msk [vmem:[%s286 + $0x60] sm:$0xff] %vm1685, %v6162
        %6195 = vst.msk [vmem:[%s286 + $0x68] sm:$0xff] %vm1685, %v6163
        %6196 = vst.msk [vmem:[%s286 + $0x70] sm:$0xff] %vm1685, %v6164
        %6197 = vst.msk [vmem:[%s286 + $0x78] sm:$0xff] %vm1685, %v6165
        %6198 = vst.msk [vmem:[%s286 + $0x80] sm:$0xff] %vm1685, %v6166
        %6199 = vst.msk [vmem:[%s286 + $0x88] sm:$0xff] %vm1685, %v6167
        %6200 = vst.msk [vmem:[%s286 + $0x90] sm:$0xff] %vm1685, %v6168
        %6201 = vst.msk [vmem:[%s286 + $0x98] sm:$0xff] %vm1685, %v6169
        %6202 = vst.msk [vmem:[%s286 + $0xa0] sm:$0xff] %vm1685, %v6170
        %6203 = vst.msk [vmem:[%s286 + $0xa8] sm:$0xff] %vm1685, %v6171
        %6204 = vst.msk [vmem:[%s286 + $0xb0] sm:$0xff] %vm1685, %v6172
        %6205 = vst.msk [vmem:[%s286 + $0xb8] sm:$0xff] %vm1685, %v6173
        %6206 = vst.msk [vmem:[%s286 + $0xc0] sm:$0xff] %vm1685, %v6174
        %6207 = vst.msk [vmem:[%s286 + $0xc8] sm:$0xff] %vm1685, %v6175
        %6208 = vst.msk [vmem:[%s286 + $0xd0] sm:$0xff] %vm1685, %v6176
        %6209 = vst.msk [vmem:[%s286 + $0xd8] sm:$0xff] %vm1685, %v6177
        %6210 = vst.msk [vmem:[%s286 + $0xe0] sm:$0xff] %vm1685, %v6178
        %6211 = vst.msk [vmem:[%s286 + $0xe8] sm:$0xff] %vm1685, %v6179
        %6212 = vst.msk [vmem:[%s286 + $0xf0] sm:$0xff] %vm1685, %v6180
        %6213 = vst.msk [vmem:[%s286 + $0xf8] sm:$0xff] %vm1685, %v6181
        %s6214 = sand.u32 %s186, 1
        %s6215 = scalar_lea.sflag [#allocation4], %s6214
        %s6216 = sand.u32 %s186, 1
        %s6217 = smul.addr %s6216, 256
        %s6218 = scalar_lea.vmem [#allocation3], %s6217
        // Predicated region
        $region49: #{decoder_block_forward.3} parent=47 // pred_check
          %p6219 = pneg %p196
        $region50: #{decoder_block_forward.3} parent=47 // pred_check_branch
          %6221 = sbr.rel (%p6219) target = $region52
        $region51: #{decoder_block_forward.3} parent=47 // pred_region
          %s6223 = ssub.s32 4096, 4096
          %6224 = vsyncadd %s6215, %s6223
          %s6225 = smul.addr %s21, 32
          %s6226 = smul.addr %s6225, 128
          %s6227 = scalar_lea.hbm %s7, %s6226
          %s6228 = sshll.u32 %s6218, 4
          %s6229 = int_to_ptr.vmem [resolvable:$true] %s6228
          %6234 = dma.vmem_to_hbm [thread:$0]  %s6229, 4096, %s6227, %s6215, 128, 128, 8
        $region52: #{decoder_block_forward.3} parent=47 // pred_fallthru
          _
      $region48: #{decoder_block_forward.3} parent=5 // pred_fallthru
        _
      %p6235 = scmp.le.s32.totalorder 2, %s16
      // Predicated region
      $region53: #{decoder_block_forward.3} parent=5 // pred_check
        %p6236 = pneg %p6235
      $region54: #{decoder_block_forward.3} parent=5 // pred_check_branch
        %6238 = sbr.rel (%p6236) target = $region56
      $region55: #{decoder_block_forward.3} parent=5 // pred_region
        %s6239 = ssub.s32 %s16, 2
        // Predicated region
        $region57: #{decoder_block_forward.3} parent=55 // pred_check
          %p6240 = pneg %p202
        $region58: #{decoder_block_forward.3} parent=55 // pred_check_branch
          %6242 = sbr.rel (%p6240) target = $region60
        $region59: #{decoder_block_forward.3} parent=55 // pred_region
          %s6243 = sand.u32 %s187, 1
          %s6244 = scalar_lea.sflag [#allocation4], %s6243
          %s6245 = sand.u32 %s187, 1
          %s6246 = smul.addr %s6245, 256
          %s6247 = scalar_lea.vmem [#allocation3], %s6246
          %6248 = dma.done %s6244, 4096
        $region60: #{decoder_block_forward.3} parent=55 // pred_fallthru
          _
      $region56: #{decoder_block_forward.3} parent=5 // pred_fallthru
        _
    $region6: #{decoder_block_forward.3} parent=1 // loop_footer
      %s20 = sadd.s32 1, %s16
    $region7: #{decoder_block_forward.3} parent=1 // loop_footer_branch
      %15 = sbr.rel target = $region3
    $region8: #{decoder_block_forward.3} parent=1 // loop_exit
      _
    %6249 = vsyncpa [#allocation4], 1
    %s6250 = scalar_lea.sflag [#allocation4], 1
    %6251 = vsyncpa %s6250, 1

</llo_original>
